<compile_context>
chip_gen: v6e
topology: v6e:2x2x1
jax: 0.10.0
libtpu: 0.0.40
codegen_flags: <defaults>
</compile_context>

<pallas_src>
import jax
import jax.numpy as jnp
import numpy as np
from jax.experimental import pallas as pl
from jax.experimental.pallas import tpu as pltpu


def extractor_head_forward(x_nchw, wconv, bconv, whead, bhead, *, tb=8):
    """x_nchw: (B, Cin, H, W) f32 (PyTorch layout).
    wconv: (Cout, Cin, 3, 3)   bconv: (Cout,)
    whead: (NC, Cout)          bhead: (NC,)
    returns (B, NC) f32
    """
    B, Cin, H, W = x_nchw.shape
    Cout = wconv.shape[0]
    NC = whead.shape[0]
    Kc = 3 * Cin            # dx taps folded into the contraction dim
    HW = H * W
    HpW = (H + 2) * W       # rows of the dy-sliceable flattened input

    # ---------------- layout glue (plain JAX, cheap) ----------------
    x_nhwc = jnp.transpose(x_nchw, (0, 2, 3, 1))                      # NHWC
    xpad = jnp.pad(x_nhwc, ((0, 0), (1, 1), (1, 1), (0, 0)))          # zero pad=1
    # xr[b, h*W + w, dx*Cin + c] = xpad[b, h, w+dx, c]
    xr = jnp.concatenate([xpad[:, :, dx:dx + W, :] for dx in range(3)], axis=-1)
    xr = xr.reshape(B, HpW, Kc).astype(jnp.bfloat16)                  # (B, (H+2)*W, 3*Cin)

    # pad batch to a multiple of the batch tile (aligned, unmasked stores)
    Bp = -(-B // tb) * tb
    if Bp != B:
        xr = jnp.pad(xr, ((0, Bp - B), (0, 0), (0, 0)))

    # conv weight: (Cout, Cin, 3, 3) -> (dy, dx*Cin + c, Cout), bf16
    wk = jnp.transpose(wconv, (2, 3, 1, 0)).reshape(3, Kc, Cout).astype(jnp.bfloat16)
    bc = bconv.reshape(1, Cout).astype(jnp.float32)
    wh = whead.T.astype(jnp.float32)                                  # (Cout, NC), tiny -> keep f32
    bh = bhead.reshape(1, NC).astype(jnp.float32)

    # ---------------- fused Pallas kernel: conv + relu + pool + linear ----------------
    def kernel(x_ref, wk_ref, bc_ref, wh_ref, bh_ref, out_ref):
        tb_ = x_ref.shape[0]
        # 3x3 conv as 3 batched matmuls with K = 3*Cin; the dy shift is a
        # tile-aligned sublane slice (offset dy*W) of the resident block.
        acc = None
        for dy in range(3):                             # static unroll
            lhs = x_ref[:, pl.ds(dy * W, HW), :]        # (TB, HW, 3*Cin) bf16
            rhs = jnp.broadcast_to(wk_ref[dy][None], (tb_, Kc, Cout))
            term = jnp.einsum('bmk,bkn->bmn', lhs, rhs,
                              preferred_element_type=jnp.float32)
            acc = term if acc is None else acc + term
        # bias + ReLU + global average pool over the spatial axis
        feat = jnp.maximum(acc + bc_ref[...], 0.0)      # (TB, HW, Cout) f32
        pooled = jnp.sum(feat, axis=1) * (1.0 / HW)     # (TB, Cout)
        # linear head, once per batch tile
        out = jnp.dot(pooled, wh_ref[...], preferred_element_type=jnp.float32)
        out_ref[...] = (out + bh_ref[...]).astype(out_ref.dtype)

    out = pl.pallas_call(
        kernel,
        out_shape=jax.ShapeDtypeStruct((Bp, NC), jnp.float32),
        grid_spec=pltpu.PrefetchScalarGridSpec(
            num_scalar_prefetch=0,
            grid=(Bp // tb,),
            in_specs=[
                pl.BlockSpec((tb, HpW, Kc), lambda b: (b, 0, 0)),
                # weights/biases: constant index maps, ~a few KiB total, so
                # default (double) buffering is a negligible VMEM cost.
                pl.BlockSpec((3, Kc, Cout), lambda b: (0, 0, 0)),
                pl.BlockSpec((1, Cout), lambda b: (0, 0)),
                pl.BlockSpec((Cout, NC), lambda b: (0, 0)),
                pl.BlockSpec((1, NC), lambda b: (0, 0)),
            ],
            out_specs=pl.BlockSpec((tb, NC), lambda b: (b, 0)),
        ),
        compiler_params=pltpu.CompilerParams(
            dimension_semantics=("parallel",),   # >=2 steps -> both v7x TCs get work
        ),
    )(xr, wk, bc, wh, bh)
    return out[:B]


def _reference(x_nchw, wconv, bconv, whead, bhead):
    # Quantize the operands the kernel consumes in bf16, then exact f32 math.
    xq = x_nchw.astype(jnp.bfloat16).astype(jnp.float32)
    wq = wconv.astype(jnp.bfloat16).astype(jnp.float32)
    conv = jax.lax.conv_general_dilated(
        xq, wq, window_strides=(1, 1), padding="SAME",
        dimension_numbers=("NCHW", "OIHW", "NCHW"),
        precision=jax.lax.Precision.HIGHEST,
    )
    feat = jnp.maximum(conv + bconv[None, :, None, None], 0.0)
    pooled = jnp.mean(feat, axis=(2, 3))                              # (B, Cout)
    return pooled @ whead.T + bhead[None, :]


if __name__ == "__main__":
    B, Cin, H, W = 16, 4, 16, 16
    Cout, NC = 32, 4

    key = jax.random.PRNGKey(0)
    k1, k2, k3, k4, k5 = jax.random.split(key, 5)

    x = jax.random.normal(k1, (B, Cin, H, W), jnp.float32)
    wconv = jax.random.normal(k2, (Cout, Cin, 3, 3), jnp.float32) * 0.1
    bconv = jax.random.normal(k3, (Cout,), jnp.float32) * 0.1
    whead = jax.random.normal(k4, (NC, Cout), jnp.float32) * 0.1
    bhead = jax.random.normal(k5, (NC,), jnp.float32) * 0.1

    out = jax.block_until_ready(extractor_head_forward(x, wconv, bconv, whead, bhead))
    ref = jax.block_until_ready(_reference(x, wconv, bconv, whead, bhead))

    np.testing.assert_allclose(np.asarray(out), np.asarray(ref),
                               rtol=5e-3, atol=5e-3)
    print("KERNEL_OK")
</pallas_src>

<mosaic_0001>
module attributes {stable_mosaic.version = 11 : i64} {
  func.func @kernel(%arg0: i32, %arg1: memref<8x288x12xbf16, #tpu.memory_space<vmem>>, %arg2: memref<3x12x32xbf16, #tpu.memory_space<vmem>>, %arg3: memref<1x32xf32, #tpu.memory_space<vmem>>, %arg4: memref<32x4xf32, #tpu.memory_space<vmem>>, %arg5: memref<1x4xf32, #tpu.memory_space<vmem>>, %arg6: memref<8x4xf32, #tpu.memory_space<vmem>>) attributes {dimension_semantics = [#tpu.dimension_semantics<parallel>], iteration_bounds = array<i64: 2>, scalar_prefetch = 0 : i64, scratch_operands = 0 : i64, tpu.core_type = #tpu.core_type<tc>, window_params = [{transform_indices = @transform_0, window_bounds = array<i64: 8, 288, 12>}, {pipeline_mode = #tpu.pipeline_mode<synchronous>, transform_indices = @transform_1, window_bounds = array<i64: 3, 12, 32>}, {pipeline_mode = #tpu.pipeline_mode<synchronous>, transform_indices = @transform_2, window_bounds = array<i64: 1, 32>}, {pipeline_mode = #tpu.pipeline_mode<synchronous>, transform_indices = @transform_3, window_bounds = array<i64: 32, 4>}, {pipeline_mode = #tpu.pipeline_mode<synchronous>, transform_indices = @transform_4, window_bounds = array<i64: 1, 4>}, {transform_indices = @transform_5, window_bounds = array<i64: 8, 4>}]} {
    %c0 = arith.constant 0 : index
    %c0_0 = arith.constant 0 : index
    %c0_1 = arith.constant 0 : index
    %0 = vector.load %arg1[%c0, %c0_0, %c0_1] : memref<8x288x12xbf16, #tpu.memory_space<vmem>>, vector<8x256x12xbf16>
    %c0_2 = arith.constant 0 : index
    %c0_3 = arith.constant 0 : index
    %c0_4 = arith.constant 0 : index
    %1 = vector.load %arg2[%c0_2, %c0_3, %c0_4] : memref<3x12x32xbf16, #tpu.memory_space<vmem>>, vector<1x12x32xbf16>
    %2 = vector.shape_cast %1 : vector<1x12x32xbf16> to vector<12x32xbf16>
    %3 = vector.shape_cast %2 : vector<12x32xbf16> to vector<1x12x32xbf16>
    %4 = vector.shape_cast %3 : vector<1x12x32xbf16> to vector<1x12x32xbf16>
    %5 = vector.broadcast %4 : vector<1x12x32xbf16> to vector<8x12x32xbf16>
    "tpu.trace_start"() <{level = 10 : i32, message = "bmk,bkn->bmn"}> : () -> ()
    %cst = arith.constant dense<0.000000e+00> : vector<8x256x32xf32>
    %6 = tpu.matmul %0, %5, %cst {dimension_numbers = #tpu.dot_dimension_numbers<[2], [1], [1], [2], [0, 0, 0, 1, 1, 2], [0], [0]>} : vector<8x256x12xbf16>, vector<8x12x32xbf16>, vector<8x256x32xf32> -> vector<8x256x32xf32>
    "tpu.trace_stop"() : () -> ()
    %c0_5 = arith.constant 0 : index
    %c16 = arith.constant 16 : index
    %c0_6 = arith.constant 0 : index
    %7 = vector.load %arg1[%c0_5, %c16, %c0_6] : memref<8x288x12xbf16, #tpu.memory_space<vmem>>, vector<8x256x12xbf16>
    %c1 = arith.constant 1 : index
    %c0_7 = arith.constant 0 : index
    %c0_8 = arith.constant 0 : index
    %8 = vector.load %arg2[%c1, %c0_7, %c0_8] : memref<3x12x32xbf16, #tpu.memory_space<vmem>>, vector<1x12x32xbf16>
    %9 = vector.shape_cast %8 : vector<1x12x32xbf16> to vector<12x32xbf16>
    %10 = vector.shape_cast %9 : vector<12x32xbf16> to vector<1x12x32xbf16>
    %11 = vector.shape_cast %10 : vector<1x12x32xbf16> to vector<1x12x32xbf16>
    %12 = vector.broadcast %11 : vector<1x12x32xbf16> to vector<8x12x32xbf16>
    "tpu.trace_start"() <{level = 10 : i32, message = "bmk,bkn->bmn"}> : () -> ()
    %cst_9 = arith.constant dense<0.000000e+00> : vector<8x256x32xf32>
    %13 = tpu.matmul %7, %12, %cst_9 {dimension_numbers = #tpu.dot_dimension_numbers<[2], [1], [1], [2], [0, 0, 0, 1, 1, 2], [0], [0]>} : vector<8x256x12xbf16>, vector<8x12x32xbf16>, vector<8x256x32xf32> -> vector<8x256x32xf32>
    "tpu.trace_stop"() : () -> ()
    %14 = arith.addf %6, %13 : vector<8x256x32xf32>
    %c0_10 = arith.constant 0 : index
    %c32 = arith.constant 32 : index
    %c0_11 = arith.constant 0 : index
    %15 = vector.load %arg1[%c0_10, %c32, %c0_11] : memref<8x288x12xbf16, #tpu.memory_space<vmem>>, vector<8x256x12xbf16>
    %c2 = arith.constant 2 : index
    %c0_12 = arith.constant 0 : index
    %c0_13 = arith.constant 0 : index
    %16 = vector.load %arg2[%c2, %c0_12, %c0_13] : memref<3x12x32xbf16, #tpu.memory_space<vmem>>, vector<1x12x32xbf16>
    %17 = vector.shape_cast %16 : vector<1x12x32xbf16> to vector<12x32xbf16>
    %18 = vector.shape_cast %17 : vector<12x32xbf16> to vector<1x12x32xbf16>
    %19 = vector.shape_cast %18 : vector<1x12x32xbf16> to vector<1x12x32xbf16>
    %20 = vector.broadcast %19 : vector<1x12x32xbf16> to vector<8x12x32xbf16>
    "tpu.trace_start"() <{level = 10 : i32, message = "bmk,bkn->bmn"}> : () -> ()
    %cst_14 = arith.constant dense<0.000000e+00> : vector<8x256x32xf32>
    %21 = tpu.matmul %15, %20, %cst_14 {dimension_numbers = #tpu.dot_dimension_numbers<[2], [1], [1], [2], [0, 0, 0, 1, 1, 2], [0], [0]>} : vector<8x256x12xbf16>, vector<8x12x32xbf16>, vector<8x256x32xf32> -> vector<8x256x32xf32>
    "tpu.trace_stop"() : () -> ()
    %22 = arith.addf %14, %21 : vector<8x256x32xf32>
    %c0_15 = arith.constant 0 : index
    %c0_16 = arith.constant 0 : index
    %23 = vector.load %arg3[%c0_15, %c0_16] : memref<1x32xf32, #tpu.memory_space<vmem>>, vector<1x32xf32>
    %24 = vector.shape_cast %23 : vector<1x32xf32> to vector<1x1x32xf32>
    %25 = vector.broadcast %24 : vector<1x1x32xf32> to vector<8x256x32xf32>
    %26 = arith.addf %22, %25 : vector<8x256x32xf32>
    %cst_17 = arith.constant 0.000000e+00 : f32
    %27 = vector.broadcast %cst_17 : f32 to vector<8x256x32xf32>
    %28 = arith.maximumf %26, %27 : vector<8x256x32xf32>
    %cst_18 = arith.constant dense<0.000000e+00> : vector<8x32xf32>
    %29 = vector.multi_reduction <add>, %28, %cst_18 [1] : vector<8x256x32xf32> to vector<8x32xf32>
    %cst_19 = arith.constant 3.906250e-03 : f32
    %30 = vector.broadcast %cst_19 : f32 to vector<8x32xf32>
    %31 = arith.mulf %29, %30 : vector<8x32xf32>
    %c0_20 = arith.constant 0 : index
    %c0_21 = arith.constant 0 : index
    %32 = vector.load %arg4[%c0_20, %c0_21] : memref<32x4xf32, #tpu.memory_space<vmem>>, vector<32x4xf32>
    %cst_22 = arith.constant dense<0.000000e+00> : vector<8x4xf32>
    %33 = tpu.matmul %31, %32, %cst_22 {dimension_numbers = #tpu.dot_dimension_numbers<[1], [0], [0], [1], [0, 0, 1, 1], [], []>} : vector<8x32xf32>, vector<32x4xf32>, vector<8x4xf32> -> vector<8x4xf32>
    %c0_23 = arith.constant 0 : index
    %c0_24 = arith.constant 0 : index
    %34 = vector.load %arg5[%c0_23, %c0_24] : memref<1x4xf32, #tpu.memory_space<vmem>>, vector<1x4xf32>
    %35 = vector.broadcast %34 : vector<1x4xf32> to vector<8x4xf32>
    %36 = arith.addf %33, %35 : vector<8x4xf32>
    %c0_25 = arith.constant 0 : index
    %c0_26 = arith.constant 0 : index
    %37 = vector.load %arg6[%c0_25, %c0_26] : memref<8x4xf32, #tpu.memory_space<vmem>>, vector<8x4xf32>
    tpu.vector_store %arg6[%c0_25, %c0_26], %36 {strides = array<i32>} : memref<8x4xf32, #tpu.memory_space<vmem>>, vector<8x4xf32>,
    return
  }
  func.func @transform_0(%arg0: i32) -> (i32, i32, i32) {
    %c0_i32 = arith.constant 0 : i32
    %c0_i32_0 = arith.constant 0 : i32
    %c0_i32_1 = arith.constant 0 : i32
    return %arg0, %c0_i32, %c0_i32_0 : i32, i32, i32
  }
  func.func @transform_1(%arg0: i32) -> (i32, i32, i32) {
    %c0_i32 = arith.constant 0 : i32
    %c0_i32_0 = arith.constant 0 : i32
    %c0_i32_1 = arith.constant 0 : i32
    %c0_i32_2 = arith.constant 0 : i32
    return %c0_i32, %c0_i32_0, %c0_i32_1 : i32, i32, i32
  }
  func.func @transform_2(%arg0: i32) -> (i32, i32) {
    %c0_i32 = arith.constant 0 : i32
    %c0_i32_0 = arith.constant 0 : i32
    %c0_i32_1 = arith.constant 0 : i32
    return %c0_i32, %c0_i32_0 : i32, i32
  }
  func.func @transform_3(%arg0: i32) -> (i32, i32) {
    %c0_i32 = arith.constant 0 : i32
    %c0_i32_0 = arith.constant 0 : i32
    %c0_i32_1 = arith.constant 0 : i32
    return %c0_i32, %c0_i32_0 : i32, i32
  }
  func.func @transform_4(%arg0: i32) -> (i32, i32) {
    %c0_i32 = arith.constant 0 : i32
    %c0_i32_0 = arith.constant 0 : i32
    %c0_i32_1 = arith.constant 0 : i32
    return %c0_i32, %c0_i32_0 : i32, i32
  }
  func.func @transform_5(%arg0: i32) -> (i32, i32) {
    %c0_i32 = arith.constant 0 : i32
    %c0_i32_0 = arith.constant 0 : i32
    return %arg0, %c0_i32 : i32, i32
  }
}

</mosaic_0001>

<llo_original>
// kernel: tpu_custom_call.1
$region0: #{tpu_custom_call.1}
  #allocation0 [shape = 'u32[]', space=smem, size = 0x4, offset = 0x4, fixed_abs, tag = 'smem constant byte address 0x4 - core index']
  #allocation1 [shape = 'u32[144,128]{1,0:T(1,128)}', space=vmem, size = 0x12000, scoped, tag = 'internal scratch']
  %s0 = inlined_call_operand.vmem [shape: bf16[16,288,12], index: 0, kind: input, shape index: {}]
  %s1 = inlined_call_operand.vmem [shape: bf16[3,12,32], index: 1, kind: input, shape index: {}]
  %s2 = inlined_call_operand.vmem [shape: f32[1,32], index: 2, kind: input, shape index: {}]
  %s3 = inlined_call_operand.vmem [shape: f32[32,4], index: 3, kind: input, shape index: {}]
  %s4 = inlined_call_operand.vmem [shape: f32[1,4], index: 4, kind: input, shape index: {}]
  %s5 = inlined_call_operand.vmem [shape: f32[16,4], index: 5, kind: output, shape index: {}]
  %s6 = sld [smem:[#allocation0]]
  $region53: #{tpu_custom_call.1} parent=0
    _
  %s8 = ssub.s32 1, %s6
  %s9 = scalar_select 0, %s8, %s6
  loop: start=0, step=1, limit=4
  $region2: #{tpu_custom_call.1} parent=0 // loop_pre_header
    _
  $region3: #{tpu_custom_call.1} parent=0 // loop_header
    %s11 = sphi 0, %s15
    %p12 = scmp.ge.s32.totalorder %s11, 4
    %s21 = sphi 0, %s23
    %s24 = sphi 0, %s21
    %s25 = sphi 0, %s24
    %s41 = sphi 0, %s25
    %s45 = sphi 0, %s45
    %s47 = sphi 0, %s45
    %s48 = sphi 0, %s47
    %s62 = sphi 0, %s48
    %s66 = sphi 0, %s66
    %s68 = sphi 0, %s66
    %s69 = sphi 0, %s68
    %s83 = sphi 0, %s69
    %s87 = sphi 0, %s87
    %s89 = sphi 0, %s87
    %s90 = sphi 0, %s89
    %s104 = sphi 0, %s90
    %s108 = sphi 0, %s108
    %s110 = sphi 0, %s108
    %s111 = sphi 0, %s110
    %s125 = sphi 0, %s111
    %s131 = sphi 0, %s133
    %s134 = sphi 0, %s131
    %s135 = sphi 0, %s134
    %s151 = sphi 0, %s135
  $region4: #{tpu_custom_call.1} parent=0 // loop_header_branch
    %14 = sbr.rel (%p12) target = $region8
  $region5: #{tpu_custom_call.1} parent=0 // loop_body
    %s16 = ssub.s32 %s11, 1
    %s17 = ssub.s32 %s11, 2
    %s18 = sadd.s32 %s11, 1
    %s19 = ssub.s32 %s11, %s18
    %p20 = scmp.eq.s32.totalorder %s19, 0
    %s22 = sadd.s32 %s21, 1
    %s23 = scalar_select %p20, %s21, %s22
    %p26 = pneg %p20
    %p27 = scmp.eq.s32.totalorder %s11, 1
    %p28 = por %p26, %p27
    %p29 = scmp.ne.s32.totalorder %s21, %s24
    %p30 = scmp.eq.s32.totalorder %s11, 0
    %p31 = por %p29, %p30
    %p32 = scmp.ne.s32.totalorder %s21, %s24
    %p33 = scmp.eq.s32.totalorder %s16, 1
    %p34 = por %p32, %p33
    %p35 = scmp.ne.s32.totalorder %s24, %s25
    %p36 = scmp.eq.s32.totalorder %s16, 0
    %p37 = por %p35, %p36
    %p38 = scmp.ne.s32.totalorder %s24, %s25
    %p39 = scmp.eq.s32.totalorder %s17, 1
    %p40 = por %p38, %p39
    %p42 = scmp.ne.s32.totalorder %s25, %s41
    %p43 = scmp.eq.s32.totalorder %s17, 0
    %p44 = por %p42, %p43
    %s46 = sadd.s32 %s45, 1
    %p49 = scmp.eq.s32.totalorder %s11, 1
    %p50 = scmp.ne.s32.totalorder %s45, %s47
    %p51 = scmp.eq.s32.totalorder %s11, 0
    %p52 = por %p50, %p51
    %p53 = scmp.ne.s32.totalorder %s45, %s47
    %p54 = scmp.eq.s32.totalorder %s16, 1
    %p55 = por %p53, %p54
    %p56 = scmp.ne.s32.totalorder %s47, %s48
    %p57 = scmp.eq.s32.totalorder %s16, 0
    %p58 = por %p56, %p57
    %p59 = scmp.ne.s32.totalorder %s47, %s48
    %p60 = scmp.eq.s32.totalorder %s17, 1
    %p61 = por %p59, %p60
    %p63 = scmp.ne.s32.totalorder %s48, %s62
    %p64 = scmp.eq.s32.totalorder %s17, 0
    %p65 = por %p63, %p64
    %s67 = sadd.s32 %s66, 1
    %p70 = scmp.eq.s32.totalorder %s11, 1
    %p71 = scmp.ne.s32.totalorder %s66, %s68
    %p72 = scmp.eq.s32.totalorder %s11, 0
    %p73 = por %p71, %p72
    %p74 = scmp.ne.s32.totalorder %s66, %s68
    %p75 = scmp.eq.s32.totalorder %s16, 1
    %p76 = por %p74, %p75
    %p77 = scmp.ne.s32.totalorder %s68, %s69
    %p78 = scmp.eq.s32.totalorder %s16, 0
    %p79 = por %p77, %p78
    %p80 = scmp.ne.s32.totalorder %s68, %s69
    %p81 = scmp.eq.s32.totalorder %s17, 1
    %p82 = por %p80, %p81
    %p84 = scmp.ne.s32.totalorder %s69, %s83
    %p85 = scmp.eq.s32.totalorder %s17, 0
    %p86 = por %p84, %p85
    %s88 = sadd.s32 %s87, 1
    %p91 = scmp.eq.s32.totalorder %s11, 1
    %p92 = scmp.ne.s32.totalorder %s87, %s89
    %p93 = scmp.eq.s32.totalorder %s11, 0
    %p94 = por %p92, %p93
    %p95 = scmp.ne.s32.totalorder %s87, %s89
    %p96 = scmp.eq.s32.totalorder %s16, 1
    %p97 = por %p95, %p96
    %p98 = scmp.ne.s32.totalorder %s89, %s90
    %p99 = scmp.eq.s32.totalorder %s16, 0
    %p100 = por %p98, %p99
    %p101 = scmp.ne.s32.totalorder %s89, %s90
    %p102 = scmp.eq.s32.totalorder %s17, 1
    %p103 = por %p101, %p102
    %p105 = scmp.ne.s32.totalorder %s90, %s104
    %p106 = scmp.eq.s32.totalorder %s17, 0
    %p107 = por %p105, %p106
    %s109 = sadd.s32 %s108, 1
    %p112 = scmp.eq.s32.totalorder %s11, 1
    %p113 = scmp.ne.s32.totalorder %s108, %s110
    %p114 = scmp.eq.s32.totalorder %s11, 0
    %p115 = por %p113, %p114
    %p116 = scmp.ne.s32.totalorder %s108, %s110
    %p117 = scmp.eq.s32.totalorder %s16, 1
    %p118 = por %p116, %p117
    %p119 = scmp.ne.s32.totalorder %s110, %s111
    %p120 = scmp.eq.s32.totalorder %s16, 0
    %p121 = por %p119, %p120
    %p122 = scmp.ne.s32.totalorder %s110, %s111
    %p123 = scmp.eq.s32.totalorder %s17, 1
    %p124 = por %p122, %p123
    %p126 = scmp.ne.s32.totalorder %s111, %s125
    %p127 = scmp.eq.s32.totalorder %s17, 0
    %p128 = por %p126, %p127
    %s129 = ssub.s32 %s11, %s18
    %p130 = scmp.eq.s32.totalorder %s129, 0
    %s132 = sadd.s32 %s131, 1
    %s133 = scalar_select %p130, %s131, %s132
    %p136 = pneg %p130
    %p137 = scmp.eq.s32.totalorder %s11, 1
    %p138 = por %p136, %p137
    %p139 = scmp.ne.s32.totalorder %s131, %s134
    %p140 = scmp.eq.s32.totalorder %s11, 0
    %p141 = por %p139, %p140
    %p142 = scmp.ne.s32.totalorder %s131, %s134
    %p143 = scmp.eq.s32.totalorder %s16, 1
    %p144 = por %p142, %p143
    %p145 = scmp.ne.s32.totalorder %s134, %s135
    %p146 = scmp.eq.s32.totalorder %s16, 0
    %p147 = por %p145, %p146
    %p148 = scmp.ne.s32.totalorder %s134, %s135
    %p149 = scmp.eq.s32.totalorder %s17, 1
    %p150 = por %p148, %p149
    %p152 = scmp.ne.s32.totalorder %s135, %s151
    %p153 = scmp.eq.s32.totalorder %s17, 0
    %p154 = por %p152, %p153
    %p155 = scmp.le.s32.totalorder 1, %s11
    %p156 = scmp.lt.s32.totalorder %s11, 3
    %p157 = pnand %p155, %p156
    %p158 = pneg %p157
    // Predicated region
    $region9: #{tpu_custom_call.1} parent=5 // pred_check
      _
    $region10: #{tpu_custom_call.1} parent=5 // pred_check_branch
      %160 = sbr.rel (%p157) target = $region12
    $region11: #{tpu_custom_call.1} parent=5 // pred_region
      %s161 = ssub.s32 %s11, 1
      // Predicated region
      $region13: #{tpu_custom_call.1} parent=11 // pred_check
        %p162 = pneg %p58
      $region14: #{tpu_custom_call.1} parent=11 // pred_check_branch
        %164 = sbr.rel (%p162) target = $region16
      $region15: #{tpu_custom_call.1} parent=11 // pred_region
        _
      $region16: #{tpu_custom_call.1} parent=11 // pred_fallthru
        _
      // Predicated region
      $region17: #{tpu_custom_call.1} parent=11 // pred_check
        %p165 = pneg %p79
      $region18: #{tpu_custom_call.1} parent=11 // pred_check_branch
        %167 = sbr.rel (%p165) target = $region20
      $region19: #{tpu_custom_call.1} parent=11 // pred_region
        _
      $region20: #{tpu_custom_call.1} parent=11 // pred_fallthru
        _
      // Predicated region
      $region21: #{tpu_custom_call.1} parent=11 // pred_check
        %p168 = pneg %p100
      $region22: #{tpu_custom_call.1} parent=11 // pred_check_branch
        %170 = sbr.rel (%p168) target = $region24
      $region23: #{tpu_custom_call.1} parent=11 // pred_region
        _
      $region24: #{tpu_custom_call.1} parent=11 // pred_fallthru
        _
      // Predicated region
      $region25: #{tpu_custom_call.1} parent=11 // pred_check
        %p171 = pneg %p121
      $region26: #{tpu_custom_call.1} parent=11 // pred_check_branch
        %173 = sbr.rel (%p171) target = $region28
      $region27: #{tpu_custom_call.1} parent=11 // pred_region
        _
      $region28: #{tpu_custom_call.1} parent=11 // pred_fallthru
        _
    $region12: #{tpu_custom_call.1} parent=5 // pred_fallthru
      _
    %p174 = scmp.lt.s32.totalorder %s11, 2
    // Predicated region
    $region29: #{tpu_custom_call.1} parent=5 // pred_check
      %p175 = pneg %p174
    $region30: #{tpu_custom_call.1} parent=5 // pred_check_branch
      %177 = sbr.rel (%p175) target = $region32
    $region31: #{tpu_custom_call.1} parent=5 // pred_region
      // Predicated region
      $region33: #{tpu_custom_call.1} parent=31 // pred_check
        %p178 = pneg %p31
      $region34: #{tpu_custom_call.1} parent=31 // pred_check_branch
        %180 = sbr.rel (%p178) target = $region36
      $region35: #{tpu_custom_call.1} parent=31 // pred_region
        %s181 = smul.u32 8, %s11
        %p182 = scmp.lt.s32.totalorder %s181, 15
        %s183 = scalar_select %p182, %s181, 15
        %s184 = smul.addr %s183, 36
        %s185 = smul.addr %s184, 4
        %s186 = scalar_lea.vmem %s0, %s185
        %s187 = smul.u32 8, %s11
      $region36: #{tpu_custom_call.1} parent=31 // pred_fallthru
        _
    $region32: #{tpu_custom_call.1} parent=5 // pred_fallthru
      _
    %p188 = scmp.le.s32.totalorder 1, %s11
    %p189 = scmp.lt.s32.totalorder %s11, 3
    %p190 = pnand %p188, %p189
    %p191 = pneg %p190
    // Predicated region
    $region37: #{tpu_custom_call.1} parent=5 // pred_check
      _
    $region38: #{tpu_custom_call.1} parent=5 // pred_check_branch
      %193 = sbr.rel (%p190) target = $region40
    $region39: #{tpu_custom_call.1} parent=5 // pred_region
      %s194 = ssub.s32 %s11, 1
      %s195 = smul.u32 8, %s16
      %p196 = scmp.lt.s32.totalorder %s195, 15
      %s197 = scalar_select %p196, %s195, 15
      %s198 = smul.addr %s197, 36
      %s199 = smul.addr %s198, 4
      %s200 = scalar_lea.vmem %s0, %s199
      %p201 = pneg %p37
      %p202 = pneg %p34
      %p203 = pneg %p58
      %p204 = pneg %p55
      %p205 = pneg %p79
      %p206 = pneg %p76
      %p207 = pneg %p100
      %p208 = pneg %p97
      %p209 = pneg %p121
      %p210 = pneg %p118
      %p211 = pneg %p147
      %p212 = pneg %p144
      %p213 = scmp.lt.s32.totalorder %s16, 1
      %s214 = scalar_select %p213, %s16, 1
      %s215 = smul.addr %s214, 8
      %s216 = scalar_lea.vmem %s5, %s215
      %s217 = smul.u32 8, %s16
      %p218 = scmp.lt.s32.totalorder %s217, 15
      %s219 = scalar_select %p218, %s217, 15
      %s220 = smul.addr %s219, 36
      %s221 = smul.addr %s220, 4
      %s222 = scalar_lea.vmem %s0, %s221
      %s223 = smul.u32 8, %s16
      %p224 = scmp.lt.s32.totalorder %s16, 1
      %s225 = scalar_select %p224, %s16, 1
      %s226 = smul.addr %s225, 8
      %s227 = scalar_lea.vmem %s5, %s226
      %v229 = vld [vmem:[%s222] sm:$0xf]
      %v230 = vld [vmem:[%s222 + $0x4] sm:$0xf]
      %v231 = vld [vmem:[%s222 + $0x8] sm:$0xf]
      %v232 = vld [vmem:[%s222 + $0xc] sm:$0xf]
      %v233 = vld [vmem:[%s222 + $0x10] sm:$0xf]
      %v234 = vld [vmem:[%s222 + $0x14] sm:$0xf]
      %v235 = vld [vmem:[%s222 + $0x18] sm:$0xf]
      %v236 = vld [vmem:[%s222 + $0x1c] sm:$0xf]
      %v237 = vld [vmem:[%s222 + $0x20] sm:$0xf]
      %v238 = vld [vmem:[%s222 + $0x24] sm:$0xf]
      %v239 = vld [vmem:[%s222 + $0x28] sm:$0xf]
      %v240 = vld [vmem:[%s222 + $0x2c] sm:$0xf]
      %v241 = vld [vmem:[%s222 + $0x30] sm:$0xf]
      %v242 = vld [vmem:[%s222 + $0x34] sm:$0xf]
      %v243 = vld [vmem:[%s222 + $0x38] sm:$0xf]
      %v244 = vld [vmem:[%s222 + $0x3c] sm:$0xf]
      %v245 = vld [vmem:[%s222 + $0x40] sm:$0xf]
      %v246 = vld [vmem:[%s222 + $0x44] sm:$0xf]
      %v247 = vld [vmem:[%s222 + $0x48] sm:$0xf]
      %v248 = vld [vmem:[%s222 + $0x4c] sm:$0xf]
      %v249 = vld [vmem:[%s222 + $0x50] sm:$0xf]
      %v250 = vld [vmem:[%s222 + $0x54] sm:$0xf]
      %v251 = vld [vmem:[%s222 + $0x58] sm:$0xf]
      %v252 = vld [vmem:[%s222 + $0x5c] sm:$0xf]
      %v253 = vld [vmem:[%s222 + $0x60] sm:$0xf]
      %v254 = vld [vmem:[%s222 + $0x64] sm:$0xf]
      %v255 = vld [vmem:[%s222 + $0x68] sm:$0xf]
      %v256 = vld [vmem:[%s222 + $0x6c] sm:$0xf]
      %v257 = vld [vmem:[%s222 + $0x70] sm:$0xf]
      %v258 = vld [vmem:[%s222 + $0x74] sm:$0xf]
      %v259 = vld [vmem:[%s222 + $0x78] sm:$0xf]
      %v260 = vld [vmem:[%s222 + $0x7c] sm:$0xf]
      %v261 = vld [vmem:[%s222 + $0x90] sm:$0xf]
      %v262 = vld [vmem:[%s222 + $0x94] sm:$0xf]
      %v263 = vld [vmem:[%s222 + $0x98] sm:$0xf]
      %v264 = vld [vmem:[%s222 + $0x9c] sm:$0xf]
      %v265 = vld [vmem:[%s222 + $0xa0] sm:$0xf]
      %v266 = vld [vmem:[%s222 + $0xa4] sm:$0xf]
      %v267 = vld [vmem:[%s222 + $0xa8] sm:$0xf]
      %v268 = vld [vmem:[%s222 + $0xac] sm:$0xf]
      %v269 = vld [vmem:[%s222 + $0xb0] sm:$0xf]
      %v270 = vld [vmem:[%s222 + $0xb4] sm:$0xf]
      %v271 = vld [vmem:[%s222 + $0xb8] sm:$0xf]
      %v272 = vld [vmem:[%s222 + $0xbc] sm:$0xf]
      %v273 = vld [vmem:[%s222 + $0xc0] sm:$0xf]
      %v274 = vld [vmem:[%s222 + $0xc4] sm:$0xf]
      %v275 = vld [vmem:[%s222 + $0xc8] sm:$0xf]
      %v276 = vld [vmem:[%s222 + $0xcc] sm:$0xf]
      %v277 = vld [vmem:[%s222 + $0xd0] sm:$0xf]
      %v278 = vld [vmem:[%s222 + $0xd4] sm:$0xf]
      %v279 = vld [vmem:[%s222 + $0xd8] sm:$0xf]
      %v280 = vld [vmem:[%s222 + $0xdc] sm:$0xf]
      %v281 = vld [vmem:[%s222 + $0xe0] sm:$0xf]
      %v282 = vld [vmem:[%s222 + $0xe4] sm:$0xf]
      %v283 = vld [vmem:[%s222 + $0xe8] sm:$0xf]
      %v284 = vld [vmem:[%s222 + $0xec] sm:$0xf]
      %v285 = vld [vmem:[%s222 + $0xf0] sm:$0xf]
      %v286 = vld [vmem:[%s222 + $0xf4] sm:$0xf]
      %v287 = vld [vmem:[%s222 + $0xf8] sm:$0xf]
      %v288 = vld [vmem:[%s222 + $0xfc] sm:$0xf]
      %v289 = vld [vmem:[%s222 + $0x100] sm:$0xf]
      %v290 = vld [vmem:[%s222 + $0x104] sm:$0xf]
      %v291 = vld [vmem:[%s222 + $0x108] sm:$0xf]
      %v292 = vld [vmem:[%s222 + $0x10c] sm:$0xf]
      %v293 = vld [vmem:[%s222 + $0x120] sm:$0xf]
      %v294 = vld [vmem:[%s222 + $0x124] sm:$0xf]
      %v295 = vld [vmem:[%s222 + $0x128] sm:$0xf]
      %v296 = vld [vmem:[%s222 + $0x12c] sm:$0xf]
      %v297 = vld [vmem:[%s222 + $0x130] sm:$0xf]
      %v298 = vld [vmem:[%s222 + $0x134] sm:$0xf]
      %v299 = vld [vmem:[%s222 + $0x138] sm:$0xf]
      %v300 = vld [vmem:[%s222 + $0x13c] sm:$0xf]
      %v301 = vld [vmem:[%s222 + $0x140] sm:$0xf]
      %v302 = vld [vmem:[%s222 + $0x144] sm:$0xf]
      %v303 = vld [vmem:[%s222 + $0x148] sm:$0xf]
      %v304 = vld [vmem:[%s222 + $0x14c] sm:$0xf]
      %v305 = vld [vmem:[%s222 + $0x150] sm:$0xf]
      %v306 = vld [vmem:[%s222 + $0x154] sm:$0xf]
      %v307 = vld [vmem:[%s222 + $0x158] sm:$0xf]
      %v308 = vld [vmem:[%s222 + $0x15c] sm:$0xf]
      %v309 = vld [vmem:[%s222 + $0x160] sm:$0xf]
      %v310 = vld [vmem:[%s222 + $0x164] sm:$0xf]
      %v311 = vld [vmem:[%s222 + $0x168] sm:$0xf]
      %v312 = vld [vmem:[%s222 + $0x16c] sm:$0xf]
      %v313 = vld [vmem:[%s222 + $0x170] sm:$0xf]
      %v314 = vld [vmem:[%s222 + $0x174] sm:$0xf]
      %v315 = vld [vmem:[%s222 + $0x178] sm:$0xf]
      %v316 = vld [vmem:[%s222 + $0x17c] sm:$0xf]
      %v317 = vld [vmem:[%s222 + $0x180] sm:$0xf]
      %v318 = vld [vmem:[%s222 + $0x184] sm:$0xf]
      %v319 = vld [vmem:[%s222 + $0x188] sm:$0xf]
      %v320 = vld [vmem:[%s222 + $0x18c] sm:$0xf]
      %v321 = vld [vmem:[%s222 + $0x190] sm:$0xf]
      %v322 = vld [vmem:[%s222 + $0x194] sm:$0xf]
      %v323 = vld [vmem:[%s222 + $0x198] sm:$0xf]
      %v324 = vld [vmem:[%s222 + $0x19c] sm:$0xf]
      %v325 = vld [vmem:[%s222 + $0x1b0] sm:$0xf]
      %v326 = vld [vmem:[%s222 + $0x1b4] sm:$0xf]
      %v327 = vld [vmem:[%s222 + $0x1b8] sm:$0xf]
      %v328 = vld [vmem:[%s222 + $0x1bc] sm:$0xf]
      %v329 = vld [vmem:[%s222 + $0x1c0] sm:$0xf]
      %v330 = vld [vmem:[%s222 + $0x1c4] sm:$0xf]
      %v331 = vld [vmem:[%s222 + $0x1c8] sm:$0xf]
      %v332 = vld [vmem:[%s222 + $0x1cc] sm:$0xf]
      %v333 = vld [vmem:[%s222 + $0x1d0] sm:$0xf]
      %v334 = vld [vmem:[%s222 + $0x1d4] sm:$0xf]
      %v335 = vld [vmem:[%s222 + $0x1d8] sm:$0xf]
      %v336 = vld [vmem:[%s222 + $0x1dc] sm:$0xf]
      %v337 = vld [vmem:[%s222 + $0x1e0] sm:$0xf]
      %v338 = vld [vmem:[%s222 + $0x1e4] sm:$0xf]
      %v339 = vld [vmem:[%s222 + $0x1e8] sm:$0xf]
      %v340 = vld [vmem:[%s222 + $0x1ec] sm:$0xf]
      %v341 = vld [vmem:[%s222 + $0x1f0] sm:$0xf]
      %v342 = vld [vmem:[%s222 + $0x1f4] sm:$0xf]
      %v343 = vld [vmem:[%s222 + $0x1f8] sm:$0xf]
      %v344 = vld [vmem:[%s222 + $0x1fc] sm:$0xf]
      %v345 = vld [vmem:[%s222 + $0x200] sm:$0xf]
      %v346 = vld [vmem:[%s222 + $0x204] sm:$0xf]
      %v347 = vld [vmem:[%s222 + $0x208] sm:$0xf]
      %v348 = vld [vmem:[%s222 + $0x20c] sm:$0xf]
      %v349 = vld [vmem:[%s222 + $0x210] sm:$0xf]
      %v350 = vld [vmem:[%s222 + $0x214] sm:$0xf]
      %v351 = vld [vmem:[%s222 + $0x218] sm:$0xf]
      %v352 = vld [vmem:[%s222 + $0x21c] sm:$0xf]
      %v353 = vld [vmem:[%s222 + $0x220] sm:$0xf]
      %v354 = vld [vmem:[%s222 + $0x224] sm:$0xf]
      %v355 = vld [vmem:[%s222 + $0x228] sm:$0xf]
      %v356 = vld [vmem:[%s222 + $0x22c] sm:$0xf]
      %v357 = vld [vmem:[%s222 + $0x240] sm:$0xf]
      %v358 = vld [vmem:[%s222 + $0x244] sm:$0xf]
      %v359 = vld [vmem:[%s222 + $0x248] sm:$0xf]
      %v360 = vld [vmem:[%s222 + $0x24c] sm:$0xf]
      %v361 = vld [vmem:[%s222 + $0x250] sm:$0xf]
      %v362 = vld [vmem:[%s222 + $0x254] sm:$0xf]
      %v363 = vld [vmem:[%s222 + $0x258] sm:$0xf]
      %v364 = vld [vmem:[%s222 + $0x25c] sm:$0xf]
      %v365 = vld [vmem:[%s222 + $0x260] sm:$0xf]
      %v366 = vld [vmem:[%s222 + $0x264] sm:$0xf]
      %v367 = vld [vmem:[%s222 + $0x268] sm:$0xf]
      %v368 = vld [vmem:[%s222 + $0x26c] sm:$0xf]
      %v369 = vld [vmem:[%s222 + $0x270] sm:$0xf]
      %v370 = vld [vmem:[%s222 + $0x274] sm:$0xf]
      %v371 = vld [vmem:[%s222 + $0x278] sm:$0xf]
      %v372 = vld [vmem:[%s222 + $0x27c] sm:$0xf]
      %v373 = vld [vmem:[%s222 + $0x280] sm:$0xf]
      %v374 = vld [vmem:[%s222 + $0x284] sm:$0xf]
      %v375 = vld [vmem:[%s222 + $0x288] sm:$0xf]
      %v376 = vld [vmem:[%s222 + $0x28c] sm:$0xf]
      %v377 = vld [vmem:[%s222 + $0x290] sm:$0xf]
      %v378 = vld [vmem:[%s222 + $0x294] sm:$0xf]
      %v379 = vld [vmem:[%s222 + $0x298] sm:$0xf]
      %v380 = vld [vmem:[%s222 + $0x29c] sm:$0xf]
      %v381 = vld [vmem:[%s222 + $0x2a0] sm:$0xf]
      %v382 = vld [vmem:[%s222 + $0x2a4] sm:$0xf]
      %v383 = vld [vmem:[%s222 + $0x2a8] sm:$0xf]
      %v384 = vld [vmem:[%s222 + $0x2ac] sm:$0xf]
      %v385 = vld [vmem:[%s222 + $0x2b0] sm:$0xf]
      %v386 = vld [vmem:[%s222 + $0x2b4] sm:$0xf]
      %v387 = vld [vmem:[%s222 + $0x2b8] sm:$0xf]
      %v388 = vld [vmem:[%s222 + $0x2bc] sm:$0xf]
      %v389 = vld [vmem:[%s222 + $0x2d0] sm:$0xf]
      %v390 = vld [vmem:[%s222 + $0x2d4] sm:$0xf]
      %v391 = vld [vmem:[%s222 + $0x2d8] sm:$0xf]
      %v392 = vld [vmem:[%s222 + $0x2dc] sm:$0xf]
      %v393 = vld [vmem:[%s222 + $0x2e0] sm:$0xf]
      %v394 = vld [vmem:[%s222 + $0x2e4] sm:$0xf]
      %v395 = vld [vmem:[%s222 + $0x2e8] sm:$0xf]
      %v396 = vld [vmem:[%s222 + $0x2ec] sm:$0xf]
      %v397 = vld [vmem:[%s222 + $0x2f0] sm:$0xf]
      %v398 = vld [vmem:[%s222 + $0x2f4] sm:$0xf]
      %v399 = vld [vmem:[%s222 + $0x2f8] sm:$0xf]
      %v400 = vld [vmem:[%s222 + $0x2fc] sm:$0xf]
      %v401 = vld [vmem:[%s222 + $0x300] sm:$0xf]
      %v402 = vld [vmem:[%s222 + $0x304] sm:$0xf]
      %v403 = vld [vmem:[%s222 + $0x308] sm:$0xf]
      %v404 = vld [vmem:[%s222 + $0x30c] sm:$0xf]
      %v405 = vld [vmem:[%s222 + $0x310] sm:$0xf]
      %v406 = vld [vmem:[%s222 + $0x314] sm:$0xf]
      %v407 = vld [vmem:[%s222 + $0x318] sm:$0xf]
      %v408 = vld [vmem:[%s222 + $0x31c] sm:$0xf]
      %v409 = vld [vmem:[%s222 + $0x320] sm:$0xf]
      %v410 = vld [vmem:[%s222 + $0x324] sm:$0xf]
      %v411 = vld [vmem:[%s222 + $0x328] sm:$0xf]
      %v412 = vld [vmem:[%s222 + $0x32c] sm:$0xf]
      %v413 = vld [vmem:[%s222 + $0x330] sm:$0xf]
      %v414 = vld [vmem:[%s222 + $0x334] sm:$0xf]
      %v415 = vld [vmem:[%s222 + $0x338] sm:$0xf]
      %v416 = vld [vmem:[%s222 + $0x33c] sm:$0xf]
      %v417 = vld [vmem:[%s222 + $0x340] sm:$0xf]
      %v418 = vld [vmem:[%s222 + $0x344] sm:$0xf]
      %v419 = vld [vmem:[%s222 + $0x348] sm:$0xf]
      %v420 = vld [vmem:[%s222 + $0x34c] sm:$0xf]
      %v421 = vld [vmem:[%s222 + $0x360] sm:$0xf]
      %v422 = vld [vmem:[%s222 + $0x364] sm:$0xf]
      %v423 = vld [vmem:[%s222 + $0x368] sm:$0xf]
      %v424 = vld [vmem:[%s222 + $0x36c] sm:$0xf]
      %v425 = vld [vmem:[%s222 + $0x370] sm:$0xf]
      %v426 = vld [vmem:[%s222 + $0x374] sm:$0xf]
      %v427 = vld [vmem:[%s222 + $0x378] sm:$0xf]
      %v428 = vld [vmem:[%s222 + $0x37c] sm:$0xf]
      %v429 = vld [vmem:[%s222 + $0x380] sm:$0xf]
      %v430 = vld [vmem:[%s222 + $0x384] sm:$0xf]
      %v431 = vld [vmem:[%s222 + $0x388] sm:$0xf]
      %v432 = vld [vmem:[%s222 + $0x38c] sm:$0xf]
      %v433 = vld [vmem:[%s222 + $0x390] sm:$0xf]
      %v434 = vld [vmem:[%s222 + $0x394] sm:$0xf]
      %v435 = vld [vmem:[%s222 + $0x398] sm:$0xf]
      %v436 = vld [vmem:[%s222 + $0x39c] sm:$0xf]
      %v437 = vld [vmem:[%s222 + $0x3a0] sm:$0xf]
      %v438 = vld [vmem:[%s222 + $0x3a4] sm:$0xf]
      %v439 = vld [vmem:[%s222 + $0x3a8] sm:$0xf]
      %v440 = vld [vmem:[%s222 + $0x3ac] sm:$0xf]
      %v441 = vld [vmem:[%s222 + $0x3b0] sm:$0xf]
      %v442 = vld [vmem:[%s222 + $0x3b4] sm:$0xf]
      %v443 = vld [vmem:[%s222 + $0x3b8] sm:$0xf]
      %v444 = vld [vmem:[%s222 + $0x3bc] sm:$0xf]
      %v445 = vld [vmem:[%s222 + $0x3c0] sm:$0xf]
      %v446 = vld [vmem:[%s222 + $0x3c4] sm:$0xf]
      %v447 = vld [vmem:[%s222 + $0x3c8] sm:$0xf]
      %v448 = vld [vmem:[%s222 + $0x3cc] sm:$0xf]
      %v449 = vld [vmem:[%s222 + $0x3d0] sm:$0xf]
      %v450 = vld [vmem:[%s222 + $0x3d4] sm:$0xf]
      %v451 = vld [vmem:[%s222 + $0x3d8] sm:$0xf]
      %v452 = vld [vmem:[%s222 + $0x3dc] sm:$0xf]
      %v453 = vld [vmem:[%s222 + $0x3f0] sm:$0xf]
      %v454 = vld [vmem:[%s222 + $0x3f4] sm:$0xf]
      %v455 = vld [vmem:[%s222 + $0x3f8] sm:$0xf]
      %v456 = vld [vmem:[%s222 + $0x3fc] sm:$0xf]
      %v457 = vld [vmem:[%s222 + $0x400] sm:$0xf]
      %v458 = vld [vmem:[%s222 + $0x404] sm:$0xf]
      %v459 = vld [vmem:[%s222 + $0x408] sm:$0xf]
      %v460 = vld [vmem:[%s222 + $0x40c] sm:$0xf]
      %v461 = vld [vmem:[%s222 + $0x410] sm:$0xf]
      %v462 = vld [vmem:[%s222 + $0x414] sm:$0xf]
      %v463 = vld [vmem:[%s222 + $0x418] sm:$0xf]
      %v464 = vld [vmem:[%s222 + $0x41c] sm:$0xf]
      %v465 = vld [vmem:[%s222 + $0x420] sm:$0xf]
      %v466 = vld [vmem:[%s222 + $0x424] sm:$0xf]
      %v467 = vld [vmem:[%s222 + $0x428] sm:$0xf]
      %v468 = vld [vmem:[%s222 + $0x42c] sm:$0xf]
      %v469 = vld [vmem:[%s222 + $0x430] sm:$0xf]
      %v470 = vld [vmem:[%s222 + $0x434] sm:$0xf]
      %v471 = vld [vmem:[%s222 + $0x438] sm:$0xf]
      %v472 = vld [vmem:[%s222 + $0x43c] sm:$0xf]
      %v473 = vld [vmem:[%s222 + $0x440] sm:$0xf]
      %v474 = vld [vmem:[%s222 + $0x444] sm:$0xf]
      %v475 = vld [vmem:[%s222 + $0x448] sm:$0xf]
      %v476 = vld [vmem:[%s222 + $0x44c] sm:$0xf]
      %v477 = vld [vmem:[%s222 + $0x450] sm:$0xf]
      %v478 = vld [vmem:[%s222 + $0x454] sm:$0xf]
      %v479 = vld [vmem:[%s222 + $0x458] sm:$0xf]
      %v480 = vld [vmem:[%s222 + $0x45c] sm:$0xf]
      %v481 = vld [vmem:[%s222 + $0x460] sm:$0xf]
      %v482 = vld [vmem:[%s222 + $0x464] sm:$0xf]
      %v483 = vld [vmem:[%s222 + $0x468] sm:$0xf]
      %v484 = vld [vmem:[%s222 + $0x46c] sm:$0xf]
      %v485 = vld [vmem:[%s1] sm:$0xf]
      %v486 = vld [vmem:[%s1 + $0x4] sm:$0x3]
      %v487 = vld [vmem:[%s222 + $0x8] sm:$0xf]
      %v488 = vld [vmem:[%s222 + $0xc] sm:$0xf]
      %v489 = vld [vmem:[%s222 + $0x10] sm:$0xf]
      %v490 = vld [vmem:[%s222 + $0x14] sm:$0xf]
      %v491 = vld [vmem:[%s222 + $0x18] sm:$0xf]
      %v492 = vld [vmem:[%s222 + $0x1c] sm:$0xf]
      %v493 = vld [vmem:[%s222 + $0x20] sm:$0xf]
      %v494 = vld [vmem:[%s222 + $0x24] sm:$0xf]
      %v495 = vld [vmem:[%s222 + $0x28] sm:$0xf]
      %v496 = vld [vmem:[%s222 + $0x2c] sm:$0xf]
      %v497 = vld [vmem:[%s222 + $0x30] sm:$0xf]
      %v498 = vld [vmem:[%s222 + $0x34] sm:$0xf]
      %v499 = vld [vmem:[%s222 + $0x38] sm:$0xf]
      %v500 = vld [vmem:[%s222 + $0x3c] sm:$0xf]
      %v501 = vld [vmem:[%s222 + $0x40] sm:$0xf]
      %v502 = vld [vmem:[%s222 + $0x44] sm:$0xf]
      %v503 = vld [vmem:[%s222 + $0x48] sm:$0xf]
      %v504 = vld [vmem:[%s222 + $0x4c] sm:$0xf]
      %v505 = vld [vmem:[%s222 + $0x50] sm:$0xf]
      %v506 = vld [vmem:[%s222 + $0x54] sm:$0xf]
      %v507 = vld [vmem:[%s222 + $0x58] sm:$0xf]
      %v508 = vld [vmem:[%s222 + $0x5c] sm:$0xf]
      %v509 = vld [vmem:[%s222 + $0x60] sm:$0xf]
      %v510 = vld [vmem:[%s222 + $0x64] sm:$0xf]
      %v511 = vld [vmem:[%s222 + $0x68] sm:$0xf]
      %v512 = vld [vmem:[%s222 + $0x6c] sm:$0xf]
      %v513 = vld [vmem:[%s222 + $0x70] sm:$0xf]
      %v514 = vld [vmem:[%s222 + $0x74] sm:$0xf]
      %v515 = vld [vmem:[%s222 + $0x78] sm:$0xf]
      %v516 = vld [vmem:[%s222 + $0x7c] sm:$0xf]
      %v517 = vld [vmem:[%s222 + $0x80] sm:$0xf]
      %v518 = vld [vmem:[%s222 + $0x84] sm:$0xf]
      %v519 = vld [vmem:[%s222 + $0x98] sm:$0xf]
      %v520 = vld [vmem:[%s222 + $0x9c] sm:$0xf]
      %v521 = vld [vmem:[%s222 + $0xa0] sm:$0xf]
      %v522 = vld [vmem:[%s222 + $0xa4] sm:$0xf]
      %v523 = vld [vmem:[%s222 + $0xa8] sm:$0xf]
      %v524 = vld [vmem:[%s222 + $0xac] sm:$0xf]
      %v525 = vld [vmem:[%s222 + $0xb0] sm:$0xf]
      %v526 = vld [vmem:[%s222 + $0xb4] sm:$0xf]
      %v527 = vld [vmem:[%s222 + $0xb8] sm:$0xf]
      %v528 = vld [vmem:[%s222 + $0xbc] sm:$0xf]
      %v529 = vld [vmem:[%s222 + $0xc0] sm:$0xf]
      %v530 = vld [vmem:[%s222 + $0xc4] sm:$0xf]
      %v531 = vld [vmem:[%s222 + $0xc8] sm:$0xf]
      %v532 = vld [vmem:[%s222 + $0xcc] sm:$0xf]
      %v533 = vld [vmem:[%s222 + $0xd0] sm:$0xf]
      %v534 = vld [vmem:[%s222 + $0xd4] sm:$0xf]
      %v535 = vld [vmem:[%s222 + $0xd8] sm:$0xf]
      %v536 = vld [vmem:[%s222 + $0xdc] sm:$0xf]
      %v537 = vld [vmem:[%s222 + $0xe0] sm:$0xf]
      %v538 = vld [vmem:[%s222 + $0xe4] sm:$0xf]
      %v539 = vld [vmem:[%s222 + $0xe8] sm:$0xf]
      %v540 = vld [vmem:[%s222 + $0xec] sm:$0xf]
      %v541 = vld [vmem:[%s222 + $0xf0] sm:$0xf]
      %v542 = vld [vmem:[%s222 + $0xf4] sm:$0xf]
      %v543 = vld [vmem:[%s222 + $0xf8] sm:$0xf]
      %v544 = vld [vmem:[%s222 + $0xfc] sm:$0xf]
      %v545 = vld [vmem:[%s222 + $0x100] sm:$0xf]
      %v546 = vld [vmem:[%s222 + $0x104] sm:$0xf]
      %v547 = vld [vmem:[%s222 + $0x108] sm:$0xf]
      %v548 = vld [vmem:[%s222 + $0x10c] sm:$0xf]
      %v549 = vld [vmem:[%s222 + $0x110] sm:$0xf]
      %v550 = vld [vmem:[%s222 + $0x114] sm:$0xf]
      %v551 = vld [vmem:[%s222 + $0x128] sm:$0xf]
      %v552 = vld [vmem:[%s222 + $0x12c] sm:$0xf]
      %v553 = vld [vmem:[%s222 + $0x130] sm:$0xf]
      %v554 = vld [vmem:[%s222 + $0x134] sm:$0xf]
      %v555 = vld [vmem:[%s222 + $0x138] sm:$0xf]
      %v556 = vld [vmem:[%s222 + $0x13c] sm:$0xf]
      %v557 = vld [vmem:[%s222 + $0x140] sm:$0xf]
      %v558 = vld [vmem:[%s222 + $0x144] sm:$0xf]
      %v559 = vld [vmem:[%s222 + $0x148] sm:$0xf]
      %v560 = vld [vmem:[%s222 + $0x14c] sm:$0xf]
      %v561 = vld [vmem:[%s222 + $0x150] sm:$0xf]
      %v562 = vld [vmem:[%s222 + $0x154] sm:$0xf]
      %v563 = vld [vmem:[%s222 + $0x158] sm:$0xf]
      %v564 = vld [vmem:[%s222 + $0x15c] sm:$0xf]
      %v565 = vld [vmem:[%s222 + $0x160] sm:$0xf]
      %v566 = vld [vmem:[%s222 + $0x164] sm:$0xf]
      %v567 = vld [vmem:[%s222 + $0x168] sm:$0xf]
      %v568 = vld [vmem:[%s222 + $0x16c] sm:$0xf]
      %v569 = vld [vmem:[%s222 + $0x170] sm:$0xf]
      %v570 = vld [vmem:[%s222 + $0x174] sm:$0xf]
      %v571 = vld [vmem:[%s222 + $0x178] sm:$0xf]
      %v572 = vld [vmem:[%s222 + $0x17c] sm:$0xf]
      %v573 = vld [vmem:[%s222 + $0x180] sm:$0xf]
      %v574 = vld [vmem:[%s222 + $0x184] sm:$0xf]
      %v575 = vld [vmem:[%s222 + $0x188] sm:$0xf]
      %v576 = vld [vmem:[%s222 + $0x18c] sm:$0xf]
      %v577 = vld [vmem:[%s222 + $0x190] sm:$0xf]
      %v578 = vld [vmem:[%s222 + $0x194] sm:$0xf]
      %v579 = vld [vmem:[%s222 + $0x198] sm:$0xf]
      %v580 = vld [vmem:[%s222 + $0x19c] sm:$0xf]
      %v581 = vld [vmem:[%s222 + $0x1a0] sm:$0xf]
      %v582 = vld [vmem:[%s222 + $0x1a4] sm:$0xf]
      %v583 = vld [vmem:[%s222 + $0x1b8] sm:$0xf]
      %v584 = vld [vmem:[%s222 + $0x1bc] sm:$0xf]
      %v585 = vld [vmem:[%s222 + $0x1c0] sm:$0xf]
      %v586 = vld [vmem:[%s222 + $0x1c4] sm:$0xf]
      %v587 = vld [vmem:[%s222 + $0x1c8] sm:$0xf]
      %v588 = vld [vmem:[%s222 + $0x1cc] sm:$0xf]
      %v589 = vld [vmem:[%s222 + $0x1d0] sm:$0xf]
      %v590 = vld [vmem:[%s222 + $0x1d4] sm:$0xf]
      %v591 = vld [vmem:[%s222 + $0x1d8] sm:$0xf]
      %v592 = vld [vmem:[%s222 + $0x1dc] sm:$0xf]
      %v593 = vld [vmem:[%s222 + $0x1e0] sm:$0xf]
      %v594 = vld [vmem:[%s222 + $0x1e4] sm:$0xf]
      %v595 = vld [vmem:[%s222 + $0x1e8] sm:$0xf]
      %v596 = vld [vmem:[%s222 + $0x1ec] sm:$0xf]
      %v597 = vld [vmem:[%s222 + $0x1f0] sm:$0xf]
      %v598 = vld [vmem:[%s222 + $0x1f4] sm:$0xf]
      %v599 = vld [vmem:[%s222 + $0x1f8] sm:$0xf]
      %v600 = vld [vmem:[%s222 + $0x1fc] sm:$0xf]
      %v601 = vld [vmem:[%s222 + $0x200] sm:$0xf]
      %v602 = vld [vmem:[%s222 + $0x204] sm:$0xf]
      %v603 = vld [vmem:[%s222 + $0x208] sm:$0xf]
      %v604 = vld [vmem:[%s222 + $0x20c] sm:$0xf]
      %v605 = vld [vmem:[%s222 + $0x210] sm:$0xf]
      %v606 = vld [vmem:[%s222 + $0x214] sm:$0xf]
      %v607 = vld [vmem:[%s222 + $0x218] sm:$0xf]
      %v608 = vld [vmem:[%s222 + $0x21c] sm:$0xf]
      %v609 = vld [vmem:[%s222 + $0x220] sm:$0xf]
      %v610 = vld [vmem:[%s222 + $0x224] sm:$0xf]
      %v611 = vld [vmem:[%s222 + $0x228] sm:$0xf]
      %v612 = vld [vmem:[%s222 + $0x22c] sm:$0xf]
      %v613 = vld [vmem:[%s222 + $0x230] sm:$0xf]
      %v614 = vld [vmem:[%s222 + $0x234] sm:$0xf]
      %v615 = vld [vmem:[%s222 + $0x248] sm:$0xf]
      %v616 = vld [vmem:[%s222 + $0x24c] sm:$0xf]
      %v617 = vld [vmem:[%s222 + $0x250] sm:$0xf]
      %v618 = vld [vmem:[%s222 + $0x254] sm:$0xf]
      %v619 = vld [vmem:[%s222 + $0x258] sm:$0xf]
      %v620 = vld [vmem:[%s222 + $0x25c] sm:$0xf]
      %v621 = vld [vmem:[%s222 + $0x260] sm:$0xf]
      %v622 = vld [vmem:[%s222 + $0x264] sm:$0xf]
      %v623 = vld [vmem:[%s222 + $0x268] sm:$0xf]
      %v624 = vld [vmem:[%s222 + $0x26c] sm:$0xf]
      %v625 = vld [vmem:[%s222 + $0x270] sm:$0xf]
      %v626 = vld [vmem:[%s222 + $0x274] sm:$0xf]
      %v627 = vld [vmem:[%s222 + $0x278] sm:$0xf]
      %v628 = vld [vmem:[%s222 + $0x27c] sm:$0xf]
      %v629 = vld [vmem:[%s222 + $0x280] sm:$0xf]
      %v630 = vld [vmem:[%s222 + $0x284] sm:$0xf]
      %v631 = vld [vmem:[%s222 + $0x288] sm:$0xf]
      %v632 = vld [vmem:[%s222 + $0x28c] sm:$0xf]
      %v633 = vld [vmem:[%s222 + $0x290] sm:$0xf]
      %v634 = vld [vmem:[%s222 + $0x294] sm:$0xf]
      %v635 = vld [vmem:[%s222 + $0x298] sm:$0xf]
      %v636 = vld [vmem:[%s222 + $0x29c] sm:$0xf]
      %v637 = vld [vmem:[%s222 + $0x2a0] sm:$0xf]
      %v638 = vld [vmem:[%s222 + $0x2a4] sm:$0xf]
      %v639 = vld [vmem:[%s222 + $0x2a8] sm:$0xf]
      %v640 = vld [vmem:[%s222 + $0x2ac] sm:$0xf]
      %v641 = vld [vmem:[%s222 + $0x2b0] sm:$0xf]
      %v642 = vld [vmem:[%s222 + $0x2b4] sm:$0xf]
      %v643 = vld [vmem:[%s222 + $0x2b8] sm:$0xf]
      %v644 = vld [vmem:[%s222 + $0x2bc] sm:$0xf]
      %v645 = vld [vmem:[%s222 + $0x2c0] sm:$0xf]
      %v646 = vld [vmem:[%s222 + $0x2c4] sm:$0xf]
      %v647 = vld [vmem:[%s222 + $0x2d8] sm:$0xf]
      %v648 = vld [vmem:[%s222 + $0x2dc] sm:$0xf]
      %v649 = vld [vmem:[%s222 + $0x2e0] sm:$0xf]
      %v650 = vld [vmem:[%s222 + $0x2e4] sm:$0xf]
      %v651 = vld [vmem:[%s222 + $0x2e8] sm:$0xf]
      %v652 = vld [vmem:[%s222 + $0x2ec] sm:$0xf]
      %v653 = vld [vmem:[%s222 + $0x2f0] sm:$0xf]
      %v654 = vld [vmem:[%s222 + $0x2f4] sm:$0xf]
      %v655 = vld [vmem:[%s222 + $0x2f8] sm:$0xf]
      %v656 = vld [vmem:[%s222 + $0x2fc] sm:$0xf]
      %v657 = vld [vmem:[%s222 + $0x300] sm:$0xf]
      %v658 = vld [vmem:[%s222 + $0x304] sm:$0xf]
      %v659 = vld [vmem:[%s222 + $0x308] sm:$0xf]
      %v660 = vld [vmem:[%s222 + $0x30c] sm:$0xf]
      %v661 = vld [vmem:[%s222 + $0x310] sm:$0xf]
      %v662 = vld [vmem:[%s222 + $0x314] sm:$0xf]
      %v663 = vld [vmem:[%s222 + $0x318] sm:$0xf]
      %v664 = vld [vmem:[%s222 + $0x31c] sm:$0xf]
      %v665 = vld [vmem:[%s222 + $0x320] sm:$0xf]
      %v666 = vld [vmem:[%s222 + $0x324] sm:$0xf]
      %v667 = vld [vmem:[%s222 + $0x328] sm:$0xf]
      %v668 = vld [vmem:[%s222 + $0x32c] sm:$0xf]
      %v669 = vld [vmem:[%s222 + $0x330] sm:$0xf]
      %v670 = vld [vmem:[%s222 + $0x334] sm:$0xf]
      %v671 = vld [vmem:[%s222 + $0x338] sm:$0xf]
      %v672 = vld [vmem:[%s222 + $0x33c] sm:$0xf]
      %v673 = vld [vmem:[%s222 + $0x340] sm:$0xf]
      %v674 = vld [vmem:[%s222 + $0x344] sm:$0xf]
      %v675 = vld [vmem:[%s222 + $0x348] sm:$0xf]
      %v676 = vld [vmem:[%s222 + $0x34c] sm:$0xf]
      %v677 = vld [vmem:[%s222 + $0x350] sm:$0xf]
      %v678 = vld [vmem:[%s222 + $0x354] sm:$0xf]
      %v679 = vld [vmem:[%s222 + $0x368] sm:$0xf]
      %v680 = vld [vmem:[%s222 + $0x36c] sm:$0xf]
      %v681 = vld [vmem:[%s222 + $0x370] sm:$0xf]
      %v682 = vld [vmem:[%s222 + $0x374] sm:$0xf]
      %v683 = vld [vmem:[%s222 + $0x378] sm:$0xf]
      %v684 = vld [vmem:[%s222 + $0x37c] sm:$0xf]
      %v685 = vld [vmem:[%s222 + $0x380] sm:$0xf]
      %v686 = vld [vmem:[%s222 + $0x384] sm:$0xf]
      %v687 = vld [vmem:[%s222 + $0x388] sm:$0xf]
      %v688 = vld [vmem:[%s222 + $0x38c] sm:$0xf]
      %v689 = vld [vmem:[%s222 + $0x390] sm:$0xf]
      %v690 = vld [vmem:[%s222 + $0x394] sm:$0xf]
      %v691 = vld [vmem:[%s222 + $0x398] sm:$0xf]
      %v692 = vld [vmem:[%s222 + $0x39c] sm:$0xf]
      %v693 = vld [vmem:[%s222 + $0x3a0] sm:$0xf]
      %v694 = vld [vmem:[%s222 + $0x3a4] sm:$0xf]
      %v695 = vld [vmem:[%s222 + $0x3a8] sm:$0xf]
      %v696 = vld [vmem:[%s222 + $0x3ac] sm:$0xf]
      %v697 = vld [vmem:[%s222 + $0x3b0] sm:$0xf]
      %v698 = vld [vmem:[%s222 + $0x3b4] sm:$0xf]
      %v699 = vld [vmem:[%s222 + $0x3b8] sm:$0xf]
      %v700 = vld [vmem:[%s222 + $0x3bc] sm:$0xf]
      %v701 = vld [vmem:[%s222 + $0x3c0] sm:$0xf]
      %v702 = vld [vmem:[%s222 + $0x3c4] sm:$0xf]
      %v703 = vld [vmem:[%s222 + $0x3c8] sm:$0xf]
      %v704 = vld [vmem:[%s222 + $0x3cc] sm:$0xf]
      %v705 = vld [vmem:[%s222 + $0x3d0] sm:$0xf]
      %v706 = vld [vmem:[%s222 + $0x3d4] sm:$0xf]
      %v707 = vld [vmem:[%s222 + $0x3d8] sm:$0xf]
      %v708 = vld [vmem:[%s222 + $0x3dc] sm:$0xf]
      %v709 = vld [vmem:[%s222 + $0x3e0] sm:$0xf]
      %v710 = vld [vmem:[%s222 + $0x3e4] sm:$0xf]
      %v711 = vld [vmem:[%s222 + $0x3f8] sm:$0xf]
      %v712 = vld [vmem:[%s222 + $0x3fc] sm:$0xf]
      %v713 = vld [vmem:[%s222 + $0x400] sm:$0xf]
      %v714 = vld [vmem:[%s222 + $0x404] sm:$0xf]
      %v715 = vld [vmem:[%s222 + $0x408] sm:$0xf]
      %v716 = vld [vmem:[%s222 + $0x40c] sm:$0xf]
      %v717 = vld [vmem:[%s222 + $0x410] sm:$0xf]
      %v718 = vld [vmem:[%s222 + $0x414] sm:$0xf]
      %v719 = vld [vmem:[%s222 + $0x418] sm:$0xf]
      %v720 = vld [vmem:[%s222 + $0x41c] sm:$0xf]
      %v721 = vld [vmem:[%s222 + $0x420] sm:$0xf]
      %v722 = vld [vmem:[%s222 + $0x424] sm:$0xf]
      %v723 = vld [vmem:[%s222 + $0x428] sm:$0xf]
      %v724 = vld [vmem:[%s222 + $0x42c] sm:$0xf]
      %v725 = vld [vmem:[%s222 + $0x430] sm:$0xf]
      %v726 = vld [vmem:[%s222 + $0x434] sm:$0xf]
      %v727 = vld [vmem:[%s222 + $0x438] sm:$0xf]
      %v728 = vld [vmem:[%s222 + $0x43c] sm:$0xf]
      %v729 = vld [vmem:[%s222 + $0x440] sm:$0xf]
      %v730 = vld [vmem:[%s222 + $0x444] sm:$0xf]
      %v731 = vld [vmem:[%s222 + $0x448] sm:$0xf]
      %v732 = vld [vmem:[%s222 + $0x44c] sm:$0xf]
      %v733 = vld [vmem:[%s222 + $0x450] sm:$0xf]
      %v734 = vld [vmem:[%s222 + $0x454] sm:$0xf]
      %v735 = vld [vmem:[%s222 + $0x458] sm:$0xf]
      %v736 = vld [vmem:[%s222 + $0x45c] sm:$0xf]
      %v737 = vld [vmem:[%s222 + $0x460] sm:$0xf]
      %v738 = vld [vmem:[%s222 + $0x464] sm:$0xf]
      %v739 = vld [vmem:[%s222 + $0x468] sm:$0xf]
      %v740 = vld [vmem:[%s222 + $0x46c] sm:$0xf]
      %v741 = vld [vmem:[%s222 + $0x470] sm:$0xf]
      %v742 = vld [vmem:[%s222 + $0x474] sm:$0xf]
      %s743 = scalar_lea.vmem %s1, 8
      %v744 = vld [vmem:[%s743] sm:$0xf]
      %v745 = vld [vmem:[%s743 + $0x4] sm:$0x3]
      %v778 = vunpack.c.l.b16 %v487
      %v779 = vunpack.c.l.b16 %v488
      %v780 = vunpack.c.l.b16 %v489
      %v781 = vunpack.c.l.b16 %v490
      %v782 = vunpack.c.l.b16 %v491
      %v783 = vunpack.c.l.b16 %v492
      %v784 = vunpack.c.l.b16 %v493
      %v785 = vunpack.c.l.b16 %v494
      %v786 = vunpack.c.l.b16 %v495
      %v787 = vunpack.c.l.b16 %v496
      %v788 = vunpack.c.l.b16 %v497
      %v789 = vunpack.c.l.b16 %v498
      %v790 = vunpack.c.l.b16 %v499
      %v791 = vunpack.c.l.b16 %v500
      %v792 = vunpack.c.l.b16 %v501
      %v793 = vunpack.c.l.b16 %v502
      %v794 = vunpack.c.l.b16 %v503
      %v795 = vunpack.c.l.b16 %v504
      %v796 = vunpack.c.l.b16 %v505
      %v797 = vunpack.c.l.b16 %v506
      %v798 = vunpack.c.l.b16 %v507
      %v799 = vunpack.c.l.b16 %v508
      %v800 = vunpack.c.l.b16 %v509
      %v801 = vunpack.c.l.b16 %v510
      %v802 = vunpack.c.l.b16 %v511
      %v803 = vunpack.c.l.b16 %v512
      %v804 = vunpack.c.l.b16 %v513
      %v805 = vunpack.c.l.b16 %v514
      %v806 = vunpack.c.l.b16 %v515
      %v807 = vunpack.c.l.b16 %v516
      %v808 = vunpack.c.l.b16 %v517
      %v809 = vunpack.c.l.b16 %v518
      %v810 = vpack.c.b16 %v779, %v778
      %v811 = vpack.c.b16 %v781, %v780
      %v812 = vpack.c.b16 %v783, %v782
      %v813 = vpack.c.b16 %v785, %v784
      %v814 = vpack.c.b16 %v787, %v786
      %v815 = vpack.c.b16 %v789, %v788
      %v816 = vpack.c.b16 %v791, %v790
      %v817 = vpack.c.b16 %v793, %v792
      %v818 = vpack.c.b16 %v795, %v794
      %v819 = vpack.c.b16 %v797, %v796
      %v820 = vpack.c.b16 %v799, %v798
      %v821 = vpack.c.b16 %v801, %v800
      %v822 = vpack.c.b16 %v803, %v802
      %v823 = vpack.c.b16 %v805, %v804
      %v824 = vpack.c.b16 %v807, %v806
      %v825 = vpack.c.b16 %v809, %v808
      %v828 = vunpack.c.l.b16 %v744
      %v829 = vunpack.c.l.b16 %v745
      %v830 = vpack.c.b16 %v829, %v828
      %vm831 = vcmask 97280
      %v833 = vsel %vm831, %v810, 0
      %v836 = vsel %vm831, %v811, 0
      %v839 = vsel %vm831, %v812, 0
      %v842 = vsel %vm831, %v813, 0
      %v845 = vsel %vm831, %v814, 0
      %v848 = vsel %vm831, %v815, 0
      %v851 = vsel %vm831, %v816, 0
      %v854 = vsel %vm831, %v817, 0
      %v857 = vsel %vm831, %v818, 0
      %v860 = vsel %vm831, %v819, 0
      %v863 = vsel %vm831, %v820, 0
      %v866 = vsel %vm831, %v821, 0
      %v869 = vsel %vm831, %v822, 0
      %v872 = vsel %vm831, %v823, 0
      %v875 = vsel %vm831, %v824, 0
      %v878 = vsel %vm831, %v825, 0
      %vm880 = vcmask 1045504
      %v882 = vsel %vm880, %v830, 0
      %884 = vmatprep.subr.bf16.mxu0 0
      %885 = vmatpush1.bf16.msra.mxu0 0
      %886 = vmatprep.subr.bf16.mxu0 0
      %887 = vmatpush1.bf16.msra.mxu0 0
      %888 = vmatprep.subr.bf16.mxu0 0
      %889 = vmatpush1.bf16.msra.mxu0 0
      %890 = vmatprep.subr.bf16.mxu0 0
      %891 = vmatpush1.bf16.msra.mxu0 0
      %892 = vmatprep.subr.bf16.mxu0 0
      %893 = vmatpush1.bf16.msra.mxu0 0
      %894 = vmatprep.subr.bf16.mxu0 0
      %895 = vmatpush1.bf16.msra.mxu0 0
      %896 = vmatprep.subr.bf16.mxu0 0
      %897 = vmatpush1.bf16.msra.mxu0 0
      %898 = vmatprep.subr.bf16.mxu0 0
      %899 = vmatpush1.bf16.msra.mxu0 %v882
      %900 = vmatprep.subr.bf16.mxu0 0
      %901 = vmatpush2.bf16.msra.mxu0 0
      %902 = vmatprep.subr.bf16.mxu0 0
      %903 = vmatpush2.bf16.msra.mxu0 0
      %904 = vmatprep.subr.bf16.mxu0 0
      %905 = vmatpush2.bf16.msra.mxu0 0
      %906 = vmatprep.subr.bf16.mxu0 0
      %907 = vmatpush2.bf16.msra.mxu0 0
      %908 = vmatprep.subr.bf16.mxu0 0
      %909 = vmatpush2.bf16.msra.mxu0 0
      %910 = vmatprep.subr.bf16.mxu0 0
      %911 = vmatpush2.bf16.msra.mxu0 0
      %912 = vmatprep.subr.bf16.mxu0 0
      %913 = vmatpush2.bf16.msra.mxu0 0
      %914 = vmatprep.subr.bf16.mxu0 0
      %915 = vmatpush2.bf16.msra.mxu0 0
      %916 = vmatprep.mubr.bf16.mxu0 0
      %917 = vmatmul.mubr.bf16.gmra.mxu0 %v833
      %v918 = vpop.f32.mrf.mxu0
      %v919 = vadd.f32 0.0, %v918
      %v920 = vpop.f32.mrf.mxu0
      %v921 = vpop.f32.mrf.mxu0
      %v922 = vadd.f32 0.0, %v921
      %v923 = vpop.f32.mrf.mxu0
      %924 = vmatprep.mubr.bf16.mxu0 0
      %925 = vmatmul.mubr.bf16.gmra.mxu0 %v836
      %v926 = vpop.f32.mrf.mxu0
      %v927 = vadd.f32 0.0, %v926
      %v928 = vpop.f32.mrf.mxu0
      %v929 = vpop.f32.mrf.mxu0
      %v930 = vadd.f32 0.0, %v929
      %v931 = vpop.f32.mrf.mxu0
      %932 = vmatprep.mubr.bf16.mxu0 0
      %933 = vmatmul.mubr.bf16.gmra.mxu0 %v839
      %v934 = vpop.f32.mrf.mxu0
      %v935 = vadd.f32 0.0, %v934
      %v936 = vpop.f32.mrf.mxu0
      %v937 = vpop.f32.mrf.mxu0
      %v938 = vadd.f32 0.0, %v937
      %v939 = vpop.f32.mrf.mxu0
      %940 = vmatprep.mubr.bf16.mxu0 0
      %941 = vmatmul.mubr.bf16.gmra.mxu0 %v842
      %v942 = vpop.f32.mrf.mxu0
      %v943 = vadd.f32 0.0, %v942
      %v944 = vpop.f32.mrf.mxu0
      %v945 = vpop.f32.mrf.mxu0
      %v946 = vadd.f32 0.0, %v945
      %v947 = vpop.f32.mrf.mxu0
      %948 = vmatprep.mubr.bf16.mxu0 0
      %949 = vmatmul.mubr.bf16.gmra.mxu0 %v845
      %v950 = vpop.f32.mrf.mxu0
      %v951 = vadd.f32 0.0, %v950
      %v952 = vpop.f32.mrf.mxu0
      %v953 = vpop.f32.mrf.mxu0
      %v954 = vadd.f32 0.0, %v953
      %v955 = vpop.f32.mrf.mxu0
      %956 = vmatprep.mubr.bf16.mxu0 0
      %957 = vmatmul.mubr.bf16.gmra.mxu0 %v848
      %v958 = vpop.f32.mrf.mxu0
      %v959 = vadd.f32 0.0, %v958
      %v960 = vpop.f32.mrf.mxu0
      %v961 = vpop.f32.mrf.mxu0
      %v962 = vadd.f32 0.0, %v961
      %v963 = vpop.f32.mrf.mxu0
      %964 = vmatprep.mubr.bf16.mxu0 0
      %965 = vmatmul.mubr.bf16.gmra.mxu0 %v851
      %v966 = vpop.f32.mrf.mxu0
      %v967 = vadd.f32 0.0, %v966
      %v968 = vpop.f32.mrf.mxu0
      %v969 = vpop.f32.mrf.mxu0
      %v970 = vadd.f32 0.0, %v969
      %v971 = vpop.f32.mrf.mxu0
      %972 = vmatprep.mubr.bf16.mxu0 0
      %973 = vmatmul.mubr.bf16.gmra.mxu0 %v854
      %v974 = vpop.f32.mrf.mxu0
      %v975 = vadd.f32 0.0, %v974
      %v976 = vpop.f32.mrf.mxu0
      %v977 = vpop.f32.mrf.mxu0
      %v978 = vadd.f32 0.0, %v977
      %v979 = vpop.f32.mrf.mxu0
      %980 = vmatprep.mubr.bf16.mxu0 0
      %981 = vmatmul.mubr.bf16.gmra.mxu0 %v857
      %v982 = vpop.f32.mrf.mxu0
      %v983 = vadd.f32 0.0, %v982
      %v984 = vpop.f32.mrf.mxu0
      %v985 = vpop.f32.mrf.mxu0
      %v986 = vadd.f32 0.0, %v985
      %v987 = vpop.f32.mrf.mxu0
      %988 = vmatprep.mubr.bf16.mxu0 0
      %989 = vmatmul.mubr.bf16.gmra.mxu0 %v860
      %v990 = vpop.f32.mrf.mxu0
      %v991 = vadd.f32 0.0, %v990
      %v992 = vpop.f32.mrf.mxu0
      %v993 = vpop.f32.mrf.mxu0
      %v994 = vadd.f32 0.0, %v993
      %v995 = vpop.f32.mrf.mxu0
      %996 = vmatprep.mubr.bf16.mxu0 0
      %997 = vmatmul.mubr.bf16.gmra.mxu0 %v863
      %v998 = vpop.f32.mrf.mxu0
      %v999 = vadd.f32 0.0, %v998
      %v1000 = vpop.f32.mrf.mxu0
      %v1001 = vpop.f32.mrf.mxu0
      %v1002 = vadd.f32 0.0, %v1001
      %v1003 = vpop.f32.mrf.mxu0
      %1004 = vmatprep.mubr.bf16.mxu0 0
      %1005 = vmatmul.mubr.bf16.gmra.mxu0 %v866
      %v1006 = vpop.f32.mrf.mxu0
      %v1007 = vadd.f32 0.0, %v1006
      %v1008 = vpop.f32.mrf.mxu0
      %v1009 = vpop.f32.mrf.mxu0
      %v1010 = vadd.f32 0.0, %v1009
      %v1011 = vpop.f32.mrf.mxu0
      %1012 = vmatprep.mubr.bf16.mxu0 0
      %1013 = vmatmul.mubr.bf16.gmra.mxu0 %v869
      %v1014 = vpop.f32.mrf.mxu0
      %v1015 = vadd.f32 0.0, %v1014
      %v1016 = vpop.f32.mrf.mxu0
      %v1017 = vpop.f32.mrf.mxu0
      %v1018 = vadd.f32 0.0, %v1017
      %v1019 = vpop.f32.mrf.mxu0
      %1020 = vmatprep.mubr.bf16.mxu0 0
      %1021 = vmatmul.mubr.bf16.gmra.mxu0 %v872
      %v1022 = vpop.f32.mrf.mxu0
      %v1023 = vadd.f32 0.0, %v1022
      %v1024 = vpop.f32.mrf.mxu0
      %v1025 = vpop.f32.mrf.mxu0
      %v1026 = vadd.f32 0.0, %v1025
      %v1027 = vpop.f32.mrf.mxu0
      %1028 = vmatprep.mubr.bf16.mxu0 0
      %1029 = vmatmul.mubr.bf16.gmra.mxu0 %v875
      %v1030 = vpop.f32.mrf.mxu0
      %v1031 = vadd.f32 0.0, %v1030
      %v1032 = vpop.f32.mrf.mxu0
      %v1033 = vpop.f32.mrf.mxu0
      %v1034 = vadd.f32 0.0, %v1033
      %v1035 = vpop.f32.mrf.mxu0
      %1036 = vmatprep.mubr.bf16.mxu0 0
      %1037 = vmatmul.mubr.bf16.gmra.mxu0 %v878
      %v1038 = vpop.f32.mrf.mxu0
      %v1039 = vadd.f32 0.0, %v1038
      %v1040 = vpop.f32.mrf.mxu0
      %v1041 = vpop.f32.mrf.mxu0
      %v1042 = vadd.f32 0.0, %v1041
      %v1043 = vpop.f32.mrf.mxu0
      %1044 = vdwg.mxu0
      %v1077 = vunpack.c.l.b16 %v519
      %v1078 = vunpack.c.l.b16 %v520
      %v1079 = vunpack.c.l.b16 %v521
      %v1080 = vunpack.c.l.b16 %v522
      %v1081 = vunpack.c.l.b16 %v523
      %v1082 = vunpack.c.l.b16 %v524
      %v1083 = vunpack.c.l.b16 %v525
      %v1084 = vunpack.c.l.b16 %v526
      %v1085 = vunpack.c.l.b16 %v527
      %v1086 = vunpack.c.l.b16 %v528
      %v1087 = vunpack.c.l.b16 %v529
      %v1088 = vunpack.c.l.b16 %v530
      %v1089 = vunpack.c.l.b16 %v531
      %v1090 = vunpack.c.l.b16 %v532
      %v1091 = vunpack.c.l.b16 %v533
      %v1092 = vunpack.c.l.b16 %v534
      %v1093 = vunpack.c.l.b16 %v535
      %v1094 = vunpack.c.l.b16 %v536
      %v1095 = vunpack.c.l.b16 %v537
      %v1096 = vunpack.c.l.b16 %v538
      %v1097 = vunpack.c.l.b16 %v539
      %v1098 = vunpack.c.l.b16 %v540
      %v1099 = vunpack.c.l.b16 %v541
      %v1100 = vunpack.c.l.b16 %v542
      %v1101 = vunpack.c.l.b16 %v543
      %v1102 = vunpack.c.l.b16 %v544
      %v1103 = vunpack.c.l.b16 %v545
      %v1104 = vunpack.c.l.b16 %v546
      %v1105 = vunpack.c.l.b16 %v547
      %v1106 = vunpack.c.l.b16 %v548
      %v1107 = vunpack.c.l.b16 %v549
      %v1108 = vunpack.c.l.b16 %v550
      %v1109 = vpack.c.b16 %v1078, %v1077
      %v1110 = vpack.c.b16 %v1080, %v1079
      %v1111 = vpack.c.b16 %v1082, %v1081
      %v1112 = vpack.c.b16 %v1084, %v1083
      %v1113 = vpack.c.b16 %v1086, %v1085
      %v1114 = vpack.c.b16 %v1088, %v1087
      %v1115 = vpack.c.b16 %v1090, %v1089
      %v1116 = vpack.c.b16 %v1092, %v1091
      %v1117 = vpack.c.b16 %v1094, %v1093
      %v1118 = vpack.c.b16 %v1096, %v1095
      %v1119 = vpack.c.b16 %v1098, %v1097
      %v1120 = vpack.c.b16 %v1100, %v1099
      %v1121 = vpack.c.b16 %v1102, %v1101
      %v1122 = vpack.c.b16 %v1104, %v1103
      %v1123 = vpack.c.b16 %v1106, %v1105
      %v1124 = vpack.c.b16 %v1108, %v1107
      %v1126 = vsel %vm831, %v1109, 0
      %v1129 = vsel %vm831, %v1110, 0
      %v1132 = vsel %vm831, %v1111, 0
      %v1135 = vsel %vm831, %v1112, 0
      %v1138 = vsel %vm831, %v1113, 0
      %v1141 = vsel %vm831, %v1114, 0
      %v1144 = vsel %vm831, %v1115, 0
      %v1147 = vsel %vm831, %v1116, 0
      %v1150 = vsel %vm831, %v1117, 0
      %v1153 = vsel %vm831, %v1118, 0
      %v1156 = vsel %vm831, %v1119, 0
      %v1159 = vsel %vm831, %v1120, 0
      %v1162 = vsel %vm831, %v1121, 0
      %v1165 = vsel %vm831, %v1122, 0
      %v1168 = vsel %vm831, %v1123, 0
      %v1171 = vsel %vm831, %v1124, 0
      %1173 = vmatprep.subr.bf16.mxu0 0
      %1174 = vmatpush1.bf16.msra.mxu0 0
      %1175 = vmatprep.subr.bf16.mxu0 0
      %1176 = vmatpush1.bf16.msra.mxu0 0
      %1177 = vmatprep.subr.bf16.mxu0 0
      %1178 = vmatpush1.bf16.msra.mxu0 0
      %1179 = vmatprep.subr.bf16.mxu0 0
      %1180 = vmatpush1.bf16.msra.mxu0 0
      %1181 = vmatprep.subr.bf16.mxu0 0
      %1182 = vmatpush1.bf16.msra.mxu0 0
      %1183 = vmatprep.subr.bf16.mxu0 0
      %1184 = vmatpush1.bf16.msra.mxu0 0
      %1185 = vmatprep.subr.bf16.mxu0 0
      %1186 = vmatpush1.bf16.msra.mxu0 0
      %1187 = vmatprep.subr.bf16.mxu0 0
      %1188 = vmatpush1.bf16.msra.mxu0 %v882
      %1189 = vmatprep.subr.bf16.mxu0 0
      %1190 = vmatpush2.bf16.msra.mxu0 0
      %1191 = vmatprep.subr.bf16.mxu0 0
      %1192 = vmatpush2.bf16.msra.mxu0 0
      %1193 = vmatprep.subr.bf16.mxu0 0
      %1194 = vmatpush2.bf16.msra.mxu0 0
      %1195 = vmatprep.subr.bf16.mxu0 0
      %1196 = vmatpush2.bf16.msra.mxu0 0
      %1197 = vmatprep.subr.bf16.mxu0 0
      %1198 = vmatpush2.bf16.msra.mxu0 0
      %1199 = vmatprep.subr.bf16.mxu0 0
      %1200 = vmatpush2.bf16.msra.mxu0 0
      %1201 = vmatprep.subr.bf16.mxu0 0
      %1202 = vmatpush2.bf16.msra.mxu0 0
      %1203 = vmatprep.subr.bf16.mxu0 0
      %1204 = vmatpush2.bf16.msra.mxu0 0
      %1205 = vmatprep.mubr.bf16.mxu0 0
      %1206 = vmatmul.mubr.bf16.gmra.mxu0 %v1126
      %v1207 = vpop.f32.mrf.mxu0
      %v1208 = vadd.f32 0.0, %v1207
      %v1209 = vpop.f32.mrf.mxu0
      %v1210 = vpop.f32.mrf.mxu0
      %v1211 = vadd.f32 0.0, %v1210
      %v1212 = vpop.f32.mrf.mxu0
      %1213 = vmatprep.mubr.bf16.mxu0 0
      %1214 = vmatmul.mubr.bf16.gmra.mxu0 %v1129
      %v1215 = vpop.f32.mrf.mxu0
      %v1216 = vadd.f32 0.0, %v1215
      %v1217 = vpop.f32.mrf.mxu0
      %v1218 = vpop.f32.mrf.mxu0
      %v1219 = vadd.f32 0.0, %v1218
      %v1220 = vpop.f32.mrf.mxu0
      %1221 = vmatprep.mubr.bf16.mxu0 0
      %1222 = vmatmul.mubr.bf16.gmra.mxu0 %v1132
      %v1223 = vpop.f32.mrf.mxu0
      %v1224 = vadd.f32 0.0, %v1223
      %v1225 = vpop.f32.mrf.mxu0
      %v1226 = vpop.f32.mrf.mxu0
      %v1227 = vadd.f32 0.0, %v1226
      %v1228 = vpop.f32.mrf.mxu0
      %1229 = vmatprep.mubr.bf16.mxu0 0
      %1230 = vmatmul.mubr.bf16.gmra.mxu0 %v1135
      %v1231 = vpop.f32.mrf.mxu0
      %v1232 = vadd.f32 0.0, %v1231
      %v1233 = vpop.f32.mrf.mxu0
      %v1234 = vpop.f32.mrf.mxu0
      %v1235 = vadd.f32 0.0, %v1234
      %v1236 = vpop.f32.mrf.mxu0
      %1237 = vmatprep.mubr.bf16.mxu0 0
      %1238 = vmatmul.mubr.bf16.gmra.mxu0 %v1138
      %v1239 = vpop.f32.mrf.mxu0
      %v1240 = vadd.f32 0.0, %v1239
      %v1241 = vpop.f32.mrf.mxu0
      %v1242 = vpop.f32.mrf.mxu0
      %v1243 = vadd.f32 0.0, %v1242
      %v1244 = vpop.f32.mrf.mxu0
      %1245 = vmatprep.mubr.bf16.mxu0 0
      %1246 = vmatmul.mubr.bf16.gmra.mxu0 %v1141
      %v1247 = vpop.f32.mrf.mxu0
      %v1248 = vadd.f32 0.0, %v1247
      %v1249 = vpop.f32.mrf.mxu0
      %v1250 = vpop.f32.mrf.mxu0
      %v1251 = vadd.f32 0.0, %v1250
      %v1252 = vpop.f32.mrf.mxu0
      %1253 = vmatprep.mubr.bf16.mxu0 0
      %1254 = vmatmul.mubr.bf16.gmra.mxu0 %v1144
      %v1255 = vpop.f32.mrf.mxu0
      %v1256 = vadd.f32 0.0, %v1255
      %v1257 = vpop.f32.mrf.mxu0
      %v1258 = vpop.f32.mrf.mxu0
      %v1259 = vadd.f32 0.0, %v1258
      %v1260 = vpop.f32.mrf.mxu0
      %1261 = vmatprep.mubr.bf16.mxu0 0
      %1262 = vmatmul.mubr.bf16.gmra.mxu0 %v1147
      %v1263 = vpop.f32.mrf.mxu0
      %v1264 = vadd.f32 0.0, %v1263
      %v1265 = vpop.f32.mrf.mxu0
      %v1266 = vpop.f32.mrf.mxu0
      %v1267 = vadd.f32 0.0, %v1266
      %v1268 = vpop.f32.mrf.mxu0
      %1269 = vmatprep.mubr.bf16.mxu0 0
      %1270 = vmatmul.mubr.bf16.gmra.mxu0 %v1150
      %v1271 = vpop.f32.mrf.mxu0
      %v1272 = vadd.f32 0.0, %v1271
      %v1273 = vpop.f32.mrf.mxu0
      %v1274 = vpop.f32.mrf.mxu0
      %v1275 = vadd.f32 0.0, %v1274
      %v1276 = vpop.f32.mrf.mxu0
      %1277 = vmatprep.mubr.bf16.mxu0 0
      %1278 = vmatmul.mubr.bf16.gmra.mxu0 %v1153
      %v1279 = vpop.f32.mrf.mxu0
      %v1280 = vadd.f32 0.0, %v1279
      %v1281 = vpop.f32.mrf.mxu0
      %v1282 = vpop.f32.mrf.mxu0
      %v1283 = vadd.f32 0.0, %v1282
      %v1284 = vpop.f32.mrf.mxu0
      %1285 = vmatprep.mubr.bf16.mxu0 0
      %1286 = vmatmul.mubr.bf16.gmra.mxu0 %v1156
      %v1287 = vpop.f32.mrf.mxu0
      %v1288 = vadd.f32 0.0, %v1287
      %v1289 = vpop.f32.mrf.mxu0
      %v1290 = vpop.f32.mrf.mxu0
      %v1291 = vadd.f32 0.0, %v1290
      %v1292 = vpop.f32.mrf.mxu0
      %1293 = vmatprep.mubr.bf16.mxu0 0
      %1294 = vmatmul.mubr.bf16.gmra.mxu0 %v1159
      %v1295 = vpop.f32.mrf.mxu0
      %v1296 = vadd.f32 0.0, %v1295
      %v1297 = vpop.f32.mrf.mxu0
      %v1298 = vpop.f32.mrf.mxu0
      %v1299 = vadd.f32 0.0, %v1298
      %v1300 = vpop.f32.mrf.mxu0
      %1301 = vmatprep.mubr.bf16.mxu0 0
      %1302 = vmatmul.mubr.bf16.gmra.mxu0 %v1162
      %v1303 = vpop.f32.mrf.mxu0
      %v1304 = vadd.f32 0.0, %v1303
      %v1305 = vpop.f32.mrf.mxu0
      %v1306 = vpop.f32.mrf.mxu0
      %v1307 = vadd.f32 0.0, %v1306
      %v1308 = vpop.f32.mrf.mxu0
      %1309 = vmatprep.mubr.bf16.mxu0 0
      %1310 = vmatmul.mubr.bf16.gmra.mxu0 %v1165
      %v1311 = vpop.f32.mrf.mxu0
      %v1312 = vadd.f32 0.0, %v1311
      %v1313 = vpop.f32.mrf.mxu0
      %v1314 = vpop.f32.mrf.mxu0
      %v1315 = vadd.f32 0.0, %v1314
      %v1316 = vpop.f32.mrf.mxu0
      %1317 = vmatprep.mubr.bf16.mxu0 0
      %1318 = vmatmul.mubr.bf16.gmra.mxu0 %v1168
      %v1319 = vpop.f32.mrf.mxu0
      %v1320 = vadd.f32 0.0, %v1319
      %v1321 = vpop.f32.mrf.mxu0
      %v1322 = vpop.f32.mrf.mxu0
      %v1323 = vadd.f32 0.0, %v1322
      %v1324 = vpop.f32.mrf.mxu0
      %1325 = vmatprep.mubr.bf16.mxu0 0
      %1326 = vmatmul.mubr.bf16.gmra.mxu0 %v1171
      %v1327 = vpop.f32.mrf.mxu0
      %v1328 = vadd.f32 0.0, %v1327
      %v1329 = vpop.f32.mrf.mxu0
      %v1330 = vpop.f32.mrf.mxu0
      %v1331 = vadd.f32 0.0, %v1330
      %v1332 = vpop.f32.mrf.mxu0
      %1333 = vdwg.mxu0
      %v1366 = vunpack.c.l.b16 %v551
      %v1367 = vunpack.c.l.b16 %v552
      %v1368 = vunpack.c.l.b16 %v553
      %v1369 = vunpack.c.l.b16 %v554
      %v1370 = vunpack.c.l.b16 %v555
      %v1371 = vunpack.c.l.b16 %v556
      %v1372 = vunpack.c.l.b16 %v557
      %v1373 = vunpack.c.l.b16 %v558
      %v1374 = vunpack.c.l.b16 %v559
      %v1375 = vunpack.c.l.b16 %v560
      %v1376 = vunpack.c.l.b16 %v561
      %v1377 = vunpack.c.l.b16 %v562
      %v1378 = vunpack.c.l.b16 %v563
      %v1379 = vunpack.c.l.b16 %v564
      %v1380 = vunpack.c.l.b16 %v565
      %v1381 = vunpack.c.l.b16 %v566
      %v1382 = vunpack.c.l.b16 %v567
      %v1383 = vunpack.c.l.b16 %v568
      %v1384 = vunpack.c.l.b16 %v569
      %v1385 = vunpack.c.l.b16 %v570
      %v1386 = vunpack.c.l.b16 %v571
      %v1387 = vunpack.c.l.b16 %v572
      %v1388 = vunpack.c.l.b16 %v573
      %v1389 = vunpack.c.l.b16 %v574
      %v1390 = vunpack.c.l.b16 %v575
      %v1391 = vunpack.c.l.b16 %v576
      %v1392 = vunpack.c.l.b16 %v577
      %v1393 = vunpack.c.l.b16 %v578
      %v1394 = vunpack.c.l.b16 %v579
      %v1395 = vunpack.c.l.b16 %v580
      %v1396 = vunpack.c.l.b16 %v581
      %v1397 = vunpack.c.l.b16 %v582
      %v1398 = vpack.c.b16 %v1367, %v1366
      %v1399 = vpack.c.b16 %v1369, %v1368
      %v1400 = vpack.c.b16 %v1371, %v1370
      %v1401 = vpack.c.b16 %v1373, %v1372
      %v1402 = vpack.c.b16 %v1375, %v1374
      %v1403 = vpack.c.b16 %v1377, %v1376
      %v1404 = vpack.c.b16 %v1379, %v1378
      %v1405 = vpack.c.b16 %v1381, %v1380
      %v1406 = vpack.c.b16 %v1383, %v1382
      %v1407 = vpack.c.b16 %v1385, %v1384
      %v1408 = vpack.c.b16 %v1387, %v1386
      %v1409 = vpack.c.b16 %v1389, %v1388
      %v1410 = vpack.c.b16 %v1391, %v1390
      %v1411 = vpack.c.b16 %v1393, %v1392
      %v1412 = vpack.c.b16 %v1395, %v1394
      %v1413 = vpack.c.b16 %v1397, %v1396
      %v1415 = vsel %vm831, %v1398, 0
      %v1418 = vsel %vm831, %v1399, 0
      %v1421 = vsel %vm831, %v1400, 0
      %v1424 = vsel %vm831, %v1401, 0
      %v1427 = vsel %vm831, %v1402, 0
      %v1430 = vsel %vm831, %v1403, 0
      %v1433 = vsel %vm831, %v1404, 0
      %v1436 = vsel %vm831, %v1405, 0
      %v1439 = vsel %vm831, %v1406, 0
      %v1442 = vsel %vm831, %v1407, 0
      %v1445 = vsel %vm831, %v1408, 0
      %v1448 = vsel %vm831, %v1409, 0
      %v1451 = vsel %vm831, %v1410, 0
      %v1454 = vsel %vm831, %v1411, 0
      %v1457 = vsel %vm831, %v1412, 0
      %v1460 = vsel %vm831, %v1413, 0
      %1462 = vmatprep.subr.bf16.mxu0 0
      %1463 = vmatpush1.bf16.msra.mxu0 0
      %1464 = vmatprep.subr.bf16.mxu0 0
      %1465 = vmatpush1.bf16.msra.mxu0 0
      %1466 = vmatprep.subr.bf16.mxu0 0
      %1467 = vmatpush1.bf16.msra.mxu0 0
      %1468 = vmatprep.subr.bf16.mxu0 0
      %1469 = vmatpush1.bf16.msra.mxu0 0
      %1470 = vmatprep.subr.bf16.mxu0 0
      %1471 = vmatpush1.bf16.msra.mxu0 0
      %1472 = vmatprep.subr.bf16.mxu0 0
      %1473 = vmatpush1.bf16.msra.mxu0 0
      %1474 = vmatprep.subr.bf16.mxu0 0
      %1475 = vmatpush1.bf16.msra.mxu0 0
      %1476 = vmatprep.subr.bf16.mxu0 0
      %1477 = vmatpush1.bf16.msra.mxu0 %v882
      %1478 = vmatprep.subr.bf16.mxu0 0
      %1479 = vmatpush2.bf16.msra.mxu0 0
      %1480 = vmatprep.subr.bf16.mxu0 0
      %1481 = vmatpush2.bf16.msra.mxu0 0
      %1482 = vmatprep.subr.bf16.mxu0 0
      %1483 = vmatpush2.bf16.msra.mxu0 0
      %1484 = vmatprep.subr.bf16.mxu0 0
      %1485 = vmatpush2.bf16.msra.mxu0 0
      %1486 = vmatprep.subr.bf16.mxu0 0
      %1487 = vmatpush2.bf16.msra.mxu0 0
      %1488 = vmatprep.subr.bf16.mxu0 0
      %1489 = vmatpush2.bf16.msra.mxu0 0
      %1490 = vmatprep.subr.bf16.mxu0 0
      %1491 = vmatpush2.bf16.msra.mxu0 0
      %1492 = vmatprep.subr.bf16.mxu0 0
      %1493 = vmatpush2.bf16.msra.mxu0 0
      %1494 = vmatprep.mubr.bf16.mxu0 0
      %1495 = vmatmul.mubr.bf16.gmra.mxu0 %v1415
      %v1496 = vpop.f32.mrf.mxu0
      %v1497 = vadd.f32 0.0, %v1496
      %v1498 = vpop.f32.mrf.mxu0
      %v1499 = vpop.f32.mrf.mxu0
      %v1500 = vadd.f32 0.0, %v1499
      %v1501 = vpop.f32.mrf.mxu0
      %1502 = vmatprep.mubr.bf16.mxu0 0
      %1503 = vmatmul.mubr.bf16.gmra.mxu0 %v1418
      %v1504 = vpop.f32.mrf.mxu0
      %v1505 = vadd.f32 0.0, %v1504
      %v1506 = vpop.f32.mrf.mxu0
      %v1507 = vpop.f32.mrf.mxu0
      %v1508 = vadd.f32 0.0, %v1507
      %v1509 = vpop.f32.mrf.mxu0
      %1510 = vmatprep.mubr.bf16.mxu0 0
      %1511 = vmatmul.mubr.bf16.gmra.mxu0 %v1421
      %v1512 = vpop.f32.mrf.mxu0
      %v1513 = vadd.f32 0.0, %v1512
      %v1514 = vpop.f32.mrf.mxu0
      %v1515 = vpop.f32.mrf.mxu0
      %v1516 = vadd.f32 0.0, %v1515
      %v1517 = vpop.f32.mrf.mxu0
      %1518 = vmatprep.mubr.bf16.mxu0 0
      %1519 = vmatmul.mubr.bf16.gmra.mxu0 %v1424
      %v1520 = vpop.f32.mrf.mxu0
      %v1521 = vadd.f32 0.0, %v1520
      %v1522 = vpop.f32.mrf.mxu0
      %v1523 = vpop.f32.mrf.mxu0
      %v1524 = vadd.f32 0.0, %v1523
      %v1525 = vpop.f32.mrf.mxu0
      %1526 = vmatprep.mubr.bf16.mxu0 0
      %1527 = vmatmul.mubr.bf16.gmra.mxu0 %v1427
      %v1528 = vpop.f32.mrf.mxu0
      %v1529 = vadd.f32 0.0, %v1528
      %v1530 = vpop.f32.mrf.mxu0
      %v1531 = vpop.f32.mrf.mxu0
      %v1532 = vadd.f32 0.0, %v1531
      %v1533 = vpop.f32.mrf.mxu0
      %1534 = vmatprep.mubr.bf16.mxu0 0
      %1535 = vmatmul.mubr.bf16.gmra.mxu0 %v1430
      %v1536 = vpop.f32.mrf.mxu0
      %v1537 = vadd.f32 0.0, %v1536
      %v1538 = vpop.f32.mrf.mxu0
      %v1539 = vpop.f32.mrf.mxu0
      %v1540 = vadd.f32 0.0, %v1539
      %v1541 = vpop.f32.mrf.mxu0
      %1542 = vmatprep.mubr.bf16.mxu0 0
      %1543 = vmatmul.mubr.bf16.gmra.mxu0 %v1433
      %v1544 = vpop.f32.mrf.mxu0
      %v1545 = vadd.f32 0.0, %v1544
      %v1546 = vpop.f32.mrf.mxu0
      %v1547 = vpop.f32.mrf.mxu0
      %v1548 = vadd.f32 0.0, %v1547
      %v1549 = vpop.f32.mrf.mxu0
      %1550 = vmatprep.mubr.bf16.mxu0 0
      %1551 = vmatmul.mubr.bf16.gmra.mxu0 %v1436
      %v1552 = vpop.f32.mrf.mxu0
      %v1553 = vadd.f32 0.0, %v1552
      %v1554 = vpop.f32.mrf.mxu0
      %v1555 = vpop.f32.mrf.mxu0
      %v1556 = vadd.f32 0.0, %v1555
      %v1557 = vpop.f32.mrf.mxu0
      %1558 = vmatprep.mubr.bf16.mxu0 0
      %1559 = vmatmul.mubr.bf16.gmra.mxu0 %v1439
      %v1560 = vpop.f32.mrf.mxu0
      %v1561 = vadd.f32 0.0, %v1560
      %v1562 = vpop.f32.mrf.mxu0
      %v1563 = vpop.f32.mrf.mxu0
      %v1564 = vadd.f32 0.0, %v1563
      %v1565 = vpop.f32.mrf.mxu0
      %1566 = vmatprep.mubr.bf16.mxu0 0
      %1567 = vmatmul.mubr.bf16.gmra.mxu0 %v1442
      %v1568 = vpop.f32.mrf.mxu0
      %v1569 = vadd.f32 0.0, %v1568
      %v1570 = vpop.f32.mrf.mxu0
      %v1571 = vpop.f32.mrf.mxu0
      %v1572 = vadd.f32 0.0, %v1571
      %v1573 = vpop.f32.mrf.mxu0
      %1574 = vmatprep.mubr.bf16.mxu0 0
      %1575 = vmatmul.mubr.bf16.gmra.mxu0 %v1445
      %v1576 = vpop.f32.mrf.mxu0
      %v1577 = vadd.f32 0.0, %v1576
      %v1578 = vpop.f32.mrf.mxu0
      %v1579 = vpop.f32.mrf.mxu0
      %v1580 = vadd.f32 0.0, %v1579
      %v1581 = vpop.f32.mrf.mxu0
      %1582 = vmatprep.mubr.bf16.mxu0 0
      %1583 = vmatmul.mubr.bf16.gmra.mxu0 %v1448
      %v1584 = vpop.f32.mrf.mxu0
      %v1585 = vadd.f32 0.0, %v1584
      %v1586 = vpop.f32.mrf.mxu0
      %v1587 = vpop.f32.mrf.mxu0
      %v1588 = vadd.f32 0.0, %v1587
      %v1589 = vpop.f32.mrf.mxu0
      %1590 = vmatprep.mubr.bf16.mxu0 0
      %1591 = vmatmul.mubr.bf16.gmra.mxu0 %v1451
      %v1592 = vpop.f32.mrf.mxu0
      %v1593 = vadd.f32 0.0, %v1592
      %v1594 = vpop.f32.mrf.mxu0
      %v1595 = vpop.f32.mrf.mxu0
      %v1596 = vadd.f32 0.0, %v1595
      %v1597 = vpop.f32.mrf.mxu0
      %1598 = vmatprep.mubr.bf16.mxu0 0
      %1599 = vmatmul.mubr.bf16.gmra.mxu0 %v1454
      %v1600 = vpop.f32.mrf.mxu0
      %v1601 = vadd.f32 0.0, %v1600
      %v1602 = vpop.f32.mrf.mxu0
      %v1603 = vpop.f32.mrf.mxu0
      %v1604 = vadd.f32 0.0, %v1603
      %v1605 = vpop.f32.mrf.mxu0
      %1606 = vmatprep.mubr.bf16.mxu0 0
      %1607 = vmatmul.mubr.bf16.gmra.mxu0 %v1457
      %v1608 = vpop.f32.mrf.mxu0
      %v1609 = vadd.f32 0.0, %v1608
      %v1610 = vpop.f32.mrf.mxu0
      %v1611 = vpop.f32.mrf.mxu0
      %v1612 = vadd.f32 0.0, %v1611
      %v1613 = vpop.f32.mrf.mxu0
      %1614 = vmatprep.mubr.bf16.mxu0 0
      %1615 = vmatmul.mubr.bf16.gmra.mxu0 %v1460
      %v1616 = vpop.f32.mrf.mxu0
      %v1617 = vadd.f32 0.0, %v1616
      %v1618 = vpop.f32.mrf.mxu0
      %v1619 = vpop.f32.mrf.mxu0
      %v1620 = vadd.f32 0.0, %v1619
      %v1621 = vpop.f32.mrf.mxu0
      %1622 = vdwg.mxu0
      %v1655 = vunpack.c.l.b16 %v583
      %v1656 = vunpack.c.l.b16 %v584
      %v1657 = vunpack.c.l.b16 %v585
      %v1658 = vunpack.c.l.b16 %v586
      %v1659 = vunpack.c.l.b16 %v587
      %v1660 = vunpack.c.l.b16 %v588
      %v1661 = vunpack.c.l.b16 %v589
      %v1662 = vunpack.c.l.b16 %v590
      %v1663 = vunpack.c.l.b16 %v591
      %v1664 = vunpack.c.l.b16 %v592
      %v1665 = vunpack.c.l.b16 %v593
      %v1666 = vunpack.c.l.b16 %v594
      %v1667 = vunpack.c.l.b16 %v595
      %v1668 = vunpack.c.l.b16 %v596
      %v1669 = vunpack.c.l.b16 %v597
      %v1670 = vunpack.c.l.b16 %v598
      %v1671 = vunpack.c.l.b16 %v599
      %v1672 = vunpack.c.l.b16 %v600
      %v1673 = vunpack.c.l.b16 %v601
      %v1674 = vunpack.c.l.b16 %v602
      %v1675 = vunpack.c.l.b16 %v603
      %v1676 = vunpack.c.l.b16 %v604
      %v1677 = vunpack.c.l.b16 %v605
      %v1678 = vunpack.c.l.b16 %v606
      %v1679 = vunpack.c.l.b16 %v607
      %v1680 = vunpack.c.l.b16 %v608
      %v1681 = vunpack.c.l.b16 %v609
      %v1682 = vunpack.c.l.b16 %v610
      %v1683 = vunpack.c.l.b16 %v611
      %v1684 = vunpack.c.l.b16 %v612
      %v1685 = vunpack.c.l.b16 %v613
      %v1686 = vunpack.c.l.b16 %v614
      %v1687 = vpack.c.b16 %v1656, %v1655
      %v1688 = vpack.c.b16 %v1658, %v1657
      %v1689 = vpack.c.b16 %v1660, %v1659
      %v1690 = vpack.c.b16 %v1662, %v1661
      %v1691 = vpack.c.b16 %v1664, %v1663
      %v1692 = vpack.c.b16 %v1666, %v1665
      %v1693 = vpack.c.b16 %v1668, %v1667
      %v1694 = vpack.c.b16 %v1670, %v1669
      %v1695 = vpack.c.b16 %v1672, %v1671
      %v1696 = vpack.c.b16 %v1674, %v1673
      %v1697 = vpack.c.b16 %v1676, %v1675
      %v1698 = vpack.c.b16 %v1678, %v1677
      %v1699 = vpack.c.b16 %v1680, %v1679
      %v1700 = vpack.c.b16 %v1682, %v1681
      %v1701 = vpack.c.b16 %v1684, %v1683
      %v1702 = vpack.c.b16 %v1686, %v1685
      %v1704 = vsel %vm831, %v1687, 0
      %v1707 = vsel %vm831, %v1688, 0
      %v1710 = vsel %vm831, %v1689, 0
      %v1713 = vsel %vm831, %v1690, 0
      %v1716 = vsel %vm831, %v1691, 0
      %v1719 = vsel %vm831, %v1692, 0
      %v1722 = vsel %vm831, %v1693, 0
      %v1725 = vsel %vm831, %v1694, 0
      %v1728 = vsel %vm831, %v1695, 0
      %v1731 = vsel %vm831, %v1696, 0
      %v1734 = vsel %vm831, %v1697, 0
      %v1737 = vsel %vm831, %v1698, 0
      %v1740 = vsel %vm831, %v1699, 0
      %v1743 = vsel %vm831, %v1700, 0
      %v1746 = vsel %vm831, %v1701, 0
      %v1749 = vsel %vm831, %v1702, 0
      %1751 = vmatprep.subr.bf16.mxu0 0
      %1752 = vmatpush1.bf16.msra.mxu0 0
      %1753 = vmatprep.subr.bf16.mxu0 0
      %1754 = vmatpush1.bf16.msra.mxu0 0
      %1755 = vmatprep.subr.bf16.mxu0 0
      %1756 = vmatpush1.bf16.msra.mxu0 0
      %1757 = vmatprep.subr.bf16.mxu0 0
      %1758 = vmatpush1.bf16.msra.mxu0 0
      %1759 = vmatprep.subr.bf16.mxu0 0
      %1760 = vmatpush1.bf16.msra.mxu0 0
      %1761 = vmatprep.subr.bf16.mxu0 0
      %1762 = vmatpush1.bf16.msra.mxu0 0
      %1763 = vmatprep.subr.bf16.mxu0 0
      %1764 = vmatpush1.bf16.msra.mxu0 0
      %1765 = vmatprep.subr.bf16.mxu0 0
      %1766 = vmatpush1.bf16.msra.mxu0 %v882
      %1767 = vmatprep.subr.bf16.mxu0 0
      %1768 = vmatpush2.bf16.msra.mxu0 0
      %1769 = vmatprep.subr.bf16.mxu0 0
      %1770 = vmatpush2.bf16.msra.mxu0 0
      %1771 = vmatprep.subr.bf16.mxu0 0
      %1772 = vmatpush2.bf16.msra.mxu0 0
      %1773 = vmatprep.subr.bf16.mxu0 0
      %1774 = vmatpush2.bf16.msra.mxu0 0
      %1775 = vmatprep.subr.bf16.mxu0 0
      %1776 = vmatpush2.bf16.msra.mxu0 0
      %1777 = vmatprep.subr.bf16.mxu0 0
      %1778 = vmatpush2.bf16.msra.mxu0 0
      %1779 = vmatprep.subr.bf16.mxu0 0
      %1780 = vmatpush2.bf16.msra.mxu0 0
      %1781 = vmatprep.subr.bf16.mxu0 0
      %1782 = vmatpush2.bf16.msra.mxu0 0
      %1783 = vmatprep.mubr.bf16.mxu0 0
      %1784 = vmatmul.mubr.bf16.gmra.mxu0 %v1704
      %v1785 = vpop.f32.mrf.mxu0
      %v1786 = vadd.f32 0.0, %v1785
      %v1787 = vpop.f32.mrf.mxu0
      %v1788 = vpop.f32.mrf.mxu0
      %v1789 = vadd.f32 0.0, %v1788
      %v1790 = vpop.f32.mrf.mxu0
      %1791 = vmatprep.mubr.bf16.mxu0 0
      %1792 = vmatmul.mubr.bf16.gmra.mxu0 %v1707
      %v1793 = vpop.f32.mrf.mxu0
      %v1794 = vadd.f32 0.0, %v1793
      %v1795 = vpop.f32.mrf.mxu0
      %v1796 = vpop.f32.mrf.mxu0
      %v1797 = vadd.f32 0.0, %v1796
      %v1798 = vpop.f32.mrf.mxu0
      %1799 = vmatprep.mubr.bf16.mxu0 0
      %1800 = vmatmul.mubr.bf16.gmra.mxu0 %v1710
      %v1801 = vpop.f32.mrf.mxu0
      %v1802 = vadd.f32 0.0, %v1801
      %v1803 = vpop.f32.mrf.mxu0
      %v1804 = vpop.f32.mrf.mxu0
      %v1805 = vadd.f32 0.0, %v1804
      %v1806 = vpop.f32.mrf.mxu0
      %1807 = vmatprep.mubr.bf16.mxu0 0
      %1808 = vmatmul.mubr.bf16.gmra.mxu0 %v1713
      %v1809 = vpop.f32.mrf.mxu0
      %v1810 = vadd.f32 0.0, %v1809
      %v1811 = vpop.f32.mrf.mxu0
      %v1812 = vpop.f32.mrf.mxu0
      %v1813 = vadd.f32 0.0, %v1812
      %v1814 = vpop.f32.mrf.mxu0
      %1815 = vmatprep.mubr.bf16.mxu0 0
      %1816 = vmatmul.mubr.bf16.gmra.mxu0 %v1716
      %v1817 = vpop.f32.mrf.mxu0
      %v1818 = vadd.f32 0.0, %v1817
      %v1819 = vpop.f32.mrf.mxu0
      %v1820 = vpop.f32.mrf.mxu0
      %v1821 = vadd.f32 0.0, %v1820
      %v1822 = vpop.f32.mrf.mxu0
      %1823 = vmatprep.mubr.bf16.mxu0 0
      %1824 = vmatmul.mubr.bf16.gmra.mxu0 %v1719
      %v1825 = vpop.f32.mrf.mxu0
      %v1826 = vadd.f32 0.0, %v1825
      %v1827 = vpop.f32.mrf.mxu0
      %v1828 = vpop.f32.mrf.mxu0
      %v1829 = vadd.f32 0.0, %v1828
      %v1830 = vpop.f32.mrf.mxu0
      %1831 = vmatprep.mubr.bf16.mxu0 0
      %1832 = vmatmul.mubr.bf16.gmra.mxu0 %v1722
      %v1833 = vpop.f32.mrf.mxu0
      %v1834 = vadd.f32 0.0, %v1833
      %v1835 = vpop.f32.mrf.mxu0
      %v1836 = vpop.f32.mrf.mxu0
      %v1837 = vadd.f32 0.0, %v1836
      %v1838 = vpop.f32.mrf.mxu0
      %1839 = vmatprep.mubr.bf16.mxu0 0
      %1840 = vmatmul.mubr.bf16.gmra.mxu0 %v1725
      %v1841 = vpop.f32.mrf.mxu0
      %v1842 = vadd.f32 0.0, %v1841
      %v1843 = vpop.f32.mrf.mxu0
      %v1844 = vpop.f32.mrf.mxu0
      %v1845 = vadd.f32 0.0, %v1844
      %v1846 = vpop.f32.mrf.mxu0
      %1847 = vmatprep.mubr.bf16.mxu0 0
      %1848 = vmatmul.mubr.bf16.gmra.mxu0 %v1728
      %v1849 = vpop.f32.mrf.mxu0
      %v1850 = vadd.f32 0.0, %v1849
      %v1851 = vpop.f32.mrf.mxu0
      %v1852 = vpop.f32.mrf.mxu0
      %v1853 = vadd.f32 0.0, %v1852
      %v1854 = vpop.f32.mrf.mxu0
      %1855 = vmatprep.mubr.bf16.mxu0 0
      %1856 = vmatmul.mubr.bf16.gmra.mxu0 %v1731
      %v1857 = vpop.f32.mrf.mxu0
      %v1858 = vadd.f32 0.0, %v1857
      %v1859 = vpop.f32.mrf.mxu0
      %v1860 = vpop.f32.mrf.mxu0
      %v1861 = vadd.f32 0.0, %v1860
      %v1862 = vpop.f32.mrf.mxu0
      %1863 = vmatprep.mubr.bf16.mxu0 0
      %1864 = vmatmul.mubr.bf16.gmra.mxu0 %v1734
      %v1865 = vpop.f32.mrf.mxu0
      %v1866 = vadd.f32 0.0, %v1865
      %v1867 = vpop.f32.mrf.mxu0
      %v1868 = vpop.f32.mrf.mxu0
      %v1869 = vadd.f32 0.0, %v1868
      %v1870 = vpop.f32.mrf.mxu0
      %1871 = vmatprep.mubr.bf16.mxu0 0
      %1872 = vmatmul.mubr.bf16.gmra.mxu0 %v1737
      %v1873 = vpop.f32.mrf.mxu0
      %v1874 = vadd.f32 0.0, %v1873
      %v1875 = vpop.f32.mrf.mxu0
      %v1876 = vpop.f32.mrf.mxu0
      %v1877 = vadd.f32 0.0, %v1876
      %v1878 = vpop.f32.mrf.mxu0
      %1879 = vmatprep.mubr.bf16.mxu0 0
      %1880 = vmatmul.mubr.bf16.gmra.mxu0 %v1740
      %v1881 = vpop.f32.mrf.mxu0
      %v1882 = vadd.f32 0.0, %v1881
      %v1883 = vpop.f32.mrf.mxu0
      %v1884 = vpop.f32.mrf.mxu0
      %v1885 = vadd.f32 0.0, %v1884
      %v1886 = vpop.f32.mrf.mxu0
      %1887 = vmatprep.mubr.bf16.mxu0 0
      %1888 = vmatmul.mubr.bf16.gmra.mxu0 %v1743
      %v1889 = vpop.f32.mrf.mxu0
      %v1890 = vadd.f32 0.0, %v1889
      %v1891 = vpop.f32.mrf.mxu0
      %v1892 = vpop.f32.mrf.mxu0
      %v1893 = vadd.f32 0.0, %v1892
      %v1894 = vpop.f32.mrf.mxu0
      %1895 = vmatprep.mubr.bf16.mxu0 0
      %1896 = vmatmul.mubr.bf16.gmra.mxu0 %v1746
      %v1897 = vpop.f32.mrf.mxu0
      %v1898 = vadd.f32 0.0, %v1897
      %v1899 = vpop.f32.mrf.mxu0
      %v1900 = vpop.f32.mrf.mxu0
      %v1901 = vadd.f32 0.0, %v1900
      %v1902 = vpop.f32.mrf.mxu0
      %1903 = vmatprep.mubr.bf16.mxu0 0
      %1904 = vmatmul.mubr.bf16.gmra.mxu0 %v1749
      %v1905 = vpop.f32.mrf.mxu0
      %v1906 = vadd.f32 0.0, %v1905
      %v1907 = vpop.f32.mrf.mxu0
      %v1908 = vpop.f32.mrf.mxu0
      %v1909 = vadd.f32 0.0, %v1908
      %v1910 = vpop.f32.mrf.mxu0
      %1911 = vdwg.mxu0
      %v1944 = vunpack.c.l.b16 %v615
      %v1945 = vunpack.c.l.b16 %v616
      %v1946 = vunpack.c.l.b16 %v617
      %v1947 = vunpack.c.l.b16 %v618
      %v1948 = vunpack.c.l.b16 %v619
      %v1949 = vunpack.c.l.b16 %v620
      %v1950 = vunpack.c.l.b16 %v621
      %v1951 = vunpack.c.l.b16 %v622
      %v1952 = vunpack.c.l.b16 %v623
      %v1953 = vunpack.c.l.b16 %v624
      %v1954 = vunpack.c.l.b16 %v625
      %v1955 = vunpack.c.l.b16 %v626
      %v1956 = vunpack.c.l.b16 %v627
      %v1957 = vunpack.c.l.b16 %v628
      %v1958 = vunpack.c.l.b16 %v629
      %v1959 = vunpack.c.l.b16 %v630
      %v1960 = vunpack.c.l.b16 %v631
      %v1961 = vunpack.c.l.b16 %v632
      %v1962 = vunpack.c.l.b16 %v633
      %v1963 = vunpack.c.l.b16 %v634
      %v1964 = vunpack.c.l.b16 %v635
      %v1965 = vunpack.c.l.b16 %v636
      %v1966 = vunpack.c.l.b16 %v637
      %v1967 = vunpack.c.l.b16 %v638
      %v1968 = vunpack.c.l.b16 %v639
      %v1969 = vunpack.c.l.b16 %v640
      %v1970 = vunpack.c.l.b16 %v641
      %v1971 = vunpack.c.l.b16 %v642
      %v1972 = vunpack.c.l.b16 %v643
      %v1973 = vunpack.c.l.b16 %v644
      %v1974 = vunpack.c.l.b16 %v645
      %v1975 = vunpack.c.l.b16 %v646
      %v1976 = vpack.c.b16 %v1945, %v1944
      %v1977 = vpack.c.b16 %v1947, %v1946
      %v1978 = vpack.c.b16 %v1949, %v1948
      %v1979 = vpack.c.b16 %v1951, %v1950
      %v1980 = vpack.c.b16 %v1953, %v1952
      %v1981 = vpack.c.b16 %v1955, %v1954
      %v1982 = vpack.c.b16 %v1957, %v1956
      %v1983 = vpack.c.b16 %v1959, %v1958
      %v1984 = vpack.c.b16 %v1961, %v1960
      %v1985 = vpack.c.b16 %v1963, %v1962
      %v1986 = vpack.c.b16 %v1965, %v1964
      %v1987 = vpack.c.b16 %v1967, %v1966
      %v1988 = vpack.c.b16 %v1969, %v1968
      %v1989 = vpack.c.b16 %v1971, %v1970
      %v1990 = vpack.c.b16 %v1973, %v1972
      %v1991 = vpack.c.b16 %v1975, %v1974
      %v1993 = vsel %vm831, %v1976, 0
      %v1996 = vsel %vm831, %v1977, 0
      %v1999 = vsel %vm831, %v1978, 0
      %v2002 = vsel %vm831, %v1979, 0
      %v2005 = vsel %vm831, %v1980, 0
      %v2008 = vsel %vm831, %v1981, 0
      %v2011 = vsel %vm831, %v1982, 0
      %v2014 = vsel %vm831, %v1983, 0
      %v2017 = vsel %vm831, %v1984, 0
      %v2020 = vsel %vm831, %v1985, 0
      %v2023 = vsel %vm831, %v1986, 0
      %v2026 = vsel %vm831, %v1987, 0
      %v2029 = vsel %vm831, %v1988, 0
      %v2032 = vsel %vm831, %v1989, 0
      %v2035 = vsel %vm831, %v1990, 0
      %v2038 = vsel %vm831, %v1991, 0
      %2040 = vmatprep.subr.bf16.mxu0 0
      %2041 = vmatpush1.bf16.msra.mxu0 0
      %2042 = vmatprep.subr.bf16.mxu0 0
      %2043 = vmatpush1.bf16.msra.mxu0 0
      %2044 = vmatprep.subr.bf16.mxu0 0
      %2045 = vmatpush1.bf16.msra.mxu0 0
      %2046 = vmatprep.subr.bf16.mxu0 0
      %2047 = vmatpush1.bf16.msra.mxu0 0
      %2048 = vmatprep.subr.bf16.mxu0 0
      %2049 = vmatpush1.bf16.msra.mxu0 0
      %2050 = vmatprep.subr.bf16.mxu0 0
      %2051 = vmatpush1.bf16.msra.mxu0 0
      %2052 = vmatprep.subr.bf16.mxu0 0
      %2053 = vmatpush1.bf16.msra.mxu0 0
      %2054 = vmatprep.subr.bf16.mxu0 0
      %2055 = vmatpush1.bf16.msra.mxu0 %v882
      %2056 = vmatprep.subr.bf16.mxu0 0
      %2057 = vmatpush2.bf16.msra.mxu0 0
      %2058 = vmatprep.subr.bf16.mxu0 0
      %2059 = vmatpush2.bf16.msra.mxu0 0
      %2060 = vmatprep.subr.bf16.mxu0 0
      %2061 = vmatpush2.bf16.msra.mxu0 0
      %2062 = vmatprep.subr.bf16.mxu0 0
      %2063 = vmatpush2.bf16.msra.mxu0 0
      %2064 = vmatprep.subr.bf16.mxu0 0
      %2065 = vmatpush2.bf16.msra.mxu0 0
      %2066 = vmatprep.subr.bf16.mxu0 0
      %2067 = vmatpush2.bf16.msra.mxu0 0
      %2068 = vmatprep.subr.bf16.mxu0 0
      %2069 = vmatpush2.bf16.msra.mxu0 0
      %2070 = vmatprep.subr.bf16.mxu0 0
      %2071 = vmatpush2.bf16.msra.mxu0 0
      %2072 = vmatprep.mubr.bf16.mxu0 0
      %2073 = vmatmul.mubr.bf16.gmra.mxu0 %v1993
      %v2074 = vpop.f32.mrf.mxu0
      %v2075 = vadd.f32 0.0, %v2074
      %v2076 = vpop.f32.mrf.mxu0
      %v2077 = vpop.f32.mrf.mxu0
      %v2078 = vadd.f32 0.0, %v2077
      %v2079 = vpop.f32.mrf.mxu0
      %2080 = vmatprep.mubr.bf16.mxu0 0
      %2081 = vmatmul.mubr.bf16.gmra.mxu0 %v1996
      %v2082 = vpop.f32.mrf.mxu0
      %v2083 = vadd.f32 0.0, %v2082
      %v2084 = vpop.f32.mrf.mxu0
      %v2085 = vpop.f32.mrf.mxu0
      %v2086 = vadd.f32 0.0, %v2085
      %v2087 = vpop.f32.mrf.mxu0
      %2088 = vmatprep.mubr.bf16.mxu0 0
      %2089 = vmatmul.mubr.bf16.gmra.mxu0 %v1999
      %v2090 = vpop.f32.mrf.mxu0
      %v2091 = vadd.f32 0.0, %v2090
      %v2092 = vpop.f32.mrf.mxu0
      %v2093 = vpop.f32.mrf.mxu0
      %v2094 = vadd.f32 0.0, %v2093
      %v2095 = vpop.f32.mrf.mxu0
      %2096 = vmatprep.mubr.bf16.mxu0 0
      %2097 = vmatmul.mubr.bf16.gmra.mxu0 %v2002
      %v2098 = vpop.f32.mrf.mxu0
      %v2099 = vadd.f32 0.0, %v2098
      %v2100 = vpop.f32.mrf.mxu0
      %v2101 = vpop.f32.mrf.mxu0
      %v2102 = vadd.f32 0.0, %v2101
      %v2103 = vpop.f32.mrf.mxu0
      %2104 = vmatprep.mubr.bf16.mxu0 0
      %2105 = vmatmul.mubr.bf16.gmra.mxu0 %v2005
      %v2106 = vpop.f32.mrf.mxu0
      %v2107 = vadd.f32 0.0, %v2106
      %v2108 = vpop.f32.mrf.mxu0
      %v2109 = vpop.f32.mrf.mxu0
      %v2110 = vadd.f32 0.0, %v2109
      %v2111 = vpop.f32.mrf.mxu0
      %2112 = vmatprep.mubr.bf16.mxu0 0
      %2113 = vmatmul.mubr.bf16.gmra.mxu0 %v2008
      %v2114 = vpop.f32.mrf.mxu0
      %v2115 = vadd.f32 0.0, %v2114
      %v2116 = vpop.f32.mrf.mxu0
      %v2117 = vpop.f32.mrf.mxu0
      %v2118 = vadd.f32 0.0, %v2117
      %v2119 = vpop.f32.mrf.mxu0
      %2120 = vmatprep.mubr.bf16.mxu0 0
      %2121 = vmatmul.mubr.bf16.gmra.mxu0 %v2011
      %v2122 = vpop.f32.mrf.mxu0
      %v2123 = vadd.f32 0.0, %v2122
      %v2124 = vpop.f32.mrf.mxu0
      %v2125 = vpop.f32.mrf.mxu0
      %v2126 = vadd.f32 0.0, %v2125
      %v2127 = vpop.f32.mrf.mxu0
      %2128 = vmatprep.mubr.bf16.mxu0 0
      %2129 = vmatmul.mubr.bf16.gmra.mxu0 %v2014
      %v2130 = vpop.f32.mrf.mxu0
      %v2131 = vadd.f32 0.0, %v2130
      %v2132 = vpop.f32.mrf.mxu0
      %v2133 = vpop.f32.mrf.mxu0
      %v2134 = vadd.f32 0.0, %v2133
      %v2135 = vpop.f32.mrf.mxu0
      %2136 = vmatprep.mubr.bf16.mxu0 0
      %2137 = vmatmul.mubr.bf16.gmra.mxu0 %v2017
      %v2138 = vpop.f32.mrf.mxu0
      %v2139 = vadd.f32 0.0, %v2138
      %v2140 = vpop.f32.mrf.mxu0
      %v2141 = vpop.f32.mrf.mxu0
      %v2142 = vadd.f32 0.0, %v2141
      %v2143 = vpop.f32.mrf.mxu0
      %2144 = vmatprep.mubr.bf16.mxu0 0
      %2145 = vmatmul.mubr.bf16.gmra.mxu0 %v2020
      %v2146 = vpop.f32.mrf.mxu0
      %v2147 = vadd.f32 0.0, %v2146
      %v2148 = vpop.f32.mrf.mxu0
      %v2149 = vpop.f32.mrf.mxu0
      %v2150 = vadd.f32 0.0, %v2149
      %v2151 = vpop.f32.mrf.mxu0
      %2152 = vmatprep.mubr.bf16.mxu0 0
      %2153 = vmatmul.mubr.bf16.gmra.mxu0 %v2023
      %v2154 = vpop.f32.mrf.mxu0
      %v2155 = vadd.f32 0.0, %v2154
      %v2156 = vpop.f32.mrf.mxu0
      %v2157 = vpop.f32.mrf.mxu0
      %v2158 = vadd.f32 0.0, %v2157
      %v2159 = vpop.f32.mrf.mxu0
      %2160 = vmatprep.mubr.bf16.mxu0 0
      %2161 = vmatmul.mubr.bf16.gmra.mxu0 %v2026
      %v2162 = vpop.f32.mrf.mxu0
      %v2163 = vadd.f32 0.0, %v2162
      %v2164 = vpop.f32.mrf.mxu0
      %v2165 = vpop.f32.mrf.mxu0
      %v2166 = vadd.f32 0.0, %v2165
      %v2167 = vpop.f32.mrf.mxu0
      %2168 = vmatprep.mubr.bf16.mxu0 0
      %2169 = vmatmul.mubr.bf16.gmra.mxu0 %v2029
      %v2170 = vpop.f32.mrf.mxu0
      %v2171 = vadd.f32 0.0, %v2170
      %v2172 = vpop.f32.mrf.mxu0
      %v2173 = vpop.f32.mrf.mxu0
      %v2174 = vadd.f32 0.0, %v2173
      %v2175 = vpop.f32.mrf.mxu0
      %2176 = vmatprep.mubr.bf16.mxu0 0
      %2177 = vmatmul.mubr.bf16.gmra.mxu0 %v2032
      %v2178 = vpop.f32.mrf.mxu0
      %v2179 = vadd.f32 0.0, %v2178
      %v2180 = vpop.f32.mrf.mxu0
      %v2181 = vpop.f32.mrf.mxu0
      %v2182 = vadd.f32 0.0, %v2181
      %v2183 = vpop.f32.mrf.mxu0
      %2184 = vmatprep.mubr.bf16.mxu0 0
      %2185 = vmatmul.mubr.bf16.gmra.mxu0 %v2035
      %v2186 = vpop.f32.mrf.mxu0
      %v2187 = vadd.f32 0.0, %v2186
      %v2188 = vpop.f32.mrf.mxu0
      %v2189 = vpop.f32.mrf.mxu0
      %v2190 = vadd.f32 0.0, %v2189
      %v2191 = vpop.f32.mrf.mxu0
      %2192 = vmatprep.mubr.bf16.mxu0 0
      %2193 = vmatmul.mubr.bf16.gmra.mxu0 %v2038
      %v2194 = vpop.f32.mrf.mxu0
      %v2195 = vadd.f32 0.0, %v2194
      %v2196 = vpop.f32.mrf.mxu0
      %v2197 = vpop.f32.mrf.mxu0
      %v2198 = vadd.f32 0.0, %v2197
      %v2199 = vpop.f32.mrf.mxu0
      %2200 = vdwg.mxu0
      %v2233 = vunpack.c.l.b16 %v647
      %v2234 = vunpack.c.l.b16 %v648
      %v2235 = vunpack.c.l.b16 %v649
      %v2236 = vunpack.c.l.b16 %v650
      %v2237 = vunpack.c.l.b16 %v651
      %v2238 = vunpack.c.l.b16 %v652
      %v2239 = vunpack.c.l.b16 %v653
      %v2240 = vunpack.c.l.b16 %v654
      %v2241 = vunpack.c.l.b16 %v655
      %v2242 = vunpack.c.l.b16 %v656
      %v2243 = vunpack.c.l.b16 %v657
      %v2244 = vunpack.c.l.b16 %v658
      %v2245 = vunpack.c.l.b16 %v659
      %v2246 = vunpack.c.l.b16 %v660
      %v2247 = vunpack.c.l.b16 %v661
      %v2248 = vunpack.c.l.b16 %v662
      %v2249 = vunpack.c.l.b16 %v663
      %v2250 = vunpack.c.l.b16 %v664
      %v2251 = vunpack.c.l.b16 %v665
      %v2252 = vunpack.c.l.b16 %v666
      %v2253 = vunpack.c.l.b16 %v667
      %v2254 = vunpack.c.l.b16 %v668
      %v2255 = vunpack.c.l.b16 %v669
      %v2256 = vunpack.c.l.b16 %v670
      %v2257 = vunpack.c.l.b16 %v671
      %v2258 = vunpack.c.l.b16 %v672
      %v2259 = vunpack.c.l.b16 %v673
      %v2260 = vunpack.c.l.b16 %v674
      %v2261 = vunpack.c.l.b16 %v675
      %v2262 = vunpack.c.l.b16 %v676
      %v2263 = vunpack.c.l.b16 %v677
      %v2264 = vunpack.c.l.b16 %v678
      %v2265 = vpack.c.b16 %v2234, %v2233
      %v2266 = vpack.c.b16 %v2236, %v2235
      %v2267 = vpack.c.b16 %v2238, %v2237
      %v2268 = vpack.c.b16 %v2240, %v2239
      %v2269 = vpack.c.b16 %v2242, %v2241
      %v2270 = vpack.c.b16 %v2244, %v2243
      %v2271 = vpack.c.b16 %v2246, %v2245
      %v2272 = vpack.c.b16 %v2248, %v2247
      %v2273 = vpack.c.b16 %v2250, %v2249
      %v2274 = vpack.c.b16 %v2252, %v2251
      %v2275 = vpack.c.b16 %v2254, %v2253
      %v2276 = vpack.c.b16 %v2256, %v2255
      %v2277 = vpack.c.b16 %v2258, %v2257
      %v2278 = vpack.c.b16 %v2260, %v2259
      %v2279 = vpack.c.b16 %v2262, %v2261
      %v2280 = vpack.c.b16 %v2264, %v2263
      %v2282 = vsel %vm831, %v2265, 0
      %v2285 = vsel %vm831, %v2266, 0
      %v2288 = vsel %vm831, %v2267, 0
      %v2291 = vsel %vm831, %v2268, 0
      %v2294 = vsel %vm831, %v2269, 0
      %v2297 = vsel %vm831, %v2270, 0
      %v2300 = vsel %vm831, %v2271, 0
      %v2303 = vsel %vm831, %v2272, 0
      %v2306 = vsel %vm831, %v2273, 0
      %v2309 = vsel %vm831, %v2274, 0
      %v2312 = vsel %vm831, %v2275, 0
      %v2315 = vsel %vm831, %v2276, 0
      %v2318 = vsel %vm831, %v2277, 0
      %v2321 = vsel %vm831, %v2278, 0
      %v2324 = vsel %vm831, %v2279, 0
      %v2327 = vsel %vm831, %v2280, 0
      %2329 = vmatprep.subr.bf16.mxu0 0
      %2330 = vmatpush1.bf16.msra.mxu0 0
      %2331 = vmatprep.subr.bf16.mxu0 0
      %2332 = vmatpush1.bf16.msra.mxu0 0
      %2333 = vmatprep.subr.bf16.mxu0 0
      %2334 = vmatpush1.bf16.msra.mxu0 0
      %2335 = vmatprep.subr.bf16.mxu0 0
      %2336 = vmatpush1.bf16.msra.mxu0 0
      %2337 = vmatprep.subr.bf16.mxu0 0
      %2338 = vmatpush1.bf16.msra.mxu0 0
      %2339 = vmatprep.subr.bf16.mxu0 0
      %2340 = vmatpush1.bf16.msra.mxu0 0
      %2341 = vmatprep.subr.bf16.mxu0 0
      %2342 = vmatpush1.bf16.msra.mxu0 0
      %2343 = vmatprep.subr.bf16.mxu0 0
      %2344 = vmatpush1.bf16.msra.mxu0 %v882
      %2345 = vmatprep.subr.bf16.mxu0 0
      %2346 = vmatpush2.bf16.msra.mxu0 0
      %2347 = vmatprep.subr.bf16.mxu0 0
      %2348 = vmatpush2.bf16.msra.mxu0 0
      %2349 = vmatprep.subr.bf16.mxu0 0
      %2350 = vmatpush2.bf16.msra.mxu0 0
      %2351 = vmatprep.subr.bf16.mxu0 0
      %2352 = vmatpush2.bf16.msra.mxu0 0
      %2353 = vmatprep.subr.bf16.mxu0 0
      %2354 = vmatpush2.bf16.msra.mxu0 0
      %2355 = vmatprep.subr.bf16.mxu0 0
      %2356 = vmatpush2.bf16.msra.mxu0 0
      %2357 = vmatprep.subr.bf16.mxu0 0
      %2358 = vmatpush2.bf16.msra.mxu0 0
      %2359 = vmatprep.subr.bf16.mxu0 0
      %2360 = vmatpush2.bf16.msra.mxu0 0
      %2361 = vmatprep.mubr.bf16.mxu0 0
      %2362 = vmatmul.mubr.bf16.gmra.mxu0 %v2282
      %v2363 = vpop.f32.mrf.mxu0
      %v2364 = vadd.f32 0.0, %v2363
      %v2365 = vpop.f32.mrf.mxu0
      %v2366 = vpop.f32.mrf.mxu0
      %v2367 = vadd.f32 0.0, %v2366
      %v2368 = vpop.f32.mrf.mxu0
      %2369 = vmatprep.mubr.bf16.mxu0 0
      %2370 = vmatmul.mubr.bf16.gmra.mxu0 %v2285
      %v2371 = vpop.f32.mrf.mxu0
      %v2372 = vadd.f32 0.0, %v2371
      %v2373 = vpop.f32.mrf.mxu0
      %v2374 = vpop.f32.mrf.mxu0
      %v2375 = vadd.f32 0.0, %v2374
      %v2376 = vpop.f32.mrf.mxu0
      %2377 = vmatprep.mubr.bf16.mxu0 0
      %2378 = vmatmul.mubr.bf16.gmra.mxu0 %v2288
      %v2379 = vpop.f32.mrf.mxu0
      %v2380 = vadd.f32 0.0, %v2379
      %v2381 = vpop.f32.mrf.mxu0
      %v2382 = vpop.f32.mrf.mxu0
      %v2383 = vadd.f32 0.0, %v2382
      %v2384 = vpop.f32.mrf.mxu0
      %2385 = vmatprep.mubr.bf16.mxu0 0
      %2386 = vmatmul.mubr.bf16.gmra.mxu0 %v2291
      %v2387 = vpop.f32.mrf.mxu0
      %v2388 = vadd.f32 0.0, %v2387
      %v2389 = vpop.f32.mrf.mxu0
      %v2390 = vpop.f32.mrf.mxu0
      %v2391 = vadd.f32 0.0, %v2390
      %v2392 = vpop.f32.mrf.mxu0
      %2393 = vmatprep.mubr.bf16.mxu0 0
      %2394 = vmatmul.mubr.bf16.gmra.mxu0 %v2294
      %v2395 = vpop.f32.mrf.mxu0
      %v2396 = vadd.f32 0.0, %v2395
      %v2397 = vpop.f32.mrf.mxu0
      %v2398 = vpop.f32.mrf.mxu0
      %v2399 = vadd.f32 0.0, %v2398
      %v2400 = vpop.f32.mrf.mxu0
      %2401 = vmatprep.mubr.bf16.mxu0 0
      %2402 = vmatmul.mubr.bf16.gmra.mxu0 %v2297
      %v2403 = vpop.f32.mrf.mxu0
      %v2404 = vadd.f32 0.0, %v2403
      %v2405 = vpop.f32.mrf.mxu0
      %v2406 = vpop.f32.mrf.mxu0
      %v2407 = vadd.f32 0.0, %v2406
      %v2408 = vpop.f32.mrf.mxu0
      %2409 = vmatprep.mubr.bf16.mxu0 0
      %2410 = vmatmul.mubr.bf16.gmra.mxu0 %v2300
      %v2411 = vpop.f32.mrf.mxu0
      %v2412 = vadd.f32 0.0, %v2411
      %v2413 = vpop.f32.mrf.mxu0
      %v2414 = vpop.f32.mrf.mxu0
      %v2415 = vadd.f32 0.0, %v2414
      %v2416 = vpop.f32.mrf.mxu0
      %2417 = vmatprep.mubr.bf16.mxu0 0
      %2418 = vmatmul.mubr.bf16.gmra.mxu0 %v2303
      %v2419 = vpop.f32.mrf.mxu0
      %v2420 = vadd.f32 0.0, %v2419
      %v2421 = vpop.f32.mrf.mxu0
      %v2422 = vpop.f32.mrf.mxu0
      %v2423 = vadd.f32 0.0, %v2422
      %v2424 = vpop.f32.mrf.mxu0
      %2425 = vmatprep.mubr.bf16.mxu0 0
      %2426 = vmatmul.mubr.bf16.gmra.mxu0 %v2306
      %v2427 = vpop.f32.mrf.mxu0
      %v2428 = vadd.f32 0.0, %v2427
      %v2429 = vpop.f32.mrf.mxu0
      %v2430 = vpop.f32.mrf.mxu0
      %v2431 = vadd.f32 0.0, %v2430
      %v2432 = vpop.f32.mrf.mxu0
      %2433 = vmatprep.mubr.bf16.mxu0 0
      %2434 = vmatmul.mubr.bf16.gmra.mxu0 %v2309
      %v2435 = vpop.f32.mrf.mxu0
      %v2436 = vadd.f32 0.0, %v2435
      %v2437 = vpop.f32.mrf.mxu0
      %v2438 = vpop.f32.mrf.mxu0
      %v2439 = vadd.f32 0.0, %v2438
      %v2440 = vpop.f32.mrf.mxu0
      %2441 = vmatprep.mubr.bf16.mxu0 0
      %2442 = vmatmul.mubr.bf16.gmra.mxu0 %v2312
      %v2443 = vpop.f32.mrf.mxu0
      %v2444 = vadd.f32 0.0, %v2443
      %v2445 = vpop.f32.mrf.mxu0
      %v2446 = vpop.f32.mrf.mxu0
      %v2447 = vadd.f32 0.0, %v2446
      %v2448 = vpop.f32.mrf.mxu0
      %2449 = vmatprep.mubr.bf16.mxu0 0
      %2450 = vmatmul.mubr.bf16.gmra.mxu0 %v2315
      %v2451 = vpop.f32.mrf.mxu0
      %v2452 = vadd.f32 0.0, %v2451
      %v2453 = vpop.f32.mrf.mxu0
      %v2454 = vpop.f32.mrf.mxu0
      %v2455 = vadd.f32 0.0, %v2454
      %v2456 = vpop.f32.mrf.mxu0
      %2457 = vmatprep.mubr.bf16.mxu0 0
      %2458 = vmatmul.mubr.bf16.gmra.mxu0 %v2318
      %v2459 = vpop.f32.mrf.mxu0
      %v2460 = vadd.f32 0.0, %v2459
      %v2461 = vpop.f32.mrf.mxu0
      %v2462 = vpop.f32.mrf.mxu0
      %v2463 = vadd.f32 0.0, %v2462
      %v2464 = vpop.f32.mrf.mxu0
      %2465 = vmatprep.mubr.bf16.mxu0 0
      %2466 = vmatmul.mubr.bf16.gmra.mxu0 %v2321
      %v2467 = vpop.f32.mrf.mxu0
      %v2468 = vadd.f32 0.0, %v2467
      %v2469 = vpop.f32.mrf.mxu0
      %v2470 = vpop.f32.mrf.mxu0
      %v2471 = vadd.f32 0.0, %v2470
      %v2472 = vpop.f32.mrf.mxu0
      %2473 = vmatprep.mubr.bf16.mxu0 0
      %2474 = vmatmul.mubr.bf16.gmra.mxu0 %v2324
      %v2475 = vpop.f32.mrf.mxu0
      %v2476 = vadd.f32 0.0, %v2475
      %v2477 = vpop.f32.mrf.mxu0
      %v2478 = vpop.f32.mrf.mxu0
      %v2479 = vadd.f32 0.0, %v2478
      %v2480 = vpop.f32.mrf.mxu0
      %2481 = vmatprep.mubr.bf16.mxu0 0
      %2482 = vmatmul.mubr.bf16.gmra.mxu0 %v2327
      %v2483 = vpop.f32.mrf.mxu0
      %v2484 = vadd.f32 0.0, %v2483
      %v2485 = vpop.f32.mrf.mxu0
      %v2486 = vpop.f32.mrf.mxu0
      %v2487 = vadd.f32 0.0, %v2486
      %v2488 = vpop.f32.mrf.mxu0
      %2489 = vdwg.mxu0
      %v2522 = vunpack.c.l.b16 %v679
      %v2523 = vunpack.c.l.b16 %v680
      %v2524 = vunpack.c.l.b16 %v681
      %v2525 = vunpack.c.l.b16 %v682
      %v2526 = vunpack.c.l.b16 %v683
      %v2527 = vunpack.c.l.b16 %v684
      %v2528 = vunpack.c.l.b16 %v685
      %v2529 = vunpack.c.l.b16 %v686
      %v2530 = vunpack.c.l.b16 %v687
      %v2531 = vunpack.c.l.b16 %v688
      %v2532 = vunpack.c.l.b16 %v689
      %v2533 = vunpack.c.l.b16 %v690
      %v2534 = vunpack.c.l.b16 %v691
      %v2535 = vunpack.c.l.b16 %v692
      %v2536 = vunpack.c.l.b16 %v693
      %v2537 = vunpack.c.l.b16 %v694
      %v2538 = vunpack.c.l.b16 %v695
      %v2539 = vunpack.c.l.b16 %v696
      %v2540 = vunpack.c.l.b16 %v697
      %v2541 = vunpack.c.l.b16 %v698
      %v2542 = vunpack.c.l.b16 %v699
      %v2543 = vunpack.c.l.b16 %v700
      %v2544 = vunpack.c.l.b16 %v701
      %v2545 = vunpack.c.l.b16 %v702
      %v2546 = vunpack.c.l.b16 %v703
      %v2547 = vunpack.c.l.b16 %v704
      %v2548 = vunpack.c.l.b16 %v705
      %v2549 = vunpack.c.l.b16 %v706
      %v2550 = vunpack.c.l.b16 %v707
      %v2551 = vunpack.c.l.b16 %v708
      %v2552 = vunpack.c.l.b16 %v709
      %v2553 = vunpack.c.l.b16 %v710
      %v2554 = vpack.c.b16 %v2523, %v2522
      %v2555 = vpack.c.b16 %v2525, %v2524
      %v2556 = vpack.c.b16 %v2527, %v2526
      %v2557 = vpack.c.b16 %v2529, %v2528
      %v2558 = vpack.c.b16 %v2531, %v2530
      %v2559 = vpack.c.b16 %v2533, %v2532
      %v2560 = vpack.c.b16 %v2535, %v2534
      %v2561 = vpack.c.b16 %v2537, %v2536
      %v2562 = vpack.c.b16 %v2539, %v2538
      %v2563 = vpack.c.b16 %v2541, %v2540
      %v2564 = vpack.c.b16 %v2543, %v2542
      %v2565 = vpack.c.b16 %v2545, %v2544
      %v2566 = vpack.c.b16 %v2547, %v2546
      %v2567 = vpack.c.b16 %v2549, %v2548
      %v2568 = vpack.c.b16 %v2551, %v2550
      %v2569 = vpack.c.b16 %v2553, %v2552
      %v2571 = vsel %vm831, %v2554, 0
      %v2574 = vsel %vm831, %v2555, 0
      %v2577 = vsel %vm831, %v2556, 0
      %v2580 = vsel %vm831, %v2557, 0
      %v2583 = vsel %vm831, %v2558, 0
      %v2586 = vsel %vm831, %v2559, 0
      %v2589 = vsel %vm831, %v2560, 0
      %v2592 = vsel %vm831, %v2561, 0
      %v2595 = vsel %vm831, %v2562, 0
      %v2598 = vsel %vm831, %v2563, 0
      %v2601 = vsel %vm831, %v2564, 0
      %v2604 = vsel %vm831, %v2565, 0
      %v2607 = vsel %vm831, %v2566, 0
      %v2610 = vsel %vm831, %v2567, 0
      %v2613 = vsel %vm831, %v2568, 0
      %v2616 = vsel %vm831, %v2569, 0
      %2618 = vmatprep.subr.bf16.mxu0 0
      %2619 = vmatpush1.bf16.msra.mxu0 0
      %2620 = vmatprep.subr.bf16.mxu0 0
      %2621 = vmatpush1.bf16.msra.mxu0 0
      %2622 = vmatprep.subr.bf16.mxu0 0
      %2623 = vmatpush1.bf16.msra.mxu0 0
      %2624 = vmatprep.subr.bf16.mxu0 0
      %2625 = vmatpush1.bf16.msra.mxu0 0
      %2626 = vmatprep.subr.bf16.mxu0 0
      %2627 = vmatpush1.bf16.msra.mxu0 0
      %2628 = vmatprep.subr.bf16.mxu0 0
      %2629 = vmatpush1.bf16.msra.mxu0 0
      %2630 = vmatprep.subr.bf16.mxu0 0
      %2631 = vmatpush1.bf16.msra.mxu0 0
      %2632 = vmatprep.subr.bf16.mxu0 0
      %2633 = vmatpush1.bf16.msra.mxu0 %v882
      %2634 = vmatprep.subr.bf16.mxu0 0
      %2635 = vmatpush2.bf16.msra.mxu0 0
      %2636 = vmatprep.subr.bf16.mxu0 0
      %2637 = vmatpush2.bf16.msra.mxu0 0
      %2638 = vmatprep.subr.bf16.mxu0 0
      %2639 = vmatpush2.bf16.msra.mxu0 0
      %2640 = vmatprep.subr.bf16.mxu0 0
      %2641 = vmatpush2.bf16.msra.mxu0 0
      %2642 = vmatprep.subr.bf16.mxu0 0
      %2643 = vmatpush2.bf16.msra.mxu0 0
      %2644 = vmatprep.subr.bf16.mxu0 0
      %2645 = vmatpush2.bf16.msra.mxu0 0
      %2646 = vmatprep.subr.bf16.mxu0 0
      %2647 = vmatpush2.bf16.msra.mxu0 0
      %2648 = vmatprep.subr.bf16.mxu0 0
      %2649 = vmatpush2.bf16.msra.mxu0 0
      %2650 = vmatprep.mubr.bf16.mxu0 0
      %2651 = vmatmul.mubr.bf16.gmra.mxu0 %v2571
      %v2652 = vpop.f32.mrf.mxu0
      %v2653 = vadd.f32 0.0, %v2652
      %v2654 = vpop.f32.mrf.mxu0
      %v2655 = vpop.f32.mrf.mxu0
      %v2656 = vadd.f32 0.0, %v2655
      %v2657 = vpop.f32.mrf.mxu0
      %2658 = vmatprep.mubr.bf16.mxu0 0
      %2659 = vmatmul.mubr.bf16.gmra.mxu0 %v2574
      %v2660 = vpop.f32.mrf.mxu0
      %v2661 = vadd.f32 0.0, %v2660
      %v2662 = vpop.f32.mrf.mxu0
      %v2663 = vpop.f32.mrf.mxu0
      %v2664 = vadd.f32 0.0, %v2663
      %v2665 = vpop.f32.mrf.mxu0
      %2666 = vmatprep.mubr.bf16.mxu0 0
      %2667 = vmatmul.mubr.bf16.gmra.mxu0 %v2577
      %v2668 = vpop.f32.mrf.mxu0
      %v2669 = vadd.f32 0.0, %v2668
      %v2670 = vpop.f32.mrf.mxu0
      %v2671 = vpop.f32.mrf.mxu0
      %v2672 = vadd.f32 0.0, %v2671
      %v2673 = vpop.f32.mrf.mxu0
      %2674 = vmatprep.mubr.bf16.mxu0 0
      %2675 = vmatmul.mubr.bf16.gmra.mxu0 %v2580
      %v2676 = vpop.f32.mrf.mxu0
      %v2677 = vadd.f32 0.0, %v2676
      %v2678 = vpop.f32.mrf.mxu0
      %v2679 = vpop.f32.mrf.mxu0
      %v2680 = vadd.f32 0.0, %v2679
      %v2681 = vpop.f32.mrf.mxu0
      %2682 = vmatprep.mubr.bf16.mxu0 0
      %2683 = vmatmul.mubr.bf16.gmra.mxu0 %v2583
      %v2684 = vpop.f32.mrf.mxu0
      %v2685 = vadd.f32 0.0, %v2684
      %v2686 = vpop.f32.mrf.mxu0
      %v2687 = vpop.f32.mrf.mxu0
      %v2688 = vadd.f32 0.0, %v2687
      %v2689 = vpop.f32.mrf.mxu0
      %2690 = vmatprep.mubr.bf16.mxu0 0
      %2691 = vmatmul.mubr.bf16.gmra.mxu0 %v2586
      %v2692 = vpop.f32.mrf.mxu0
      %v2693 = vadd.f32 0.0, %v2692
      %v2694 = vpop.f32.mrf.mxu0
      %v2695 = vpop.f32.mrf.mxu0
      %v2696 = vadd.f32 0.0, %v2695
      %v2697 = vpop.f32.mrf.mxu0
      %2698 = vmatprep.mubr.bf16.mxu0 0
      %2699 = vmatmul.mubr.bf16.gmra.mxu0 %v2589
      %v2700 = vpop.f32.mrf.mxu0
      %v2701 = vadd.f32 0.0, %v2700
      %v2702 = vpop.f32.mrf.mxu0
      %v2703 = vpop.f32.mrf.mxu0
      %v2704 = vadd.f32 0.0, %v2703
      %v2705 = vpop.f32.mrf.mxu0
      %2706 = vmatprep.mubr.bf16.mxu0 0
      %2707 = vmatmul.mubr.bf16.gmra.mxu0 %v2592
      %v2708 = vpop.f32.mrf.mxu0
      %v2709 = vadd.f32 0.0, %v2708
      %v2710 = vpop.f32.mrf.mxu0
      %v2711 = vpop.f32.mrf.mxu0
      %v2712 = vadd.f32 0.0, %v2711
      %v2713 = vpop.f32.mrf.mxu0
      %2714 = vmatprep.mubr.bf16.mxu0 0
      %2715 = vmatmul.mubr.bf16.gmra.mxu0 %v2595
      %v2716 = vpop.f32.mrf.mxu0
      %v2717 = vadd.f32 0.0, %v2716
      %v2718 = vpop.f32.mrf.mxu0
      %v2719 = vpop.f32.mrf.mxu0
      %v2720 = vadd.f32 0.0, %v2719
      %v2721 = vpop.f32.mrf.mxu0
      %2722 = vmatprep.mubr.bf16.mxu0 0
      %2723 = vmatmul.mubr.bf16.gmra.mxu0 %v2598
      %v2724 = vpop.f32.mrf.mxu0
      %v2725 = vadd.f32 0.0, %v2724
      %v2726 = vpop.f32.mrf.mxu0
      %v2727 = vpop.f32.mrf.mxu0
      %v2728 = vadd.f32 0.0, %v2727
      %v2729 = vpop.f32.mrf.mxu0
      %2730 = vmatprep.mubr.bf16.mxu0 0
      %2731 = vmatmul.mubr.bf16.gmra.mxu0 %v2601
      %v2732 = vpop.f32.mrf.mxu0
      %v2733 = vadd.f32 0.0, %v2732
      %v2734 = vpop.f32.mrf.mxu0
      %v2735 = vpop.f32.mrf.mxu0
      %v2736 = vadd.f32 0.0, %v2735
      %v2737 = vpop.f32.mrf.mxu0
      %2738 = vmatprep.mubr.bf16.mxu0 0
      %2739 = vmatmul.mubr.bf16.gmra.mxu0 %v2604
      %v2740 = vpop.f32.mrf.mxu0
      %v2741 = vadd.f32 0.0, %v2740
      %v2742 = vpop.f32.mrf.mxu0
      %v2743 = vpop.f32.mrf.mxu0
      %v2744 = vadd.f32 0.0, %v2743
      %v2745 = vpop.f32.mrf.mxu0
      %2746 = vmatprep.mubr.bf16.mxu0 0
      %2747 = vmatmul.mubr.bf16.gmra.mxu0 %v2607
      %v2748 = vpop.f32.mrf.mxu0
      %v2749 = vadd.f32 0.0, %v2748
      %v2750 = vpop.f32.mrf.mxu0
      %v2751 = vpop.f32.mrf.mxu0
      %v2752 = vadd.f32 0.0, %v2751
      %v2753 = vpop.f32.mrf.mxu0
      %2754 = vmatprep.mubr.bf16.mxu0 0
      %2755 = vmatmul.mubr.bf16.gmra.mxu0 %v2610
      %v2756 = vpop.f32.mrf.mxu0
      %v2757 = vadd.f32 0.0, %v2756
      %v2758 = vpop.f32.mrf.mxu0
      %v2759 = vpop.f32.mrf.mxu0
      %v2760 = vadd.f32 0.0, %v2759
      %v2761 = vpop.f32.mrf.mxu0
      %2762 = vmatprep.mubr.bf16.mxu0 0
      %2763 = vmatmul.mubr.bf16.gmra.mxu0 %v2613
      %v2764 = vpop.f32.mrf.mxu0
      %v2765 = vadd.f32 0.0, %v2764
      %v2766 = vpop.f32.mrf.mxu0
      %v2767 = vpop.f32.mrf.mxu0
      %v2768 = vadd.f32 0.0, %v2767
      %v2769 = vpop.f32.mrf.mxu0
      %2770 = vmatprep.mubr.bf16.mxu0 0
      %2771 = vmatmul.mubr.bf16.gmra.mxu0 %v2616
      %v2772 = vpop.f32.mrf.mxu0
      %v2773 = vadd.f32 0.0, %v2772
      %v2774 = vpop.f32.mrf.mxu0
      %v2775 = vpop.f32.mrf.mxu0
      %v2776 = vadd.f32 0.0, %v2775
      %v2777 = vpop.f32.mrf.mxu0
      %2778 = vdwg.mxu0
      %v2811 = vunpack.c.l.b16 %v711
      %v2812 = vunpack.c.l.b16 %v712
      %v2813 = vunpack.c.l.b16 %v713
      %v2814 = vunpack.c.l.b16 %v714
      %v2815 = vunpack.c.l.b16 %v715
      %v2816 = vunpack.c.l.b16 %v716
      %v2817 = vunpack.c.l.b16 %v717
      %v2818 = vunpack.c.l.b16 %v718
      %v2819 = vunpack.c.l.b16 %v719
      %v2820 = vunpack.c.l.b16 %v720
      %v2821 = vunpack.c.l.b16 %v721
      %v2822 = vunpack.c.l.b16 %v722
      %v2823 = vunpack.c.l.b16 %v723
      %v2824 = vunpack.c.l.b16 %v724
      %v2825 = vunpack.c.l.b16 %v725
      %v2826 = vunpack.c.l.b16 %v726
      %v2827 = vunpack.c.l.b16 %v727
      %v2828 = vunpack.c.l.b16 %v728
      %v2829 = vunpack.c.l.b16 %v729
      %v2830 = vunpack.c.l.b16 %v730
      %v2831 = vunpack.c.l.b16 %v731
      %v2832 = vunpack.c.l.b16 %v732
      %v2833 = vunpack.c.l.b16 %v733
      %v2834 = vunpack.c.l.b16 %v734
      %v2835 = vunpack.c.l.b16 %v735
      %v2836 = vunpack.c.l.b16 %v736
      %v2837 = vunpack.c.l.b16 %v737
      %v2838 = vunpack.c.l.b16 %v738
      %v2839 = vunpack.c.l.b16 %v739
      %v2840 = vunpack.c.l.b16 %v740
      %v2841 = vunpack.c.l.b16 %v741
      %v2842 = vunpack.c.l.b16 %v742
      %v2843 = vpack.c.b16 %v2812, %v2811
      %v2844 = vpack.c.b16 %v2814, %v2813
      %v2845 = vpack.c.b16 %v2816, %v2815
      %v2846 = vpack.c.b16 %v2818, %v2817
      %v2847 = vpack.c.b16 %v2820, %v2819
      %v2848 = vpack.c.b16 %v2822, %v2821
      %v2849 = vpack.c.b16 %v2824, %v2823
      %v2850 = vpack.c.b16 %v2826, %v2825
      %v2851 = vpack.c.b16 %v2828, %v2827
      %v2852 = vpack.c.b16 %v2830, %v2829
      %v2853 = vpack.c.b16 %v2832, %v2831
      %v2854 = vpack.c.b16 %v2834, %v2833
      %v2855 = vpack.c.b16 %v2836, %v2835
      %v2856 = vpack.c.b16 %v2838, %v2837
      %v2857 = vpack.c.b16 %v2840, %v2839
      %v2858 = vpack.c.b16 %v2842, %v2841
      %v2860 = vsel %vm831, %v2843, 0
      %v2863 = vsel %vm831, %v2844, 0
      %v2866 = vsel %vm831, %v2845, 0
      %v2869 = vsel %vm831, %v2846, 0
      %v2872 = vsel %vm831, %v2847, 0
      %v2875 = vsel %vm831, %v2848, 0
      %v2878 = vsel %vm831, %v2849, 0
      %v2881 = vsel %vm831, %v2850, 0
      %v2884 = vsel %vm831, %v2851, 0
      %v2887 = vsel %vm831, %v2852, 0
      %v2890 = vsel %vm831, %v2853, 0
      %v2893 = vsel %vm831, %v2854, 0
      %v2896 = vsel %vm831, %v2855, 0
      %v2899 = vsel %vm831, %v2856, 0
      %v2902 = vsel %vm831, %v2857, 0
      %v2905 = vsel %vm831, %v2858, 0
      %2907 = vmatprep.subr.bf16.mxu0 0
      %2908 = vmatpush1.bf16.msra.mxu0 0
      %2909 = vmatprep.subr.bf16.mxu0 0
      %2910 = vmatpush1.bf16.msra.mxu0 0
      %2911 = vmatprep.subr.bf16.mxu0 0
      %2912 = vmatpush1.bf16.msra.mxu0 0
      %2913 = vmatprep.subr.bf16.mxu0 0
      %2914 = vmatpush1.bf16.msra.mxu0 0
      %2915 = vmatprep.subr.bf16.mxu0 0
      %2916 = vmatpush1.bf16.msra.mxu0 0
      %2917 = vmatprep.subr.bf16.mxu0 0
      %2918 = vmatpush1.bf16.msra.mxu0 0
      %2919 = vmatprep.subr.bf16.mxu0 0
      %2920 = vmatpush1.bf16.msra.mxu0 0
      %2921 = vmatprep.subr.bf16.mxu0 0
      %2922 = vmatpush1.bf16.msra.mxu0 %v882
      %2923 = vmatprep.subr.bf16.mxu0 0
      %2924 = vmatpush2.bf16.msra.mxu0 0
      %2925 = vmatprep.subr.bf16.mxu0 0
      %2926 = vmatpush2.bf16.msra.mxu0 0
      %2927 = vmatprep.subr.bf16.mxu0 0
      %2928 = vmatpush2.bf16.msra.mxu0 0
      %2929 = vmatprep.subr.bf16.mxu0 0
      %2930 = vmatpush2.bf16.msra.mxu0 0
      %2931 = vmatprep.subr.bf16.mxu0 0
      %2932 = vmatpush2.bf16.msra.mxu0 0
      %2933 = vmatprep.subr.bf16.mxu0 0
      %2934 = vmatpush2.bf16.msra.mxu0 0
      %2935 = vmatprep.subr.bf16.mxu0 0
      %2936 = vmatpush2.bf16.msra.mxu0 0
      %2937 = vmatprep.subr.bf16.mxu0 0
      %2938 = vmatpush2.bf16.msra.mxu0 0
      %2939 = vmatprep.mubr.bf16.mxu0 0
      %2940 = vmatmul.mubr.bf16.gmra.mxu0 %v2860
      %v2941 = vpop.f32.mrf.mxu0
      %v2942 = vadd.f32 0.0, %v2941
      %v2943 = vpop.f32.mrf.mxu0
      %v2944 = vpop.f32.mrf.mxu0
      %v2945 = vadd.f32 0.0, %v2944
      %v2946 = vpop.f32.mrf.mxu0
      %2947 = vmatprep.mubr.bf16.mxu0 0
      %2948 = vmatmul.mubr.bf16.gmra.mxu0 %v2863
      %v2949 = vpop.f32.mrf.mxu0
      %v2950 = vadd.f32 0.0, %v2949
      %v2951 = vpop.f32.mrf.mxu0
      %v2952 = vpop.f32.mrf.mxu0
      %v2953 = vadd.f32 0.0, %v2952
      %v2954 = vpop.f32.mrf.mxu0
      %2955 = vmatprep.mubr.bf16.mxu0 0
      %2956 = vmatmul.mubr.bf16.gmra.mxu0 %v2866
      %v2957 = vpop.f32.mrf.mxu0
      %v2958 = vadd.f32 0.0, %v2957
      %v2959 = vpop.f32.mrf.mxu0
      %v2960 = vpop.f32.mrf.mxu0
      %v2961 = vadd.f32 0.0, %v2960
      %v2962 = vpop.f32.mrf.mxu0
      %2963 = vmatprep.mubr.bf16.mxu0 0
      %2964 = vmatmul.mubr.bf16.gmra.mxu0 %v2869
      %v2965 = vpop.f32.mrf.mxu0
      %v2966 = vadd.f32 0.0, %v2965
      %v2967 = vpop.f32.mrf.mxu0
      %v2968 = vpop.f32.mrf.mxu0
      %v2969 = vadd.f32 0.0, %v2968
      %v2970 = vpop.f32.mrf.mxu0
      %2971 = vmatprep.mubr.bf16.mxu0 0
      %2972 = vmatmul.mubr.bf16.gmra.mxu0 %v2872
      %v2973 = vpop.f32.mrf.mxu0
      %v2974 = vadd.f32 0.0, %v2973
      %v2975 = vpop.f32.mrf.mxu0
      %v2976 = vpop.f32.mrf.mxu0
      %v2977 = vadd.f32 0.0, %v2976
      %v2978 = vpop.f32.mrf.mxu0
      %2979 = vmatprep.mubr.bf16.mxu0 0
      %2980 = vmatmul.mubr.bf16.gmra.mxu0 %v2875
      %v2981 = vpop.f32.mrf.mxu0
      %v2982 = vadd.f32 0.0, %v2981
      %v2983 = vpop.f32.mrf.mxu0
      %v2984 = vpop.f32.mrf.mxu0
      %v2985 = vadd.f32 0.0, %v2984
      %v2986 = vpop.f32.mrf.mxu0
      %2987 = vmatprep.mubr.bf16.mxu0 0
      %2988 = vmatmul.mubr.bf16.gmra.mxu0 %v2878
      %v2989 = vpop.f32.mrf.mxu0
      %v2990 = vadd.f32 0.0, %v2989
      %v2991 = vpop.f32.mrf.mxu0
      %v2992 = vpop.f32.mrf.mxu0
      %v2993 = vadd.f32 0.0, %v2992
      %v2994 = vpop.f32.mrf.mxu0
      %2995 = vmatprep.mubr.bf16.mxu0 0
      %2996 = vmatmul.mubr.bf16.gmra.mxu0 %v2881
      %v2997 = vpop.f32.mrf.mxu0
      %v2998 = vadd.f32 0.0, %v2997
      %v2999 = vpop.f32.mrf.mxu0
      %v3000 = vpop.f32.mrf.mxu0
      %v3001 = vadd.f32 0.0, %v3000
      %v3002 = vpop.f32.mrf.mxu0
      %3003 = vmatprep.mubr.bf16.mxu0 0
      %3004 = vmatmul.mubr.bf16.gmra.mxu0 %v2884
      %v3005 = vpop.f32.mrf.mxu0
      %v3006 = vadd.f32 0.0, %v3005
      %v3007 = vpop.f32.mrf.mxu0
      %v3008 = vpop.f32.mrf.mxu0
      %v3009 = vadd.f32 0.0, %v3008
      %v3010 = vpop.f32.mrf.mxu0
      %3011 = vmatprep.mubr.bf16.mxu0 0
      %3012 = vmatmul.mubr.bf16.gmra.mxu0 %v2887
      %v3013 = vpop.f32.mrf.mxu0
      %v3014 = vadd.f32 0.0, %v3013
      %v3015 = vpop.f32.mrf.mxu0
      %v3016 = vpop.f32.mrf.mxu0
      %v3017 = vadd.f32 0.0, %v3016
      %v3018 = vpop.f32.mrf.mxu0
      %3019 = vmatprep.mubr.bf16.mxu0 0
      %3020 = vmatmul.mubr.bf16.gmra.mxu0 %v2890
      %v3021 = vpop.f32.mrf.mxu0
      %v3022 = vadd.f32 0.0, %v3021
      %v3023 = vpop.f32.mrf.mxu0
      %v3024 = vpop.f32.mrf.mxu0
      %v3025 = vadd.f32 0.0, %v3024
      %v3026 = vpop.f32.mrf.mxu0
      %3027 = vmatprep.mubr.bf16.mxu0 0
      %3028 = vmatmul.mubr.bf16.gmra.mxu0 %v2893
      %v3029 = vpop.f32.mrf.mxu0
      %v3030 = vadd.f32 0.0, %v3029
      %v3031 = vpop.f32.mrf.mxu0
      %v3032 = vpop.f32.mrf.mxu0
      %v3033 = vadd.f32 0.0, %v3032
      %v3034 = vpop.f32.mrf.mxu0
      %3035 = vmatprep.mubr.bf16.mxu0 0
      %3036 = vmatmul.mubr.bf16.gmra.mxu0 %v2896
      %v3037 = vpop.f32.mrf.mxu0
      %v3038 = vadd.f32 0.0, %v3037
      %v3039 = vpop.f32.mrf.mxu0
      %v3040 = vpop.f32.mrf.mxu0
      %v3041 = vadd.f32 0.0, %v3040
      %v3042 = vpop.f32.mrf.mxu0
      %3043 = vmatprep.mubr.bf16.mxu0 0
      %3044 = vmatmul.mubr.bf16.gmra.mxu0 %v2899
      %v3045 = vpop.f32.mrf.mxu0
      %v3046 = vadd.f32 0.0, %v3045
      %v3047 = vpop.f32.mrf.mxu0
      %v3048 = vpop.f32.mrf.mxu0
      %v3049 = vadd.f32 0.0, %v3048
      %v3050 = vpop.f32.mrf.mxu0
      %3051 = vmatprep.mubr.bf16.mxu0 0
      %3052 = vmatmul.mubr.bf16.gmra.mxu0 %v2902
      %v3053 = vpop.f32.mrf.mxu0
      %v3054 = vadd.f32 0.0, %v3053
      %v3055 = vpop.f32.mrf.mxu0
      %v3056 = vpop.f32.mrf.mxu0
      %v3057 = vadd.f32 0.0, %v3056
      %v3058 = vpop.f32.mrf.mxu0
      %3059 = vmatprep.mubr.bf16.mxu0 0
      %3060 = vmatmul.mubr.bf16.gmra.mxu0 %v2905
      %v3061 = vpop.f32.mrf.mxu0
      %v3062 = vadd.f32 0.0, %v3061
      %v3063 = vpop.f32.mrf.mxu0
      %v3064 = vpop.f32.mrf.mxu0
      %v3065 = vadd.f32 0.0, %v3064
      %v3066 = vpop.f32.mrf.mxu0
      %3067 = vdwg.mxu0
      %v3100 = vunpack.c.l.b16 %v229
      %v3101 = vunpack.c.l.b16 %v230
      %v3102 = vunpack.c.l.b16 %v231
      %v3103 = vunpack.c.l.b16 %v232
      %v3104 = vunpack.c.l.b16 %v233
      %v3105 = vunpack.c.l.b16 %v234
      %v3106 = vunpack.c.l.b16 %v235
      %v3107 = vunpack.c.l.b16 %v236
      %v3108 = vunpack.c.l.b16 %v237
      %v3109 = vunpack.c.l.b16 %v238
      %v3110 = vunpack.c.l.b16 %v239
      %v3111 = vunpack.c.l.b16 %v240
      %v3112 = vunpack.c.l.b16 %v241
      %v3113 = vunpack.c.l.b16 %v242
      %v3114 = vunpack.c.l.b16 %v243
      %v3115 = vunpack.c.l.b16 %v244
      %v3116 = vunpack.c.l.b16 %v245
      %v3117 = vunpack.c.l.b16 %v246
      %v3118 = vunpack.c.l.b16 %v247
      %v3119 = vunpack.c.l.b16 %v248
      %v3120 = vunpack.c.l.b16 %v249
      %v3121 = vunpack.c.l.b16 %v250
      %v3122 = vunpack.c.l.b16 %v251
      %v3123 = vunpack.c.l.b16 %v252
      %v3124 = vunpack.c.l.b16 %v253
      %v3125 = vunpack.c.l.b16 %v254
      %v3126 = vunpack.c.l.b16 %v255
      %v3127 = vunpack.c.l.b16 %v256
      %v3128 = vunpack.c.l.b16 %v257
      %v3129 = vunpack.c.l.b16 %v258
      %v3130 = vunpack.c.l.b16 %v259
      %v3131 = vunpack.c.l.b16 %v260
      %v3132 = vpack.c.b16 %v3101, %v3100
      %v3133 = vpack.c.b16 %v3103, %v3102
      %v3134 = vpack.c.b16 %v3105, %v3104
      %v3135 = vpack.c.b16 %v3107, %v3106
      %v3136 = vpack.c.b16 %v3109, %v3108
      %v3137 = vpack.c.b16 %v3111, %v3110
      %v3138 = vpack.c.b16 %v3113, %v3112
      %v3139 = vpack.c.b16 %v3115, %v3114
      %v3140 = vpack.c.b16 %v3117, %v3116
      %v3141 = vpack.c.b16 %v3119, %v3118
      %v3142 = vpack.c.b16 %v3121, %v3120
      %v3143 = vpack.c.b16 %v3123, %v3122
      %v3144 = vpack.c.b16 %v3125, %v3124
      %v3145 = vpack.c.b16 %v3127, %v3126
      %v3146 = vpack.c.b16 %v3129, %v3128
      %v3147 = vpack.c.b16 %v3131, %v3130
      %v3150 = vunpack.c.l.b16 %v485
      %v3151 = vunpack.c.l.b16 %v486
      %v3152 = vpack.c.b16 %v3151, %v3150
      %v3154 = vsel %vm831, %v3132, 0
      %v3157 = vsel %vm831, %v3133, 0
      %v3160 = vsel %vm831, %v3134, 0
      %v3163 = vsel %vm831, %v3135, 0
      %v3166 = vsel %vm831, %v3136, 0
      %v3169 = vsel %vm831, %v3137, 0
      %v3172 = vsel %vm831, %v3138, 0
      %v3175 = vsel %vm831, %v3139, 0
      %v3178 = vsel %vm831, %v3140, 0
      %v3181 = vsel %vm831, %v3141, 0
      %v3184 = vsel %vm831, %v3142, 0
      %v3187 = vsel %vm831, %v3143, 0
      %v3190 = vsel %vm831, %v3144, 0
      %v3193 = vsel %vm831, %v3145, 0
      %v3196 = vsel %vm831, %v3146, 0
      %v3199 = vsel %vm831, %v3147, 0
      %v3202 = vsel %vm880, %v3152, 0
      %3204 = vmatprep.subr.bf16.mxu0 0
      %3205 = vmatpush1.bf16.msra.mxu0 0
      %3206 = vmatprep.subr.bf16.mxu0 0
      %3207 = vmatpush1.bf16.msra.mxu0 0
      %3208 = vmatprep.subr.bf16.mxu0 0
      %3209 = vmatpush1.bf16.msra.mxu0 0
      %3210 = vmatprep.subr.bf16.mxu0 0
      %3211 = vmatpush1.bf16.msra.mxu0 0
      %3212 = vmatprep.subr.bf16.mxu0 0
      %3213 = vmatpush1.bf16.msra.mxu0 0
      %3214 = vmatprep.subr.bf16.mxu0 0
      %3215 = vmatpush1.bf16.msra.mxu0 0
      %3216 = vmatprep.subr.bf16.mxu0 0
      %3217 = vmatpush1.bf16.msra.mxu0 0
      %3218 = vmatprep.subr.bf16.mxu0 0
      %3219 = vmatpush1.bf16.msra.mxu0 %v3202
      %3220 = vmatprep.subr.bf16.mxu0 0
      %3221 = vmatpush2.bf16.msra.mxu0 0
      %3222 = vmatprep.subr.bf16.mxu0 0
      %3223 = vmatpush2.bf16.msra.mxu0 0
      %3224 = vmatprep.subr.bf16.mxu0 0
      %3225 = vmatpush2.bf16.msra.mxu0 0
      %3226 = vmatprep.subr.bf16.mxu0 0
      %3227 = vmatpush2.bf16.msra.mxu0 0
      %3228 = vmatprep.subr.bf16.mxu0 0
      %3229 = vmatpush2.bf16.msra.mxu0 0
      %3230 = vmatprep.subr.bf16.mxu0 0
      %3231 = vmatpush2.bf16.msra.mxu0 0
      %3232 = vmatprep.subr.bf16.mxu0 0
      %3233 = vmatpush2.bf16.msra.mxu0 0
      %3234 = vmatprep.subr.bf16.mxu0 0
      %3235 = vmatpush2.bf16.msra.mxu0 0
      %3236 = vmatprep.mubr.bf16.mxu0 0
      %3237 = vmatmul.mubr.bf16.gmra.mxu0 %v3154
      %v3238 = vpop.f32.mrf.mxu0
      %v3239 = vadd.f32 %v919, %v3238
      %v3240 = vpop.f32.mrf.mxu0
      %v3241 = vpop.f32.mrf.mxu0
      %v3242 = vadd.f32 %v922, %v3241
      %v3243 = vpop.f32.mrf.mxu0
      %3244 = vmatprep.mubr.bf16.mxu0 0
      %3245 = vmatmul.mubr.bf16.gmra.mxu0 %v3157
      %v3246 = vpop.f32.mrf.mxu0
      %v3247 = vadd.f32 %v927, %v3246
      %v3248 = vpop.f32.mrf.mxu0
      %v3249 = vpop.f32.mrf.mxu0
      %v3250 = vadd.f32 %v930, %v3249
      %v3251 = vpop.f32.mrf.mxu0
      %3252 = vmatprep.mubr.bf16.mxu0 0
      %3253 = vmatmul.mubr.bf16.gmra.mxu0 %v3160
      %v3254 = vpop.f32.mrf.mxu0
      %v3255 = vadd.f32 %v935, %v3254
      %v3256 = vpop.f32.mrf.mxu0
      %v3257 = vpop.f32.mrf.mxu0
      %v3258 = vadd.f32 %v938, %v3257
      %v3259 = vpop.f32.mrf.mxu0
      %3260 = vmatprep.mubr.bf16.mxu0 0
      %3261 = vmatmul.mubr.bf16.gmra.mxu0 %v3163
      %v3262 = vpop.f32.mrf.mxu0
      %v3263 = vadd.f32 %v943, %v3262
      %v3264 = vpop.f32.mrf.mxu0
      %v3265 = vpop.f32.mrf.mxu0
      %v3266 = vadd.f32 %v946, %v3265
      %v3267 = vpop.f32.mrf.mxu0
      %3268 = vmatprep.mubr.bf16.mxu0 0
      %3269 = vmatmul.mubr.bf16.gmra.mxu0 %v3166
      %v3270 = vpop.f32.mrf.mxu0
      %v3271 = vadd.f32 %v951, %v3270
      %v3272 = vpop.f32.mrf.mxu0
      %v3273 = vpop.f32.mrf.mxu0
      %v3274 = vadd.f32 %v954, %v3273
      %v3275 = vpop.f32.mrf.mxu0
      %3276 = vmatprep.mubr.bf16.mxu0 0
      %3277 = vmatmul.mubr.bf16.gmra.mxu0 %v3169
      %v3278 = vpop.f32.mrf.mxu0
      %v3279 = vadd.f32 %v959, %v3278
      %v3280 = vpop.f32.mrf.mxu0
      %v3281 = vpop.f32.mrf.mxu0
      %v3282 = vadd.f32 %v962, %v3281
      %v3283 = vpop.f32.mrf.mxu0
      %3284 = vmatprep.mubr.bf16.mxu0 0
      %3285 = vmatmul.mubr.bf16.gmra.mxu0 %v3172
      %v3286 = vpop.f32.mrf.mxu0
      %v3287 = vadd.f32 %v967, %v3286
      %v3288 = vpop.f32.mrf.mxu0
      %v3289 = vpop.f32.mrf.mxu0
      %v3290 = vadd.f32 %v970, %v3289
      %v3291 = vpop.f32.mrf.mxu0
      %3292 = vmatprep.mubr.bf16.mxu0 0
      %3293 = vmatmul.mubr.bf16.gmra.mxu0 %v3175
      %v3294 = vpop.f32.mrf.mxu0
      %v3295 = vadd.f32 %v975, %v3294
      %v3296 = vpop.f32.mrf.mxu0
      %v3297 = vpop.f32.mrf.mxu0
      %v3298 = vadd.f32 %v978, %v3297
      %v3299 = vpop.f32.mrf.mxu0
      %3300 = vmatprep.mubr.bf16.mxu0 0
      %3301 = vmatmul.mubr.bf16.gmra.mxu0 %v3178
      %v3302 = vpop.f32.mrf.mxu0
      %v3303 = vadd.f32 %v983, %v3302
      %v3304 = vpop.f32.mrf.mxu0
      %v3305 = vpop.f32.mrf.mxu0
      %v3306 = vadd.f32 %v986, %v3305
      %v3307 = vpop.f32.mrf.mxu0
      %3308 = vmatprep.mubr.bf16.mxu0 0
      %3309 = vmatmul.mubr.bf16.gmra.mxu0 %v3181
      %v3310 = vpop.f32.mrf.mxu0
      %v3311 = vadd.f32 %v991, %v3310
      %v3312 = vpop.f32.mrf.mxu0
      %v3313 = vpop.f32.mrf.mxu0
      %v3314 = vadd.f32 %v994, %v3313
      %v3315 = vpop.f32.mrf.mxu0
      %3316 = vmatprep.mubr.bf16.mxu0 0
      %3317 = vmatmul.mubr.bf16.gmra.mxu0 %v3184
      %v3318 = vpop.f32.mrf.mxu0
      %v3319 = vadd.f32 %v999, %v3318
      %v3320 = vpop.f32.mrf.mxu0
      %v3321 = vpop.f32.mrf.mxu0
      %v3322 = vadd.f32 %v1002, %v3321
      %v3323 = vpop.f32.mrf.mxu0
      %3324 = vmatprep.mubr.bf16.mxu0 0
      %3325 = vmatmul.mubr.bf16.gmra.mxu0 %v3187
      %v3326 = vpop.f32.mrf.mxu0
      %v3327 = vadd.f32 %v1007, %v3326
      %v3328 = vpop.f32.mrf.mxu0
      %v3329 = vpop.f32.mrf.mxu0
      %v3330 = vadd.f32 %v1010, %v3329
      %v3331 = vpop.f32.mrf.mxu0
      %3332 = vmatprep.mubr.bf16.mxu0 0
      %3333 = vmatmul.mubr.bf16.gmra.mxu0 %v3190
      %v3334 = vpop.f32.mrf.mxu0
      %v3335 = vadd.f32 %v1015, %v3334
      %v3336 = vpop.f32.mrf.mxu0
      %v3337 = vpop.f32.mrf.mxu0
      %v3338 = vadd.f32 %v1018, %v3337
      %v3339 = vpop.f32.mrf.mxu0
      %3340 = vmatprep.mubr.bf16.mxu0 0
      %3341 = vmatmul.mubr.bf16.gmra.mxu0 %v3193
      %v3342 = vpop.f32.mrf.mxu0
      %v3343 = vadd.f32 %v1023, %v3342
      %v3344 = vpop.f32.mrf.mxu0
      %v3345 = vpop.f32.mrf.mxu0
      %v3346 = vadd.f32 %v1026, %v3345
      %v3347 = vpop.f32.mrf.mxu0
      %3348 = vmatprep.mubr.bf16.mxu0 0
      %3349 = vmatmul.mubr.bf16.gmra.mxu0 %v3196
      %v3350 = vpop.f32.mrf.mxu0
      %v3351 = vadd.f32 %v1031, %v3350
      %v3352 = vpop.f32.mrf.mxu0
      %v3353 = vpop.f32.mrf.mxu0
      %v3354 = vadd.f32 %v1034, %v3353
      %v3355 = vpop.f32.mrf.mxu0
      %3356 = vmatprep.mubr.bf16.mxu0 0
      %3357 = vmatmul.mubr.bf16.gmra.mxu0 %v3199
      %v3358 = vpop.f32.mrf.mxu0
      %v3359 = vadd.f32 %v1039, %v3358
      %v3360 = vpop.f32.mrf.mxu0
      %v3361 = vpop.f32.mrf.mxu0
      %v3362 = vadd.f32 %v1042, %v3361
      %v3363 = vpop.f32.mrf.mxu0
      %3364 = vdwg.mxu0
      %v3397 = vunpack.c.l.b16 %v261
      %v3398 = vunpack.c.l.b16 %v262
      %v3399 = vunpack.c.l.b16 %v263
      %v3400 = vunpack.c.l.b16 %v264
      %v3401 = vunpack.c.l.b16 %v265
      %v3402 = vunpack.c.l.b16 %v266
      %v3403 = vunpack.c.l.b16 %v267
      %v3404 = vunpack.c.l.b16 %v268
      %v3405 = vunpack.c.l.b16 %v269
      %v3406 = vunpack.c.l.b16 %v270
      %v3407 = vunpack.c.l.b16 %v271
      %v3408 = vunpack.c.l.b16 %v272
      %v3409 = vunpack.c.l.b16 %v273
      %v3410 = vunpack.c.l.b16 %v274
      %v3411 = vunpack.c.l.b16 %v275
      %v3412 = vunpack.c.l.b16 %v276
      %v3413 = vunpack.c.l.b16 %v277
      %v3414 = vunpack.c.l.b16 %v278
      %v3415 = vunpack.c.l.b16 %v279
      %v3416 = vunpack.c.l.b16 %v280
      %v3417 = vunpack.c.l.b16 %v281
      %v3418 = vunpack.c.l.b16 %v282
      %v3419 = vunpack.c.l.b16 %v283
      %v3420 = vunpack.c.l.b16 %v284
      %v3421 = vunpack.c.l.b16 %v285
      %v3422 = vunpack.c.l.b16 %v286
      %v3423 = vunpack.c.l.b16 %v287
      %v3424 = vunpack.c.l.b16 %v288
      %v3425 = vunpack.c.l.b16 %v289
      %v3426 = vunpack.c.l.b16 %v290
      %v3427 = vunpack.c.l.b16 %v291
      %v3428 = vunpack.c.l.b16 %v292
      %v3429 = vpack.c.b16 %v3398, %v3397
      %v3430 = vpack.c.b16 %v3400, %v3399
      %v3431 = vpack.c.b16 %v3402, %v3401
      %v3432 = vpack.c.b16 %v3404, %v3403
      %v3433 = vpack.c.b16 %v3406, %v3405
      %v3434 = vpack.c.b16 %v3408, %v3407
      %v3435 = vpack.c.b16 %v3410, %v3409
      %v3436 = vpack.c.b16 %v3412, %v3411
      %v3437 = vpack.c.b16 %v3414, %v3413
      %v3438 = vpack.c.b16 %v3416, %v3415
      %v3439 = vpack.c.b16 %v3418, %v3417
      %v3440 = vpack.c.b16 %v3420, %v3419
      %v3441 = vpack.c.b16 %v3422, %v3421
      %v3442 = vpack.c.b16 %v3424, %v3423
      %v3443 = vpack.c.b16 %v3426, %v3425
      %v3444 = vpack.c.b16 %v3428, %v3427
      %v3446 = vsel %vm831, %v3429, 0
      %v3449 = vsel %vm831, %v3430, 0
      %v3452 = vsel %vm831, %v3431, 0
      %v3455 = vsel %vm831, %v3432, 0
      %v3458 = vsel %vm831, %v3433, 0
      %v3461 = vsel %vm831, %v3434, 0
      %v3464 = vsel %vm831, %v3435, 0
      %v3467 = vsel %vm831, %v3436, 0
      %v3470 = vsel %vm831, %v3437, 0
      %v3473 = vsel %vm831, %v3438, 0
      %v3476 = vsel %vm831, %v3439, 0
      %v3479 = vsel %vm831, %v3440, 0
      %v3482 = vsel %vm831, %v3441, 0
      %v3485 = vsel %vm831, %v3442, 0
      %v3488 = vsel %vm831, %v3443, 0
      %v3491 = vsel %vm831, %v3444, 0
      %3493 = vmatprep.subr.bf16.mxu0 0
      %3494 = vmatpush1.bf16.msra.mxu0 0
      %3495 = vmatprep.subr.bf16.mxu0 0
      %3496 = vmatpush1.bf16.msra.mxu0 0
      %3497 = vmatprep.subr.bf16.mxu0 0
      %3498 = vmatpush1.bf16.msra.mxu0 0
      %3499 = vmatprep.subr.bf16.mxu0 0
      %3500 = vmatpush1.bf16.msra.mxu0 0
      %3501 = vmatprep.subr.bf16.mxu0 0
      %3502 = vmatpush1.bf16.msra.mxu0 0
      %3503 = vmatprep.subr.bf16.mxu0 0
      %3504 = vmatpush1.bf16.msra.mxu0 0
      %3505 = vmatprep.subr.bf16.mxu0 0
      %3506 = vmatpush1.bf16.msra.mxu0 0
      %3507 = vmatprep.subr.bf16.mxu0 0
      %3508 = vmatpush1.bf16.msra.mxu0 %v3202
      %3509 = vmatprep.subr.bf16.mxu0 0
      %3510 = vmatpush2.bf16.msra.mxu0 0
      %3511 = vmatprep.subr.bf16.mxu0 0
      %3512 = vmatpush2.bf16.msra.mxu0 0
      %3513 = vmatprep.subr.bf16.mxu0 0
      %3514 = vmatpush2.bf16.msra.mxu0 0
      %3515 = vmatprep.subr.bf16.mxu0 0
      %3516 = vmatpush2.bf16.msra.mxu0 0
      %3517 = vmatprep.subr.bf16.mxu0 0
      %3518 = vmatpush2.bf16.msra.mxu0 0
      %3519 = vmatprep.subr.bf16.mxu0 0
      %3520 = vmatpush2.bf16.msra.mxu0 0
      %3521 = vmatprep.subr.bf16.mxu0 0
      %3522 = vmatpush2.bf16.msra.mxu0 0
      %3523 = vmatprep.subr.bf16.mxu0 0
      %3524 = vmatpush2.bf16.msra.mxu0 0
      %3525 = vmatprep.mubr.bf16.mxu0 0
      %3526 = vmatmul.mubr.bf16.gmra.mxu0 %v3446
      %v3527 = vpop.f32.mrf.mxu0
      %v3528 = vadd.f32 %v1208, %v3527
      %v3529 = vpop.f32.mrf.mxu0
      %v3530 = vpop.f32.mrf.mxu0
      %v3531 = vadd.f32 %v1211, %v3530
      %v3532 = vpop.f32.mrf.mxu0
      %3533 = vmatprep.mubr.bf16.mxu0 0
      %3534 = vmatmul.mubr.bf16.gmra.mxu0 %v3449
      %v3535 = vpop.f32.mrf.mxu0
      %v3536 = vadd.f32 %v1216, %v3535
      %v3537 = vpop.f32.mrf.mxu0
      %v3538 = vpop.f32.mrf.mxu0
      %v3539 = vadd.f32 %v1219, %v3538
      %v3540 = vpop.f32.mrf.mxu0
      %3541 = vmatprep.mubr.bf16.mxu0 0
      %3542 = vmatmul.mubr.bf16.gmra.mxu0 %v3452
      %v3543 = vpop.f32.mrf.mxu0
      %v3544 = vadd.f32 %v1224, %v3543
      %v3545 = vpop.f32.mrf.mxu0
      %v3546 = vpop.f32.mrf.mxu0
      %v3547 = vadd.f32 %v1227, %v3546
      %v3548 = vpop.f32.mrf.mxu0
      %3549 = vmatprep.mubr.bf16.mxu0 0
      %3550 = vmatmul.mubr.bf16.gmra.mxu0 %v3455
      %v3551 = vpop.f32.mrf.mxu0
      %v3552 = vadd.f32 %v1232, %v3551
      %v3553 = vpop.f32.mrf.mxu0
      %v3554 = vpop.f32.mrf.mxu0
      %v3555 = vadd.f32 %v1235, %v3554
      %v3556 = vpop.f32.mrf.mxu0
      %3557 = vmatprep.mubr.bf16.mxu0 0
      %3558 = vmatmul.mubr.bf16.gmra.mxu0 %v3458
      %v3559 = vpop.f32.mrf.mxu0
      %v3560 = vadd.f32 %v1240, %v3559
      %v3561 = vpop.f32.mrf.mxu0
      %v3562 = vpop.f32.mrf.mxu0
      %v3563 = vadd.f32 %v1243, %v3562
      %v3564 = vpop.f32.mrf.mxu0
      %3565 = vmatprep.mubr.bf16.mxu0 0
      %3566 = vmatmul.mubr.bf16.gmra.mxu0 %v3461
      %v3567 = vpop.f32.mrf.mxu0
      %v3568 = vadd.f32 %v1248, %v3567
      %v3569 = vpop.f32.mrf.mxu0
      %v3570 = vpop.f32.mrf.mxu0
      %v3571 = vadd.f32 %v1251, %v3570
      %v3572 = vpop.f32.mrf.mxu0
      %3573 = vmatprep.mubr.bf16.mxu0 0
      %3574 = vmatmul.mubr.bf16.gmra.mxu0 %v3464
      %v3575 = vpop.f32.mrf.mxu0
      %v3576 = vadd.f32 %v1256, %v3575
      %v3577 = vpop.f32.mrf.mxu0
      %v3578 = vpop.f32.mrf.mxu0
      %v3579 = vadd.f32 %v1259, %v3578
      %v3580 = vpop.f32.mrf.mxu0
      %3581 = vmatprep.mubr.bf16.mxu0 0
      %3582 = vmatmul.mubr.bf16.gmra.mxu0 %v3467
      %v3583 = vpop.f32.mrf.mxu0
      %v3584 = vadd.f32 %v1264, %v3583
      %v3585 = vpop.f32.mrf.mxu0
      %v3586 = vpop.f32.mrf.mxu0
      %v3587 = vadd.f32 %v1267, %v3586
      %v3588 = vpop.f32.mrf.mxu0
      %3589 = vmatprep.mubr.bf16.mxu0 0
      %3590 = vmatmul.mubr.bf16.gmra.mxu0 %v3470
      %v3591 = vpop.f32.mrf.mxu0
      %v3592 = vadd.f32 %v1272, %v3591
      %v3593 = vpop.f32.mrf.mxu0
      %v3594 = vpop.f32.mrf.mxu0
      %v3595 = vadd.f32 %v1275, %v3594
      %v3596 = vpop.f32.mrf.mxu0
      %3597 = vmatprep.mubr.bf16.mxu0 0
      %3598 = vmatmul.mubr.bf16.gmra.mxu0 %v3473
      %v3599 = vpop.f32.mrf.mxu0
      %v3600 = vadd.f32 %v1280, %v3599
      %v3601 = vpop.f32.mrf.mxu0
      %v3602 = vpop.f32.mrf.mxu0
      %v3603 = vadd.f32 %v1283, %v3602
      %v3604 = vpop.f32.mrf.mxu0
      %3605 = vmatprep.mubr.bf16.mxu0 0
      %3606 = vmatmul.mubr.bf16.gmra.mxu0 %v3476
      %v3607 = vpop.f32.mrf.mxu0
      %v3608 = vadd.f32 %v1288, %v3607
      %v3609 = vpop.f32.mrf.mxu0
      %v3610 = vpop.f32.mrf.mxu0
      %v3611 = vadd.f32 %v1291, %v3610
      %v3612 = vpop.f32.mrf.mxu0
      %3613 = vmatprep.mubr.bf16.mxu0 0
      %3614 = vmatmul.mubr.bf16.gmra.mxu0 %v3479
      %v3615 = vpop.f32.mrf.mxu0
      %v3616 = vadd.f32 %v1296, %v3615
      %v3617 = vpop.f32.mrf.mxu0
      %v3618 = vpop.f32.mrf.mxu0
      %v3619 = vadd.f32 %v1299, %v3618
      %v3620 = vpop.f32.mrf.mxu0
      %3621 = vmatprep.mubr.bf16.mxu0 0
      %3622 = vmatmul.mubr.bf16.gmra.mxu0 %v3482
      %v3623 = vpop.f32.mrf.mxu0
      %v3624 = vadd.f32 %v1304, %v3623
      %v3625 = vpop.f32.mrf.mxu0
      %v3626 = vpop.f32.mrf.mxu0
      %v3627 = vadd.f32 %v1307, %v3626
      %v3628 = vpop.f32.mrf.mxu0
      %3629 = vmatprep.mubr.bf16.mxu0 0
      %3630 = vmatmul.mubr.bf16.gmra.mxu0 %v3485
      %v3631 = vpop.f32.mrf.mxu0
      %v3632 = vadd.f32 %v1312, %v3631
      %v3633 = vpop.f32.mrf.mxu0
      %v3634 = vpop.f32.mrf.mxu0
      %v3635 = vadd.f32 %v1315, %v3634
      %v3636 = vpop.f32.mrf.mxu0
      %3637 = vmatprep.mubr.bf16.mxu0 0
      %3638 = vmatmul.mubr.bf16.gmra.mxu0 %v3488
      %v3639 = vpop.f32.mrf.mxu0
      %v3640 = vadd.f32 %v1320, %v3639
      %v3641 = vpop.f32.mrf.mxu0
      %v3642 = vpop.f32.mrf.mxu0
      %v3643 = vadd.f32 %v1323, %v3642
      %v3644 = vpop.f32.mrf.mxu0
      %3645 = vmatprep.mubr.bf16.mxu0 0
      %3646 = vmatmul.mubr.bf16.gmra.mxu0 %v3491
      %v3647 = vpop.f32.mrf.mxu0
      %v3648 = vadd.f32 %v1328, %v3647
      %v3649 = vpop.f32.mrf.mxu0
      %v3650 = vpop.f32.mrf.mxu0
      %v3651 = vadd.f32 %v1331, %v3650
      %v3652 = vpop.f32.mrf.mxu0
      %3653 = vdwg.mxu0
      %v3686 = vunpack.c.l.b16 %v293
      %v3687 = vunpack.c.l.b16 %v294
      %v3688 = vunpack.c.l.b16 %v295
      %v3689 = vunpack.c.l.b16 %v296
      %v3690 = vunpack.c.l.b16 %v297
      %v3691 = vunpack.c.l.b16 %v298
      %v3692 = vunpack.c.l.b16 %v299
      %v3693 = vunpack.c.l.b16 %v300
      %v3694 = vunpack.c.l.b16 %v301
      %v3695 = vunpack.c.l.b16 %v302
      %v3696 = vunpack.c.l.b16 %v303
      %v3697 = vunpack.c.l.b16 %v304
      %v3698 = vunpack.c.l.b16 %v305
      %v3699 = vunpack.c.l.b16 %v306
      %v3700 = vunpack.c.l.b16 %v307
      %v3701 = vunpack.c.l.b16 %v308
      %v3702 = vunpack.c.l.b16 %v309
      %v3703 = vunpack.c.l.b16 %v310
      %v3704 = vunpack.c.l.b16 %v311
      %v3705 = vunpack.c.l.b16 %v312
      %v3706 = vunpack.c.l.b16 %v313
      %v3707 = vunpack.c.l.b16 %v314
      %v3708 = vunpack.c.l.b16 %v315
      %v3709 = vunpack.c.l.b16 %v316
      %v3710 = vunpack.c.l.b16 %v317
      %v3711 = vunpack.c.l.b16 %v318
      %v3712 = vunpack.c.l.b16 %v319
      %v3713 = vunpack.c.l.b16 %v320
      %v3714 = vunpack.c.l.b16 %v321
      %v3715 = vunpack.c.l.b16 %v322
      %v3716 = vunpack.c.l.b16 %v323
      %v3717 = vunpack.c.l.b16 %v324
      %v3718 = vpack.c.b16 %v3687, %v3686
      %v3719 = vpack.c.b16 %v3689, %v3688
      %v3720 = vpack.c.b16 %v3691, %v3690
      %v3721 = vpack.c.b16 %v3693, %v3692
      %v3722 = vpack.c.b16 %v3695, %v3694
      %v3723 = vpack.c.b16 %v3697, %v3696
      %v3724 = vpack.c.b16 %v3699, %v3698
      %v3725 = vpack.c.b16 %v3701, %v3700
      %v3726 = vpack.c.b16 %v3703, %v3702
      %v3727 = vpack.c.b16 %v3705, %v3704
      %v3728 = vpack.c.b16 %v3707, %v3706
      %v3729 = vpack.c.b16 %v3709, %v3708
      %v3730 = vpack.c.b16 %v3711, %v3710
      %v3731 = vpack.c.b16 %v3713, %v3712
      %v3732 = vpack.c.b16 %v3715, %v3714
      %v3733 = vpack.c.b16 %v3717, %v3716
      %v3735 = vsel %vm831, %v3718, 0
      %v3738 = vsel %vm831, %v3719, 0
      %v3741 = vsel %vm831, %v3720, 0
      %v3744 = vsel %vm831, %v3721, 0
      %v3747 = vsel %vm831, %v3722, 0
      %v3750 = vsel %vm831, %v3723, 0
      %v3753 = vsel %vm831, %v3724, 0
      %v3756 = vsel %vm831, %v3725, 0
      %v3759 = vsel %vm831, %v3726, 0
      %v3762 = vsel %vm831, %v3727, 0
      %v3765 = vsel %vm831, %v3728, 0
      %v3768 = vsel %vm831, %v3729, 0
      %v3771 = vsel %vm831, %v3730, 0
      %v3774 = vsel %vm831, %v3731, 0
      %v3777 = vsel %vm831, %v3732, 0
      %v3780 = vsel %vm831, %v3733, 0
      %3782 = vmatprep.subr.bf16.mxu0 0
      %3783 = vmatpush1.bf16.msra.mxu0 0
      %3784 = vmatprep.subr.bf16.mxu0 0
      %3785 = vmatpush1.bf16.msra.mxu0 0
      %3786 = vmatprep.subr.bf16.mxu0 0
      %3787 = vmatpush1.bf16.msra.mxu0 0
      %3788 = vmatprep.subr.bf16.mxu0 0
      %3789 = vmatpush1.bf16.msra.mxu0 0
      %3790 = vmatprep.subr.bf16.mxu0 0
      %3791 = vmatpush1.bf16.msra.mxu0 0
      %3792 = vmatprep.subr.bf16.mxu0 0
      %3793 = vmatpush1.bf16.msra.mxu0 0
      %3794 = vmatprep.subr.bf16.mxu0 0
      %3795 = vmatpush1.bf16.msra.mxu0 0
      %3796 = vmatprep.subr.bf16.mxu0 0
      %3797 = vmatpush1.bf16.msra.mxu0 %v3202
      %3798 = vmatprep.subr.bf16.mxu0 0
      %3799 = vmatpush2.bf16.msra.mxu0 0
      %3800 = vmatprep.subr.bf16.mxu0 0
      %3801 = vmatpush2.bf16.msra.mxu0 0
      %3802 = vmatprep.subr.bf16.mxu0 0
      %3803 = vmatpush2.bf16.msra.mxu0 0
      %3804 = vmatprep.subr.bf16.mxu0 0
      %3805 = vmatpush2.bf16.msra.mxu0 0
      %3806 = vmatprep.subr.bf16.mxu0 0
      %3807 = vmatpush2.bf16.msra.mxu0 0
      %3808 = vmatprep.subr.bf16.mxu0 0
      %3809 = vmatpush2.bf16.msra.mxu0 0
      %3810 = vmatprep.subr.bf16.mxu0 0
      %3811 = vmatpush2.bf16.msra.mxu0 0
      %3812 = vmatprep.subr.bf16.mxu0 0
      %3813 = vmatpush2.bf16.msra.mxu0 0
      %3814 = vmatprep.mubr.bf16.mxu0 0
      %3815 = vmatmul.mubr.bf16.gmra.mxu0 %v3735
      %v3816 = vpop.f32.mrf.mxu0
      %v3817 = vadd.f32 %v1497, %v3816
      %v3818 = vpop.f32.mrf.mxu0
      %v3819 = vpop.f32.mrf.mxu0
      %v3820 = vadd.f32 %v1500, %v3819
      %v3821 = vpop.f32.mrf.mxu0
      %3822 = vmatprep.mubr.bf16.mxu0 0
      %3823 = vmatmul.mubr.bf16.gmra.mxu0 %v3738
      %v3824 = vpop.f32.mrf.mxu0
      %v3825 = vadd.f32 %v1505, %v3824
      %v3826 = vpop.f32.mrf.mxu0
      %v3827 = vpop.f32.mrf.mxu0
      %v3828 = vadd.f32 %v1508, %v3827
      %v3829 = vpop.f32.mrf.mxu0
      %3830 = vmatprep.mubr.bf16.mxu0 0
      %3831 = vmatmul.mubr.bf16.gmra.mxu0 %v3741
      %v3832 = vpop.f32.mrf.mxu0
      %v3833 = vadd.f32 %v1513, %v3832
      %v3834 = vpop.f32.mrf.mxu0
      %v3835 = vpop.f32.mrf.mxu0
      %v3836 = vadd.f32 %v1516, %v3835
      %v3837 = vpop.f32.mrf.mxu0
      %3838 = vmatprep.mubr.bf16.mxu0 0
      %3839 = vmatmul.mubr.bf16.gmra.mxu0 %v3744
      %v3840 = vpop.f32.mrf.mxu0
      %v3841 = vadd.f32 %v1521, %v3840
      %v3842 = vpop.f32.mrf.mxu0
      %v3843 = vpop.f32.mrf.mxu0
      %v3844 = vadd.f32 %v1524, %v3843
      %v3845 = vpop.f32.mrf.mxu0
      %3846 = vmatprep.mubr.bf16.mxu0 0
      %3847 = vmatmul.mubr.bf16.gmra.mxu0 %v3747
      %v3848 = vpop.f32.mrf.mxu0
      %v3849 = vadd.f32 %v1529, %v3848
      %v3850 = vpop.f32.mrf.mxu0
      %v3851 = vpop.f32.mrf.mxu0
      %v3852 = vadd.f32 %v1532, %v3851
      %v3853 = vpop.f32.mrf.mxu0
      %3854 = vmatprep.mubr.bf16.mxu0 0
      %3855 = vmatmul.mubr.bf16.gmra.mxu0 %v3750
      %v3856 = vpop.f32.mrf.mxu0
      %v3857 = vadd.f32 %v1537, %v3856
      %v3858 = vpop.f32.mrf.mxu0
      %v3859 = vpop.f32.mrf.mxu0
      %v3860 = vadd.f32 %v1540, %v3859
      %v3861 = vpop.f32.mrf.mxu0
      %3862 = vmatprep.mubr.bf16.mxu0 0
      %3863 = vmatmul.mubr.bf16.gmra.mxu0 %v3753
      %v3864 = vpop.f32.mrf.mxu0
      %v3865 = vadd.f32 %v1545, %v3864
      %v3866 = vpop.f32.mrf.mxu0
      %v3867 = vpop.f32.mrf.mxu0
      %v3868 = vadd.f32 %v1548, %v3867
      %v3869 = vpop.f32.mrf.mxu0
      %3870 = vmatprep.mubr.bf16.mxu0 0
      %3871 = vmatmul.mubr.bf16.gmra.mxu0 %v3756
      %v3872 = vpop.f32.mrf.mxu0
      %v3873 = vadd.f32 %v1553, %v3872
      %v3874 = vpop.f32.mrf.mxu0
      %v3875 = vpop.f32.mrf.mxu0
      %v3876 = vadd.f32 %v1556, %v3875
      %v3877 = vpop.f32.mrf.mxu0
      %3878 = vmatprep.mubr.bf16.mxu0 0
      %3879 = vmatmul.mubr.bf16.gmra.mxu0 %v3759
      %v3880 = vpop.f32.mrf.mxu0
      %v3881 = vadd.f32 %v1561, %v3880
      %v3882 = vpop.f32.mrf.mxu0
      %v3883 = vpop.f32.mrf.mxu0
      %v3884 = vadd.f32 %v1564, %v3883
      %v3885 = vpop.f32.mrf.mxu0
      %3886 = vmatprep.mubr.bf16.mxu0 0
      %3887 = vmatmul.mubr.bf16.gmra.mxu0 %v3762
      %v3888 = vpop.f32.mrf.mxu0
      %v3889 = vadd.f32 %v1569, %v3888
      %v3890 = vpop.f32.mrf.mxu0
      %v3891 = vpop.f32.mrf.mxu0
      %v3892 = vadd.f32 %v1572, %v3891
      %v3893 = vpop.f32.mrf.mxu0
      %3894 = vmatprep.mubr.bf16.mxu0 0
      %3895 = vmatmul.mubr.bf16.gmra.mxu0 %v3765
      %v3896 = vpop.f32.mrf.mxu0
      %v3897 = vadd.f32 %v1577, %v3896
      %v3898 = vpop.f32.mrf.mxu0
      %v3899 = vpop.f32.mrf.mxu0
      %v3900 = vadd.f32 %v1580, %v3899
      %v3901 = vpop.f32.mrf.mxu0
      %3902 = vmatprep.mubr.bf16.mxu0 0
      %3903 = vmatmul.mubr.bf16.gmra.mxu0 %v3768
      %v3904 = vpop.f32.mrf.mxu0
      %v3905 = vadd.f32 %v1585, %v3904
      %v3906 = vpop.f32.mrf.mxu0
      %v3907 = vpop.f32.mrf.mxu0
      %v3908 = vadd.f32 %v1588, %v3907
      %v3909 = vpop.f32.mrf.mxu0
      %3910 = vmatprep.mubr.bf16.mxu0 0
      %3911 = vmatmul.mubr.bf16.gmra.mxu0 %v3771
      %v3912 = vpop.f32.mrf.mxu0
      %v3913 = vadd.f32 %v1593, %v3912
      %v3914 = vpop.f32.mrf.mxu0
      %v3915 = vpop.f32.mrf.mxu0
      %v3916 = vadd.f32 %v1596, %v3915
      %v3917 = vpop.f32.mrf.mxu0
      %3918 = vmatprep.mubr.bf16.mxu0 0
      %3919 = vmatmul.mubr.bf16.gmra.mxu0 %v3774
      %v3920 = vpop.f32.mrf.mxu0
      %v3921 = vadd.f32 %v1601, %v3920
      %v3922 = vpop.f32.mrf.mxu0
      %v3923 = vpop.f32.mrf.mxu0
      %v3924 = vadd.f32 %v1604, %v3923
      %v3925 = vpop.f32.mrf.mxu0
      %3926 = vmatprep.mubr.bf16.mxu0 0
      %3927 = vmatmul.mubr.bf16.gmra.mxu0 %v3777
      %v3928 = vpop.f32.mrf.mxu0
      %v3929 = vadd.f32 %v1609, %v3928
      %v3930 = vpop.f32.mrf.mxu0
      %v3931 = vpop.f32.mrf.mxu0
      %v3932 = vadd.f32 %v1612, %v3931
      %v3933 = vpop.f32.mrf.mxu0
      %3934 = vmatprep.mubr.bf16.mxu0 0
      %3935 = vmatmul.mubr.bf16.gmra.mxu0 %v3780
      %v3936 = vpop.f32.mrf.mxu0
      %v3937 = vadd.f32 %v1617, %v3936
      %v3938 = vpop.f32.mrf.mxu0
      %v3939 = vpop.f32.mrf.mxu0
      %v3940 = vadd.f32 %v1620, %v3939
      %v3941 = vpop.f32.mrf.mxu0
      %3942 = vdwg.mxu0
      %v3975 = vunpack.c.l.b16 %v325
      %v3976 = vunpack.c.l.b16 %v326
      %v3977 = vunpack.c.l.b16 %v327
      %v3978 = vunpack.c.l.b16 %v328
      %v3979 = vunpack.c.l.b16 %v329
      %v3980 = vunpack.c.l.b16 %v330
      %v3981 = vunpack.c.l.b16 %v331
      %v3982 = vunpack.c.l.b16 %v332
      %v3983 = vunpack.c.l.b16 %v333
      %v3984 = vunpack.c.l.b16 %v334
      %v3985 = vunpack.c.l.b16 %v335
      %v3986 = vunpack.c.l.b16 %v336
      %v3987 = vunpack.c.l.b16 %v337
      %v3988 = vunpack.c.l.b16 %v338
      %v3989 = vunpack.c.l.b16 %v339
      %v3990 = vunpack.c.l.b16 %v340
      %v3991 = vunpack.c.l.b16 %v341
      %v3992 = vunpack.c.l.b16 %v342
      %v3993 = vunpack.c.l.b16 %v343
      %v3994 = vunpack.c.l.b16 %v344
      %v3995 = vunpack.c.l.b16 %v345
      %v3996 = vunpack.c.l.b16 %v346
      %v3997 = vunpack.c.l.b16 %v347
      %v3998 = vunpack.c.l.b16 %v348
      %v3999 = vunpack.c.l.b16 %v349
      %v4000 = vunpack.c.l.b16 %v350
      %v4001 = vunpack.c.l.b16 %v351
      %v4002 = vunpack.c.l.b16 %v352
      %v4003 = vunpack.c.l.b16 %v353
      %v4004 = vunpack.c.l.b16 %v354
      %v4005 = vunpack.c.l.b16 %v355
      %v4006 = vunpack.c.l.b16 %v356
      %v4007 = vpack.c.b16 %v3976, %v3975
      %v4008 = vpack.c.b16 %v3978, %v3977
      %v4009 = vpack.c.b16 %v3980, %v3979
      %v4010 = vpack.c.b16 %v3982, %v3981
      %v4011 = vpack.c.b16 %v3984, %v3983
      %v4012 = vpack.c.b16 %v3986, %v3985
      %v4013 = vpack.c.b16 %v3988, %v3987
      %v4014 = vpack.c.b16 %v3990, %v3989
      %v4015 = vpack.c.b16 %v3992, %v3991
      %v4016 = vpack.c.b16 %v3994, %v3993
      %v4017 = vpack.c.b16 %v3996, %v3995
      %v4018 = vpack.c.b16 %v3998, %v3997
      %v4019 = vpack.c.b16 %v4000, %v3999
      %v4020 = vpack.c.b16 %v4002, %v4001
      %v4021 = vpack.c.b16 %v4004, %v4003
      %v4022 = vpack.c.b16 %v4006, %v4005
      %v4024 = vsel %vm831, %v4007, 0
      %v4027 = vsel %vm831, %v4008, 0
      %v4030 = vsel %vm831, %v4009, 0
      %v4033 = vsel %vm831, %v4010, 0
      %v4036 = vsel %vm831, %v4011, 0
      %v4039 = vsel %vm831, %v4012, 0
      %v4042 = vsel %vm831, %v4013, 0
      %v4045 = vsel %vm831, %v4014, 0
      %v4048 = vsel %vm831, %v4015, 0
      %v4051 = vsel %vm831, %v4016, 0
      %v4054 = vsel %vm831, %v4017, 0
      %v4057 = vsel %vm831, %v4018, 0
      %v4060 = vsel %vm831, %v4019, 0
      %v4063 = vsel %vm831, %v4020, 0
      %v4066 = vsel %vm831, %v4021, 0
      %v4069 = vsel %vm831, %v4022, 0
      %4071 = vmatprep.subr.bf16.mxu0 0
      %4072 = vmatpush1.bf16.msra.mxu0 0
      %4073 = vmatprep.subr.bf16.mxu0 0
      %4074 = vmatpush1.bf16.msra.mxu0 0
      %4075 = vmatprep.subr.bf16.mxu0 0
      %4076 = vmatpush1.bf16.msra.mxu0 0
      %4077 = vmatprep.subr.bf16.mxu0 0
      %4078 = vmatpush1.bf16.msra.mxu0 0
      %4079 = vmatprep.subr.bf16.mxu0 0
      %4080 = vmatpush1.bf16.msra.mxu0 0
      %4081 = vmatprep.subr.bf16.mxu0 0
      %4082 = vmatpush1.bf16.msra.mxu0 0
      %4083 = vmatprep.subr.bf16.mxu0 0
      %4084 = vmatpush1.bf16.msra.mxu0 0
      %4085 = vmatprep.subr.bf16.mxu0 0
      %4086 = vmatpush1.bf16.msra.mxu0 %v3202
      %4087 = vmatprep.subr.bf16.mxu0 0
      %4088 = vmatpush2.bf16.msra.mxu0 0
      %4089 = vmatprep.subr.bf16.mxu0 0
      %4090 = vmatpush2.bf16.msra.mxu0 0
      %4091 = vmatprep.subr.bf16.mxu0 0
      %4092 = vmatpush2.bf16.msra.mxu0 0
      %4093 = vmatprep.subr.bf16.mxu0 0
      %4094 = vmatpush2.bf16.msra.mxu0 0
      %4095 = vmatprep.subr.bf16.mxu0 0
      %4096 = vmatpush2.bf16.msra.mxu0 0
      %4097 = vmatprep.subr.bf16.mxu0 0
      %4098 = vmatpush2.bf16.msra.mxu0 0
      %4099 = vmatprep.subr.bf16.mxu0 0
      %4100 = vmatpush2.bf16.msra.mxu0 0
      %4101 = vmatprep.subr.bf16.mxu0 0
      %4102 = vmatpush2.bf16.msra.mxu0 0
      %4103 = vmatprep.mubr.bf16.mxu0 0
      %4104 = vmatmul.mubr.bf16.gmra.mxu0 %v4024
      %v4105 = vpop.f32.mrf.mxu0
      %v4106 = vadd.f32 %v1786, %v4105
      %v4107 = vpop.f32.mrf.mxu0
      %v4108 = vpop.f32.mrf.mxu0
      %v4109 = vadd.f32 %v1789, %v4108
      %v4110 = vpop.f32.mrf.mxu0
      %4111 = vmatprep.mubr.bf16.mxu0 0
      %4112 = vmatmul.mubr.bf16.gmra.mxu0 %v4027
      %v4113 = vpop.f32.mrf.mxu0
      %v4114 = vadd.f32 %v1794, %v4113
      %v4115 = vpop.f32.mrf.mxu0
      %v4116 = vpop.f32.mrf.mxu0
      %v4117 = vadd.f32 %v1797, %v4116
      %v4118 = vpop.f32.mrf.mxu0
      %4119 = vmatprep.mubr.bf16.mxu0 0
      %4120 = vmatmul.mubr.bf16.gmra.mxu0 %v4030
      %v4121 = vpop.f32.mrf.mxu0
      %v4122 = vadd.f32 %v1802, %v4121
      %v4123 = vpop.f32.mrf.mxu0
      %v4124 = vpop.f32.mrf.mxu0
      %v4125 = vadd.f32 %v1805, %v4124
      %v4126 = vpop.f32.mrf.mxu0
      %4127 = vmatprep.mubr.bf16.mxu0 0
      %4128 = vmatmul.mubr.bf16.gmra.mxu0 %v4033
      %v4129 = vpop.f32.mrf.mxu0
      %v4130 = vadd.f32 %v1810, %v4129
      %v4131 = vpop.f32.mrf.mxu0
      %v4132 = vpop.f32.mrf.mxu0
      %v4133 = vadd.f32 %v1813, %v4132
      %v4134 = vpop.f32.mrf.mxu0
      %4135 = vmatprep.mubr.bf16.mxu0 0
      %4136 = vmatmul.mubr.bf16.gmra.mxu0 %v4036
      %v4137 = vpop.f32.mrf.mxu0
      %v4138 = vadd.f32 %v1818, %v4137
      %v4139 = vpop.f32.mrf.mxu0
      %v4140 = vpop.f32.mrf.mxu0
      %v4141 = vadd.f32 %v1821, %v4140
      %v4142 = vpop.f32.mrf.mxu0
      %4143 = vmatprep.mubr.bf16.mxu0 0
      %4144 = vmatmul.mubr.bf16.gmra.mxu0 %v4039
      %v4145 = vpop.f32.mrf.mxu0
      %v4146 = vadd.f32 %v1826, %v4145
      %v4147 = vpop.f32.mrf.mxu0
      %v4148 = vpop.f32.mrf.mxu0
      %v4149 = vadd.f32 %v1829, %v4148
      %v4150 = vpop.f32.mrf.mxu0
      %4151 = vmatprep.mubr.bf16.mxu0 0
      %4152 = vmatmul.mubr.bf16.gmra.mxu0 %v4042
      %v4153 = vpop.f32.mrf.mxu0
      %v4154 = vadd.f32 %v1834, %v4153
      %v4155 = vpop.f32.mrf.mxu0
      %v4156 = vpop.f32.mrf.mxu0
      %v4157 = vadd.f32 %v1837, %v4156
      %v4158 = vpop.f32.mrf.mxu0
      %4159 = vmatprep.mubr.bf16.mxu0 0
      %4160 = vmatmul.mubr.bf16.gmra.mxu0 %v4045
      %v4161 = vpop.f32.mrf.mxu0
      %v4162 = vadd.f32 %v1842, %v4161
      %v4163 = vpop.f32.mrf.mxu0
      %v4164 = vpop.f32.mrf.mxu0
      %v4165 = vadd.f32 %v1845, %v4164
      %v4166 = vpop.f32.mrf.mxu0
      %4167 = vmatprep.mubr.bf16.mxu0 0
      %4168 = vmatmul.mubr.bf16.gmra.mxu0 %v4048
      %v4169 = vpop.f32.mrf.mxu0
      %v4170 = vadd.f32 %v1850, %v4169
      %v4171 = vpop.f32.mrf.mxu0
      %v4172 = vpop.f32.mrf.mxu0
      %v4173 = vadd.f32 %v1853, %v4172
      %v4174 = vpop.f32.mrf.mxu0
      %4175 = vmatprep.mubr.bf16.mxu0 0
      %4176 = vmatmul.mubr.bf16.gmra.mxu0 %v4051
      %v4177 = vpop.f32.mrf.mxu0
      %v4178 = vadd.f32 %v1858, %v4177
      %v4179 = vpop.f32.mrf.mxu0
      %v4180 = vpop.f32.mrf.mxu0
      %v4181 = vadd.f32 %v1861, %v4180
      %v4182 = vpop.f32.mrf.mxu0
      %4183 = vmatprep.mubr.bf16.mxu0 0
      %4184 = vmatmul.mubr.bf16.gmra.mxu0 %v4054
      %v4185 = vpop.f32.mrf.mxu0
      %v4186 = vadd.f32 %v1866, %v4185
      %v4187 = vpop.f32.mrf.mxu0
      %v4188 = vpop.f32.mrf.mxu0
      %v4189 = vadd.f32 %v1869, %v4188
      %v4190 = vpop.f32.mrf.mxu0
      %4191 = vmatprep.mubr.bf16.mxu0 0
      %4192 = vmatmul.mubr.bf16.gmra.mxu0 %v4057
      %v4193 = vpop.f32.mrf.mxu0
      %v4194 = vadd.f32 %v1874, %v4193
      %v4195 = vpop.f32.mrf.mxu0
      %v4196 = vpop.f32.mrf.mxu0
      %v4197 = vadd.f32 %v1877, %v4196
      %v4198 = vpop.f32.mrf.mxu0
      %4199 = vmatprep.mubr.bf16.mxu0 0
      %4200 = vmatmul.mubr.bf16.gmra.mxu0 %v4060
      %v4201 = vpop.f32.mrf.mxu0
      %v4202 = vadd.f32 %v1882, %v4201
      %v4203 = vpop.f32.mrf.mxu0
      %v4204 = vpop.f32.mrf.mxu0
      %v4205 = vadd.f32 %v1885, %v4204
      %v4206 = vpop.f32.mrf.mxu0
      %4207 = vmatprep.mubr.bf16.mxu0 0
      %4208 = vmatmul.mubr.bf16.gmra.mxu0 %v4063
      %v4209 = vpop.f32.mrf.mxu0
      %v4210 = vadd.f32 %v1890, %v4209
      %v4211 = vpop.f32.mrf.mxu0
      %v4212 = vpop.f32.mrf.mxu0
      %v4213 = vadd.f32 %v1893, %v4212
      %v4214 = vpop.f32.mrf.mxu0
      %4215 = vmatprep.mubr.bf16.mxu0 0
      %4216 = vmatmul.mubr.bf16.gmra.mxu0 %v4066
      %v4217 = vpop.f32.mrf.mxu0
      %v4218 = vadd.f32 %v1898, %v4217
      %v4219 = vpop.f32.mrf.mxu0
      %v4220 = vpop.f32.mrf.mxu0
      %v4221 = vadd.f32 %v1901, %v4220
      %v4222 = vpop.f32.mrf.mxu0
      %4223 = vmatprep.mubr.bf16.mxu0 0
      %4224 = vmatmul.mubr.bf16.gmra.mxu0 %v4069
      %v4225 = vpop.f32.mrf.mxu0
      %v4226 = vadd.f32 %v1906, %v4225
      %v4227 = vpop.f32.mrf.mxu0
      %v4228 = vpop.f32.mrf.mxu0
      %v4229 = vadd.f32 %v1909, %v4228
      %v4230 = vpop.f32.mrf.mxu0
      %4231 = vdwg.mxu0
      %v4264 = vunpack.c.l.b16 %v357
      %v4265 = vunpack.c.l.b16 %v358
      %v4266 = vunpack.c.l.b16 %v359
      %v4267 = vunpack.c.l.b16 %v360
      %v4268 = vunpack.c.l.b16 %v361
      %v4269 = vunpack.c.l.b16 %v362
      %v4270 = vunpack.c.l.b16 %v363
      %v4271 = vunpack.c.l.b16 %v364
      %v4272 = vunpack.c.l.b16 %v365
      %v4273 = vunpack.c.l.b16 %v366
      %v4274 = vunpack.c.l.b16 %v367
      %v4275 = vunpack.c.l.b16 %v368
      %v4276 = vunpack.c.l.b16 %v369
      %v4277 = vunpack.c.l.b16 %v370
      %v4278 = vunpack.c.l.b16 %v371
      %v4279 = vunpack.c.l.b16 %v372
      %v4280 = vunpack.c.l.b16 %v373
      %v4281 = vunpack.c.l.b16 %v374
      %v4282 = vunpack.c.l.b16 %v375
      %v4283 = vunpack.c.l.b16 %v376
      %v4284 = vunpack.c.l.b16 %v377
      %v4285 = vunpack.c.l.b16 %v378
      %v4286 = vunpack.c.l.b16 %v379
      %v4287 = vunpack.c.l.b16 %v380
      %v4288 = vunpack.c.l.b16 %v381
      %v4289 = vunpack.c.l.b16 %v382
      %v4290 = vunpack.c.l.b16 %v383
      %v4291 = vunpack.c.l.b16 %v384
      %v4292 = vunpack.c.l.b16 %v385
      %v4293 = vunpack.c.l.b16 %v386
      %v4294 = vunpack.c.l.b16 %v387
      %v4295 = vunpack.c.l.b16 %v388
      %v4296 = vpack.c.b16 %v4265, %v4264
      %v4297 = vpack.c.b16 %v4267, %v4266
      %v4298 = vpack.c.b16 %v4269, %v4268
      %v4299 = vpack.c.b16 %v4271, %v4270
      %v4300 = vpack.c.b16 %v4273, %v4272
      %v4301 = vpack.c.b16 %v4275, %v4274
      %v4302 = vpack.c.b16 %v4277, %v4276
      %v4303 = vpack.c.b16 %v4279, %v4278
      %v4304 = vpack.c.b16 %v4281, %v4280
      %v4305 = vpack.c.b16 %v4283, %v4282
      %v4306 = vpack.c.b16 %v4285, %v4284
      %v4307 = vpack.c.b16 %v4287, %v4286
      %v4308 = vpack.c.b16 %v4289, %v4288
      %v4309 = vpack.c.b16 %v4291, %v4290
      %v4310 = vpack.c.b16 %v4293, %v4292
      %v4311 = vpack.c.b16 %v4295, %v4294
      %v4313 = vsel %vm831, %v4296, 0
      %v4316 = vsel %vm831, %v4297, 0
      %v4319 = vsel %vm831, %v4298, 0
      %v4322 = vsel %vm831, %v4299, 0
      %v4325 = vsel %vm831, %v4300, 0
      %v4328 = vsel %vm831, %v4301, 0
      %v4331 = vsel %vm831, %v4302, 0
      %v4334 = vsel %vm831, %v4303, 0
      %v4337 = vsel %vm831, %v4304, 0
      %v4340 = vsel %vm831, %v4305, 0
      %v4343 = vsel %vm831, %v4306, 0
      %v4346 = vsel %vm831, %v4307, 0
      %v4349 = vsel %vm831, %v4308, 0
      %v4352 = vsel %vm831, %v4309, 0
      %v4355 = vsel %vm831, %v4310, 0
      %v4358 = vsel %vm831, %v4311, 0
      %4360 = vmatprep.subr.bf16.mxu0 0
      %4361 = vmatpush1.bf16.msra.mxu0 0
      %4362 = vmatprep.subr.bf16.mxu0 0
      %4363 = vmatpush1.bf16.msra.mxu0 0
      %4364 = vmatprep.subr.bf16.mxu0 0
      %4365 = vmatpush1.bf16.msra.mxu0 0
      %4366 = vmatprep.subr.bf16.mxu0 0
      %4367 = vmatpush1.bf16.msra.mxu0 0
      %4368 = vmatprep.subr.bf16.mxu0 0
      %4369 = vmatpush1.bf16.msra.mxu0 0
      %4370 = vmatprep.subr.bf16.mxu0 0
      %4371 = vmatpush1.bf16.msra.mxu0 0
      %4372 = vmatprep.subr.bf16.mxu0 0
      %4373 = vmatpush1.bf16.msra.mxu0 0
      %4374 = vmatprep.subr.bf16.mxu0 0
      %4375 = vmatpush1.bf16.msra.mxu0 %v3202
      %4376 = vmatprep.subr.bf16.mxu0 0
      %4377 = vmatpush2.bf16.msra.mxu0 0
      %4378 = vmatprep.subr.bf16.mxu0 0
      %4379 = vmatpush2.bf16.msra.mxu0 0
      %4380 = vmatprep.subr.bf16.mxu0 0
      %4381 = vmatpush2.bf16.msra.mxu0 0
      %4382 = vmatprep.subr.bf16.mxu0 0
      %4383 = vmatpush2.bf16.msra.mxu0 0
      %4384 = vmatprep.subr.bf16.mxu0 0
      %4385 = vmatpush2.bf16.msra.mxu0 0
      %4386 = vmatprep.subr.bf16.mxu0 0
      %4387 = vmatpush2.bf16.msra.mxu0 0
      %4388 = vmatprep.subr.bf16.mxu0 0
      %4389 = vmatpush2.bf16.msra.mxu0 0
      %4390 = vmatprep.subr.bf16.mxu0 0
      %4391 = vmatpush2.bf16.msra.mxu0 0
      %4392 = vmatprep.mubr.bf16.mxu0 0
      %4393 = vmatmul.mubr.bf16.gmra.mxu0 %v4313
      %v4394 = vpop.f32.mrf.mxu0
      %v4395 = vadd.f32 %v2075, %v4394
      %v4396 = vpop.f32.mrf.mxu0
      %v4397 = vpop.f32.mrf.mxu0
      %v4398 = vadd.f32 %v2078, %v4397
      %v4399 = vpop.f32.mrf.mxu0
      %4400 = vmatprep.mubr.bf16.mxu0 0
      %4401 = vmatmul.mubr.bf16.gmra.mxu0 %v4316
      %v4402 = vpop.f32.mrf.mxu0
      %v4403 = vadd.f32 %v2083, %v4402
      %v4404 = vpop.f32.mrf.mxu0
      %v4405 = vpop.f32.mrf.mxu0
      %v4406 = vadd.f32 %v2086, %v4405
      %v4407 = vpop.f32.mrf.mxu0
      %4408 = vmatprep.mubr.bf16.mxu0 0
      %4409 = vmatmul.mubr.bf16.gmra.mxu0 %v4319
      %v4410 = vpop.f32.mrf.mxu0
      %v4411 = vadd.f32 %v2091, %v4410
      %v4412 = vpop.f32.mrf.mxu0
      %v4413 = vpop.f32.mrf.mxu0
      %v4414 = vadd.f32 %v2094, %v4413
      %v4415 = vpop.f32.mrf.mxu0
      %4416 = vmatprep.mubr.bf16.mxu0 0
      %4417 = vmatmul.mubr.bf16.gmra.mxu0 %v4322
      %v4418 = vpop.f32.mrf.mxu0
      %v4419 = vadd.f32 %v2099, %v4418
      %v4420 = vpop.f32.mrf.mxu0
      %v4421 = vpop.f32.mrf.mxu0
      %v4422 = vadd.f32 %v2102, %v4421
      %v4423 = vpop.f32.mrf.mxu0
      %4424 = vmatprep.mubr.bf16.mxu0 0
      %4425 = vmatmul.mubr.bf16.gmra.mxu0 %v4325
      %v4426 = vpop.f32.mrf.mxu0
      %v4427 = vadd.f32 %v2107, %v4426
      %v4428 = vpop.f32.mrf.mxu0
      %v4429 = vpop.f32.mrf.mxu0
      %v4430 = vadd.f32 %v2110, %v4429
      %v4431 = vpop.f32.mrf.mxu0
      %4432 = vmatprep.mubr.bf16.mxu0 0
      %4433 = vmatmul.mubr.bf16.gmra.mxu0 %v4328
      %v4434 = vpop.f32.mrf.mxu0
      %v4435 = vadd.f32 %v2115, %v4434
      %v4436 = vpop.f32.mrf.mxu0
      %v4437 = vpop.f32.mrf.mxu0
      %v4438 = vadd.f32 %v2118, %v4437
      %v4439 = vpop.f32.mrf.mxu0
      %4440 = vmatprep.mubr.bf16.mxu0 0
      %4441 = vmatmul.mubr.bf16.gmra.mxu0 %v4331
      %v4442 = vpop.f32.mrf.mxu0
      %v4443 = vadd.f32 %v2123, %v4442
      %v4444 = vpop.f32.mrf.mxu0
      %v4445 = vpop.f32.mrf.mxu0
      %v4446 = vadd.f32 %v2126, %v4445
      %v4447 = vpop.f32.mrf.mxu0
      %4448 = vmatprep.mubr.bf16.mxu0 0
      %4449 = vmatmul.mubr.bf16.gmra.mxu0 %v4334
      %v4450 = vpop.f32.mrf.mxu0
      %v4451 = vadd.f32 %v2131, %v4450
      %v4452 = vpop.f32.mrf.mxu0
      %v4453 = vpop.f32.mrf.mxu0
      %v4454 = vadd.f32 %v2134, %v4453
      %v4455 = vpop.f32.mrf.mxu0
      %4456 = vmatprep.mubr.bf16.mxu0 0
      %4457 = vmatmul.mubr.bf16.gmra.mxu0 %v4337
      %v4458 = vpop.f32.mrf.mxu0
      %v4459 = vadd.f32 %v2139, %v4458
      %v4460 = vpop.f32.mrf.mxu0
      %v4461 = vpop.f32.mrf.mxu0
      %v4462 = vadd.f32 %v2142, %v4461
      %v4463 = vpop.f32.mrf.mxu0
      %4464 = vmatprep.mubr.bf16.mxu0 0
      %4465 = vmatmul.mubr.bf16.gmra.mxu0 %v4340
      %v4466 = vpop.f32.mrf.mxu0
      %v4467 = vadd.f32 %v2147, %v4466
      %v4468 = vpop.f32.mrf.mxu0
      %v4469 = vpop.f32.mrf.mxu0
      %v4470 = vadd.f32 %v2150, %v4469
      %v4471 = vpop.f32.mrf.mxu0
      %4472 = vmatprep.mubr.bf16.mxu0 0
      %4473 = vmatmul.mubr.bf16.gmra.mxu0 %v4343
      %v4474 = vpop.f32.mrf.mxu0
      %v4475 = vadd.f32 %v2155, %v4474
      %v4476 = vpop.f32.mrf.mxu0
      %v4477 = vpop.f32.mrf.mxu0
      %v4478 = vadd.f32 %v2158, %v4477
      %v4479 = vpop.f32.mrf.mxu0
      %4480 = vmatprep.mubr.bf16.mxu0 0
      %4481 = vmatmul.mubr.bf16.gmra.mxu0 %v4346
      %v4482 = vpop.f32.mrf.mxu0
      %v4483 = vadd.f32 %v2163, %v4482
      %v4484 = vpop.f32.mrf.mxu0
      %v4485 = vpop.f32.mrf.mxu0
      %v4486 = vadd.f32 %v2166, %v4485
      %v4487 = vpop.f32.mrf.mxu0
      %4488 = vmatprep.mubr.bf16.mxu0 0
      %4489 = vmatmul.mubr.bf16.gmra.mxu0 %v4349
      %v4490 = vpop.f32.mrf.mxu0
      %v4491 = vadd.f32 %v2171, %v4490
      %v4492 = vpop.f32.mrf.mxu0
      %v4493 = vpop.f32.mrf.mxu0
      %v4494 = vadd.f32 %v2174, %v4493
      %v4495 = vpop.f32.mrf.mxu0
      %4496 = vmatprep.mubr.bf16.mxu0 0
      %4497 = vmatmul.mubr.bf16.gmra.mxu0 %v4352
      %v4498 = vpop.f32.mrf.mxu0
      %v4499 = vadd.f32 %v2179, %v4498
      %v4500 = vpop.f32.mrf.mxu0
      %v4501 = vpop.f32.mrf.mxu0
      %v4502 = vadd.f32 %v2182, %v4501
      %v4503 = vpop.f32.mrf.mxu0
      %4504 = vmatprep.mubr.bf16.mxu0 0
      %4505 = vmatmul.mubr.bf16.gmra.mxu0 %v4355
      %v4506 = vpop.f32.mrf.mxu0
      %v4507 = vadd.f32 %v2187, %v4506
      %v4508 = vpop.f32.mrf.mxu0
      %v4509 = vpop.f32.mrf.mxu0
      %v4510 = vadd.f32 %v2190, %v4509
      %v4511 = vpop.f32.mrf.mxu0
      %4512 = vmatprep.mubr.bf16.mxu0 0
      %4513 = vmatmul.mubr.bf16.gmra.mxu0 %v4358
      %v4514 = vpop.f32.mrf.mxu0
      %v4515 = vadd.f32 %v2195, %v4514
      %v4516 = vpop.f32.mrf.mxu0
      %v4517 = vpop.f32.mrf.mxu0
      %v4518 = vadd.f32 %v2198, %v4517
      %v4519 = vpop.f32.mrf.mxu0
      %4520 = vdwg.mxu0
      %v4553 = vunpack.c.l.b16 %v389
      %v4554 = vunpack.c.l.b16 %v390
      %v4555 = vunpack.c.l.b16 %v391
      %v4556 = vunpack.c.l.b16 %v392
      %v4557 = vunpack.c.l.b16 %v393
      %v4558 = vunpack.c.l.b16 %v394
      %v4559 = vunpack.c.l.b16 %v395
      %v4560 = vunpack.c.l.b16 %v396
      %v4561 = vunpack.c.l.b16 %v397
      %v4562 = vunpack.c.l.b16 %v398
      %v4563 = vunpack.c.l.b16 %v399
      %v4564 = vunpack.c.l.b16 %v400
      %v4565 = vunpack.c.l.b16 %v401
      %v4566 = vunpack.c.l.b16 %v402
      %v4567 = vunpack.c.l.b16 %v403
      %v4568 = vunpack.c.l.b16 %v404
      %v4569 = vunpack.c.l.b16 %v405
      %v4570 = vunpack.c.l.b16 %v406
      %v4571 = vunpack.c.l.b16 %v407
      %v4572 = vunpack.c.l.b16 %v408
      %v4573 = vunpack.c.l.b16 %v409
      %v4574 = vunpack.c.l.b16 %v410
      %v4575 = vunpack.c.l.b16 %v411
      %v4576 = vunpack.c.l.b16 %v412
      %v4577 = vunpack.c.l.b16 %v413
      %v4578 = vunpack.c.l.b16 %v414
      %v4579 = vunpack.c.l.b16 %v415
      %v4580 = vunpack.c.l.b16 %v416
      %v4581 = vunpack.c.l.b16 %v417
      %v4582 = vunpack.c.l.b16 %v418
      %v4583 = vunpack.c.l.b16 %v419
      %v4584 = vunpack.c.l.b16 %v420
      %v4585 = vpack.c.b16 %v4554, %v4553
      %v4586 = vpack.c.b16 %v4556, %v4555
      %v4587 = vpack.c.b16 %v4558, %v4557
      %v4588 = vpack.c.b16 %v4560, %v4559
      %v4589 = vpack.c.b16 %v4562, %v4561
      %v4590 = vpack.c.b16 %v4564, %v4563
      %v4591 = vpack.c.b16 %v4566, %v4565
      %v4592 = vpack.c.b16 %v4568, %v4567
      %v4593 = vpack.c.b16 %v4570, %v4569
      %v4594 = vpack.c.b16 %v4572, %v4571
      %v4595 = vpack.c.b16 %v4574, %v4573
      %v4596 = vpack.c.b16 %v4576, %v4575
      %v4597 = vpack.c.b16 %v4578, %v4577
      %v4598 = vpack.c.b16 %v4580, %v4579
      %v4599 = vpack.c.b16 %v4582, %v4581
      %v4600 = vpack.c.b16 %v4584, %v4583
      %v4602 = vsel %vm831, %v4585, 0
      %v4605 = vsel %vm831, %v4586, 0
      %v4608 = vsel %vm831, %v4587, 0
      %v4611 = vsel %vm831, %v4588, 0
      %v4614 = vsel %vm831, %v4589, 0
      %v4617 = vsel %vm831, %v4590, 0
      %v4620 = vsel %vm831, %v4591, 0
      %v4623 = vsel %vm831, %v4592, 0
      %v4626 = vsel %vm831, %v4593, 0
      %v4629 = vsel %vm831, %v4594, 0
      %v4632 = vsel %vm831, %v4595, 0
      %v4635 = vsel %vm831, %v4596, 0
      %v4638 = vsel %vm831, %v4597, 0
      %v4641 = vsel %vm831, %v4598, 0
      %v4644 = vsel %vm831, %v4599, 0
      %v4647 = vsel %vm831, %v4600, 0
      %4649 = vmatprep.subr.bf16.mxu0 0
      %4650 = vmatpush1.bf16.msra.mxu0 0
      %4651 = vmatprep.subr.bf16.mxu0 0
      %4652 = vmatpush1.bf16.msra.mxu0 0
      %4653 = vmatprep.subr.bf16.mxu0 0
      %4654 = vmatpush1.bf16.msra.mxu0 0
      %4655 = vmatprep.subr.bf16.mxu0 0
      %4656 = vmatpush1.bf16.msra.mxu0 0
      %4657 = vmatprep.subr.bf16.mxu0 0
      %4658 = vmatpush1.bf16.msra.mxu0 0
      %4659 = vmatprep.subr.bf16.mxu0 0
      %4660 = vmatpush1.bf16.msra.mxu0 0
      %4661 = vmatprep.subr.bf16.mxu0 0
      %4662 = vmatpush1.bf16.msra.mxu0 0
      %4663 = vmatprep.subr.bf16.mxu0 0
      %4664 = vmatpush1.bf16.msra.mxu0 %v3202
      %4665 = vmatprep.subr.bf16.mxu0 0
      %4666 = vmatpush2.bf16.msra.mxu0 0
      %4667 = vmatprep.subr.bf16.mxu0 0
      %4668 = vmatpush2.bf16.msra.mxu0 0
      %4669 = vmatprep.subr.bf16.mxu0 0
      %4670 = vmatpush2.bf16.msra.mxu0 0
      %4671 = vmatprep.subr.bf16.mxu0 0
      %4672 = vmatpush2.bf16.msra.mxu0 0
      %4673 = vmatprep.subr.bf16.mxu0 0
      %4674 = vmatpush2.bf16.msra.mxu0 0
      %4675 = vmatprep.subr.bf16.mxu0 0
      %4676 = vmatpush2.bf16.msra.mxu0 0
      %4677 = vmatprep.subr.bf16.mxu0 0
      %4678 = vmatpush2.bf16.msra.mxu0 0
      %4679 = vmatprep.subr.bf16.mxu0 0
      %4680 = vmatpush2.bf16.msra.mxu0 0
      %4681 = vmatprep.mubr.bf16.mxu0 0
      %4682 = vmatmul.mubr.bf16.gmra.mxu0 %v4602
      %v4683 = vpop.f32.mrf.mxu0
      %v4684 = vadd.f32 %v2364, %v4683
      %v4685 = vpop.f32.mrf.mxu0
      %v4686 = vpop.f32.mrf.mxu0
      %v4687 = vadd.f32 %v2367, %v4686
      %v4688 = vpop.f32.mrf.mxu0
      %4689 = vmatprep.mubr.bf16.mxu0 0
      %4690 = vmatmul.mubr.bf16.gmra.mxu0 %v4605
      %v4691 = vpop.f32.mrf.mxu0
      %v4692 = vadd.f32 %v2372, %v4691
      %v4693 = vpop.f32.mrf.mxu0
      %v4694 = vpop.f32.mrf.mxu0
      %v4695 = vadd.f32 %v2375, %v4694
      %v4696 = vpop.f32.mrf.mxu0
      %4697 = vmatprep.mubr.bf16.mxu0 0
      %4698 = vmatmul.mubr.bf16.gmra.mxu0 %v4608
      %v4699 = vpop.f32.mrf.mxu0
      %v4700 = vadd.f32 %v2380, %v4699
      %v4701 = vpop.f32.mrf.mxu0
      %v4702 = vpop.f32.mrf.mxu0
      %v4703 = vadd.f32 %v2383, %v4702
      %v4704 = vpop.f32.mrf.mxu0
      %4705 = vmatprep.mubr.bf16.mxu0 0
      %4706 = vmatmul.mubr.bf16.gmra.mxu0 %v4611
      %v4707 = vpop.f32.mrf.mxu0
      %v4708 = vadd.f32 %v2388, %v4707
      %v4709 = vpop.f32.mrf.mxu0
      %v4710 = vpop.f32.mrf.mxu0
      %v4711 = vadd.f32 %v2391, %v4710
      %v4712 = vpop.f32.mrf.mxu0
      %4713 = vmatprep.mubr.bf16.mxu0 0
      %4714 = vmatmul.mubr.bf16.gmra.mxu0 %v4614
      %v4715 = vpop.f32.mrf.mxu0
      %v4716 = vadd.f32 %v2396, %v4715
      %v4717 = vpop.f32.mrf.mxu0
      %v4718 = vpop.f32.mrf.mxu0
      %v4719 = vadd.f32 %v2399, %v4718
      %v4720 = vpop.f32.mrf.mxu0
      %4721 = vmatprep.mubr.bf16.mxu0 0
      %4722 = vmatmul.mubr.bf16.gmra.mxu0 %v4617
      %v4723 = vpop.f32.mrf.mxu0
      %v4724 = vadd.f32 %v2404, %v4723
      %v4725 = vpop.f32.mrf.mxu0
      %v4726 = vpop.f32.mrf.mxu0
      %v4727 = vadd.f32 %v2407, %v4726
      %v4728 = vpop.f32.mrf.mxu0
      %4729 = vmatprep.mubr.bf16.mxu0 0
      %4730 = vmatmul.mubr.bf16.gmra.mxu0 %v4620
      %v4731 = vpop.f32.mrf.mxu0
      %v4732 = vadd.f32 %v2412, %v4731
      %v4733 = vpop.f32.mrf.mxu0
      %v4734 = vpop.f32.mrf.mxu0
      %v4735 = vadd.f32 %v2415, %v4734
      %v4736 = vpop.f32.mrf.mxu0
      %4737 = vmatprep.mubr.bf16.mxu0 0
      %4738 = vmatmul.mubr.bf16.gmra.mxu0 %v4623
      %v4739 = vpop.f32.mrf.mxu0
      %v4740 = vadd.f32 %v2420, %v4739
      %v4741 = vpop.f32.mrf.mxu0
      %v4742 = vpop.f32.mrf.mxu0
      %v4743 = vadd.f32 %v2423, %v4742
      %v4744 = vpop.f32.mrf.mxu0
      %4745 = vmatprep.mubr.bf16.mxu0 0
      %4746 = vmatmul.mubr.bf16.gmra.mxu0 %v4626
      %v4747 = vpop.f32.mrf.mxu0
      %v4748 = vadd.f32 %v2428, %v4747
      %v4749 = vpop.f32.mrf.mxu0
      %v4750 = vpop.f32.mrf.mxu0
      %v4751 = vadd.f32 %v2431, %v4750
      %v4752 = vpop.f32.mrf.mxu0
      %4753 = vmatprep.mubr.bf16.mxu0 0
      %4754 = vmatmul.mubr.bf16.gmra.mxu0 %v4629
      %v4755 = vpop.f32.mrf.mxu0
      %v4756 = vadd.f32 %v2436, %v4755
      %v4757 = vpop.f32.mrf.mxu0
      %v4758 = vpop.f32.mrf.mxu0
      %v4759 = vadd.f32 %v2439, %v4758
      %v4760 = vpop.f32.mrf.mxu0
      %4761 = vmatprep.mubr.bf16.mxu0 0
      %4762 = vmatmul.mubr.bf16.gmra.mxu0 %v4632
      %v4763 = vpop.f32.mrf.mxu0
      %v4764 = vadd.f32 %v2444, %v4763
      %v4765 = vpop.f32.mrf.mxu0
      %v4766 = vpop.f32.mrf.mxu0
      %v4767 = vadd.f32 %v2447, %v4766
      %v4768 = vpop.f32.mrf.mxu0
      %4769 = vmatprep.mubr.bf16.mxu0 0
      %4770 = vmatmul.mubr.bf16.gmra.mxu0 %v4635
      %v4771 = vpop.f32.mrf.mxu0
      %v4772 = vadd.f32 %v2452, %v4771
      %v4773 = vpop.f32.mrf.mxu0
      %v4774 = vpop.f32.mrf.mxu0
      %v4775 = vadd.f32 %v2455, %v4774
      %v4776 = vpop.f32.mrf.mxu0
      %4777 = vmatprep.mubr.bf16.mxu0 0
      %4778 = vmatmul.mubr.bf16.gmra.mxu0 %v4638
      %v4779 = vpop.f32.mrf.mxu0
      %v4780 = vadd.f32 %v2460, %v4779
      %v4781 = vpop.f32.mrf.mxu0
      %v4782 = vpop.f32.mrf.mxu0
      %v4783 = vadd.f32 %v2463, %v4782
      %v4784 = vpop.f32.mrf.mxu0
      %4785 = vmatprep.mubr.bf16.mxu0 0
      %4786 = vmatmul.mubr.bf16.gmra.mxu0 %v4641
      %v4787 = vpop.f32.mrf.mxu0
      %v4788 = vadd.f32 %v2468, %v4787
      %v4789 = vpop.f32.mrf.mxu0
      %v4790 = vpop.f32.mrf.mxu0
      %v4791 = vadd.f32 %v2471, %v4790
      %v4792 = vpop.f32.mrf.mxu0
      %4793 = vmatprep.mubr.bf16.mxu0 0
      %4794 = vmatmul.mubr.bf16.gmra.mxu0 %v4644
      %v4795 = vpop.f32.mrf.mxu0
      %v4796 = vadd.f32 %v2476, %v4795
      %v4797 = vpop.f32.mrf.mxu0
      %v4798 = vpop.f32.mrf.mxu0
      %v4799 = vadd.f32 %v2479, %v4798
      %v4800 = vpop.f32.mrf.mxu0
      %4801 = vmatprep.mubr.bf16.mxu0 0
      %4802 = vmatmul.mubr.bf16.gmra.mxu0 %v4647
      %v4803 = vpop.f32.mrf.mxu0
      %v4804 = vadd.f32 %v2484, %v4803
      %v4805 = vpop.f32.mrf.mxu0
      %v4806 = vpop.f32.mrf.mxu0
      %v4807 = vadd.f32 %v2487, %v4806
      %v4808 = vpop.f32.mrf.mxu0
      %4809 = vdwg.mxu0
      %v4842 = vunpack.c.l.b16 %v421
      %v4843 = vunpack.c.l.b16 %v422
      %v4844 = vunpack.c.l.b16 %v423
      %v4845 = vunpack.c.l.b16 %v424
      %v4846 = vunpack.c.l.b16 %v425
      %v4847 = vunpack.c.l.b16 %v426
      %v4848 = vunpack.c.l.b16 %v427
      %v4849 = vunpack.c.l.b16 %v428
      %v4850 = vunpack.c.l.b16 %v429
      %v4851 = vunpack.c.l.b16 %v430
      %v4852 = vunpack.c.l.b16 %v431
      %v4853 = vunpack.c.l.b16 %v432
      %v4854 = vunpack.c.l.b16 %v433
      %v4855 = vunpack.c.l.b16 %v434
      %v4856 = vunpack.c.l.b16 %v435
      %v4857 = vunpack.c.l.b16 %v436
      %v4858 = vunpack.c.l.b16 %v437
      %v4859 = vunpack.c.l.b16 %v438
      %v4860 = vunpack.c.l.b16 %v439
      %v4861 = vunpack.c.l.b16 %v440
      %v4862 = vunpack.c.l.b16 %v441
      %v4863 = vunpack.c.l.b16 %v442
      %v4864 = vunpack.c.l.b16 %v443
      %v4865 = vunpack.c.l.b16 %v444
      %v4866 = vunpack.c.l.b16 %v445
      %v4867 = vunpack.c.l.b16 %v446
      %v4868 = vunpack.c.l.b16 %v447
      %v4869 = vunpack.c.l.b16 %v448
      %v4870 = vunpack.c.l.b16 %v449
      %v4871 = vunpack.c.l.b16 %v450
      %v4872 = vunpack.c.l.b16 %v451
      %v4873 = vunpack.c.l.b16 %v452
      %v4874 = vpack.c.b16 %v4843, %v4842
      %v4875 = vpack.c.b16 %v4845, %v4844
      %v4876 = vpack.c.b16 %v4847, %v4846
      %v4877 = vpack.c.b16 %v4849, %v4848
      %v4878 = vpack.c.b16 %v4851, %v4850
      %v4879 = vpack.c.b16 %v4853, %v4852
      %v4880 = vpack.c.b16 %v4855, %v4854
      %v4881 = vpack.c.b16 %v4857, %v4856
      %v4882 = vpack.c.b16 %v4859, %v4858
      %v4883 = vpack.c.b16 %v4861, %v4860
      %v4884 = vpack.c.b16 %v4863, %v4862
      %v4885 = vpack.c.b16 %v4865, %v4864
      %v4886 = vpack.c.b16 %v4867, %v4866
      %v4887 = vpack.c.b16 %v4869, %v4868
      %v4888 = vpack.c.b16 %v4871, %v4870
      %v4889 = vpack.c.b16 %v4873, %v4872
      %v4891 = vsel %vm831, %v4874, 0
      %v4894 = vsel %vm831, %v4875, 0
      %v4897 = vsel %vm831, %v4876, 0
      %v4900 = vsel %vm831, %v4877, 0
      %v4903 = vsel %vm831, %v4878, 0
      %v4906 = vsel %vm831, %v4879, 0
      %v4909 = vsel %vm831, %v4880, 0
      %v4912 = vsel %vm831, %v4881, 0
      %v4915 = vsel %vm831, %v4882, 0
      %v4918 = vsel %vm831, %v4883, 0
      %v4921 = vsel %vm831, %v4884, 0
      %v4924 = vsel %vm831, %v4885, 0
      %v4927 = vsel %vm831, %v4886, 0
      %v4930 = vsel %vm831, %v4887, 0
      %v4933 = vsel %vm831, %v4888, 0
      %v4936 = vsel %vm831, %v4889, 0
      %4938 = vmatprep.subr.bf16.mxu0 0
      %4939 = vmatpush1.bf16.msra.mxu0 0
      %4940 = vmatprep.subr.bf16.mxu0 0
      %4941 = vmatpush1.bf16.msra.mxu0 0
      %4942 = vmatprep.subr.bf16.mxu0 0
      %4943 = vmatpush1.bf16.msra.mxu0 0
      %4944 = vmatprep.subr.bf16.mxu0 0
      %4945 = vmatpush1.bf16.msra.mxu0 0
      %4946 = vmatprep.subr.bf16.mxu0 0
      %4947 = vmatpush1.bf16.msra.mxu0 0
      %4948 = vmatprep.subr.bf16.mxu0 0
      %4949 = vmatpush1.bf16.msra.mxu0 0
      %4950 = vmatprep.subr.bf16.mxu0 0
      %4951 = vmatpush1.bf16.msra.mxu0 0
      %4952 = vmatprep.subr.bf16.mxu0 0
      %4953 = vmatpush1.bf16.msra.mxu0 %v3202
      %4954 = vmatprep.subr.bf16.mxu0 0
      %4955 = vmatpush2.bf16.msra.mxu0 0
      %4956 = vmatprep.subr.bf16.mxu0 0
      %4957 = vmatpush2.bf16.msra.mxu0 0
      %4958 = vmatprep.subr.bf16.mxu0 0
      %4959 = vmatpush2.bf16.msra.mxu0 0
      %4960 = vmatprep.subr.bf16.mxu0 0
      %4961 = vmatpush2.bf16.msra.mxu0 0
      %4962 = vmatprep.subr.bf16.mxu0 0
      %4963 = vmatpush2.bf16.msra.mxu0 0
      %4964 = vmatprep.subr.bf16.mxu0 0
      %4965 = vmatpush2.bf16.msra.mxu0 0
      %4966 = vmatprep.subr.bf16.mxu0 0
      %4967 = vmatpush2.bf16.msra.mxu0 0
      %4968 = vmatprep.subr.bf16.mxu0 0
      %4969 = vmatpush2.bf16.msra.mxu0 0
      %4970 = vmatprep.mubr.bf16.mxu0 0
      %4971 = vmatmul.mubr.bf16.gmra.mxu0 %v4891
      %v4972 = vpop.f32.mrf.mxu0
      %v4973 = vadd.f32 %v2653, %v4972
      %v4974 = vpop.f32.mrf.mxu0
      %v4975 = vpop.f32.mrf.mxu0
      %v4976 = vadd.f32 %v2656, %v4975
      %v4977 = vpop.f32.mrf.mxu0
      %4978 = vmatprep.mubr.bf16.mxu0 0
      %4979 = vmatmul.mubr.bf16.gmra.mxu0 %v4894
      %v4980 = vpop.f32.mrf.mxu0
      %v4981 = vadd.f32 %v2661, %v4980
      %v4982 = vpop.f32.mrf.mxu0
      %v4983 = vpop.f32.mrf.mxu0
      %v4984 = vadd.f32 %v2664, %v4983
      %v4985 = vpop.f32.mrf.mxu0
      %4986 = vmatprep.mubr.bf16.mxu0 0
      %4987 = vmatmul.mubr.bf16.gmra.mxu0 %v4897
      %v4988 = vpop.f32.mrf.mxu0
      %v4989 = vadd.f32 %v2669, %v4988
      %v4990 = vpop.f32.mrf.mxu0
      %v4991 = vpop.f32.mrf.mxu0
      %v4992 = vadd.f32 %v2672, %v4991
      %v4993 = vpop.f32.mrf.mxu0
      %4994 = vmatprep.mubr.bf16.mxu0 0
      %4995 = vmatmul.mubr.bf16.gmra.mxu0 %v4900
      %v4996 = vpop.f32.mrf.mxu0
      %v4997 = vadd.f32 %v2677, %v4996
      %v4998 = vpop.f32.mrf.mxu0
      %v4999 = vpop.f32.mrf.mxu0
      %v5000 = vadd.f32 %v2680, %v4999
      %v5001 = vpop.f32.mrf.mxu0
      %5002 = vmatprep.mubr.bf16.mxu0 0
      %5003 = vmatmul.mubr.bf16.gmra.mxu0 %v4903
      %v5004 = vpop.f32.mrf.mxu0
      %v5005 = vadd.f32 %v2685, %v5004
      %v5006 = vpop.f32.mrf.mxu0
      %v5007 = vpop.f32.mrf.mxu0
      %v5008 = vadd.f32 %v2688, %v5007
      %v5009 = vpop.f32.mrf.mxu0
      %5010 = vmatprep.mubr.bf16.mxu0 0
      %5011 = vmatmul.mubr.bf16.gmra.mxu0 %v4906
      %v5012 = vpop.f32.mrf.mxu0
      %v5013 = vadd.f32 %v2693, %v5012
      %v5014 = vpop.f32.mrf.mxu0
      %v5015 = vpop.f32.mrf.mxu0
      %v5016 = vadd.f32 %v2696, %v5015
      %v5017 = vpop.f32.mrf.mxu0
      %5018 = vmatprep.mubr.bf16.mxu0 0
      %5019 = vmatmul.mubr.bf16.gmra.mxu0 %v4909
      %v5020 = vpop.f32.mrf.mxu0
      %v5021 = vadd.f32 %v2701, %v5020
      %v5022 = vpop.f32.mrf.mxu0
      %v5023 = vpop.f32.mrf.mxu0
      %v5024 = vadd.f32 %v2704, %v5023
      %v5025 = vpop.f32.mrf.mxu0
      %5026 = vmatprep.mubr.bf16.mxu0 0
      %5027 = vmatmul.mubr.bf16.gmra.mxu0 %v4912
      %v5028 = vpop.f32.mrf.mxu0
      %v5029 = vadd.f32 %v2709, %v5028
      %v5030 = vpop.f32.mrf.mxu0
      %v5031 = vpop.f32.mrf.mxu0
      %v5032 = vadd.f32 %v2712, %v5031
      %v5033 = vpop.f32.mrf.mxu0
      %5034 = vmatprep.mubr.bf16.mxu0 0
      %5035 = vmatmul.mubr.bf16.gmra.mxu0 %v4915
      %v5036 = vpop.f32.mrf.mxu0
      %v5037 = vadd.f32 %v2717, %v5036
      %v5038 = vpop.f32.mrf.mxu0
      %v5039 = vpop.f32.mrf.mxu0
      %v5040 = vadd.f32 %v2720, %v5039
      %v5041 = vpop.f32.mrf.mxu0
      %5042 = vmatprep.mubr.bf16.mxu0 0
      %5043 = vmatmul.mubr.bf16.gmra.mxu0 %v4918
      %v5044 = vpop.f32.mrf.mxu0
      %v5045 = vadd.f32 %v2725, %v5044
      %v5046 = vpop.f32.mrf.mxu0
      %v5047 = vpop.f32.mrf.mxu0
      %v5048 = vadd.f32 %v2728, %v5047
      %v5049 = vpop.f32.mrf.mxu0
      %5050 = vmatprep.mubr.bf16.mxu0 0
      %5051 = vmatmul.mubr.bf16.gmra.mxu0 %v4921
      %v5052 = vpop.f32.mrf.mxu0
      %v5053 = vadd.f32 %v2733, %v5052
      %v5054 = vpop.f32.mrf.mxu0
      %v5055 = vpop.f32.mrf.mxu0
      %v5056 = vadd.f32 %v2736, %v5055
      %v5057 = vpop.f32.mrf.mxu0
      %5058 = vmatprep.mubr.bf16.mxu0 0
      %5059 = vmatmul.mubr.bf16.gmra.mxu0 %v4924
      %v5060 = vpop.f32.mrf.mxu0
      %v5061 = vadd.f32 %v2741, %v5060
      %v5062 = vpop.f32.mrf.mxu0
      %v5063 = vpop.f32.mrf.mxu0
      %v5064 = vadd.f32 %v2744, %v5063
      %v5065 = vpop.f32.mrf.mxu0
      %5066 = vmatprep.mubr.bf16.mxu0 0
      %5067 = vmatmul.mubr.bf16.gmra.mxu0 %v4927
      %v5068 = vpop.f32.mrf.mxu0
      %v5069 = vadd.f32 %v2749, %v5068
      %v5070 = vpop.f32.mrf.mxu0
      %v5071 = vpop.f32.mrf.mxu0
      %v5072 = vadd.f32 %v2752, %v5071
      %v5073 = vpop.f32.mrf.mxu0
      %5074 = vmatprep.mubr.bf16.mxu0 0
      %5075 = vmatmul.mubr.bf16.gmra.mxu0 %v4930
      %v5076 = vpop.f32.mrf.mxu0
      %v5077 = vadd.f32 %v2757, %v5076
      %v5078 = vpop.f32.mrf.mxu0
      %v5079 = vpop.f32.mrf.mxu0
      %v5080 = vadd.f32 %v2760, %v5079
      %v5081 = vpop.f32.mrf.mxu0
      %5082 = vmatprep.mubr.bf16.mxu0 0
      %5083 = vmatmul.mubr.bf16.gmra.mxu0 %v4933
      %v5084 = vpop.f32.mrf.mxu0
      %v5085 = vadd.f32 %v2765, %v5084
      %v5086 = vpop.f32.mrf.mxu0
      %v5087 = vpop.f32.mrf.mxu0
      %v5088 = vadd.f32 %v2768, %v5087
      %v5089 = vpop.f32.mrf.mxu0
      %5090 = vmatprep.mubr.bf16.mxu0 0
      %5091 = vmatmul.mubr.bf16.gmra.mxu0 %v4936
      %v5092 = vpop.f32.mrf.mxu0
      %v5093 = vadd.f32 %v2773, %v5092
      %v5094 = vpop.f32.mrf.mxu0
      %v5095 = vpop.f32.mrf.mxu0
      %v5096 = vadd.f32 %v2776, %v5095
      %v5097 = vpop.f32.mrf.mxu0
      %5098 = vdwg.mxu0
      %v5131 = vunpack.c.l.b16 %v453
      %v5132 = vunpack.c.l.b16 %v454
      %v5133 = vunpack.c.l.b16 %v455
      %v5134 = vunpack.c.l.b16 %v456
      %v5135 = vunpack.c.l.b16 %v457
      %v5136 = vunpack.c.l.b16 %v458
      %v5137 = vunpack.c.l.b16 %v459
      %v5138 = vunpack.c.l.b16 %v460
      %v5139 = vunpack.c.l.b16 %v461
      %v5140 = vunpack.c.l.b16 %v462
      %v5141 = vunpack.c.l.b16 %v463
      %v5142 = vunpack.c.l.b16 %v464
      %v5143 = vunpack.c.l.b16 %v465
      %v5144 = vunpack.c.l.b16 %v466
      %v5145 = vunpack.c.l.b16 %v467
      %v5146 = vunpack.c.l.b16 %v468
      %v5147 = vunpack.c.l.b16 %v469
      %v5148 = vunpack.c.l.b16 %v470
      %v5149 = vunpack.c.l.b16 %v471
      %v5150 = vunpack.c.l.b16 %v472
      %v5151 = vunpack.c.l.b16 %v473
      %v5152 = vunpack.c.l.b16 %v474
      %v5153 = vunpack.c.l.b16 %v475
      %v5154 = vunpack.c.l.b16 %v476
      %v5155 = vunpack.c.l.b16 %v477
      %v5156 = vunpack.c.l.b16 %v478
      %v5157 = vunpack.c.l.b16 %v479
      %v5158 = vunpack.c.l.b16 %v480
      %v5159 = vunpack.c.l.b16 %v481
      %v5160 = vunpack.c.l.b16 %v482
      %v5161 = vunpack.c.l.b16 %v483
      %v5162 = vunpack.c.l.b16 %v484
      %v5163 = vpack.c.b16 %v5132, %v5131
      %v5164 = vpack.c.b16 %v5134, %v5133
      %v5165 = vpack.c.b16 %v5136, %v5135
      %v5166 = vpack.c.b16 %v5138, %v5137
      %v5167 = vpack.c.b16 %v5140, %v5139
      %v5168 = vpack.c.b16 %v5142, %v5141
      %v5169 = vpack.c.b16 %v5144, %v5143
      %v5170 = vpack.c.b16 %v5146, %v5145
      %v5171 = vpack.c.b16 %v5148, %v5147
      %v5172 = vpack.c.b16 %v5150, %v5149
      %v5173 = vpack.c.b16 %v5152, %v5151
      %v5174 = vpack.c.b16 %v5154, %v5153
      %v5175 = vpack.c.b16 %v5156, %v5155
      %v5176 = vpack.c.b16 %v5158, %v5157
      %v5177 = vpack.c.b16 %v5160, %v5159
      %v5178 = vpack.c.b16 %v5162, %v5161
      %v5180 = vsel %vm831, %v5163, 0
      %v5183 = vsel %vm831, %v5164, 0
      %v5186 = vsel %vm831, %v5165, 0
      %v5189 = vsel %vm831, %v5166, 0
      %v5192 = vsel %vm831, %v5167, 0
      %v5195 = vsel %vm831, %v5168, 0
      %v5198 = vsel %vm831, %v5169, 0
      %v5201 = vsel %vm831, %v5170, 0
      %v5204 = vsel %vm831, %v5171, 0
      %v5207 = vsel %vm831, %v5172, 0
      %v5210 = vsel %vm831, %v5173, 0
      %v5213 = vsel %vm831, %v5174, 0
      %v5216 = vsel %vm831, %v5175, 0
      %v5219 = vsel %vm831, %v5176, 0
      %v5222 = vsel %vm831, %v5177, 0
      %v5225 = vsel %vm831, %v5178, 0
      %5227 = vmatprep.subr.bf16.mxu0 0
      %5228 = vmatpush1.bf16.msra.mxu0 0
      %5229 = vmatprep.subr.bf16.mxu0 0
      %5230 = vmatpush1.bf16.msra.mxu0 0
      %5231 = vmatprep.subr.bf16.mxu0 0
      %5232 = vmatpush1.bf16.msra.mxu0 0
      %5233 = vmatprep.subr.bf16.mxu0 0
      %5234 = vmatpush1.bf16.msra.mxu0 0
      %5235 = vmatprep.subr.bf16.mxu0 0
      %5236 = vmatpush1.bf16.msra.mxu0 0
      %5237 = vmatprep.subr.bf16.mxu0 0
      %5238 = vmatpush1.bf16.msra.mxu0 0
      %5239 = vmatprep.subr.bf16.mxu0 0
      %5240 = vmatpush1.bf16.msra.mxu0 0
      %5241 = vmatprep.subr.bf16.mxu0 0
      %5242 = vmatpush1.bf16.msra.mxu0 %v3202
      %5243 = vmatprep.subr.bf16.mxu0 0
      %5244 = vmatpush2.bf16.msra.mxu0 0
      %5245 = vmatprep.subr.bf16.mxu0 0
      %5246 = vmatpush2.bf16.msra.mxu0 0
      %5247 = vmatprep.subr.bf16.mxu0 0
      %5248 = vmatpush2.bf16.msra.mxu0 0
      %5249 = vmatprep.subr.bf16.mxu0 0
      %5250 = vmatpush2.bf16.msra.mxu0 0
      %5251 = vmatprep.subr.bf16.mxu0 0
      %5252 = vmatpush2.bf16.msra.mxu0 0
      %5253 = vmatprep.subr.bf16.mxu0 0
      %5254 = vmatpush2.bf16.msra.mxu0 0
      %5255 = vmatprep.subr.bf16.mxu0 0
      %5256 = vmatpush2.bf16.msra.mxu0 0
      %5257 = vmatprep.subr.bf16.mxu0 0
      %5258 = vmatpush2.bf16.msra.mxu0 0
      %5259 = vmatprep.mubr.bf16.mxu0 0
      %5260 = vmatmul.mubr.bf16.gmra.mxu0 %v5180
      %v5261 = vpop.f32.mrf.mxu0
      %v5262 = vadd.f32 %v2942, %v5261
      %v5263 = vpop.f32.mrf.mxu0
      %v5264 = vpop.f32.mrf.mxu0
      %v5265 = vadd.f32 %v2945, %v5264
      %v5266 = vpop.f32.mrf.mxu0
      %5267 = vmatprep.mubr.bf16.mxu0 0
      %5268 = vmatmul.mubr.bf16.gmra.mxu0 %v5183
      %v5269 = vpop.f32.mrf.mxu0
      %v5270 = vadd.f32 %v2950, %v5269
      %v5271 = vpop.f32.mrf.mxu0
      %v5272 = vpop.f32.mrf.mxu0
      %v5273 = vadd.f32 %v2953, %v5272
      %v5274 = vpop.f32.mrf.mxu0
      %5275 = vmatprep.mubr.bf16.mxu0 0
      %5276 = vmatmul.mubr.bf16.gmra.mxu0 %v5186
      %v5277 = vpop.f32.mrf.mxu0
      %v5278 = vadd.f32 %v2958, %v5277
      %v5279 = vpop.f32.mrf.mxu0
      %v5280 = vpop.f32.mrf.mxu0
      %v5281 = vadd.f32 %v2961, %v5280
      %v5282 = vpop.f32.mrf.mxu0
      %5283 = vmatprep.mubr.bf16.mxu0 0
      %5284 = vmatmul.mubr.bf16.gmra.mxu0 %v5189
      %v5285 = vpop.f32.mrf.mxu0
      %v5286 = vadd.f32 %v2966, %v5285
      %v5287 = vpop.f32.mrf.mxu0
      %v5288 = vpop.f32.mrf.mxu0
      %v5289 = vadd.f32 %v2969, %v5288
      %v5290 = vpop.f32.mrf.mxu0
      %5291 = vmatprep.mubr.bf16.mxu0 0
      %5292 = vmatmul.mubr.bf16.gmra.mxu0 %v5192
      %v5293 = vpop.f32.mrf.mxu0
      %v5294 = vadd.f32 %v2974, %v5293
      %v5295 = vpop.f32.mrf.mxu0
      %v5296 = vpop.f32.mrf.mxu0
      %v5297 = vadd.f32 %v2977, %v5296
      %v5298 = vpop.f32.mrf.mxu0
      %5299 = vmatprep.mubr.bf16.mxu0 0
      %5300 = vmatmul.mubr.bf16.gmra.mxu0 %v5195
      %v5301 = vpop.f32.mrf.mxu0
      %v5302 = vadd.f32 %v2982, %v5301
      %v5303 = vpop.f32.mrf.mxu0
      %v5304 = vpop.f32.mrf.mxu0
      %v5305 = vadd.f32 %v2985, %v5304
      %v5306 = vpop.f32.mrf.mxu0
      %5307 = vmatprep.mubr.bf16.mxu0 0
      %5308 = vmatmul.mubr.bf16.gmra.mxu0 %v5198
      %v5309 = vpop.f32.mrf.mxu0
      %v5310 = vadd.f32 %v2990, %v5309
      %v5311 = vpop.f32.mrf.mxu0
      %v5312 = vpop.f32.mrf.mxu0
      %v5313 = vadd.f32 %v2993, %v5312
      %v5314 = vpop.f32.mrf.mxu0
      %5315 = vmatprep.mubr.bf16.mxu0 0
      %5316 = vmatmul.mubr.bf16.gmra.mxu0 %v5201
      %v5317 = vpop.f32.mrf.mxu0
      %v5318 = vadd.f32 %v2998, %v5317
      %v5319 = vpop.f32.mrf.mxu0
      %v5320 = vpop.f32.mrf.mxu0
      %v5321 = vadd.f32 %v3001, %v5320
      %v5322 = vpop.f32.mrf.mxu0
      %5323 = vmatprep.mubr.bf16.mxu0 0
      %5324 = vmatmul.mubr.bf16.gmra.mxu0 %v5204
      %v5325 = vpop.f32.mrf.mxu0
      %v5326 = vadd.f32 %v3006, %v5325
      %v5327 = vpop.f32.mrf.mxu0
      %v5328 = vpop.f32.mrf.mxu0
      %v5329 = vadd.f32 %v3009, %v5328
      %v5330 = vpop.f32.mrf.mxu0
      %5331 = vmatprep.mubr.bf16.mxu0 0
      %5332 = vmatmul.mubr.bf16.gmra.mxu0 %v5207
      %v5333 = vpop.f32.mrf.mxu0
      %v5334 = vadd.f32 %v3014, %v5333
      %v5335 = vpop.f32.mrf.mxu0
      %v5336 = vpop.f32.mrf.mxu0
      %v5337 = vadd.f32 %v3017, %v5336
      %v5338 = vpop.f32.mrf.mxu0
      %5339 = vmatprep.mubr.bf16.mxu0 0
      %5340 = vmatmul.mubr.bf16.gmra.mxu0 %v5210
      %v5341 = vpop.f32.mrf.mxu0
      %v5342 = vadd.f32 %v3022, %v5341
      %v5343 = vpop.f32.mrf.mxu0
      %v5344 = vpop.f32.mrf.mxu0
      %v5345 = vadd.f32 %v3025, %v5344
      %v5346 = vpop.f32.mrf.mxu0
      %5347 = vmatprep.mubr.bf16.mxu0 0
      %5348 = vmatmul.mubr.bf16.gmra.mxu0 %v5213
      %v5349 = vpop.f32.mrf.mxu0
      %v5350 = vadd.f32 %v3030, %v5349
      %v5351 = vpop.f32.mrf.mxu0
      %v5352 = vpop.f32.mrf.mxu0
      %v5353 = vadd.f32 %v3033, %v5352
      %v5354 = vpop.f32.mrf.mxu0
      %5355 = vmatprep.mubr.bf16.mxu0 0
      %5356 = vmatmul.mubr.bf16.gmra.mxu0 %v5216
      %v5357 = vpop.f32.mrf.mxu0
      %v5358 = vadd.f32 %v3038, %v5357
      %v5359 = vpop.f32.mrf.mxu0
      %v5360 = vpop.f32.mrf.mxu0
      %v5361 = vadd.f32 %v3041, %v5360
      %v5362 = vpop.f32.mrf.mxu0
      %5363 = vmatprep.mubr.bf16.mxu0 0
      %5364 = vmatmul.mubr.bf16.gmra.mxu0 %v5219
      %v5365 = vpop.f32.mrf.mxu0
      %v5366 = vadd.f32 %v3046, %v5365
      %v5367 = vpop.f32.mrf.mxu0
      %v5368 = vpop.f32.mrf.mxu0
      %v5369 = vadd.f32 %v3049, %v5368
      %v5370 = vpop.f32.mrf.mxu0
      %5371 = vmatprep.mubr.bf16.mxu0 0
      %5372 = vmatmul.mubr.bf16.gmra.mxu0 %v5222
      %v5373 = vpop.f32.mrf.mxu0
      %v5374 = vadd.f32 %v3054, %v5373
      %v5375 = vpop.f32.mrf.mxu0
      %v5376 = vpop.f32.mrf.mxu0
      %v5377 = vadd.f32 %v3057, %v5376
      %v5378 = vpop.f32.mrf.mxu0
      %5379 = vmatprep.mubr.bf16.mxu0 0
      %5380 = vmatmul.mubr.bf16.gmra.mxu0 %v5225
      %v5381 = vpop.f32.mrf.mxu0
      %v5382 = vadd.f32 %v3062, %v5381
      %v5383 = vpop.f32.mrf.mxu0
      %v5384 = vpop.f32.mrf.mxu0
      %v5385 = vadd.f32 %v3065, %v5384
      %v5386 = vpop.f32.mrf.mxu0
      %5387 = vdwg.mxu0
      %v5388 = vld [vmem:[%s222 + $0x10] sm:$0xf]
      %v5389 = vld [vmem:[%s222 + $0x14] sm:$0xf]
      %v5390 = vld [vmem:[%s222 + $0x18] sm:$0xf]
      %v5391 = vld [vmem:[%s222 + $0x1c] sm:$0xf]
      %v5392 = vld [vmem:[%s222 + $0x20] sm:$0xf]
      %v5393 = vld [vmem:[%s222 + $0x24] sm:$0xf]
      %v5394 = vld [vmem:[%s222 + $0x28] sm:$0xf]
      %v5395 = vld [vmem:[%s222 + $0x2c] sm:$0xf]
      %v5396 = vld [vmem:[%s222 + $0x30] sm:$0xf]
      %v5397 = vld [vmem:[%s222 + $0x34] sm:$0xf]
      %v5398 = vld [vmem:[%s222 + $0x38] sm:$0xf]
      %v5399 = vld [vmem:[%s222 + $0x3c] sm:$0xf]
      %v5400 = vld [vmem:[%s222 + $0x40] sm:$0xf]
      %v5401 = vld [vmem:[%s222 + $0x44] sm:$0xf]
      %v5402 = vld [vmem:[%s222 + $0x48] sm:$0xf]
      %v5403 = vld [vmem:[%s222 + $0x4c] sm:$0xf]
      %v5404 = vld [vmem:[%s222 + $0x50] sm:$0xf]
      %v5405 = vld [vmem:[%s222 + $0x54] sm:$0xf]
      %v5406 = vld [vmem:[%s222 + $0x58] sm:$0xf]
      %v5407 = vld [vmem:[%s222 + $0x5c] sm:$0xf]
      %v5408 = vld [vmem:[%s222 + $0x60] sm:$0xf]
      %v5409 = vld [vmem:[%s222 + $0x64] sm:$0xf]
      %v5410 = vld [vmem:[%s222 + $0x68] sm:$0xf]
      %v5411 = vld [vmem:[%s222 + $0x6c] sm:$0xf]
      %v5412 = vld [vmem:[%s222 + $0x70] sm:$0xf]
      %v5413 = vld [vmem:[%s222 + $0x74] sm:$0xf]
      %v5414 = vld [vmem:[%s222 + $0x78] sm:$0xf]
      %v5415 = vld [vmem:[%s222 + $0x7c] sm:$0xf]
      %v5416 = vld [vmem:[%s222 + $0x80] sm:$0xf]
      %v5417 = vld [vmem:[%s222 + $0x84] sm:$0xf]
      %v5418 = vld [vmem:[%s222 + $0x88] sm:$0xf]
      %v5419 = vld [vmem:[%s222 + $0x8c] sm:$0xf]
      %v5420 = vld [vmem:[%s222 + $0xa0] sm:$0xf]
      %v5421 = vld [vmem:[%s222 + $0xa4] sm:$0xf]
      %v5422 = vld [vmem:[%s222 + $0xa8] sm:$0xf]
      %v5423 = vld [vmem:[%s222 + $0xac] sm:$0xf]
      %v5424 = vld [vmem:[%s222 + $0xb0] sm:$0xf]
      %v5425 = vld [vmem:[%s222 + $0xb4] sm:$0xf]
      %v5426 = vld [vmem:[%s222 + $0xb8] sm:$0xf]
      %v5427 = vld [vmem:[%s222 + $0xbc] sm:$0xf]
      %v5428 = vld [vmem:[%s222 + $0xc0] sm:$0xf]
      %v5429 = vld [vmem:[%s222 + $0xc4] sm:$0xf]
      %v5430 = vld [vmem:[%s222 + $0xc8] sm:$0xf]
      %v5431 = vld [vmem:[%s222 + $0xcc] sm:$0xf]
      %v5432 = vld [vmem:[%s222 + $0xd0] sm:$0xf]
      %v5433 = vld [vmem:[%s222 + $0xd4] sm:$0xf]
      %v5434 = vld [vmem:[%s222 + $0xd8] sm:$0xf]
      %v5435 = vld [vmem:[%s222 + $0xdc] sm:$0xf]
      %v5436 = vld [vmem:[%s222 + $0xe0] sm:$0xf]
      %v5437 = vld [vmem:[%s222 + $0xe4] sm:$0xf]
      %v5438 = vld [vmem:[%s222 + $0xe8] sm:$0xf]
      %v5439 = vld [vmem:[%s222 + $0xec] sm:$0xf]
      %v5440 = vld [vmem:[%s222 + $0xf0] sm:$0xf]
      %v5441 = vld [vmem:[%s222 + $0xf4] sm:$0xf]
      %v5442 = vld [vmem:[%s222 + $0xf8] sm:$0xf]
      %v5443 = vld [vmem:[%s222 + $0xfc] sm:$0xf]
      %v5444 = vld [vmem:[%s222 + $0x100] sm:$0xf]
      %v5445 = vld [vmem:[%s222 + $0x104] sm:$0xf]
      %v5446 = vld [vmem:[%s222 + $0x108] sm:$0xf]
      %v5447 = vld [vmem:[%s222 + $0x10c] sm:$0xf]
      %v5448 = vld [vmem:[%s222 + $0x110] sm:$0xf]
      %v5449 = vld [vmem:[%s222 + $0x114] sm:$0xf]
      %v5450 = vld [vmem:[%s222 + $0x118] sm:$0xf]
      %v5451 = vld [vmem:[%s222 + $0x11c] sm:$0xf]
      %v5452 = vld [vmem:[%s222 + $0x130] sm:$0xf]
      %v5453 = vld [vmem:[%s222 + $0x134] sm:$0xf]
      %v5454 = vld [vmem:[%s222 + $0x138] sm:$0xf]
      %v5455 = vld [vmem:[%s222 + $0x13c] sm:$0xf]
      %v5456 = vld [vmem:[%s222 + $0x140] sm:$0xf]
      %v5457 = vld [vmem:[%s222 + $0x144] sm:$0xf]
      %v5458 = vld [vmem:[%s222 + $0x148] sm:$0xf]
      %v5459 = vld [vmem:[%s222 + $0x14c] sm:$0xf]
      %v5460 = vld [vmem:[%s222 + $0x150] sm:$0xf]
      %v5461 = vld [vmem:[%s222 + $0x154] sm:$0xf]
      %v5462 = vld [vmem:[%s222 + $0x158] sm:$0xf]
      %v5463 = vld [vmem:[%s222 + $0x15c] sm:$0xf]
      %v5464 = vld [vmem:[%s222 + $0x160] sm:$0xf]
      %v5465 = vld [vmem:[%s222 + $0x164] sm:$0xf]
      %v5466 = vld [vmem:[%s222 + $0x168] sm:$0xf]
      %v5467 = vld [vmem:[%s222 + $0x16c] sm:$0xf]
      %v5468 = vld [vmem:[%s222 + $0x170] sm:$0xf]
      %v5469 = vld [vmem:[%s222 + $0x174] sm:$0xf]
      %v5470 = vld [vmem:[%s222 + $0x178] sm:$0xf]
      %v5471 = vld [vmem:[%s222 + $0x17c] sm:$0xf]
      %v5472 = vld [vmem:[%s222 + $0x180] sm:$0xf]
      %v5473 = vld [vmem:[%s222 + $0x184] sm:$0xf]
      %v5474 = vld [vmem:[%s222 + $0x188] sm:$0xf]
      %v5475 = vld [vmem:[%s222 + $0x18c] sm:$0xf]
      %v5476 = vld [vmem:[%s222 + $0x190] sm:$0xf]
      %v5477 = vld [vmem:[%s222 + $0x194] sm:$0xf]
      %v5478 = vld [vmem:[%s222 + $0x198] sm:$0xf]
      %v5479 = vld [vmem:[%s222 + $0x19c] sm:$0xf]
      %v5480 = vld [vmem:[%s222 + $0x1a0] sm:$0xf]
      %v5481 = vld [vmem:[%s222 + $0x1a4] sm:$0xf]
      %v5482 = vld [vmem:[%s222 + $0x1a8] sm:$0xf]
      %v5483 = vld [vmem:[%s222 + $0x1ac] sm:$0xf]
      %v5484 = vld [vmem:[%s222 + $0x1c0] sm:$0xf]
      %v5485 = vld [vmem:[%s222 + $0x1c4] sm:$0xf]
      %v5486 = vld [vmem:[%s222 + $0x1c8] sm:$0xf]
      %v5487 = vld [vmem:[%s222 + $0x1cc] sm:$0xf]
      %v5488 = vld [vmem:[%s222 + $0x1d0] sm:$0xf]
      %v5489 = vld [vmem:[%s222 + $0x1d4] sm:$0xf]
      %v5490 = vld [vmem:[%s222 + $0x1d8] sm:$0xf]
      %v5491 = vld [vmem:[%s222 + $0x1dc] sm:$0xf]
      %v5492 = vld [vmem:[%s222 + $0x1e0] sm:$0xf]
      %v5493 = vld [vmem:[%s222 + $0x1e4] sm:$0xf]
      %v5494 = vld [vmem:[%s222 + $0x1e8] sm:$0xf]
      %v5495 = vld [vmem:[%s222 + $0x1ec] sm:$0xf]
      %v5496 = vld [vmem:[%s222 + $0x1f0] sm:$0xf]
      %v5497 = vld [vmem:[%s222 + $0x1f4] sm:$0xf]
      %v5498 = vld [vmem:[%s222 + $0x1f8] sm:$0xf]
      %v5499 = vld [vmem:[%s222 + $0x1fc] sm:$0xf]
      %v5500 = vld [vmem:[%s222 + $0x200] sm:$0xf]
      %v5501 = vld [vmem:[%s222 + $0x204] sm:$0xf]
      %v5502 = vld [vmem:[%s222 + $0x208] sm:$0xf]
      %v5503 = vld [vmem:[%s222 + $0x20c] sm:$0xf]
      %v5504 = vld [vmem:[%s222 + $0x210] sm:$0xf]
      %v5505 = vld [vmem:[%s222 + $0x214] sm:$0xf]
      %v5506 = vld [vmem:[%s222 + $0x218] sm:$0xf]
      %v5507 = vld [vmem:[%s222 + $0x21c] sm:$0xf]
      %v5508 = vld [vmem:[%s222 + $0x220] sm:$0xf]
      %v5509 = vld [vmem:[%s222 + $0x224] sm:$0xf]
      %v5510 = vld [vmem:[%s222 + $0x228] sm:$0xf]
      %v5511 = vld [vmem:[%s222 + $0x22c] sm:$0xf]
      %v5512 = vld [vmem:[%s222 + $0x230] sm:$0xf]
      %v5513 = vld [vmem:[%s222 + $0x234] sm:$0xf]
      %v5514 = vld [vmem:[%s222 + $0x238] sm:$0xf]
      %v5515 = vld [vmem:[%s222 + $0x23c] sm:$0xf]
      %v5516 = vld [vmem:[%s222 + $0x250] sm:$0xf]
      %v5517 = vld [vmem:[%s222 + $0x254] sm:$0xf]
      %v5518 = vld [vmem:[%s222 + $0x258] sm:$0xf]
      %v5519 = vld [vmem:[%s222 + $0x25c] sm:$0xf]
      %v5520 = vld [vmem:[%s222 + $0x260] sm:$0xf]
      %v5521 = vld [vmem:[%s222 + $0x264] sm:$0xf]
      %v5522 = vld [vmem:[%s222 + $0x268] sm:$0xf]
      %v5523 = vld [vmem:[%s222 + $0x26c] sm:$0xf]
      %v5524 = vld [vmem:[%s222 + $0x270] sm:$0xf]
      %v5525 = vld [vmem:[%s222 + $0x274] sm:$0xf]
      %v5526 = vld [vmem:[%s222 + $0x278] sm:$0xf]
      %v5527 = vld [vmem:[%s222 + $0x27c] sm:$0xf]
      %v5528 = vld [vmem:[%s222 + $0x280] sm:$0xf]
      %v5529 = vld [vmem:[%s222 + $0x284] sm:$0xf]
      %v5530 = vld [vmem:[%s222 + $0x288] sm:$0xf]
      %v5531 = vld [vmem:[%s222 + $0x28c] sm:$0xf]
      %v5532 = vld [vmem:[%s222 + $0x290] sm:$0xf]
      %v5533 = vld [vmem:[%s222 + $0x294] sm:$0xf]
      %v5534 = vld [vmem:[%s222 + $0x298] sm:$0xf]
      %v5535 = vld [vmem:[%s222 + $0x29c] sm:$0xf]
      %v5536 = vld [vmem:[%s222 + $0x2a0] sm:$0xf]
      %v5537 = vld [vmem:[%s222 + $0x2a4] sm:$0xf]
      %v5538 = vld [vmem:[%s222 + $0x2a8] sm:$0xf]
      %v5539 = vld [vmem:[%s222 + $0x2ac] sm:$0xf]
      %v5540 = vld [vmem:[%s222 + $0x2b0] sm:$0xf]
      %v5541 = vld [vmem:[%s222 + $0x2b4] sm:$0xf]
      %v5542 = vld [vmem:[%s222 + $0x2b8] sm:$0xf]
      %v5543 = vld [vmem:[%s222 + $0x2bc] sm:$0xf]
      %v5544 = vld [vmem:[%s222 + $0x2c0] sm:$0xf]
      %v5545 = vld [vmem:[%s222 + $0x2c4] sm:$0xf]
      %v5546 = vld [vmem:[%s222 + $0x2c8] sm:$0xf]
      %v5547 = vld [vmem:[%s222 + $0x2cc] sm:$0xf]
      %v5548 = vld [vmem:[%s222 + $0x2e0] sm:$0xf]
      %v5549 = vld [vmem:[%s222 + $0x2e4] sm:$0xf]
      %v5550 = vld [vmem:[%s222 + $0x2e8] sm:$0xf]
      %v5551 = vld [vmem:[%s222 + $0x2ec] sm:$0xf]
      %v5552 = vld [vmem:[%s222 + $0x2f0] sm:$0xf]
      %v5553 = vld [vmem:[%s222 + $0x2f4] sm:$0xf]
      %v5554 = vld [vmem:[%s222 + $0x2f8] sm:$0xf]
      %v5555 = vld [vmem:[%s222 + $0x2fc] sm:$0xf]
      %v5556 = vld [vmem:[%s222 + $0x300] sm:$0xf]
      %v5557 = vld [vmem:[%s222 + $0x304] sm:$0xf]
      %v5558 = vld [vmem:[%s222 + $0x308] sm:$0xf]
      %v5559 = vld [vmem:[%s222 + $0x30c] sm:$0xf]
      %v5560 = vld [vmem:[%s222 + $0x310] sm:$0xf]
      %v5561 = vld [vmem:[%s222 + $0x314] sm:$0xf]
      %v5562 = vld [vmem:[%s222 + $0x318] sm:$0xf]
      %v5563 = vld [vmem:[%s222 + $0x31c] sm:$0xf]
      %v5564 = vld [vmem:[%s222 + $0x320] sm:$0xf]
      %v5565 = vld [vmem:[%s222 + $0x324] sm:$0xf]
      %v5566 = vld [vmem:[%s222 + $0x328] sm:$0xf]
      %v5567 = vld [vmem:[%s222 + $0x32c] sm:$0xf]
      %v5568 = vld [vmem:[%s222 + $0x330] sm:$0xf]
      %v5569 = vld [vmem:[%s222 + $0x334] sm:$0xf]
      %v5570 = vld [vmem:[%s222 + $0x338] sm:$0xf]
      %v5571 = vld [vmem:[%s222 + $0x33c] sm:$0xf]
      %v5572 = vld [vmem:[%s222 + $0x340] sm:$0xf]
      %v5573 = vld [vmem:[%s222 + $0x344] sm:$0xf]
      %v5574 = vld [vmem:[%s222 + $0x348] sm:$0xf]
      %v5575 = vld [vmem:[%s222 + $0x34c] sm:$0xf]
      %v5576 = vld [vmem:[%s222 + $0x350] sm:$0xf]
      %v5577 = vld [vmem:[%s222 + $0x354] sm:$0xf]
      %v5578 = vld [vmem:[%s222 + $0x358] sm:$0xf]
      %v5579 = vld [vmem:[%s222 + $0x35c] sm:$0xf]
      %v5580 = vld [vmem:[%s222 + $0x370] sm:$0xf]
      %v5581 = vld [vmem:[%s222 + $0x374] sm:$0xf]
      %v5582 = vld [vmem:[%s222 + $0x378] sm:$0xf]
      %v5583 = vld [vmem:[%s222 + $0x37c] sm:$0xf]
      %v5584 = vld [vmem:[%s222 + $0x380] sm:$0xf]
      %v5585 = vld [vmem:[%s222 + $0x384] sm:$0xf]
      %v5586 = vld [vmem:[%s222 + $0x388] sm:$0xf]
      %v5587 = vld [vmem:[%s222 + $0x38c] sm:$0xf]
      %v5588 = vld [vmem:[%s222 + $0x390] sm:$0xf]
      %v5589 = vld [vmem:[%s222 + $0x394] sm:$0xf]
      %v5590 = vld [vmem:[%s222 + $0x398] sm:$0xf]
      %v5591 = vld [vmem:[%s222 + $0x39c] sm:$0xf]
      %v5592 = vld [vmem:[%s222 + $0x3a0] sm:$0xf]
      %v5593 = vld [vmem:[%s222 + $0x3a4] sm:$0xf]
      %v5594 = vld [vmem:[%s222 + $0x3a8] sm:$0xf]
      %v5595 = vld [vmem:[%s222 + $0x3ac] sm:$0xf]
      %v5596 = vld [vmem:[%s222 + $0x3b0] sm:$0xf]
      %v5597 = vld [vmem:[%s222 + $0x3b4] sm:$0xf]
      %v5598 = vld [vmem:[%s222 + $0x3b8] sm:$0xf]
      %v5599 = vld [vmem:[%s222 + $0x3bc] sm:$0xf]
      %v5600 = vld [vmem:[%s222 + $0x3c0] sm:$0xf]
      %v5601 = vld [vmem:[%s222 + $0x3c4] sm:$0xf]
      %v5602 = vld [vmem:[%s222 + $0x3c8] sm:$0xf]
      %v5603 = vld [vmem:[%s222 + $0x3cc] sm:$0xf]
      %v5604 = vld [vmem:[%s222 + $0x3d0] sm:$0xf]
      %v5605 = vld [vmem:[%s222 + $0x3d4] sm:$0xf]
      %v5606 = vld [vmem:[%s222 + $0x3d8] sm:$0xf]
      %v5607 = vld [vmem:[%s222 + $0x3dc] sm:$0xf]
      %v5608 = vld [vmem:[%s222 + $0x3e0] sm:$0xf]
      %v5609 = vld [vmem:[%s222 + $0x3e4] sm:$0xf]
      %v5610 = vld [vmem:[%s222 + $0x3e8] sm:$0xf]
      %v5611 = vld [vmem:[%s222 + $0x3ec] sm:$0xf]
      %v5612 = vld [vmem:[%s222 + $0x400] sm:$0xf]
      %v5613 = vld [vmem:[%s222 + $0x404] sm:$0xf]
      %v5614 = vld [vmem:[%s222 + $0x408] sm:$0xf]
      %v5615 = vld [vmem:[%s222 + $0x40c] sm:$0xf]
      %v5616 = vld [vmem:[%s222 + $0x410] sm:$0xf]
      %v5617 = vld [vmem:[%s222 + $0x414] sm:$0xf]
      %v5618 = vld [vmem:[%s222 + $0x418] sm:$0xf]
      %v5619 = vld [vmem:[%s222 + $0x41c] sm:$0xf]
      %v5620 = vld [vmem:[%s222 + $0x420] sm:$0xf]
      %v5621 = vld [vmem:[%s222 + $0x424] sm:$0xf]
      %v5622 = vld [vmem:[%s222 + $0x428] sm:$0xf]
      %v5623 = vld [vmem:[%s222 + $0x42c] sm:$0xf]
      %v5624 = vld [vmem:[%s222 + $0x430] sm:$0xf]
      %v5625 = vld [vmem:[%s222 + $0x434] sm:$0xf]
      %v5626 = vld [vmem:[%s222 + $0x438] sm:$0xf]
      %v5627 = vld [vmem:[%s222 + $0x43c] sm:$0xf]
      %v5628 = vld [vmem:[%s222 + $0x440] sm:$0xf]
      %v5629 = vld [vmem:[%s222 + $0x444] sm:$0xf]
      %v5630 = vld [vmem:[%s222 + $0x448] sm:$0xf]
      %v5631 = vld [vmem:[%s222 + $0x44c] sm:$0xf]
      %v5632 = vld [vmem:[%s222 + $0x450] sm:$0xf]
      %v5633 = vld [vmem:[%s222 + $0x454] sm:$0xf]
      %v5634 = vld [vmem:[%s222 + $0x458] sm:$0xf]
      %v5635 = vld [vmem:[%s222 + $0x45c] sm:$0xf]
      %v5636 = vld [vmem:[%s222 + $0x460] sm:$0xf]
      %v5637 = vld [vmem:[%s222 + $0x464] sm:$0xf]
      %v5638 = vld [vmem:[%s222 + $0x468] sm:$0xf]
      %v5639 = vld [vmem:[%s222 + $0x46c] sm:$0xf]
      %v5640 = vld [vmem:[%s222 + $0x470] sm:$0xf]
      %v5641 = vld [vmem:[%s222 + $0x474] sm:$0xf]
      %v5642 = vld [vmem:[%s222 + $0x478] sm:$0xf]
      %v5643 = vld [vmem:[%s222 + $0x47c] sm:$0xf]
      %s5644 = scalar_lea.vmem %s1, 16
      %v5645 = vld [vmem:[%s5644] sm:$0xf]
      %v5646 = vld [vmem:[%s5644 + $0x4] sm:$0x3]
      %v5679 = vunpack.c.l.b16 %v5388
      %v5680 = vunpack.c.l.b16 %v5389
      %v5681 = vunpack.c.l.b16 %v5390
      %v5682 = vunpack.c.l.b16 %v5391
      %v5683 = vunpack.c.l.b16 %v5392
      %v5684 = vunpack.c.l.b16 %v5393
      %v5685 = vunpack.c.l.b16 %v5394
      %v5686 = vunpack.c.l.b16 %v5395
      %v5687 = vunpack.c.l.b16 %v5396
      %v5688 = vunpack.c.l.b16 %v5397
      %v5689 = vunpack.c.l.b16 %v5398
      %v5690 = vunpack.c.l.b16 %v5399
      %v5691 = vunpack.c.l.b16 %v5400
      %v5692 = vunpack.c.l.b16 %v5401
      %v5693 = vunpack.c.l.b16 %v5402
      %v5694 = vunpack.c.l.b16 %v5403
      %v5695 = vunpack.c.l.b16 %v5404
      %v5696 = vunpack.c.l.b16 %v5405
      %v5697 = vunpack.c.l.b16 %v5406
      %v5698 = vunpack.c.l.b16 %v5407
      %v5699 = vunpack.c.l.b16 %v5408
      %v5700 = vunpack.c.l.b16 %v5409
      %v5701 = vunpack.c.l.b16 %v5410
      %v5702 = vunpack.c.l.b16 %v5411
      %v5703 = vunpack.c.l.b16 %v5412
      %v5704 = vunpack.c.l.b16 %v5413
      %v5705 = vunpack.c.l.b16 %v5414
      %v5706 = vunpack.c.l.b16 %v5415
      %v5707 = vunpack.c.l.b16 %v5416
      %v5708 = vunpack.c.l.b16 %v5417
      %v5709 = vunpack.c.l.b16 %v5418
      %v5710 = vunpack.c.l.b16 %v5419
      %v5711 = vpack.c.b16 %v5680, %v5679
      %v5712 = vpack.c.b16 %v5682, %v5681
      %v5713 = vpack.c.b16 %v5684, %v5683
      %v5714 = vpack.c.b16 %v5686, %v5685
      %v5715 = vpack.c.b16 %v5688, %v5687
      %v5716 = vpack.c.b16 %v5690, %v5689
      %v5717 = vpack.c.b16 %v5692, %v5691
      %v5718 = vpack.c.b16 %v5694, %v5693
      %v5719 = vpack.c.b16 %v5696, %v5695
      %v5720 = vpack.c.b16 %v5698, %v5697
      %v5721 = vpack.c.b16 %v5700, %v5699
      %v5722 = vpack.c.b16 %v5702, %v5701
      %v5723 = vpack.c.b16 %v5704, %v5703
      %v5724 = vpack.c.b16 %v5706, %v5705
      %v5725 = vpack.c.b16 %v5708, %v5707
      %v5726 = vpack.c.b16 %v5710, %v5709
      %v5729 = vunpack.c.l.b16 %v5645
      %v5730 = vunpack.c.l.b16 %v5646
      %v5731 = vpack.c.b16 %v5730, %v5729
      %v5733 = vsel %vm831, %v5711, 0
      %v5736 = vsel %vm831, %v5712, 0
      %v5739 = vsel %vm831, %v5713, 0
      %v5742 = vsel %vm831, %v5714, 0
      %v5745 = vsel %vm831, %v5715, 0
      %v5748 = vsel %vm831, %v5716, 0
      %v5751 = vsel %vm831, %v5717, 0
      %v5754 = vsel %vm831, %v5718, 0
      %v5757 = vsel %vm831, %v5719, 0
      %v5760 = vsel %vm831, %v5720, 0
      %v5763 = vsel %vm831, %v5721, 0
      %v5766 = vsel %vm831, %v5722, 0
      %v5769 = vsel %vm831, %v5723, 0
      %v5772 = vsel %vm831, %v5724, 0
      %v5775 = vsel %vm831, %v5725, 0
      %v5778 = vsel %vm831, %v5726, 0
      %v5781 = vsel %vm880, %v5731, 0
      %5783 = vmatprep.subr.bf16.mxu0 0
      %5784 = vmatpush1.bf16.msra.mxu0 0
      %5785 = vmatprep.subr.bf16.mxu0 0
      %5786 = vmatpush1.bf16.msra.mxu0 0
      %5787 = vmatprep.subr.bf16.mxu0 0
      %5788 = vmatpush1.bf16.msra.mxu0 0
      %5789 = vmatprep.subr.bf16.mxu0 0
      %5790 = vmatpush1.bf16.msra.mxu0 0
      %5791 = vmatprep.subr.bf16.mxu0 0
      %5792 = vmatpush1.bf16.msra.mxu0 0
      %5793 = vmatprep.subr.bf16.mxu0 0
      %5794 = vmatpush1.bf16.msra.mxu0 0
      %5795 = vmatprep.subr.bf16.mxu0 0
      %5796 = vmatpush1.bf16.msra.mxu0 0
      %5797 = vmatprep.subr.bf16.mxu0 0
      %5798 = vmatpush1.bf16.msra.mxu0 %v5781
      %5799 = vmatprep.subr.bf16.mxu0 0
      %5800 = vmatpush2.bf16.msra.mxu0 0
      %5801 = vmatprep.subr.bf16.mxu0 0
      %5802 = vmatpush2.bf16.msra.mxu0 0
      %5803 = vmatprep.subr.bf16.mxu0 0
      %5804 = vmatpush2.bf16.msra.mxu0 0
      %5805 = vmatprep.subr.bf16.mxu0 0
      %5806 = vmatpush2.bf16.msra.mxu0 0
      %5807 = vmatprep.subr.bf16.mxu0 0
      %5808 = vmatpush2.bf16.msra.mxu0 0
      %5809 = vmatprep.subr.bf16.mxu0 0
      %5810 = vmatpush2.bf16.msra.mxu0 0
      %5811 = vmatprep.subr.bf16.mxu0 0
      %5812 = vmatpush2.bf16.msra.mxu0 0
      %5813 = vmatprep.subr.bf16.mxu0 0
      %5814 = vmatpush2.bf16.msra.mxu0 0
      %5815 = vmatprep.mubr.bf16.mxu0 0
      %5816 = vmatmul.mubr.bf16.gmra.mxu0 %v5733
      %v5817 = vpop.f32.mrf.mxu0
      %v5818 = vadd.f32 0.0, %v5817
      %v5819 = vpop.f32.mrf.mxu0
      %v5820 = vpop.f32.mrf.mxu0
      %v5821 = vadd.f32 0.0, %v5820
      %v5822 = vpop.f32.mrf.mxu0
      %5823 = vmatprep.mubr.bf16.mxu0 0
      %5824 = vmatmul.mubr.bf16.gmra.mxu0 %v5736
      %v5825 = vpop.f32.mrf.mxu0
      %v5826 = vadd.f32 0.0, %v5825
      %v5827 = vpop.f32.mrf.mxu0
      %v5828 = vpop.f32.mrf.mxu0
      %v5829 = vadd.f32 0.0, %v5828
      %v5830 = vpop.f32.mrf.mxu0
      %5831 = vmatprep.mubr.bf16.mxu0 0
      %5832 = vmatmul.mubr.bf16.gmra.mxu0 %v5739
      %v5833 = vpop.f32.mrf.mxu0
      %v5834 = vadd.f32 0.0, %v5833
      %v5835 = vpop.f32.mrf.mxu0
      %v5836 = vpop.f32.mrf.mxu0
      %v5837 = vadd.f32 0.0, %v5836
      %v5838 = vpop.f32.mrf.mxu0
      %5839 = vmatprep.mubr.bf16.mxu0 0
      %5840 = vmatmul.mubr.bf16.gmra.mxu0 %v5742
      %v5841 = vpop.f32.mrf.mxu0
      %v5842 = vadd.f32 0.0, %v5841
      %v5843 = vpop.f32.mrf.mxu0
      %v5844 = vpop.f32.mrf.mxu0
      %v5845 = vadd.f32 0.0, %v5844
      %v5846 = vpop.f32.mrf.mxu0
      %5847 = vmatprep.mubr.bf16.mxu0 0
      %5848 = vmatmul.mubr.bf16.gmra.mxu0 %v5745
      %v5849 = vpop.f32.mrf.mxu0
      %v5850 = vadd.f32 0.0, %v5849
      %v5851 = vpop.f32.mrf.mxu0
      %v5852 = vpop.f32.mrf.mxu0
      %v5853 = vadd.f32 0.0, %v5852
      %v5854 = vpop.f32.mrf.mxu0
      %5855 = vmatprep.mubr.bf16.mxu0 0
      %5856 = vmatmul.mubr.bf16.gmra.mxu0 %v5748
      %v5857 = vpop.f32.mrf.mxu0
      %v5858 = vadd.f32 0.0, %v5857
      %v5859 = vpop.f32.mrf.mxu0
      %v5860 = vpop.f32.mrf.mxu0
      %v5861 = vadd.f32 0.0, %v5860
      %v5862 = vpop.f32.mrf.mxu0
      %5863 = vmatprep.mubr.bf16.mxu0 0
      %5864 = vmatmul.mubr.bf16.gmra.mxu0 %v5751
      %v5865 = vpop.f32.mrf.mxu0
      %v5866 = vadd.f32 0.0, %v5865
      %v5867 = vpop.f32.mrf.mxu0
      %v5868 = vpop.f32.mrf.mxu0
      %v5869 = vadd.f32 0.0, %v5868
      %v5870 = vpop.f32.mrf.mxu0
      %5871 = vmatprep.mubr.bf16.mxu0 0
      %5872 = vmatmul.mubr.bf16.gmra.mxu0 %v5754
      %v5873 = vpop.f32.mrf.mxu0
      %v5874 = vadd.f32 0.0, %v5873
      %v5875 = vpop.f32.mrf.mxu0
      %v5876 = vpop.f32.mrf.mxu0
      %v5877 = vadd.f32 0.0, %v5876
      %v5878 = vpop.f32.mrf.mxu0
      %5879 = vmatprep.mubr.bf16.mxu0 0
      %5880 = vmatmul.mubr.bf16.gmra.mxu0 %v5757
      %v5881 = vpop.f32.mrf.mxu0
      %v5882 = vadd.f32 0.0, %v5881
      %v5883 = vpop.f32.mrf.mxu0
      %v5884 = vpop.f32.mrf.mxu0
      %v5885 = vadd.f32 0.0, %v5884
      %v5886 = vpop.f32.mrf.mxu0
      %5887 = vmatprep.mubr.bf16.mxu0 0
      %5888 = vmatmul.mubr.bf16.gmra.mxu0 %v5760
      %v5889 = vpop.f32.mrf.mxu0
      %v5890 = vadd.f32 0.0, %v5889
      %v5891 = vpop.f32.mrf.mxu0
      %v5892 = vpop.f32.mrf.mxu0
      %v5893 = vadd.f32 0.0, %v5892
      %v5894 = vpop.f32.mrf.mxu0
      %5895 = vmatprep.mubr.bf16.mxu0 0
      %5896 = vmatmul.mubr.bf16.gmra.mxu0 %v5763
      %v5897 = vpop.f32.mrf.mxu0
      %v5898 = vadd.f32 0.0, %v5897
      %v5899 = vpop.f32.mrf.mxu0
      %v5900 = vpop.f32.mrf.mxu0
      %v5901 = vadd.f32 0.0, %v5900
      %v5902 = vpop.f32.mrf.mxu0
      %5903 = vmatprep.mubr.bf16.mxu0 0
      %5904 = vmatmul.mubr.bf16.gmra.mxu0 %v5766
      %v5905 = vpop.f32.mrf.mxu0
      %v5906 = vadd.f32 0.0, %v5905
      %v5907 = vpop.f32.mrf.mxu0
      %v5908 = vpop.f32.mrf.mxu0
      %v5909 = vadd.f32 0.0, %v5908
      %v5910 = vpop.f32.mrf.mxu0
      %5911 = vmatprep.mubr.bf16.mxu0 0
      %5912 = vmatmul.mubr.bf16.gmra.mxu0 %v5769
      %v5913 = vpop.f32.mrf.mxu0
      %v5914 = vadd.f32 0.0, %v5913
      %v5915 = vpop.f32.mrf.mxu0
      %v5916 = vpop.f32.mrf.mxu0
      %v5917 = vadd.f32 0.0, %v5916
      %v5918 = vpop.f32.mrf.mxu0
      %5919 = vmatprep.mubr.bf16.mxu0 0
      %5920 = vmatmul.mubr.bf16.gmra.mxu0 %v5772
      %v5921 = vpop.f32.mrf.mxu0
      %v5922 = vadd.f32 0.0, %v5921
      %v5923 = vpop.f32.mrf.mxu0
      %v5924 = vpop.f32.mrf.mxu0
      %v5925 = vadd.f32 0.0, %v5924
      %v5926 = vpop.f32.mrf.mxu0
      %5927 = vmatprep.mubr.bf16.mxu0 0
      %5928 = vmatmul.mubr.bf16.gmra.mxu0 %v5775
      %v5929 = vpop.f32.mrf.mxu0
      %v5930 = vadd.f32 0.0, %v5929
      %v5931 = vpop.f32.mrf.mxu0
      %v5932 = vpop.f32.mrf.mxu0
      %v5933 = vadd.f32 0.0, %v5932
      %v5934 = vpop.f32.mrf.mxu0
      %5935 = vmatprep.mubr.bf16.mxu0 0
      %5936 = vmatmul.mubr.bf16.gmra.mxu0 %v5778
      %v5937 = vpop.f32.mrf.mxu0
      %v5938 = vadd.f32 0.0, %v5937
      %v5939 = vpop.f32.mrf.mxu0
      %v5940 = vpop.f32.mrf.mxu0
      %v5941 = vadd.f32 0.0, %v5940
      %v5942 = vpop.f32.mrf.mxu0
      %5943 = vdwg.mxu0
      %v5976 = vunpack.c.l.b16 %v5420
      %v5977 = vunpack.c.l.b16 %v5421
      %v5978 = vunpack.c.l.b16 %v5422
      %v5979 = vunpack.c.l.b16 %v5423
      %v5980 = vunpack.c.l.b16 %v5424
      %v5981 = vunpack.c.l.b16 %v5425
      %v5982 = vunpack.c.l.b16 %v5426
      %v5983 = vunpack.c.l.b16 %v5427
      %v5984 = vunpack.c.l.b16 %v5428
      %v5985 = vunpack.c.l.b16 %v5429
      %v5986 = vunpack.c.l.b16 %v5430
      %v5987 = vunpack.c.l.b16 %v5431
      %v5988 = vunpack.c.l.b16 %v5432
      %v5989 = vunpack.c.l.b16 %v5433
      %v5990 = vunpack.c.l.b16 %v5434
      %v5991 = vunpack.c.l.b16 %v5435
      %v5992 = vunpack.c.l.b16 %v5436
      %v5993 = vunpack.c.l.b16 %v5437
      %v5994 = vunpack.c.l.b16 %v5438
      %v5995 = vunpack.c.l.b16 %v5439
      %v5996 = vunpack.c.l.b16 %v5440
      %v5997 = vunpack.c.l.b16 %v5441
      %v5998 = vunpack.c.l.b16 %v5442
      %v5999 = vunpack.c.l.b16 %v5443
      %v6000 = vunpack.c.l.b16 %v5444
      %v6001 = vunpack.c.l.b16 %v5445
      %v6002 = vunpack.c.l.b16 %v5446
      %v6003 = vunpack.c.l.b16 %v5447
      %v6004 = vunpack.c.l.b16 %v5448
      %v6005 = vunpack.c.l.b16 %v5449
      %v6006 = vunpack.c.l.b16 %v5450
      %v6007 = vunpack.c.l.b16 %v5451
      %v6008 = vpack.c.b16 %v5977, %v5976
      %v6009 = vpack.c.b16 %v5979, %v5978
      %v6010 = vpack.c.b16 %v5981, %v5980
      %v6011 = vpack.c.b16 %v5983, %v5982
      %v6012 = vpack.c.b16 %v5985, %v5984
      %v6013 = vpack.c.b16 %v5987, %v5986
      %v6014 = vpack.c.b16 %v5989, %v5988
      %v6015 = vpack.c.b16 %v5991, %v5990
      %v6016 = vpack.c.b16 %v5993, %v5992
      %v6017 = vpack.c.b16 %v5995, %v5994
      %v6018 = vpack.c.b16 %v5997, %v5996
      %v6019 = vpack.c.b16 %v5999, %v5998
      %v6020 = vpack.c.b16 %v6001, %v6000
      %v6021 = vpack.c.b16 %v6003, %v6002
      %v6022 = vpack.c.b16 %v6005, %v6004
      %v6023 = vpack.c.b16 %v6007, %v6006
      %v6025 = vsel %vm831, %v6008, 0
      %v6028 = vsel %vm831, %v6009, 0
      %v6031 = vsel %vm831, %v6010, 0
      %v6034 = vsel %vm831, %v6011, 0
      %v6037 = vsel %vm831, %v6012, 0
      %v6040 = vsel %vm831, %v6013, 0
      %v6043 = vsel %vm831, %v6014, 0
      %v6046 = vsel %vm831, %v6015, 0
      %v6049 = vsel %vm831, %v6016, 0
      %v6052 = vsel %vm831, %v6017, 0
      %v6055 = vsel %vm831, %v6018, 0
      %v6058 = vsel %vm831, %v6019, 0
      %v6061 = vsel %vm831, %v6020, 0
      %v6064 = vsel %vm831, %v6021, 0
      %v6067 = vsel %vm831, %v6022, 0
      %v6070 = vsel %vm831, %v6023, 0
      %6072 = vmatprep.subr.bf16.mxu0 0
      %6073 = vmatpush1.bf16.msra.mxu0 0
      %6074 = vmatprep.subr.bf16.mxu0 0
      %6075 = vmatpush1.bf16.msra.mxu0 0
      %6076 = vmatprep.subr.bf16.mxu0 0
      %6077 = vmatpush1.bf16.msra.mxu0 0
      %6078 = vmatprep.subr.bf16.mxu0 0
      %6079 = vmatpush1.bf16.msra.mxu0 0
      %6080 = vmatprep.subr.bf16.mxu0 0
      %6081 = vmatpush1.bf16.msra.mxu0 0
      %6082 = vmatprep.subr.bf16.mxu0 0
      %6083 = vmatpush1.bf16.msra.mxu0 0
      %6084 = vmatprep.subr.bf16.mxu0 0
      %6085 = vmatpush1.bf16.msra.mxu0 0
      %6086 = vmatprep.subr.bf16.mxu0 0
      %6087 = vmatpush1.bf16.msra.mxu0 %v5781
      %6088 = vmatprep.subr.bf16.mxu0 0
      %6089 = vmatpush2.bf16.msra.mxu0 0
      %6090 = vmatprep.subr.bf16.mxu0 0
      %6091 = vmatpush2.bf16.msra.mxu0 0
      %6092 = vmatprep.subr.bf16.mxu0 0
      %6093 = vmatpush2.bf16.msra.mxu0 0
      %6094 = vmatprep.subr.bf16.mxu0 0
      %6095 = vmatpush2.bf16.msra.mxu0 0
      %6096 = vmatprep.subr.bf16.mxu0 0
      %6097 = vmatpush2.bf16.msra.mxu0 0
      %6098 = vmatprep.subr.bf16.mxu0 0
      %6099 = vmatpush2.bf16.msra.mxu0 0
      %6100 = vmatprep.subr.bf16.mxu0 0
      %6101 = vmatpush2.bf16.msra.mxu0 0
      %6102 = vmatprep.subr.bf16.mxu0 0
      %6103 = vmatpush2.bf16.msra.mxu0 0
      %6104 = vmatprep.mubr.bf16.mxu0 0
      %6105 = vmatmul.mubr.bf16.gmra.mxu0 %v6025
      %v6106 = vpop.f32.mrf.mxu0
      %v6107 = vadd.f32 0.0, %v6106
      %v6108 = vpop.f32.mrf.mxu0
      %v6109 = vpop.f32.mrf.mxu0
      %v6110 = vadd.f32 0.0, %v6109
      %v6111 = vpop.f32.mrf.mxu0
      %6112 = vmatprep.mubr.bf16.mxu0 0
      %6113 = vmatmul.mubr.bf16.gmra.mxu0 %v6028
      %v6114 = vpop.f32.mrf.mxu0
      %v6115 = vadd.f32 0.0, %v6114
      %v6116 = vpop.f32.mrf.mxu0
      %v6117 = vpop.f32.mrf.mxu0
      %v6118 = vadd.f32 0.0, %v6117
      %v6119 = vpop.f32.mrf.mxu0
      %6120 = vmatprep.mubr.bf16.mxu0 0
      %6121 = vmatmul.mubr.bf16.gmra.mxu0 %v6031
      %v6122 = vpop.f32.mrf.mxu0
      %v6123 = vadd.f32 0.0, %v6122
      %v6124 = vpop.f32.mrf.mxu0
      %v6125 = vpop.f32.mrf.mxu0
      %v6126 = vadd.f32 0.0, %v6125
      %v6127 = vpop.f32.mrf.mxu0
      %6128 = vmatprep.mubr.bf16.mxu0 0
      %6129 = vmatmul.mubr.bf16.gmra.mxu0 %v6034
      %v6130 = vpop.f32.mrf.mxu0
      %v6131 = vadd.f32 0.0, %v6130
      %v6132 = vpop.f32.mrf.mxu0
      %v6133 = vpop.f32.mrf.mxu0
      %v6134 = vadd.f32 0.0, %v6133
      %v6135 = vpop.f32.mrf.mxu0
      %6136 = vmatprep.mubr.bf16.mxu0 0
      %6137 = vmatmul.mubr.bf16.gmra.mxu0 %v6037
      %v6138 = vpop.f32.mrf.mxu0
      %v6139 = vadd.f32 0.0, %v6138
      %v6140 = vpop.f32.mrf.mxu0
      %v6141 = vpop.f32.mrf.mxu0
      %v6142 = vadd.f32 0.0, %v6141
      %v6143 = vpop.f32.mrf.mxu0
      %6144 = vmatprep.mubr.bf16.mxu0 0
      %6145 = vmatmul.mubr.bf16.gmra.mxu0 %v6040
      %v6146 = vpop.f32.mrf.mxu0
      %v6147 = vadd.f32 0.0, %v6146
      %v6148 = vpop.f32.mrf.mxu0
      %v6149 = vpop.f32.mrf.mxu0
      %v6150 = vadd.f32 0.0, %v6149
      %v6151 = vpop.f32.mrf.mxu0
      %6152 = vmatprep.mubr.bf16.mxu0 0
      %6153 = vmatmul.mubr.bf16.gmra.mxu0 %v6043
      %v6154 = vpop.f32.mrf.mxu0
      %v6155 = vadd.f32 0.0, %v6154
      %v6156 = vpop.f32.mrf.mxu0
      %v6157 = vpop.f32.mrf.mxu0
      %v6158 = vadd.f32 0.0, %v6157
      %v6159 = vpop.f32.mrf.mxu0
      %6160 = vmatprep.mubr.bf16.mxu0 0
      %6161 = vmatmul.mubr.bf16.gmra.mxu0 %v6046
      %v6162 = vpop.f32.mrf.mxu0
      %v6163 = vadd.f32 0.0, %v6162
      %v6164 = vpop.f32.mrf.mxu0
      %v6165 = vpop.f32.mrf.mxu0
      %v6166 = vadd.f32 0.0, %v6165
      %v6167 = vpop.f32.mrf.mxu0
      %6168 = vmatprep.mubr.bf16.mxu0 0
      %6169 = vmatmul.mubr.bf16.gmra.mxu0 %v6049
      %v6170 = vpop.f32.mrf.mxu0
      %v6171 = vadd.f32 0.0, %v6170
      %v6172 = vpop.f32.mrf.mxu0
      %v6173 = vpop.f32.mrf.mxu0
      %v6174 = vadd.f32 0.0, %v6173
      %v6175 = vpop.f32.mrf.mxu0
      %6176 = vmatprep.mubr.bf16.mxu0 0
      %6177 = vmatmul.mubr.bf16.gmra.mxu0 %v6052
      %v6178 = vpop.f32.mrf.mxu0
      %v6179 = vadd.f32 0.0, %v6178
      %v6180 = vpop.f32.mrf.mxu0
      %v6181 = vpop.f32.mrf.mxu0
      %v6182 = vadd.f32 0.0, %v6181
      %v6183 = vpop.f32.mrf.mxu0
      %6184 = vmatprep.mubr.bf16.mxu0 0
      %6185 = vmatmul.mubr.bf16.gmra.mxu0 %v6055
      %v6186 = vpop.f32.mrf.mxu0
      %v6187 = vadd.f32 0.0, %v6186
      %v6188 = vpop.f32.mrf.mxu0
      %v6189 = vpop.f32.mrf.mxu0
      %v6190 = vadd.f32 0.0, %v6189
      %v6191 = vpop.f32.mrf.mxu0
      %6192 = vmatprep.mubr.bf16.mxu0 0
      %6193 = vmatmul.mubr.bf16.gmra.mxu0 %v6058
      %v6194 = vpop.f32.mrf.mxu0
      %v6195 = vadd.f32 0.0, %v6194
      %v6196 = vpop.f32.mrf.mxu0
      %v6197 = vpop.f32.mrf.mxu0
      %v6198 = vadd.f32 0.0, %v6197
      %v6199 = vpop.f32.mrf.mxu0
      %6200 = vmatprep.mubr.bf16.mxu0 0
      %6201 = vmatmul.mubr.bf16.gmra.mxu0 %v6061
      %v6202 = vpop.f32.mrf.mxu0
      %v6203 = vadd.f32 0.0, %v6202
      %v6204 = vpop.f32.mrf.mxu0
      %v6205 = vpop.f32.mrf.mxu0
      %v6206 = vadd.f32 0.0, %v6205
      %v6207 = vpop.f32.mrf.mxu0
      %6208 = vmatprep.mubr.bf16.mxu0 0
      %6209 = vmatmul.mubr.bf16.gmra.mxu0 %v6064
      %v6210 = vpop.f32.mrf.mxu0
      %v6211 = vadd.f32 0.0, %v6210
      %v6212 = vpop.f32.mrf.mxu0
      %v6213 = vpop.f32.mrf.mxu0
      %v6214 = vadd.f32 0.0, %v6213
      %v6215 = vpop.f32.mrf.mxu0
      %6216 = vmatprep.mubr.bf16.mxu0 0
      %6217 = vmatmul.mubr.bf16.gmra.mxu0 %v6067
      %v6218 = vpop.f32.mrf.mxu0
      %v6219 = vadd.f32 0.0, %v6218
      %v6220 = vpop.f32.mrf.mxu0
      %v6221 = vpop.f32.mrf.mxu0
      %v6222 = vadd.f32 0.0, %v6221
      %v6223 = vpop.f32.mrf.mxu0
      %6224 = vmatprep.mubr.bf16.mxu0 0
      %6225 = vmatmul.mubr.bf16.gmra.mxu0 %v6070
      %v6226 = vpop.f32.mrf.mxu0
      %v6227 = vadd.f32 0.0, %v6226
      %v6228 = vpop.f32.mrf.mxu0
      %v6229 = vpop.f32.mrf.mxu0
      %v6230 = vadd.f32 0.0, %v6229
      %v6231 = vpop.f32.mrf.mxu0
      %6232 = vdwg.mxu0
      %v6265 = vunpack.c.l.b16 %v5452
      %v6266 = vunpack.c.l.b16 %v5453
      %v6267 = vunpack.c.l.b16 %v5454
      %v6268 = vunpack.c.l.b16 %v5455
      %v6269 = vunpack.c.l.b16 %v5456
      %v6270 = vunpack.c.l.b16 %v5457
      %v6271 = vunpack.c.l.b16 %v5458
      %v6272 = vunpack.c.l.b16 %v5459
      %v6273 = vunpack.c.l.b16 %v5460
      %v6274 = vunpack.c.l.b16 %v5461
      %v6275 = vunpack.c.l.b16 %v5462
      %v6276 = vunpack.c.l.b16 %v5463
      %v6277 = vunpack.c.l.b16 %v5464
      %v6278 = vunpack.c.l.b16 %v5465
      %v6279 = vunpack.c.l.b16 %v5466
      %v6280 = vunpack.c.l.b16 %v5467
      %v6281 = vunpack.c.l.b16 %v5468
      %v6282 = vunpack.c.l.b16 %v5469
      %v6283 = vunpack.c.l.b16 %v5470
      %v6284 = vunpack.c.l.b16 %v5471
      %v6285 = vunpack.c.l.b16 %v5472
      %v6286 = vunpack.c.l.b16 %v5473
      %v6287 = vunpack.c.l.b16 %v5474
      %v6288 = vunpack.c.l.b16 %v5475
      %v6289 = vunpack.c.l.b16 %v5476
      %v6290 = vunpack.c.l.b16 %v5477
      %v6291 = vunpack.c.l.b16 %v5478
      %v6292 = vunpack.c.l.b16 %v5479
      %v6293 = vunpack.c.l.b16 %v5480
      %v6294 = vunpack.c.l.b16 %v5481
      %v6295 = vunpack.c.l.b16 %v5482
      %v6296 = vunpack.c.l.b16 %v5483
      %v6297 = vpack.c.b16 %v6266, %v6265
      %v6298 = vpack.c.b16 %v6268, %v6267
      %v6299 = vpack.c.b16 %v6270, %v6269
      %v6300 = vpack.c.b16 %v6272, %v6271
      %v6301 = vpack.c.b16 %v6274, %v6273
      %v6302 = vpack.c.b16 %v6276, %v6275
      %v6303 = vpack.c.b16 %v6278, %v6277
      %v6304 = vpack.c.b16 %v6280, %v6279
      %v6305 = vpack.c.b16 %v6282, %v6281
      %v6306 = vpack.c.b16 %v6284, %v6283
      %v6307 = vpack.c.b16 %v6286, %v6285
      %v6308 = vpack.c.b16 %v6288, %v6287
      %v6309 = vpack.c.b16 %v6290, %v6289
      %v6310 = vpack.c.b16 %v6292, %v6291
      %v6311 = vpack.c.b16 %v6294, %v6293
      %v6312 = vpack.c.b16 %v6296, %v6295
      %v6314 = vsel %vm831, %v6297, 0
      %v6317 = vsel %vm831, %v6298, 0
      %v6320 = vsel %vm831, %v6299, 0
      %v6323 = vsel %vm831, %v6300, 0
      %v6326 = vsel %vm831, %v6301, 0
      %v6329 = vsel %vm831, %v6302, 0
      %v6332 = vsel %vm831, %v6303, 0
      %v6335 = vsel %vm831, %v6304, 0
      %v6338 = vsel %vm831, %v6305, 0
      %v6341 = vsel %vm831, %v6306, 0
      %v6344 = vsel %vm831, %v6307, 0
      %v6347 = vsel %vm831, %v6308, 0
      %v6350 = vsel %vm831, %v6309, 0
      %v6353 = vsel %vm831, %v6310, 0
      %v6356 = vsel %vm831, %v6311, 0
      %v6359 = vsel %vm831, %v6312, 0
      %6361 = vmatprep.subr.bf16.mxu0 0
      %6362 = vmatpush1.bf16.msra.mxu0 0
      %6363 = vmatprep.subr.bf16.mxu0 0
      %6364 = vmatpush1.bf16.msra.mxu0 0
      %6365 = vmatprep.subr.bf16.mxu0 0
      %6366 = vmatpush1.bf16.msra.mxu0 0
      %6367 = vmatprep.subr.bf16.mxu0 0
      %6368 = vmatpush1.bf16.msra.mxu0 0
      %6369 = vmatprep.subr.bf16.mxu0 0
      %6370 = vmatpush1.bf16.msra.mxu0 0
      %6371 = vmatprep.subr.bf16.mxu0 0
      %6372 = vmatpush1.bf16.msra.mxu0 0
      %6373 = vmatprep.subr.bf16.mxu0 0
      %6374 = vmatpush1.bf16.msra.mxu0 0
      %6375 = vmatprep.subr.bf16.mxu0 0
      %6376 = vmatpush1.bf16.msra.mxu0 %v5781
      %6377 = vmatprep.subr.bf16.mxu0 0
      %6378 = vmatpush2.bf16.msra.mxu0 0
      %6379 = vmatprep.subr.bf16.mxu0 0
      %6380 = vmatpush2.bf16.msra.mxu0 0
      %6381 = vmatprep.subr.bf16.mxu0 0
      %6382 = vmatpush2.bf16.msra.mxu0 0
      %6383 = vmatprep.subr.bf16.mxu0 0
      %6384 = vmatpush2.bf16.msra.mxu0 0
      %6385 = vmatprep.subr.bf16.mxu0 0
      %6386 = vmatpush2.bf16.msra.mxu0 0
      %6387 = vmatprep.subr.bf16.mxu0 0
      %6388 = vmatpush2.bf16.msra.mxu0 0
      %6389 = vmatprep.subr.bf16.mxu0 0
      %6390 = vmatpush2.bf16.msra.mxu0 0
      %6391 = vmatprep.subr.bf16.mxu0 0
      %6392 = vmatpush2.bf16.msra.mxu0 0
      %6393 = vmatprep.mubr.bf16.mxu0 0
      %6394 = vmatmul.mubr.bf16.gmra.mxu0 %v6314
      %v6395 = vpop.f32.mrf.mxu0
      %v6396 = vadd.f32 0.0, %v6395
      %v6397 = vpop.f32.mrf.mxu0
      %v6398 = vpop.f32.mrf.mxu0
      %v6399 = vadd.f32 0.0, %v6398
      %v6400 = vpop.f32.mrf.mxu0
      %6401 = vmatprep.mubr.bf16.mxu0 0
      %6402 = vmatmul.mubr.bf16.gmra.mxu0 %v6317
      %v6403 = vpop.f32.mrf.mxu0
      %v6404 = vadd.f32 0.0, %v6403
      %v6405 = vpop.f32.mrf.mxu0
      %v6406 = vpop.f32.mrf.mxu0
      %v6407 = vadd.f32 0.0, %v6406
      %v6408 = vpop.f32.mrf.mxu0
      %6409 = vmatprep.mubr.bf16.mxu0 0
      %6410 = vmatmul.mubr.bf16.gmra.mxu0 %v6320
      %v6411 = vpop.f32.mrf.mxu0
      %v6412 = vadd.f32 0.0, %v6411
      %v6413 = vpop.f32.mrf.mxu0
      %v6414 = vpop.f32.mrf.mxu0
      %v6415 = vadd.f32 0.0, %v6414
      %v6416 = vpop.f32.mrf.mxu0
      %6417 = vmatprep.mubr.bf16.mxu0 0
      %6418 = vmatmul.mubr.bf16.gmra.mxu0 %v6323
      %v6419 = vpop.f32.mrf.mxu0
      %v6420 = vadd.f32 0.0, %v6419
      %v6421 = vpop.f32.mrf.mxu0
      %v6422 = vpop.f32.mrf.mxu0
      %v6423 = vadd.f32 0.0, %v6422
      %v6424 = vpop.f32.mrf.mxu0
      %6425 = vmatprep.mubr.bf16.mxu0 0
      %6426 = vmatmul.mubr.bf16.gmra.mxu0 %v6326
      %v6427 = vpop.f32.mrf.mxu0
      %v6428 = vadd.f32 0.0, %v6427
      %v6429 = vpop.f32.mrf.mxu0
      %v6430 = vpop.f32.mrf.mxu0
      %v6431 = vadd.f32 0.0, %v6430
      %v6432 = vpop.f32.mrf.mxu0
      %6433 = vmatprep.mubr.bf16.mxu0 0
      %6434 = vmatmul.mubr.bf16.gmra.mxu0 %v6329
      %v6435 = vpop.f32.mrf.mxu0
      %v6436 = vadd.f32 0.0, %v6435
      %v6437 = vpop.f32.mrf.mxu0
      %v6438 = vpop.f32.mrf.mxu0
      %v6439 = vadd.f32 0.0, %v6438
      %v6440 = vpop.f32.mrf.mxu0
      %6441 = vmatprep.mubr.bf16.mxu0 0
      %6442 = vmatmul.mubr.bf16.gmra.mxu0 %v6332
      %v6443 = vpop.f32.mrf.mxu0
      %v6444 = vadd.f32 0.0, %v6443
      %v6445 = vpop.f32.mrf.mxu0
      %v6446 = vpop.f32.mrf.mxu0
      %v6447 = vadd.f32 0.0, %v6446
      %v6448 = vpop.f32.mrf.mxu0
      %6449 = vmatprep.mubr.bf16.mxu0 0
      %6450 = vmatmul.mubr.bf16.gmra.mxu0 %v6335
      %v6451 = vpop.f32.mrf.mxu0
      %v6452 = vadd.f32 0.0, %v6451
      %v6453 = vpop.f32.mrf.mxu0
      %v6454 = vpop.f32.mrf.mxu0
      %v6455 = vadd.f32 0.0, %v6454
      %v6456 = vpop.f32.mrf.mxu0
      %6457 = vmatprep.mubr.bf16.mxu0 0
      %6458 = vmatmul.mubr.bf16.gmra.mxu0 %v6338
      %v6459 = vpop.f32.mrf.mxu0
      %v6460 = vadd.f32 0.0, %v6459
      %v6461 = vpop.f32.mrf.mxu0
      %v6462 = vpop.f32.mrf.mxu0
      %v6463 = vadd.f32 0.0, %v6462
      %v6464 = vpop.f32.mrf.mxu0
      %6465 = vmatprep.mubr.bf16.mxu0 0
      %6466 = vmatmul.mubr.bf16.gmra.mxu0 %v6341
      %v6467 = vpop.f32.mrf.mxu0
      %v6468 = vadd.f32 0.0, %v6467
      %v6469 = vpop.f32.mrf.mxu0
      %v6470 = vpop.f32.mrf.mxu0
      %v6471 = vadd.f32 0.0, %v6470
      %v6472 = vpop.f32.mrf.mxu0
      %6473 = vmatprep.mubr.bf16.mxu0 0
      %6474 = vmatmul.mubr.bf16.gmra.mxu0 %v6344
      %v6475 = vpop.f32.mrf.mxu0
      %v6476 = vadd.f32 0.0, %v6475
      %v6477 = vpop.f32.mrf.mxu0
      %v6478 = vpop.f32.mrf.mxu0
      %v6479 = vadd.f32 0.0, %v6478
      %v6480 = vpop.f32.mrf.mxu0
      %6481 = vmatprep.mubr.bf16.mxu0 0
      %6482 = vmatmul.mubr.bf16.gmra.mxu0 %v6347
      %v6483 = vpop.f32.mrf.mxu0
      %v6484 = vadd.f32 0.0, %v6483
      %v6485 = vpop.f32.mrf.mxu0
      %v6486 = vpop.f32.mrf.mxu0
      %v6487 = vadd.f32 0.0, %v6486
      %v6488 = vpop.f32.mrf.mxu0
      %6489 = vmatprep.mubr.bf16.mxu0 0
      %6490 = vmatmul.mubr.bf16.gmra.mxu0 %v6350
      %v6491 = vpop.f32.mrf.mxu0
      %v6492 = vadd.f32 0.0, %v6491
      %v6493 = vpop.f32.mrf.mxu0
      %v6494 = vpop.f32.mrf.mxu0
      %v6495 = vadd.f32 0.0, %v6494
      %v6496 = vpop.f32.mrf.mxu0
      %6497 = vmatprep.mubr.bf16.mxu0 0
      %6498 = vmatmul.mubr.bf16.gmra.mxu0 %v6353
      %v6499 = vpop.f32.mrf.mxu0
      %v6500 = vadd.f32 0.0, %v6499
      %v6501 = vpop.f32.mrf.mxu0
      %v6502 = vpop.f32.mrf.mxu0
      %v6503 = vadd.f32 0.0, %v6502
      %v6504 = vpop.f32.mrf.mxu0
      %6505 = vmatprep.mubr.bf16.mxu0 0
      %6506 = vmatmul.mubr.bf16.gmra.mxu0 %v6356
      %v6507 = vpop.f32.mrf.mxu0
      %v6508 = vadd.f32 0.0, %v6507
      %v6509 = vpop.f32.mrf.mxu0
      %v6510 = vpop.f32.mrf.mxu0
      %v6511 = vadd.f32 0.0, %v6510
      %v6512 = vpop.f32.mrf.mxu0
      %6513 = vmatprep.mubr.bf16.mxu0 0
      %6514 = vmatmul.mubr.bf16.gmra.mxu0 %v6359
      %v6515 = vpop.f32.mrf.mxu0
      %v6516 = vadd.f32 0.0, %v6515
      %v6517 = vpop.f32.mrf.mxu0
      %v6518 = vpop.f32.mrf.mxu0
      %v6519 = vadd.f32 0.0, %v6518
      %v6520 = vpop.f32.mrf.mxu0
      %6521 = vdwg.mxu0
      %v6554 = vunpack.c.l.b16 %v5484
      %v6555 = vunpack.c.l.b16 %v5485
      %v6556 = vunpack.c.l.b16 %v5486
      %v6557 = vunpack.c.l.b16 %v5487
      %v6558 = vunpack.c.l.b16 %v5488
      %v6559 = vunpack.c.l.b16 %v5489
      %v6560 = vunpack.c.l.b16 %v5490
      %v6561 = vunpack.c.l.b16 %v5491
      %v6562 = vunpack.c.l.b16 %v5492
      %v6563 = vunpack.c.l.b16 %v5493
      %v6564 = vunpack.c.l.b16 %v5494
      %v6565 = vunpack.c.l.b16 %v5495
      %v6566 = vunpack.c.l.b16 %v5496
      %v6567 = vunpack.c.l.b16 %v5497
      %v6568 = vunpack.c.l.b16 %v5498
      %v6569 = vunpack.c.l.b16 %v5499
      %v6570 = vunpack.c.l.b16 %v5500
      %v6571 = vunpack.c.l.b16 %v5501
      %v6572 = vunpack.c.l.b16 %v5502
      %v6573 = vunpack.c.l.b16 %v5503
      %v6574 = vunpack.c.l.b16 %v5504
      %v6575 = vunpack.c.l.b16 %v5505
      %v6576 = vunpack.c.l.b16 %v5506
      %v6577 = vunpack.c.l.b16 %v5507
      %v6578 = vunpack.c.l.b16 %v5508
      %v6579 = vunpack.c.l.b16 %v5509
      %v6580 = vunpack.c.l.b16 %v5510
      %v6581 = vunpack.c.l.b16 %v5511
      %v6582 = vunpack.c.l.b16 %v5512
      %v6583 = vunpack.c.l.b16 %v5513
      %v6584 = vunpack.c.l.b16 %v5514
      %v6585 = vunpack.c.l.b16 %v5515
      %v6586 = vpack.c.b16 %v6555, %v6554
      %v6587 = vpack.c.b16 %v6557, %v6556
      %v6588 = vpack.c.b16 %v6559, %v6558
      %v6589 = vpack.c.b16 %v6561, %v6560
      %v6590 = vpack.c.b16 %v6563, %v6562
      %v6591 = vpack.c.b16 %v6565, %v6564
      %v6592 = vpack.c.b16 %v6567, %v6566
      %v6593 = vpack.c.b16 %v6569, %v6568
      %v6594 = vpack.c.b16 %v6571, %v6570
      %v6595 = vpack.c.b16 %v6573, %v6572
      %v6596 = vpack.c.b16 %v6575, %v6574
      %v6597 = vpack.c.b16 %v6577, %v6576
      %v6598 = vpack.c.b16 %v6579, %v6578
      %v6599 = vpack.c.b16 %v6581, %v6580
      %v6600 = vpack.c.b16 %v6583, %v6582
      %v6601 = vpack.c.b16 %v6585, %v6584
      %v6603 = vsel %vm831, %v6586, 0
      %v6606 = vsel %vm831, %v6587, 0
      %v6609 = vsel %vm831, %v6588, 0
      %v6612 = vsel %vm831, %v6589, 0
      %v6615 = vsel %vm831, %v6590, 0
      %v6618 = vsel %vm831, %v6591, 0
      %v6621 = vsel %vm831, %v6592, 0
      %v6624 = vsel %vm831, %v6593, 0
      %v6627 = vsel %vm831, %v6594, 0
      %v6630 = vsel %vm831, %v6595, 0
      %v6633 = vsel %vm831, %v6596, 0
      %v6636 = vsel %vm831, %v6597, 0
      %v6639 = vsel %vm831, %v6598, 0
      %v6642 = vsel %vm831, %v6599, 0
      %v6645 = vsel %vm831, %v6600, 0
      %v6648 = vsel %vm831, %v6601, 0
      %6650 = vmatprep.subr.bf16.mxu0 0
      %6651 = vmatpush1.bf16.msra.mxu0 0
      %6652 = vmatprep.subr.bf16.mxu0 0
      %6653 = vmatpush1.bf16.msra.mxu0 0
      %6654 = vmatprep.subr.bf16.mxu0 0
      %6655 = vmatpush1.bf16.msra.mxu0 0
      %6656 = vmatprep.subr.bf16.mxu0 0
      %6657 = vmatpush1.bf16.msra.mxu0 0
      %6658 = vmatprep.subr.bf16.mxu0 0
      %6659 = vmatpush1.bf16.msra.mxu0 0
      %6660 = vmatprep.subr.bf16.mxu0 0
      %6661 = vmatpush1.bf16.msra.mxu0 0
      %6662 = vmatprep.subr.bf16.mxu0 0
      %6663 = vmatpush1.bf16.msra.mxu0 0
      %6664 = vmatprep.subr.bf16.mxu0 0
      %6665 = vmatpush1.bf16.msra.mxu0 %v5781
      %6666 = vmatprep.subr.bf16.mxu0 0
      %6667 = vmatpush2.bf16.msra.mxu0 0
      %6668 = vmatprep.subr.bf16.mxu0 0
      %6669 = vmatpush2.bf16.msra.mxu0 0
      %6670 = vmatprep.subr.bf16.mxu0 0
      %6671 = vmatpush2.bf16.msra.mxu0 0
      %6672 = vmatprep.subr.bf16.mxu0 0
      %6673 = vmatpush2.bf16.msra.mxu0 0
      %6674 = vmatprep.subr.bf16.mxu0 0
      %6675 = vmatpush2.bf16.msra.mxu0 0
      %6676 = vmatprep.subr.bf16.mxu0 0
      %6677 = vmatpush2.bf16.msra.mxu0 0
      %6678 = vmatprep.subr.bf16.mxu0 0
      %6679 = vmatpush2.bf16.msra.mxu0 0
      %6680 = vmatprep.subr.bf16.mxu0 0
      %6681 = vmatpush2.bf16.msra.mxu0 0
      %6682 = vmatprep.mubr.bf16.mxu0 0
      %6683 = vmatmul.mubr.bf16.gmra.mxu0 %v6603
      %v6684 = vpop.f32.mrf.mxu0
      %v6685 = vadd.f32 0.0, %v6684
      %v6686 = vpop.f32.mrf.mxu0
      %v6687 = vpop.f32.mrf.mxu0
      %v6688 = vadd.f32 0.0, %v6687
      %v6689 = vpop.f32.mrf.mxu0
      %6690 = vmatprep.mubr.bf16.mxu0 0
      %6691 = vmatmul.mubr.bf16.gmra.mxu0 %v6606
      %v6692 = vpop.f32.mrf.mxu0
      %v6693 = vadd.f32 0.0, %v6692
      %v6694 = vpop.f32.mrf.mxu0
      %v6695 = vpop.f32.mrf.mxu0
      %v6696 = vadd.f32 0.0, %v6695
      %v6697 = vpop.f32.mrf.mxu0
      %6698 = vmatprep.mubr.bf16.mxu0 0
      %6699 = vmatmul.mubr.bf16.gmra.mxu0 %v6609
      %v6700 = vpop.f32.mrf.mxu0
      %v6701 = vadd.f32 0.0, %v6700
      %v6702 = vpop.f32.mrf.mxu0
      %v6703 = vpop.f32.mrf.mxu0
      %v6704 = vadd.f32 0.0, %v6703
      %v6705 = vpop.f32.mrf.mxu0
      %6706 = vmatprep.mubr.bf16.mxu0 0
      %6707 = vmatmul.mubr.bf16.gmra.mxu0 %v6612
      %v6708 = vpop.f32.mrf.mxu0
      %v6709 = vadd.f32 0.0, %v6708
      %v6710 = vpop.f32.mrf.mxu0
      %v6711 = vpop.f32.mrf.mxu0
      %v6712 = vadd.f32 0.0, %v6711
      %v6713 = vpop.f32.mrf.mxu0
      %6714 = vmatprep.mubr.bf16.mxu0 0
      %6715 = vmatmul.mubr.bf16.gmra.mxu0 %v6615
      %v6716 = vpop.f32.mrf.mxu0
      %v6717 = vadd.f32 0.0, %v6716
      %v6718 = vpop.f32.mrf.mxu0
      %v6719 = vpop.f32.mrf.mxu0
      %v6720 = vadd.f32 0.0, %v6719
      %v6721 = vpop.f32.mrf.mxu0
      %6722 = vmatprep.mubr.bf16.mxu0 0
      %6723 = vmatmul.mubr.bf16.gmra.mxu0 %v6618
      %v6724 = vpop.f32.mrf.mxu0
      %v6725 = vadd.f32 0.0, %v6724
      %v6726 = vpop.f32.mrf.mxu0
      %v6727 = vpop.f32.mrf.mxu0
      %v6728 = vadd.f32 0.0, %v6727
      %v6729 = vpop.f32.mrf.mxu0
      %6730 = vmatprep.mubr.bf16.mxu0 0
      %6731 = vmatmul.mubr.bf16.gmra.mxu0 %v6621
      %v6732 = vpop.f32.mrf.mxu0
      %v6733 = vadd.f32 0.0, %v6732
      %v6734 = vpop.f32.mrf.mxu0
      %v6735 = vpop.f32.mrf.mxu0
      %v6736 = vadd.f32 0.0, %v6735
      %v6737 = vpop.f32.mrf.mxu0
      %6738 = vmatprep.mubr.bf16.mxu0 0
      %6739 = vmatmul.mubr.bf16.gmra.mxu0 %v6624
      %v6740 = vpop.f32.mrf.mxu0
      %v6741 = vadd.f32 0.0, %v6740
      %v6742 = vpop.f32.mrf.mxu0
      %v6743 = vpop.f32.mrf.mxu0
      %v6744 = vadd.f32 0.0, %v6743
      %v6745 = vpop.f32.mrf.mxu0
      %6746 = vmatprep.mubr.bf16.mxu0 0
      %6747 = vmatmul.mubr.bf16.gmra.mxu0 %v6627
      %v6748 = vpop.f32.mrf.mxu0
      %v6749 = vadd.f32 0.0, %v6748
      %v6750 = vpop.f32.mrf.mxu0
      %v6751 = vpop.f32.mrf.mxu0
      %v6752 = vadd.f32 0.0, %v6751
      %v6753 = vpop.f32.mrf.mxu0
      %6754 = vmatprep.mubr.bf16.mxu0 0
      %6755 = vmatmul.mubr.bf16.gmra.mxu0 %v6630
      %v6756 = vpop.f32.mrf.mxu0
      %v6757 = vadd.f32 0.0, %v6756
      %v6758 = vpop.f32.mrf.mxu0
      %v6759 = vpop.f32.mrf.mxu0
      %v6760 = vadd.f32 0.0, %v6759
      %v6761 = vpop.f32.mrf.mxu0
      %6762 = vmatprep.mubr.bf16.mxu0 0
      %6763 = vmatmul.mubr.bf16.gmra.mxu0 %v6633
      %v6764 = vpop.f32.mrf.mxu0
      %v6765 = vadd.f32 0.0, %v6764
      %v6766 = vpop.f32.mrf.mxu0
      %v6767 = vpop.f32.mrf.mxu0
      %v6768 = vadd.f32 0.0, %v6767
      %v6769 = vpop.f32.mrf.mxu0
      %6770 = vmatprep.mubr.bf16.mxu0 0
      %6771 = vmatmul.mubr.bf16.gmra.mxu0 %v6636
      %v6772 = vpop.f32.mrf.mxu0
      %v6773 = vadd.f32 0.0, %v6772
      %v6774 = vpop.f32.mrf.mxu0
      %v6775 = vpop.f32.mrf.mxu0
      %v6776 = vadd.f32 0.0, %v6775
      %v6777 = vpop.f32.mrf.mxu0
      %6778 = vmatprep.mubr.bf16.mxu0 0
      %6779 = vmatmul.mubr.bf16.gmra.mxu0 %v6639
      %v6780 = vpop.f32.mrf.mxu0
      %v6781 = vadd.f32 0.0, %v6780
      %v6782 = vpop.f32.mrf.mxu0
      %v6783 = vpop.f32.mrf.mxu0
      %v6784 = vadd.f32 0.0, %v6783
      %v6785 = vpop.f32.mrf.mxu0
      %6786 = vmatprep.mubr.bf16.mxu0 0
      %6787 = vmatmul.mubr.bf16.gmra.mxu0 %v6642
      %v6788 = vpop.f32.mrf.mxu0
      %v6789 = vadd.f32 0.0, %v6788
      %v6790 = vpop.f32.mrf.mxu0
      %v6791 = vpop.f32.mrf.mxu0
      %v6792 = vadd.f32 0.0, %v6791
      %v6793 = vpop.f32.mrf.mxu0
      %6794 = vmatprep.mubr.bf16.mxu0 0
      %6795 = vmatmul.mubr.bf16.gmra.mxu0 %v6645
      %v6796 = vpop.f32.mrf.mxu0
      %v6797 = vadd.f32 0.0, %v6796
      %v6798 = vpop.f32.mrf.mxu0
      %v6799 = vpop.f32.mrf.mxu0
      %v6800 = vadd.f32 0.0, %v6799
      %v6801 = vpop.f32.mrf.mxu0
      %6802 = vmatprep.mubr.bf16.mxu0 0
      %6803 = vmatmul.mubr.bf16.gmra.mxu0 %v6648
      %v6804 = vpop.f32.mrf.mxu0
      %v6805 = vadd.f32 0.0, %v6804
      %v6806 = vpop.f32.mrf.mxu0
      %v6807 = vpop.f32.mrf.mxu0
      %v6808 = vadd.f32 0.0, %v6807
      %v6809 = vpop.f32.mrf.mxu0
      %6810 = vdwg.mxu0
      %v6843 = vunpack.c.l.b16 %v5516
      %v6844 = vunpack.c.l.b16 %v5517
      %v6845 = vunpack.c.l.b16 %v5518
      %v6846 = vunpack.c.l.b16 %v5519
      %v6847 = vunpack.c.l.b16 %v5520
      %v6848 = vunpack.c.l.b16 %v5521
      %v6849 = vunpack.c.l.b16 %v5522
      %v6850 = vunpack.c.l.b16 %v5523
      %v6851 = vunpack.c.l.b16 %v5524
      %v6852 = vunpack.c.l.b16 %v5525
      %v6853 = vunpack.c.l.b16 %v5526
      %v6854 = vunpack.c.l.b16 %v5527
      %v6855 = vunpack.c.l.b16 %v5528
      %v6856 = vunpack.c.l.b16 %v5529
      %v6857 = vunpack.c.l.b16 %v5530
      %v6858 = vunpack.c.l.b16 %v5531
      %v6859 = vunpack.c.l.b16 %v5532
      %v6860 = vunpack.c.l.b16 %v5533
      %v6861 = vunpack.c.l.b16 %v5534
      %v6862 = vunpack.c.l.b16 %v5535
      %v6863 = vunpack.c.l.b16 %v5536
      %v6864 = vunpack.c.l.b16 %v5537
      %v6865 = vunpack.c.l.b16 %v5538
      %v6866 = vunpack.c.l.b16 %v5539
      %v6867 = vunpack.c.l.b16 %v5540
      %v6868 = vunpack.c.l.b16 %v5541
      %v6869 = vunpack.c.l.b16 %v5542
      %v6870 = vunpack.c.l.b16 %v5543
      %v6871 = vunpack.c.l.b16 %v5544
      %v6872 = vunpack.c.l.b16 %v5545
      %v6873 = vunpack.c.l.b16 %v5546
      %v6874 = vunpack.c.l.b16 %v5547
      %v6875 = vpack.c.b16 %v6844, %v6843
      %v6876 = vpack.c.b16 %v6846, %v6845
      %v6877 = vpack.c.b16 %v6848, %v6847
      %v6878 = vpack.c.b16 %v6850, %v6849
      %v6879 = vpack.c.b16 %v6852, %v6851
      %v6880 = vpack.c.b16 %v6854, %v6853
      %v6881 = vpack.c.b16 %v6856, %v6855
      %v6882 = vpack.c.b16 %v6858, %v6857
      %v6883 = vpack.c.b16 %v6860, %v6859
      %v6884 = vpack.c.b16 %v6862, %v6861
      %v6885 = vpack.c.b16 %v6864, %v6863
      %v6886 = vpack.c.b16 %v6866, %v6865
      %v6887 = vpack.c.b16 %v6868, %v6867
      %v6888 = vpack.c.b16 %v6870, %v6869
      %v6889 = vpack.c.b16 %v6872, %v6871
      %v6890 = vpack.c.b16 %v6874, %v6873
      %v6892 = vsel %vm831, %v6875, 0
      %v6895 = vsel %vm831, %v6876, 0
      %v6898 = vsel %vm831, %v6877, 0
      %v6901 = vsel %vm831, %v6878, 0
      %v6904 = vsel %vm831, %v6879, 0
      %v6907 = vsel %vm831, %v6880, 0
      %v6910 = vsel %vm831, %v6881, 0
      %v6913 = vsel %vm831, %v6882, 0
      %v6916 = vsel %vm831, %v6883, 0
      %v6919 = vsel %vm831, %v6884, 0
      %v6922 = vsel %vm831, %v6885, 0
      %v6925 = vsel %vm831, %v6886, 0
      %v6928 = vsel %vm831, %v6887, 0
      %v6931 = vsel %vm831, %v6888, 0
      %v6934 = vsel %vm831, %v6889, 0
      %v6937 = vsel %vm831, %v6890, 0
      %6939 = vmatprep.subr.bf16.mxu0 0
      %6940 = vmatpush1.bf16.msra.mxu0 0
      %6941 = vmatprep.subr.bf16.mxu0 0
      %6942 = vmatpush1.bf16.msra.mxu0 0
      %6943 = vmatprep.subr.bf16.mxu0 0
      %6944 = vmatpush1.bf16.msra.mxu0 0
      %6945 = vmatprep.subr.bf16.mxu0 0
      %6946 = vmatpush1.bf16.msra.mxu0 0
      %6947 = vmatprep.subr.bf16.mxu0 0
      %6948 = vmatpush1.bf16.msra.mxu0 0
      %6949 = vmatprep.subr.bf16.mxu0 0
      %6950 = vmatpush1.bf16.msra.mxu0 0
      %6951 = vmatprep.subr.bf16.mxu0 0
      %6952 = vmatpush1.bf16.msra.mxu0 0
      %6953 = vmatprep.subr.bf16.mxu0 0
      %6954 = vmatpush1.bf16.msra.mxu0 %v5781
      %6955 = vmatprep.subr.bf16.mxu0 0
      %6956 = vmatpush2.bf16.msra.mxu0 0
      %6957 = vmatprep.subr.bf16.mxu0 0
      %6958 = vmatpush2.bf16.msra.mxu0 0
      %6959 = vmatprep.subr.bf16.mxu0 0
      %6960 = vmatpush2.bf16.msra.mxu0 0
      %6961 = vmatprep.subr.bf16.mxu0 0
      %6962 = vmatpush2.bf16.msra.mxu0 0
      %6963 = vmatprep.subr.bf16.mxu0 0
      %6964 = vmatpush2.bf16.msra.mxu0 0
      %6965 = vmatprep.subr.bf16.mxu0 0
      %6966 = vmatpush2.bf16.msra.mxu0 0
      %6967 = vmatprep.subr.bf16.mxu0 0
      %6968 = vmatpush2.bf16.msra.mxu0 0
      %6969 = vmatprep.subr.bf16.mxu0 0
      %6970 = vmatpush2.bf16.msra.mxu0 0
      %6971 = vmatprep.mubr.bf16.mxu0 0
      %6972 = vmatmul.mubr.bf16.gmra.mxu0 %v6892
      %v6973 = vpop.f32.mrf.mxu0
      %v6974 = vadd.f32 0.0, %v6973
      %v6975 = vpop.f32.mrf.mxu0
      %v6976 = vpop.f32.mrf.mxu0
      %v6977 = vadd.f32 0.0, %v6976
      %v6978 = vpop.f32.mrf.mxu0
      %6979 = vmatprep.mubr.bf16.mxu0 0
      %6980 = vmatmul.mubr.bf16.gmra.mxu0 %v6895
      %v6981 = vpop.f32.mrf.mxu0
      %v6982 = vadd.f32 0.0, %v6981
      %v6983 = vpop.f32.mrf.mxu0
      %v6984 = vpop.f32.mrf.mxu0
      %v6985 = vadd.f32 0.0, %v6984
      %v6986 = vpop.f32.mrf.mxu0
      %6987 = vmatprep.mubr.bf16.mxu0 0
      %6988 = vmatmul.mubr.bf16.gmra.mxu0 %v6898
      %v6989 = vpop.f32.mrf.mxu0
      %v6990 = vadd.f32 0.0, %v6989
      %v6991 = vpop.f32.mrf.mxu0
      %v6992 = vpop.f32.mrf.mxu0
      %v6993 = vadd.f32 0.0, %v6992
      %v6994 = vpop.f32.mrf.mxu0
      %6995 = vmatprep.mubr.bf16.mxu0 0
      %6996 = vmatmul.mubr.bf16.gmra.mxu0 %v6901
      %v6997 = vpop.f32.mrf.mxu0
      %v6998 = vadd.f32 0.0, %v6997
      %v6999 = vpop.f32.mrf.mxu0
      %v7000 = vpop.f32.mrf.mxu0
      %v7001 = vadd.f32 0.0, %v7000
      %v7002 = vpop.f32.mrf.mxu0
      %7003 = vmatprep.mubr.bf16.mxu0 0
      %7004 = vmatmul.mubr.bf16.gmra.mxu0 %v6904
      %v7005 = vpop.f32.mrf.mxu0
      %v7006 = vadd.f32 0.0, %v7005
      %v7007 = vpop.f32.mrf.mxu0
      %v7008 = vpop.f32.mrf.mxu0
      %v7009 = vadd.f32 0.0, %v7008
      %v7010 = vpop.f32.mrf.mxu0
      %7011 = vmatprep.mubr.bf16.mxu0 0
      %7012 = vmatmul.mubr.bf16.gmra.mxu0 %v6907
      %v7013 = vpop.f32.mrf.mxu0
      %v7014 = vadd.f32 0.0, %v7013
      %v7015 = vpop.f32.mrf.mxu0
      %v7016 = vpop.f32.mrf.mxu0
      %v7017 = vadd.f32 0.0, %v7016
      %v7018 = vpop.f32.mrf.mxu0
      %7019 = vmatprep.mubr.bf16.mxu0 0
      %7020 = vmatmul.mubr.bf16.gmra.mxu0 %v6910
      %v7021 = vpop.f32.mrf.mxu0
      %v7022 = vadd.f32 0.0, %v7021
      %v7023 = vpop.f32.mrf.mxu0
      %v7024 = vpop.f32.mrf.mxu0
      %v7025 = vadd.f32 0.0, %v7024
      %v7026 = vpop.f32.mrf.mxu0
      %7027 = vmatprep.mubr.bf16.mxu0 0
      %7028 = vmatmul.mubr.bf16.gmra.mxu0 %v6913
      %v7029 = vpop.f32.mrf.mxu0
      %v7030 = vadd.f32 0.0, %v7029
      %v7031 = vpop.f32.mrf.mxu0
      %v7032 = vpop.f32.mrf.mxu0
      %v7033 = vadd.f32 0.0, %v7032
      %v7034 = vpop.f32.mrf.mxu0
      %7035 = vmatprep.mubr.bf16.mxu0 0
      %7036 = vmatmul.mubr.bf16.gmra.mxu0 %v6916
      %v7037 = vpop.f32.mrf.mxu0
      %v7038 = vadd.f32 0.0, %v7037
      %v7039 = vpop.f32.mrf.mxu0
      %v7040 = vpop.f32.mrf.mxu0
      %v7041 = vadd.f32 0.0, %v7040
      %v7042 = vpop.f32.mrf.mxu0
      %7043 = vmatprep.mubr.bf16.mxu0 0
      %7044 = vmatmul.mubr.bf16.gmra.mxu0 %v6919
      %v7045 = vpop.f32.mrf.mxu0
      %v7046 = vadd.f32 0.0, %v7045
      %v7047 = vpop.f32.mrf.mxu0
      %v7048 = vpop.f32.mrf.mxu0
      %v7049 = vadd.f32 0.0, %v7048
      %v7050 = vpop.f32.mrf.mxu0
      %7051 = vmatprep.mubr.bf16.mxu0 0
      %7052 = vmatmul.mubr.bf16.gmra.mxu0 %v6922
      %v7053 = vpop.f32.mrf.mxu0
      %v7054 = vadd.f32 0.0, %v7053
      %v7055 = vpop.f32.mrf.mxu0
      %v7056 = vpop.f32.mrf.mxu0
      %v7057 = vadd.f32 0.0, %v7056
      %v7058 = vpop.f32.mrf.mxu0
      %7059 = vmatprep.mubr.bf16.mxu0 0
      %7060 = vmatmul.mubr.bf16.gmra.mxu0 %v6925
      %v7061 = vpop.f32.mrf.mxu0
      %v7062 = vadd.f32 0.0, %v7061
      %v7063 = vpop.f32.mrf.mxu0
      %v7064 = vpop.f32.mrf.mxu0
      %v7065 = vadd.f32 0.0, %v7064
      %v7066 = vpop.f32.mrf.mxu0
      %7067 = vmatprep.mubr.bf16.mxu0 0
      %7068 = vmatmul.mubr.bf16.gmra.mxu0 %v6928
      %v7069 = vpop.f32.mrf.mxu0
      %v7070 = vadd.f32 0.0, %v7069
      %v7071 = vpop.f32.mrf.mxu0
      %v7072 = vpop.f32.mrf.mxu0
      %v7073 = vadd.f32 0.0, %v7072
      %v7074 = vpop.f32.mrf.mxu0
      %7075 = vmatprep.mubr.bf16.mxu0 0
      %7076 = vmatmul.mubr.bf16.gmra.mxu0 %v6931
      %v7077 = vpop.f32.mrf.mxu0
      %v7078 = vadd.f32 0.0, %v7077
      %v7079 = vpop.f32.mrf.mxu0
      %v7080 = vpop.f32.mrf.mxu0
      %v7081 = vadd.f32 0.0, %v7080
      %v7082 = vpop.f32.mrf.mxu0
      %7083 = vmatprep.mubr.bf16.mxu0 0
      %7084 = vmatmul.mubr.bf16.gmra.mxu0 %v6934
      %v7085 = vpop.f32.mrf.mxu0
      %v7086 = vadd.f32 0.0, %v7085
      %v7087 = vpop.f32.mrf.mxu0
      %v7088 = vpop.f32.mrf.mxu0
      %v7089 = vadd.f32 0.0, %v7088
      %v7090 = vpop.f32.mrf.mxu0
      %7091 = vmatprep.mubr.bf16.mxu0 0
      %7092 = vmatmul.mubr.bf16.gmra.mxu0 %v6937
      %v7093 = vpop.f32.mrf.mxu0
      %v7094 = vadd.f32 0.0, %v7093
      %v7095 = vpop.f32.mrf.mxu0
      %v7096 = vpop.f32.mrf.mxu0
      %v7097 = vadd.f32 0.0, %v7096
      %v7098 = vpop.f32.mrf.mxu0
      %7099 = vdwg.mxu0
      %v7132 = vunpack.c.l.b16 %v5548
      %v7133 = vunpack.c.l.b16 %v5549
      %v7134 = vunpack.c.l.b16 %v5550
      %v7135 = vunpack.c.l.b16 %v5551
      %v7136 = vunpack.c.l.b16 %v5552
      %v7137 = vunpack.c.l.b16 %v5553
      %v7138 = vunpack.c.l.b16 %v5554
      %v7139 = vunpack.c.l.b16 %v5555
      %v7140 = vunpack.c.l.b16 %v5556
      %v7141 = vunpack.c.l.b16 %v5557
      %v7142 = vunpack.c.l.b16 %v5558
      %v7143 = vunpack.c.l.b16 %v5559
      %v7144 = vunpack.c.l.b16 %v5560
      %v7145 = vunpack.c.l.b16 %v5561
      %v7146 = vunpack.c.l.b16 %v5562
      %v7147 = vunpack.c.l.b16 %v5563
      %v7148 = vunpack.c.l.b16 %v5564
      %v7149 = vunpack.c.l.b16 %v5565
      %v7150 = vunpack.c.l.b16 %v5566
      %v7151 = vunpack.c.l.b16 %v5567
      %v7152 = vunpack.c.l.b16 %v5568
      %v7153 = vunpack.c.l.b16 %v5569
      %v7154 = vunpack.c.l.b16 %v5570
      %v7155 = vunpack.c.l.b16 %v5571
      %v7156 = vunpack.c.l.b16 %v5572
      %v7157 = vunpack.c.l.b16 %v5573
      %v7158 = vunpack.c.l.b16 %v5574
      %v7159 = vunpack.c.l.b16 %v5575
      %v7160 = vunpack.c.l.b16 %v5576
      %v7161 = vunpack.c.l.b16 %v5577
      %v7162 = vunpack.c.l.b16 %v5578
      %v7163 = vunpack.c.l.b16 %v5579
      %v7164 = vpack.c.b16 %v7133, %v7132
      %v7165 = vpack.c.b16 %v7135, %v7134
      %v7166 = vpack.c.b16 %v7137, %v7136
      %v7167 = vpack.c.b16 %v7139, %v7138
      %v7168 = vpack.c.b16 %v7141, %v7140
      %v7169 = vpack.c.b16 %v7143, %v7142
      %v7170 = vpack.c.b16 %v7145, %v7144
      %v7171 = vpack.c.b16 %v7147, %v7146
      %v7172 = vpack.c.b16 %v7149, %v7148
      %v7173 = vpack.c.b16 %v7151, %v7150
      %v7174 = vpack.c.b16 %v7153, %v7152
      %v7175 = vpack.c.b16 %v7155, %v7154
      %v7176 = vpack.c.b16 %v7157, %v7156
      %v7177 = vpack.c.b16 %v7159, %v7158
      %v7178 = vpack.c.b16 %v7161, %v7160
      %v7179 = vpack.c.b16 %v7163, %v7162
      %v7181 = vsel %vm831, %v7164, 0
      %v7184 = vsel %vm831, %v7165, 0
      %v7187 = vsel %vm831, %v7166, 0
      %v7190 = vsel %vm831, %v7167, 0
      %v7193 = vsel %vm831, %v7168, 0
      %v7196 = vsel %vm831, %v7169, 0
      %v7199 = vsel %vm831, %v7170, 0
      %v7202 = vsel %vm831, %v7171, 0
      %v7205 = vsel %vm831, %v7172, 0
      %v7208 = vsel %vm831, %v7173, 0
      %v7211 = vsel %vm831, %v7174, 0
      %v7214 = vsel %vm831, %v7175, 0
      %v7217 = vsel %vm831, %v7176, 0
      %v7220 = vsel %vm831, %v7177, 0
      %v7223 = vsel %vm831, %v7178, 0
      %v7226 = vsel %vm831, %v7179, 0
      %7228 = vmatprep.subr.bf16.mxu0 0
      %7229 = vmatpush1.bf16.msra.mxu0 0
      %7230 = vmatprep.subr.bf16.mxu0 0
      %7231 = vmatpush1.bf16.msra.mxu0 0
      %7232 = vmatprep.subr.bf16.mxu0 0
      %7233 = vmatpush1.bf16.msra.mxu0 0
      %7234 = vmatprep.subr.bf16.mxu0 0
      %7235 = vmatpush1.bf16.msra.mxu0 0
      %7236 = vmatprep.subr.bf16.mxu0 0
      %7237 = vmatpush1.bf16.msra.mxu0 0
      %7238 = vmatprep.subr.bf16.mxu0 0
      %7239 = vmatpush1.bf16.msra.mxu0 0
      %7240 = vmatprep.subr.bf16.mxu0 0
      %7241 = vmatpush1.bf16.msra.mxu0 0
      %7242 = vmatprep.subr.bf16.mxu0 0
      %7243 = vmatpush1.bf16.msra.mxu0 %v5781
      %7244 = vmatprep.subr.bf16.mxu0 0
      %7245 = vmatpush2.bf16.msra.mxu0 0
      %7246 = vmatprep.subr.bf16.mxu0 0
      %7247 = vmatpush2.bf16.msra.mxu0 0
      %7248 = vmatprep.subr.bf16.mxu0 0
      %7249 = vmatpush2.bf16.msra.mxu0 0
      %7250 = vmatprep.subr.bf16.mxu0 0
      %7251 = vmatpush2.bf16.msra.mxu0 0
      %7252 = vmatprep.subr.bf16.mxu0 0
      %7253 = vmatpush2.bf16.msra.mxu0 0
      %7254 = vmatprep.subr.bf16.mxu0 0
      %7255 = vmatpush2.bf16.msra.mxu0 0
      %7256 = vmatprep.subr.bf16.mxu0 0
      %7257 = vmatpush2.bf16.msra.mxu0 0
      %7258 = vmatprep.subr.bf16.mxu0 0
      %7259 = vmatpush2.bf16.msra.mxu0 0
      %7260 = vmatprep.mubr.bf16.mxu0 0
      %7261 = vmatmul.mubr.bf16.gmra.mxu0 %v7181
      %v7262 = vpop.f32.mrf.mxu0
      %v7263 = vadd.f32 0.0, %v7262
      %v7264 = vpop.f32.mrf.mxu0
      %v7265 = vpop.f32.mrf.mxu0
      %v7266 = vadd.f32 0.0, %v7265
      %v7267 = vpop.f32.mrf.mxu0
      %7268 = vmatprep.mubr.bf16.mxu0 0
      %7269 = vmatmul.mubr.bf16.gmra.mxu0 %v7184
      %v7270 = vpop.f32.mrf.mxu0
      %v7271 = vadd.f32 0.0, %v7270
      %v7272 = vpop.f32.mrf.mxu0
      %v7273 = vpop.f32.mrf.mxu0
      %v7274 = vadd.f32 0.0, %v7273
      %v7275 = vpop.f32.mrf.mxu0
      %7276 = vmatprep.mubr.bf16.mxu0 0
      %7277 = vmatmul.mubr.bf16.gmra.mxu0 %v7187
      %v7278 = vpop.f32.mrf.mxu0
      %v7279 = vadd.f32 0.0, %v7278
      %v7280 = vpop.f32.mrf.mxu0
      %v7281 = vpop.f32.mrf.mxu0
      %v7282 = vadd.f32 0.0, %v7281
      %v7283 = vpop.f32.mrf.mxu0
      %7284 = vmatprep.mubr.bf16.mxu0 0
      %7285 = vmatmul.mubr.bf16.gmra.mxu0 %v7190
      %v7286 = vpop.f32.mrf.mxu0
      %v7287 = vadd.f32 0.0, %v7286
      %v7288 = vpop.f32.mrf.mxu0
      %v7289 = vpop.f32.mrf.mxu0
      %v7290 = vadd.f32 0.0, %v7289
      %v7291 = vpop.f32.mrf.mxu0
      %7292 = vmatprep.mubr.bf16.mxu0 0
      %7293 = vmatmul.mubr.bf16.gmra.mxu0 %v7193
      %v7294 = vpop.f32.mrf.mxu0
      %v7295 = vadd.f32 0.0, %v7294
      %v7296 = vpop.f32.mrf.mxu0
      %v7297 = vpop.f32.mrf.mxu0
      %v7298 = vadd.f32 0.0, %v7297
      %v7299 = vpop.f32.mrf.mxu0
      %7300 = vmatprep.mubr.bf16.mxu0 0
      %7301 = vmatmul.mubr.bf16.gmra.mxu0 %v7196
      %v7302 = vpop.f32.mrf.mxu0
      %v7303 = vadd.f32 0.0, %v7302
      %v7304 = vpop.f32.mrf.mxu0
      %v7305 = vpop.f32.mrf.mxu0
      %v7306 = vadd.f32 0.0, %v7305
      %v7307 = vpop.f32.mrf.mxu0
      %7308 = vmatprep.mubr.bf16.mxu0 0
      %7309 = vmatmul.mubr.bf16.gmra.mxu0 %v7199
      %v7310 = vpop.f32.mrf.mxu0
      %v7311 = vadd.f32 0.0, %v7310
      %v7312 = vpop.f32.mrf.mxu0
      %v7313 = vpop.f32.mrf.mxu0
      %v7314 = vadd.f32 0.0, %v7313
      %v7315 = vpop.f32.mrf.mxu0
      %7316 = vmatprep.mubr.bf16.mxu0 0
      %7317 = vmatmul.mubr.bf16.gmra.mxu0 %v7202
      %v7318 = vpop.f32.mrf.mxu0
      %v7319 = vadd.f32 0.0, %v7318
      %v7320 = vpop.f32.mrf.mxu0
      %v7321 = vpop.f32.mrf.mxu0
      %v7322 = vadd.f32 0.0, %v7321
      %v7323 = vpop.f32.mrf.mxu0
      %7324 = vmatprep.mubr.bf16.mxu0 0
      %7325 = vmatmul.mubr.bf16.gmra.mxu0 %v7205
      %v7326 = vpop.f32.mrf.mxu0
      %v7327 = vadd.f32 0.0, %v7326
      %v7328 = vpop.f32.mrf.mxu0
      %v7329 = vpop.f32.mrf.mxu0
      %v7330 = vadd.f32 0.0, %v7329
      %v7331 = vpop.f32.mrf.mxu0
      %7332 = vmatprep.mubr.bf16.mxu0 0
      %7333 = vmatmul.mubr.bf16.gmra.mxu0 %v7208
      %v7334 = vpop.f32.mrf.mxu0
      %v7335 = vadd.f32 0.0, %v7334
      %v7336 = vpop.f32.mrf.mxu0
      %v7337 = vpop.f32.mrf.mxu0
      %v7338 = vadd.f32 0.0, %v7337
      %v7339 = vpop.f32.mrf.mxu0
      %7340 = vmatprep.mubr.bf16.mxu0 0
      %7341 = vmatmul.mubr.bf16.gmra.mxu0 %v7211
      %v7342 = vpop.f32.mrf.mxu0
      %v7343 = vadd.f32 0.0, %v7342
      %v7344 = vpop.f32.mrf.mxu0
      %v7345 = vpop.f32.mrf.mxu0
      %v7346 = vadd.f32 0.0, %v7345
      %v7347 = vpop.f32.mrf.mxu0
      %7348 = vmatprep.mubr.bf16.mxu0 0
      %7349 = vmatmul.mubr.bf16.gmra.mxu0 %v7214
      %v7350 = vpop.f32.mrf.mxu0
      %v7351 = vadd.f32 0.0, %v7350
      %v7352 = vpop.f32.mrf.mxu0
      %v7353 = vpop.f32.mrf.mxu0
      %v7354 = vadd.f32 0.0, %v7353
      %v7355 = vpop.f32.mrf.mxu0
      %7356 = vmatprep.mubr.bf16.mxu0 0
      %7357 = vmatmul.mubr.bf16.gmra.mxu0 %v7217
      %v7358 = vpop.f32.mrf.mxu0
      %v7359 = vadd.f32 0.0, %v7358
      %v7360 = vpop.f32.mrf.mxu0
      %v7361 = vpop.f32.mrf.mxu0
      %v7362 = vadd.f32 0.0, %v7361
      %v7363 = vpop.f32.mrf.mxu0
      %7364 = vmatprep.mubr.bf16.mxu0 0
      %7365 = vmatmul.mubr.bf16.gmra.mxu0 %v7220
      %v7366 = vpop.f32.mrf.mxu0
      %v7367 = vadd.f32 0.0, %v7366
      %v7368 = vpop.f32.mrf.mxu0
      %v7369 = vpop.f32.mrf.mxu0
      %v7370 = vadd.f32 0.0, %v7369
      %v7371 = vpop.f32.mrf.mxu0
      %7372 = vmatprep.mubr.bf16.mxu0 0
      %7373 = vmatmul.mubr.bf16.gmra.mxu0 %v7223
      %v7374 = vpop.f32.mrf.mxu0
      %v7375 = vadd.f32 0.0, %v7374
      %v7376 = vpop.f32.mrf.mxu0
      %v7377 = vpop.f32.mrf.mxu0
      %v7378 = vadd.f32 0.0, %v7377
      %v7379 = vpop.f32.mrf.mxu0
      %7380 = vmatprep.mubr.bf16.mxu0 0
      %7381 = vmatmul.mubr.bf16.gmra.mxu0 %v7226
      %v7382 = vpop.f32.mrf.mxu0
      %v7383 = vadd.f32 0.0, %v7382
      %v7384 = vpop.f32.mrf.mxu0
      %v7385 = vpop.f32.mrf.mxu0
      %v7386 = vadd.f32 0.0, %v7385
      %v7387 = vpop.f32.mrf.mxu0
      %7388 = vdwg.mxu0
      %v7421 = vunpack.c.l.b16 %v5580
      %v7422 = vunpack.c.l.b16 %v5581
      %v7423 = vunpack.c.l.b16 %v5582
      %v7424 = vunpack.c.l.b16 %v5583
      %v7425 = vunpack.c.l.b16 %v5584
      %v7426 = vunpack.c.l.b16 %v5585
      %v7427 = vunpack.c.l.b16 %v5586
      %v7428 = vunpack.c.l.b16 %v5587
      %v7429 = vunpack.c.l.b16 %v5588
      %v7430 = vunpack.c.l.b16 %v5589
      %v7431 = vunpack.c.l.b16 %v5590
      %v7432 = vunpack.c.l.b16 %v5591
      %v7433 = vunpack.c.l.b16 %v5592
      %v7434 = vunpack.c.l.b16 %v5593
      %v7435 = vunpack.c.l.b16 %v5594
      %v7436 = vunpack.c.l.b16 %v5595
      %v7437 = vunpack.c.l.b16 %v5596
      %v7438 = vunpack.c.l.b16 %v5597
      %v7439 = vunpack.c.l.b16 %v5598
      %v7440 = vunpack.c.l.b16 %v5599
      %v7441 = vunpack.c.l.b16 %v5600
      %v7442 = vunpack.c.l.b16 %v5601
      %v7443 = vunpack.c.l.b16 %v5602
      %v7444 = vunpack.c.l.b16 %v5603
      %v7445 = vunpack.c.l.b16 %v5604
      %v7446 = vunpack.c.l.b16 %v5605
      %v7447 = vunpack.c.l.b16 %v5606
      %v7448 = vunpack.c.l.b16 %v5607
      %v7449 = vunpack.c.l.b16 %v5608
      %v7450 = vunpack.c.l.b16 %v5609
      %v7451 = vunpack.c.l.b16 %v5610
      %v7452 = vunpack.c.l.b16 %v5611
      %v7453 = vpack.c.b16 %v7422, %v7421
      %v7454 = vpack.c.b16 %v7424, %v7423
      %v7455 = vpack.c.b16 %v7426, %v7425
      %v7456 = vpack.c.b16 %v7428, %v7427
      %v7457 = vpack.c.b16 %v7430, %v7429
      %v7458 = vpack.c.b16 %v7432, %v7431
      %v7459 = vpack.c.b16 %v7434, %v7433
      %v7460 = vpack.c.b16 %v7436, %v7435
      %v7461 = vpack.c.b16 %v7438, %v7437
      %v7462 = vpack.c.b16 %v7440, %v7439
      %v7463 = vpack.c.b16 %v7442, %v7441
      %v7464 = vpack.c.b16 %v7444, %v7443
      %v7465 = vpack.c.b16 %v7446, %v7445
      %v7466 = vpack.c.b16 %v7448, %v7447
      %v7467 = vpack.c.b16 %v7450, %v7449
      %v7468 = vpack.c.b16 %v7452, %v7451
      %v7470 = vsel %vm831, %v7453, 0
      %v7473 = vsel %vm831, %v7454, 0
      %v7476 = vsel %vm831, %v7455, 0
      %v7479 = vsel %vm831, %v7456, 0
      %v7482 = vsel %vm831, %v7457, 0
      %v7485 = vsel %vm831, %v7458, 0
      %v7488 = vsel %vm831, %v7459, 0
      %v7491 = vsel %vm831, %v7460, 0
      %v7494 = vsel %vm831, %v7461, 0
      %v7497 = vsel %vm831, %v7462, 0
      %v7500 = vsel %vm831, %v7463, 0
      %v7503 = vsel %vm831, %v7464, 0
      %v7506 = vsel %vm831, %v7465, 0
      %v7509 = vsel %vm831, %v7466, 0
      %v7512 = vsel %vm831, %v7467, 0
      %v7515 = vsel %vm831, %v7468, 0
      %7517 = vmatprep.subr.bf16.mxu0 0
      %7518 = vmatpush1.bf16.msra.mxu0 0
      %7519 = vmatprep.subr.bf16.mxu0 0
      %7520 = vmatpush1.bf16.msra.mxu0 0
      %7521 = vmatprep.subr.bf16.mxu0 0
      %7522 = vmatpush1.bf16.msra.mxu0 0
      %7523 = vmatprep.subr.bf16.mxu0 0
      %7524 = vmatpush1.bf16.msra.mxu0 0
      %7525 = vmatprep.subr.bf16.mxu0 0
      %7526 = vmatpush1.bf16.msra.mxu0 0
      %7527 = vmatprep.subr.bf16.mxu0 0
      %7528 = vmatpush1.bf16.msra.mxu0 0
      %7529 = vmatprep.subr.bf16.mxu0 0
      %7530 = vmatpush1.bf16.msra.mxu0 0
      %7531 = vmatprep.subr.bf16.mxu0 0
      %7532 = vmatpush1.bf16.msra.mxu0 %v5781
      %7533 = vmatprep.subr.bf16.mxu0 0
      %7534 = vmatpush2.bf16.msra.mxu0 0
      %7535 = vmatprep.subr.bf16.mxu0 0
      %7536 = vmatpush2.bf16.msra.mxu0 0
      %7537 = vmatprep.subr.bf16.mxu0 0
      %7538 = vmatpush2.bf16.msra.mxu0 0
      %7539 = vmatprep.subr.bf16.mxu0 0
      %7540 = vmatpush2.bf16.msra.mxu0 0
      %7541 = vmatprep.subr.bf16.mxu0 0
      %7542 = vmatpush2.bf16.msra.mxu0 0
      %7543 = vmatprep.subr.bf16.mxu0 0
      %7544 = vmatpush2.bf16.msra.mxu0 0
      %7545 = vmatprep.subr.bf16.mxu0 0
      %7546 = vmatpush2.bf16.msra.mxu0 0
      %7547 = vmatprep.subr.bf16.mxu0 0
      %7548 = vmatpush2.bf16.msra.mxu0 0
      %7549 = vmatprep.mubr.bf16.mxu0 0
      %7550 = vmatmul.mubr.bf16.gmra.mxu0 %v7470
      %v7551 = vpop.f32.mrf.mxu0
      %v7552 = vadd.f32 0.0, %v7551
      %v7553 = vpop.f32.mrf.mxu0
      %v7554 = vpop.f32.mrf.mxu0
      %v7555 = vadd.f32 0.0, %v7554
      %v7556 = vpop.f32.mrf.mxu0
      %7557 = vmatprep.mubr.bf16.mxu0 0
      %7558 = vmatmul.mubr.bf16.gmra.mxu0 %v7473
      %v7559 = vpop.f32.mrf.mxu0
      %v7560 = vadd.f32 0.0, %v7559
      %v7561 = vpop.f32.mrf.mxu0
      %v7562 = vpop.f32.mrf.mxu0
      %v7563 = vadd.f32 0.0, %v7562
      %v7564 = vpop.f32.mrf.mxu0
      %7565 = vmatprep.mubr.bf16.mxu0 0
      %7566 = vmatmul.mubr.bf16.gmra.mxu0 %v7476
      %v7567 = vpop.f32.mrf.mxu0
      %v7568 = vadd.f32 0.0, %v7567
      %v7569 = vpop.f32.mrf.mxu0
      %v7570 = vpop.f32.mrf.mxu0
      %v7571 = vadd.f32 0.0, %v7570
      %v7572 = vpop.f32.mrf.mxu0
      %7573 = vmatprep.mubr.bf16.mxu0 0
      %7574 = vmatmul.mubr.bf16.gmra.mxu0 %v7479
      %v7575 = vpop.f32.mrf.mxu0
      %v7576 = vadd.f32 0.0, %v7575
      %v7577 = vpop.f32.mrf.mxu0
      %v7578 = vpop.f32.mrf.mxu0
      %v7579 = vadd.f32 0.0, %v7578
      %v7580 = vpop.f32.mrf.mxu0
      %7581 = vmatprep.mubr.bf16.mxu0 0
      %7582 = vmatmul.mubr.bf16.gmra.mxu0 %v7482
      %v7583 = vpop.f32.mrf.mxu0
      %v7584 = vadd.f32 0.0, %v7583
      %v7585 = vpop.f32.mrf.mxu0
      %v7586 = vpop.f32.mrf.mxu0
      %v7587 = vadd.f32 0.0, %v7586
      %v7588 = vpop.f32.mrf.mxu0
      %7589 = vmatprep.mubr.bf16.mxu0 0
      %7590 = vmatmul.mubr.bf16.gmra.mxu0 %v7485
      %v7591 = vpop.f32.mrf.mxu0
      %v7592 = vadd.f32 0.0, %v7591
      %v7593 = vpop.f32.mrf.mxu0
      %v7594 = vpop.f32.mrf.mxu0
      %v7595 = vadd.f32 0.0, %v7594
      %v7596 = vpop.f32.mrf.mxu0
      %7597 = vmatprep.mubr.bf16.mxu0 0
      %7598 = vmatmul.mubr.bf16.gmra.mxu0 %v7488
      %v7599 = vpop.f32.mrf.mxu0
      %v7600 = vadd.f32 0.0, %v7599
      %v7601 = vpop.f32.mrf.mxu0
      %v7602 = vpop.f32.mrf.mxu0
      %v7603 = vadd.f32 0.0, %v7602
      %v7604 = vpop.f32.mrf.mxu0
      %7605 = vmatprep.mubr.bf16.mxu0 0
      %7606 = vmatmul.mubr.bf16.gmra.mxu0 %v7491
      %v7607 = vpop.f32.mrf.mxu0
      %v7608 = vadd.f32 0.0, %v7607
      %v7609 = vpop.f32.mrf.mxu0
      %v7610 = vpop.f32.mrf.mxu0
      %v7611 = vadd.f32 0.0, %v7610
      %v7612 = vpop.f32.mrf.mxu0
      %7613 = vmatprep.mubr.bf16.mxu0 0
      %7614 = vmatmul.mubr.bf16.gmra.mxu0 %v7494
      %v7615 = vpop.f32.mrf.mxu0
      %v7616 = vadd.f32 0.0, %v7615
      %v7617 = vpop.f32.mrf.mxu0
      %v7618 = vpop.f32.mrf.mxu0
      %v7619 = vadd.f32 0.0, %v7618
      %v7620 = vpop.f32.mrf.mxu0
      %7621 = vmatprep.mubr.bf16.mxu0 0
      %7622 = vmatmul.mubr.bf16.gmra.mxu0 %v7497
      %v7623 = vpop.f32.mrf.mxu0
      %v7624 = vadd.f32 0.0, %v7623
      %v7625 = vpop.f32.mrf.mxu0
      %v7626 = vpop.f32.mrf.mxu0
      %v7627 = vadd.f32 0.0, %v7626
      %v7628 = vpop.f32.mrf.mxu0
      %7629 = vmatprep.mubr.bf16.mxu0 0
      %7630 = vmatmul.mubr.bf16.gmra.mxu0 %v7500
      %v7631 = vpop.f32.mrf.mxu0
      %v7632 = vadd.f32 0.0, %v7631
      %v7633 = vpop.f32.mrf.mxu0
      %v7634 = vpop.f32.mrf.mxu0
      %v7635 = vadd.f32 0.0, %v7634
      %v7636 = vpop.f32.mrf.mxu0
      %7637 = vmatprep.mubr.bf16.mxu0 0
      %7638 = vmatmul.mubr.bf16.gmra.mxu0 %v7503
      %v7639 = vpop.f32.mrf.mxu0
      %v7640 = vadd.f32 0.0, %v7639
      %v7641 = vpop.f32.mrf.mxu0
      %v7642 = vpop.f32.mrf.mxu0
      %v7643 = vadd.f32 0.0, %v7642
      %v7644 = vpop.f32.mrf.mxu0
      %7645 = vmatprep.mubr.bf16.mxu0 0
      %7646 = vmatmul.mubr.bf16.gmra.mxu0 %v7506
      %v7647 = vpop.f32.mrf.mxu0
      %v7648 = vadd.f32 0.0, %v7647
      %v7649 = vpop.f32.mrf.mxu0
      %v7650 = vpop.f32.mrf.mxu0
      %v7651 = vadd.f32 0.0, %v7650
      %v7652 = vpop.f32.mrf.mxu0
      %7653 = vmatprep.mubr.bf16.mxu0 0
      %7654 = vmatmul.mubr.bf16.gmra.mxu0 %v7509
      %v7655 = vpop.f32.mrf.mxu0
      %v7656 = vadd.f32 0.0, %v7655
      %v7657 = vpop.f32.mrf.mxu0
      %v7658 = vpop.f32.mrf.mxu0
      %v7659 = vadd.f32 0.0, %v7658
      %v7660 = vpop.f32.mrf.mxu0
      %7661 = vmatprep.mubr.bf16.mxu0 0
      %7662 = vmatmul.mubr.bf16.gmra.mxu0 %v7512
      %v7663 = vpop.f32.mrf.mxu0
      %v7664 = vadd.f32 0.0, %v7663
      %v7665 = vpop.f32.mrf.mxu0
      %v7666 = vpop.f32.mrf.mxu0
      %v7667 = vadd.f32 0.0, %v7666
      %v7668 = vpop.f32.mrf.mxu0
      %7669 = vmatprep.mubr.bf16.mxu0 0
      %7670 = vmatmul.mubr.bf16.gmra.mxu0 %v7515
      %v7671 = vpop.f32.mrf.mxu0
      %v7672 = vadd.f32 0.0, %v7671
      %v7673 = vpop.f32.mrf.mxu0
      %v7674 = vpop.f32.mrf.mxu0
      %v7675 = vadd.f32 0.0, %v7674
      %v7676 = vpop.f32.mrf.mxu0
      %7677 = vdwg.mxu0
      %v7710 = vunpack.c.l.b16 %v5612
      %v7711 = vunpack.c.l.b16 %v5613
      %v7712 = vunpack.c.l.b16 %v5614
      %v7713 = vunpack.c.l.b16 %v5615
      %v7714 = vunpack.c.l.b16 %v5616
      %v7715 = vunpack.c.l.b16 %v5617
      %v7716 = vunpack.c.l.b16 %v5618
      %v7717 = vunpack.c.l.b16 %v5619
      %v7718 = vunpack.c.l.b16 %v5620
      %v7719 = vunpack.c.l.b16 %v5621
      %v7720 = vunpack.c.l.b16 %v5622
      %v7721 = vunpack.c.l.b16 %v5623
      %v7722 = vunpack.c.l.b16 %v5624
      %v7723 = vunpack.c.l.b16 %v5625
      %v7724 = vunpack.c.l.b16 %v5626
      %v7725 = vunpack.c.l.b16 %v5627
      %v7726 = vunpack.c.l.b16 %v5628
      %v7727 = vunpack.c.l.b16 %v5629
      %v7728 = vunpack.c.l.b16 %v5630
      %v7729 = vunpack.c.l.b16 %v5631
      %v7730 = vunpack.c.l.b16 %v5632
      %v7731 = vunpack.c.l.b16 %v5633
      %v7732 = vunpack.c.l.b16 %v5634
      %v7733 = vunpack.c.l.b16 %v5635
      %v7734 = vunpack.c.l.b16 %v5636
      %v7735 = vunpack.c.l.b16 %v5637
      %v7736 = vunpack.c.l.b16 %v5638
      %v7737 = vunpack.c.l.b16 %v5639
      %v7738 = vunpack.c.l.b16 %v5640
      %v7739 = vunpack.c.l.b16 %v5641
      %v7740 = vunpack.c.l.b16 %v5642
      %v7741 = vunpack.c.l.b16 %v5643
      %v7742 = vpack.c.b16 %v7711, %v7710
      %v7743 = vpack.c.b16 %v7713, %v7712
      %v7744 = vpack.c.b16 %v7715, %v7714
      %v7745 = vpack.c.b16 %v7717, %v7716
      %v7746 = vpack.c.b16 %v7719, %v7718
      %v7747 = vpack.c.b16 %v7721, %v7720
      %v7748 = vpack.c.b16 %v7723, %v7722
      %v7749 = vpack.c.b16 %v7725, %v7724
      %v7750 = vpack.c.b16 %v7727, %v7726
      %v7751 = vpack.c.b16 %v7729, %v7728
      %v7752 = vpack.c.b16 %v7731, %v7730
      %v7753 = vpack.c.b16 %v7733, %v7732
      %v7754 = vpack.c.b16 %v7735, %v7734
      %v7755 = vpack.c.b16 %v7737, %v7736
      %v7756 = vpack.c.b16 %v7739, %v7738
      %v7757 = vpack.c.b16 %v7741, %v7740
      %v7759 = vsel %vm831, %v7742, 0
      %v7762 = vsel %vm831, %v7743, 0
      %v7765 = vsel %vm831, %v7744, 0
      %v7768 = vsel %vm831, %v7745, 0
      %v7771 = vsel %vm831, %v7746, 0
      %v7774 = vsel %vm831, %v7747, 0
      %v7777 = vsel %vm831, %v7748, 0
      %v7780 = vsel %vm831, %v7749, 0
      %v7783 = vsel %vm831, %v7750, 0
      %v7786 = vsel %vm831, %v7751, 0
      %v7789 = vsel %vm831, %v7752, 0
      %v7792 = vsel %vm831, %v7753, 0
      %v7795 = vsel %vm831, %v7754, 0
      %v7798 = vsel %vm831, %v7755, 0
      %v7801 = vsel %vm831, %v7756, 0
      %v7804 = vsel %vm831, %v7757, 0
      %7806 = vmatprep.subr.bf16.mxu0 0
      %7807 = vmatpush1.bf16.msra.mxu0 0
      %7808 = vmatprep.subr.bf16.mxu0 0
      %7809 = vmatpush1.bf16.msra.mxu0 0
      %7810 = vmatprep.subr.bf16.mxu0 0
      %7811 = vmatpush1.bf16.msra.mxu0 0
      %7812 = vmatprep.subr.bf16.mxu0 0
      %7813 = vmatpush1.bf16.msra.mxu0 0
      %7814 = vmatprep.subr.bf16.mxu0 0
      %7815 = vmatpush1.bf16.msra.mxu0 0
      %7816 = vmatprep.subr.bf16.mxu0 0
      %7817 = vmatpush1.bf16.msra.mxu0 0
      %7818 = vmatprep.subr.bf16.mxu0 0
      %7819 = vmatpush1.bf16.msra.mxu0 0
      %7820 = vmatprep.subr.bf16.mxu0 0
      %7821 = vmatpush1.bf16.msra.mxu0 %v5781
      %7822 = vmatprep.subr.bf16.mxu0 0
      %7823 = vmatpush2.bf16.msra.mxu0 0
      %7824 = vmatprep.subr.bf16.mxu0 0
      %7825 = vmatpush2.bf16.msra.mxu0 0
      %7826 = vmatprep.subr.bf16.mxu0 0
      %7827 = vmatpush2.bf16.msra.mxu0 0
      %7828 = vmatprep.subr.bf16.mxu0 0
      %7829 = vmatpush2.bf16.msra.mxu0 0
      %7830 = vmatprep.subr.bf16.mxu0 0
      %7831 = vmatpush2.bf16.msra.mxu0 0
      %7832 = vmatprep.subr.bf16.mxu0 0
      %7833 = vmatpush2.bf16.msra.mxu0 0
      %7834 = vmatprep.subr.bf16.mxu0 0
      %7835 = vmatpush2.bf16.msra.mxu0 0
      %7836 = vmatprep.subr.bf16.mxu0 0
      %7837 = vmatpush2.bf16.msra.mxu0 0
      %7838 = vmatprep.mubr.bf16.mxu0 0
      %7839 = vmatmul.mubr.bf16.gmra.mxu0 %v7759
      %v7840 = vpop.f32.mrf.mxu0
      %v7841 = vadd.f32 0.0, %v7840
      %v7842 = vpop.f32.mrf.mxu0
      %v7843 = vpop.f32.mrf.mxu0
      %v7844 = vadd.f32 0.0, %v7843
      %v7845 = vpop.f32.mrf.mxu0
      %7846 = vmatprep.mubr.bf16.mxu0 0
      %7847 = vmatmul.mubr.bf16.gmra.mxu0 %v7762
      %v7848 = vpop.f32.mrf.mxu0
      %v7849 = vadd.f32 0.0, %v7848
      %v7850 = vpop.f32.mrf.mxu0
      %v7851 = vpop.f32.mrf.mxu0
      %v7852 = vadd.f32 0.0, %v7851
      %v7853 = vpop.f32.mrf.mxu0
      %7854 = vmatprep.mubr.bf16.mxu0 0
      %7855 = vmatmul.mubr.bf16.gmra.mxu0 %v7765
      %v7856 = vpop.f32.mrf.mxu0
      %v7857 = vadd.f32 0.0, %v7856
      %v7858 = vpop.f32.mrf.mxu0
      %v7859 = vpop.f32.mrf.mxu0
      %v7860 = vadd.f32 0.0, %v7859
      %v7861 = vpop.f32.mrf.mxu0
      %7862 = vmatprep.mubr.bf16.mxu0 0
      %7863 = vmatmul.mubr.bf16.gmra.mxu0 %v7768
      %v7864 = vpop.f32.mrf.mxu0
      %v7865 = vadd.f32 0.0, %v7864
      %v7866 = vpop.f32.mrf.mxu0
      %v7867 = vpop.f32.mrf.mxu0
      %v7868 = vadd.f32 0.0, %v7867
      %v7869 = vpop.f32.mrf.mxu0
      %7870 = vmatprep.mubr.bf16.mxu0 0
      %7871 = vmatmul.mubr.bf16.gmra.mxu0 %v7771
      %v7872 = vpop.f32.mrf.mxu0
      %v7873 = vadd.f32 0.0, %v7872
      %v7874 = vpop.f32.mrf.mxu0
      %v7875 = vpop.f32.mrf.mxu0
      %v7876 = vadd.f32 0.0, %v7875
      %v7877 = vpop.f32.mrf.mxu0
      %7878 = vmatprep.mubr.bf16.mxu0 0
      %7879 = vmatmul.mubr.bf16.gmra.mxu0 %v7774
      %v7880 = vpop.f32.mrf.mxu0
      %v7881 = vadd.f32 0.0, %v7880
      %v7882 = vpop.f32.mrf.mxu0
      %v7883 = vpop.f32.mrf.mxu0
      %v7884 = vadd.f32 0.0, %v7883
      %v7885 = vpop.f32.mrf.mxu0
      %7886 = vmatprep.mubr.bf16.mxu0 0
      %7887 = vmatmul.mubr.bf16.gmra.mxu0 %v7777
      %v7888 = vpop.f32.mrf.mxu0
      %v7889 = vadd.f32 0.0, %v7888
      %v7890 = vpop.f32.mrf.mxu0
      %v7891 = vpop.f32.mrf.mxu0
      %v7892 = vadd.f32 0.0, %v7891
      %v7893 = vpop.f32.mrf.mxu0
      %7894 = vmatprep.mubr.bf16.mxu0 0
      %7895 = vmatmul.mubr.bf16.gmra.mxu0 %v7780
      %v7896 = vpop.f32.mrf.mxu0
      %v7897 = vadd.f32 0.0, %v7896
      %v7898 = vpop.f32.mrf.mxu0
      %v7899 = vpop.f32.mrf.mxu0
      %v7900 = vadd.f32 0.0, %v7899
      %v7901 = vpop.f32.mrf.mxu0
      %7902 = vmatprep.mubr.bf16.mxu0 0
      %7903 = vmatmul.mubr.bf16.gmra.mxu0 %v7783
      %v7904 = vpop.f32.mrf.mxu0
      %v7905 = vadd.f32 0.0, %v7904
      %v7906 = vpop.f32.mrf.mxu0
      %v7907 = vpop.f32.mrf.mxu0
      %v7908 = vadd.f32 0.0, %v7907
      %v7909 = vpop.f32.mrf.mxu0
      %7910 = vmatprep.mubr.bf16.mxu0 0
      %7911 = vmatmul.mubr.bf16.gmra.mxu0 %v7786
      %v7912 = vpop.f32.mrf.mxu0
      %v7913 = vadd.f32 0.0, %v7912
      %v7914 = vpop.f32.mrf.mxu0
      %v7915 = vpop.f32.mrf.mxu0
      %v7916 = vadd.f32 0.0, %v7915
      %v7917 = vpop.f32.mrf.mxu0
      %7918 = vmatprep.mubr.bf16.mxu0 0
      %7919 = vmatmul.mubr.bf16.gmra.mxu0 %v7789
      %v7920 = vpop.f32.mrf.mxu0
      %v7921 = vadd.f32 0.0, %v7920
      %v7922 = vpop.f32.mrf.mxu0
      %v7923 = vpop.f32.mrf.mxu0
      %v7924 = vadd.f32 0.0, %v7923
      %v7925 = vpop.f32.mrf.mxu0
      %7926 = vmatprep.mubr.bf16.mxu0 0
      %7927 = vmatmul.mubr.bf16.gmra.mxu0 %v7792
      %v7928 = vpop.f32.mrf.mxu0
      %v7929 = vadd.f32 0.0, %v7928
      %v7930 = vpop.f32.mrf.mxu0
      %v7931 = vpop.f32.mrf.mxu0
      %v7932 = vadd.f32 0.0, %v7931
      %v7933 = vpop.f32.mrf.mxu0
      %7934 = vmatprep.mubr.bf16.mxu0 0
      %7935 = vmatmul.mubr.bf16.gmra.mxu0 %v7795
      %v7936 = vpop.f32.mrf.mxu0
      %v7937 = vadd.f32 0.0, %v7936
      %v7938 = vpop.f32.mrf.mxu0
      %v7939 = vpop.f32.mrf.mxu0
      %v7940 = vadd.f32 0.0, %v7939
      %v7941 = vpop.f32.mrf.mxu0
      %7942 = vmatprep.mubr.bf16.mxu0 0
      %7943 = vmatmul.mubr.bf16.gmra.mxu0 %v7798
      %v7944 = vpop.f32.mrf.mxu0
      %v7945 = vadd.f32 0.0, %v7944
      %v7946 = vpop.f32.mrf.mxu0
      %v7947 = vpop.f32.mrf.mxu0
      %v7948 = vadd.f32 0.0, %v7947
      %v7949 = vpop.f32.mrf.mxu0
      %7950 = vmatprep.mubr.bf16.mxu0 0
      %7951 = vmatmul.mubr.bf16.gmra.mxu0 %v7801
      %v7952 = vpop.f32.mrf.mxu0
      %v7953 = vadd.f32 0.0, %v7952
      %v7954 = vpop.f32.mrf.mxu0
      %v7955 = vpop.f32.mrf.mxu0
      %v7956 = vadd.f32 0.0, %v7955
      %v7957 = vpop.f32.mrf.mxu0
      %7958 = vmatprep.mubr.bf16.mxu0 0
      %7959 = vmatmul.mubr.bf16.gmra.mxu0 %v7804
      %v7960 = vpop.f32.mrf.mxu0
      %v7961 = vadd.f32 0.0, %v7960
      %v7962 = vpop.f32.mrf.mxu0
      %v7963 = vpop.f32.mrf.mxu0
      %v7964 = vadd.f32 0.0, %v7963
      %v7965 = vpop.f32.mrf.mxu0
      %7966 = vdwg.mxu0
      %v7967 = vadd.f32 %v3239, %v5818
      %v7968 = vadd.f32 %v3242, %v5821
      %v7969 = vadd.f32 %v3247, %v5826
      %v7970 = vadd.f32 %v3250, %v5829
      %v7971 = vadd.f32 %v3255, %v5834
      %v7972 = vadd.f32 %v3258, %v5837
      %v7973 = vadd.f32 %v3263, %v5842
      %v7974 = vadd.f32 %v3266, %v5845
      %v7975 = vadd.f32 %v3271, %v5850
      %v7976 = vadd.f32 %v3274, %v5853
      %v7977 = vadd.f32 %v3279, %v5858
      %v7978 = vadd.f32 %v3282, %v5861
      %v7979 = vadd.f32 %v3287, %v5866
      %v7980 = vadd.f32 %v3290, %v5869
      %v7981 = vadd.f32 %v3295, %v5874
      %v7982 = vadd.f32 %v3298, %v5877
      %v7983 = vadd.f32 %v3303, %v5882
      %v7984 = vadd.f32 %v3306, %v5885
      %v7985 = vadd.f32 %v3311, %v5890
      %v7986 = vadd.f32 %v3314, %v5893
      %v7987 = vadd.f32 %v3319, %v5898
      %v7988 = vadd.f32 %v3322, %v5901
      %v7989 = vadd.f32 %v3327, %v5906
      %v7990 = vadd.f32 %v3330, %v5909
      %v7991 = vadd.f32 %v3335, %v5914
      %v7992 = vadd.f32 %v3338, %v5917
      %v7993 = vadd.f32 %v3343, %v5922
      %v7994 = vadd.f32 %v3346, %v5925
      %v7995 = vadd.f32 %v3351, %v5930
      %v7996 = vadd.f32 %v3354, %v5933
      %v7997 = vadd.f32 %v3359, %v5938
      %v7998 = vadd.f32 %v3362, %v5941
      %v7999 = vadd.f32 %v3528, %v6107
      %v8000 = vadd.f32 %v3531, %v6110
      %v8001 = vadd.f32 %v3536, %v6115
      %v8002 = vadd.f32 %v3539, %v6118
      %v8003 = vadd.f32 %v3544, %v6123
      %v8004 = vadd.f32 %v3547, %v6126
      %v8005 = vadd.f32 %v3552, %v6131
      %v8006 = vadd.f32 %v3555, %v6134
      %v8007 = vadd.f32 %v3560, %v6139
      %v8008 = vadd.f32 %v3563, %v6142
      %v8009 = vadd.f32 %v3568, %v6147
      %v8010 = vadd.f32 %v3571, %v6150
      %v8011 = vadd.f32 %v3576, %v6155
      %v8012 = vadd.f32 %v3579, %v6158
      %v8013 = vadd.f32 %v3584, %v6163
      %v8014 = vadd.f32 %v3587, %v6166
      %v8015 = vadd.f32 %v3592, %v6171
      %v8016 = vadd.f32 %v3595, %v6174
      %v8017 = vadd.f32 %v3600, %v6179
      %v8018 = vadd.f32 %v3603, %v6182
      %v8019 = vadd.f32 %v3608, %v6187
      %v8020 = vadd.f32 %v3611, %v6190
      %v8021 = vadd.f32 %v3616, %v6195
      %v8022 = vadd.f32 %v3619, %v6198
      %v8023 = vadd.f32 %v3624, %v6203
      %v8024 = vadd.f32 %v3627, %v6206
      %v8025 = vadd.f32 %v3632, %v6211
      %v8026 = vadd.f32 %v3635, %v6214
      %v8027 = vadd.f32 %v3640, %v6219
      %v8028 = vadd.f32 %v3643, %v6222
      %v8029 = vadd.f32 %v3648, %v6227
      %v8030 = vadd.f32 %v3651, %v6230
      %v8031 = vadd.f32 %v3817, %v6396
      %v8032 = vadd.f32 %v3820, %v6399
      %v8033 = vadd.f32 %v3825, %v6404
      %v8034 = vadd.f32 %v3828, %v6407
      %v8035 = vadd.f32 %v3833, %v6412
      %v8036 = vadd.f32 %v3836, %v6415
      %v8037 = vadd.f32 %v3841, %v6420
      %v8038 = vadd.f32 %v3844, %v6423
      %v8039 = vadd.f32 %v3849, %v6428
      %v8040 = vadd.f32 %v3852, %v6431
      %v8041 = vadd.f32 %v3857, %v6436
      %v8042 = vadd.f32 %v3860, %v6439
      %v8043 = vadd.f32 %v3865, %v6444
      %v8044 = vadd.f32 %v3868, %v6447
      %v8045 = vadd.f32 %v3873, %v6452
      %v8046 = vadd.f32 %v3876, %v6455
      %v8047 = vadd.f32 %v3881, %v6460
      %v8048 = vadd.f32 %v3884, %v6463
      %v8049 = vadd.f32 %v3889, %v6468
      %v8050 = vadd.f32 %v3892, %v6471
      %v8051 = vadd.f32 %v3897, %v6476
      %v8052 = vadd.f32 %v3900, %v6479
      %v8053 = vadd.f32 %v3905, %v6484
      %v8054 = vadd.f32 %v3908, %v6487
      %v8055 = vadd.f32 %v3913, %v6492
      %v8056 = vadd.f32 %v3916, %v6495
      %v8057 = vadd.f32 %v3921, %v6500
      %v8058 = vadd.f32 %v3924, %v6503
      %v8059 = vadd.f32 %v3929, %v6508
      %v8060 = vadd.f32 %v3932, %v6511
      %v8061 = vadd.f32 %v3937, %v6516
      %v8062 = vadd.f32 %v3940, %v6519
      %v8063 = vadd.f32 %v4106, %v6685
      %v8064 = vadd.f32 %v4109, %v6688
      %v8065 = vadd.f32 %v4114, %v6693
      %v8066 = vadd.f32 %v4117, %v6696
      %v8067 = vadd.f32 %v4122, %v6701
      %v8068 = vadd.f32 %v4125, %v6704
      %v8069 = vadd.f32 %v4130, %v6709
      %v8070 = vadd.f32 %v4133, %v6712
      %v8071 = vadd.f32 %v4138, %v6717
      %v8072 = vadd.f32 %v4141, %v6720
      %v8073 = vadd.f32 %v4146, %v6725
      %v8074 = vadd.f32 %v4149, %v6728
      %v8075 = vadd.f32 %v4154, %v6733
      %v8076 = vadd.f32 %v4157, %v6736
      %v8077 = vadd.f32 %v4162, %v6741
      %v8078 = vadd.f32 %v4165, %v6744
      %v8079 = vadd.f32 %v4170, %v6749
      %v8080 = vadd.f32 %v4173, %v6752
      %v8081 = vadd.f32 %v4178, %v6757
      %v8082 = vadd.f32 %v4181, %v6760
      %v8083 = vadd.f32 %v4186, %v6765
      %v8084 = vadd.f32 %v4189, %v6768
      %v8085 = vadd.f32 %v4194, %v6773
      %v8086 = vadd.f32 %v4197, %v6776
      %v8087 = vadd.f32 %v4202, %v6781
      %v8088 = vadd.f32 %v4205, %v6784
      %v8089 = vadd.f32 %v4210, %v6789
      %v8090 = vadd.f32 %v4213, %v6792
      %v8091 = vadd.f32 %v4218, %v6797
      %v8092 = vadd.f32 %v4221, %v6800
      %v8093 = vadd.f32 %v4226, %v6805
      %v8094 = vadd.f32 %v4229, %v6808
      %v8095 = vadd.f32 %v4395, %v6974
      %v8096 = vadd.f32 %v4398, %v6977
      %v8097 = vadd.f32 %v4403, %v6982
      %v8098 = vadd.f32 %v4406, %v6985
      %v8099 = vadd.f32 %v4411, %v6990
      %v8100 = vadd.f32 %v4414, %v6993
      %v8101 = vadd.f32 %v4419, %v6998
      %v8102 = vadd.f32 %v4422, %v7001
      %v8103 = vadd.f32 %v4427, %v7006
      %v8104 = vadd.f32 %v4430, %v7009
      %v8105 = vadd.f32 %v4435, %v7014
      %v8106 = vadd.f32 %v4438, %v7017
      %v8107 = vadd.f32 %v4443, %v7022
      %v8108 = vadd.f32 %v4446, %v7025
      %v8109 = vadd.f32 %v4451, %v7030
      %v8110 = vadd.f32 %v4454, %v7033
      %v8111 = vadd.f32 %v4459, %v7038
      %v8112 = vadd.f32 %v4462, %v7041
      %v8113 = vadd.f32 %v4467, %v7046
      %v8114 = vadd.f32 %v4470, %v7049
      %v8115 = vadd.f32 %v4475, %v7054
      %v8116 = vadd.f32 %v4478, %v7057
      %v8117 = vadd.f32 %v4483, %v7062
      %v8118 = vadd.f32 %v4486, %v7065
      %v8119 = vadd.f32 %v4491, %v7070
      %v8120 = vadd.f32 %v4494, %v7073
      %v8121 = vadd.f32 %v4499, %v7078
      %v8122 = vadd.f32 %v4502, %v7081
      %v8123 = vadd.f32 %v4507, %v7086
      %v8124 = vadd.f32 %v4510, %v7089
      %v8125 = vadd.f32 %v4515, %v7094
      %v8126 = vadd.f32 %v4518, %v7097
      %v8127 = vadd.f32 %v4684, %v7263
      %v8128 = vadd.f32 %v4687, %v7266
      %v8129 = vadd.f32 %v4692, %v7271
      %v8130 = vadd.f32 %v4695, %v7274
      %v8131 = vadd.f32 %v4700, %v7279
      %v8132 = vadd.f32 %v4703, %v7282
      %v8133 = vadd.f32 %v4708, %v7287
      %v8134 = vadd.f32 %v4711, %v7290
      %v8135 = vadd.f32 %v4716, %v7295
      %v8136 = vadd.f32 %v4719, %v7298
      %v8137 = vadd.f32 %v4724, %v7303
      %v8138 = vadd.f32 %v4727, %v7306
      %v8139 = vadd.f32 %v4732, %v7311
      %v8140 = vadd.f32 %v4735, %v7314
      %v8141 = vadd.f32 %v4740, %v7319
      %v8142 = vadd.f32 %v4743, %v7322
      %v8143 = vadd.f32 %v4748, %v7327
      %v8144 = vadd.f32 %v4751, %v7330
      %v8145 = vadd.f32 %v4756, %v7335
      %v8146 = vadd.f32 %v4759, %v7338
      %v8147 = vadd.f32 %v4764, %v7343
      %v8148 = vadd.f32 %v4767, %v7346
      %v8149 = vadd.f32 %v4772, %v7351
      %v8150 = vadd.f32 %v4775, %v7354
      %v8151 = vadd.f32 %v4780, %v7359
      %v8152 = vadd.f32 %v4783, %v7362
      %v8153 = vadd.f32 %v4788, %v7367
      %v8154 = vadd.f32 %v4791, %v7370
      %v8155 = vadd.f32 %v4796, %v7375
      %v8156 = vadd.f32 %v4799, %v7378
      %v8157 = vadd.f32 %v4804, %v7383
      %v8158 = vadd.f32 %v4807, %v7386
      %v8159 = vadd.f32 %v4973, %v7552
      %v8160 = vadd.f32 %v4976, %v7555
      %v8161 = vadd.f32 %v4981, %v7560
      %v8162 = vadd.f32 %v4984, %v7563
      %v8163 = vadd.f32 %v4989, %v7568
      %v8164 = vadd.f32 %v4992, %v7571
      %v8165 = vadd.f32 %v4997, %v7576
      %v8166 = vadd.f32 %v5000, %v7579
      %v8167 = vadd.f32 %v5005, %v7584
      %v8168 = vadd.f32 %v5008, %v7587
      %v8169 = vadd.f32 %v5013, %v7592
      %v8170 = vadd.f32 %v5016, %v7595
      %v8171 = vadd.f32 %v5021, %v7600
      %v8172 = vadd.f32 %v5024, %v7603
      %v8173 = vadd.f32 %v5029, %v7608
      %v8174 = vadd.f32 %v5032, %v7611
      %v8175 = vadd.f32 %v5037, %v7616
      %v8176 = vadd.f32 %v5040, %v7619
      %v8177 = vadd.f32 %v5045, %v7624
      %v8178 = vadd.f32 %v5048, %v7627
      %v8179 = vadd.f32 %v5053, %v7632
      %v8180 = vadd.f32 %v5056, %v7635
      %v8181 = vadd.f32 %v5061, %v7640
      %v8182 = vadd.f32 %v5064, %v7643
      %v8183 = vadd.f32 %v5069, %v7648
      %v8184 = vadd.f32 %v5072, %v7651
      %v8185 = vadd.f32 %v5077, %v7656
      %v8186 = vadd.f32 %v5080, %v7659
      %v8187 = vadd.f32 %v5085, %v7664
      %v8188 = vadd.f32 %v5088, %v7667
      %v8189 = vadd.f32 %v5093, %v7672
      %v8190 = vadd.f32 %v5096, %v7675
      %v8191 = vadd.f32 %v5262, %v7841
      %v8192 = vadd.f32 %v5265, %v7844
      %v8193 = vadd.f32 %v5270, %v7849
      %v8194 = vadd.f32 %v5273, %v7852
      %v8195 = vadd.f32 %v5278, %v7857
      %v8196 = vadd.f32 %v5281, %v7860
      %v8197 = vadd.f32 %v5286, %v7865
      %v8198 = vadd.f32 %v5289, %v7868
      %v8199 = vadd.f32 %v5294, %v7873
      %v8200 = vadd.f32 %v5297, %v7876
      %v8201 = vadd.f32 %v5302, %v7881
      %v8202 = vadd.f32 %v5305, %v7884
      %v8203 = vadd.f32 %v5310, %v7889
      %v8204 = vadd.f32 %v5313, %v7892
      %v8205 = vadd.f32 %v5318, %v7897
      %v8206 = vadd.f32 %v5321, %v7900
      %v8207 = vadd.f32 %v5326, %v7905
      %v8208 = vadd.f32 %v5329, %v7908
      %v8209 = vadd.f32 %v5334, %v7913
      %v8210 = vadd.f32 %v5337, %v7916
      %v8211 = vadd.f32 %v5342, %v7921
      %v8212 = vadd.f32 %v5345, %v7924
      %v8213 = vadd.f32 %v5350, %v7929
      %v8214 = vadd.f32 %v5353, %v7932
      %v8215 = vadd.f32 %v5358, %v7937
      %v8216 = vadd.f32 %v5361, %v7940
      %v8217 = vadd.f32 %v5366, %v7945
      %v8218 = vadd.f32 %v5369, %v7948
      %v8219 = vadd.f32 %v5374, %v7953
      %v8220 = vadd.f32 %v5377, %v7956
      %v8221 = vadd.f32 %v5382, %v7961
      %v8222 = vadd.f32 %v5385, %v7964
      %v8223 = vld [vmem:[%s2] sm:$0x1]
      %v8225 = vlaneseq
      %v8226 = vshrl.u32 %v8225, 7
      %v8227 = vsub.s32 0, %v8226
      %v8228 = vrot.slane %v8223, %v8227
      %v8230 = vadd.f32 %v7967, %v8228
      %v8231 = vadd.f32 %v7968, %v8228
      %v8232 = vadd.f32 %v7969, %v8228
      %v8233 = vadd.f32 %v7970, %v8228
      %v8234 = vadd.f32 %v7971, %v8228
      %v8235 = vadd.f32 %v7972, %v8228
      %v8236 = vadd.f32 %v7973, %v8228
      %v8237 = vadd.f32 %v7974, %v8228
      %v8238 = vadd.f32 %v7975, %v8228
      %v8239 = vadd.f32 %v7976, %v8228
      %v8240 = vadd.f32 %v7977, %v8228
      %v8241 = vadd.f32 %v7978, %v8228
      %v8242 = vadd.f32 %v7979, %v8228
      %v8243 = vadd.f32 %v7980, %v8228
      %v8244 = vadd.f32 %v7981, %v8228
      %v8245 = vadd.f32 %v7982, %v8228
      %v8246 = vadd.f32 %v7983, %v8228
      %v8247 = vadd.f32 %v7984, %v8228
      %v8248 = vadd.f32 %v7985, %v8228
      %v8249 = vadd.f32 %v7986, %v8228
      %v8250 = vadd.f32 %v7987, %v8228
      %v8251 = vadd.f32 %v7988, %v8228
      %v8252 = vadd.f32 %v7989, %v8228
      %v8253 = vadd.f32 %v7990, %v8228
      %v8254 = vadd.f32 %v7991, %v8228
      %v8255 = vadd.f32 %v7992, %v8228
      %v8256 = vadd.f32 %v7993, %v8228
      %v8257 = vadd.f32 %v7994, %v8228
      %v8258 = vadd.f32 %v7995, %v8228
      %v8259 = vadd.f32 %v7996, %v8228
      %v8260 = vadd.f32 %v7997, %v8228
      %v8261 = vadd.f32 %v7998, %v8228
      %v8262 = vadd.f32 %v7999, %v8228
      %v8263 = vadd.f32 %v8000, %v8228
      %v8264 = vadd.f32 %v8001, %v8228
      %v8265 = vadd.f32 %v8002, %v8228
      %v8266 = vadd.f32 %v8003, %v8228
      %v8267 = vadd.f32 %v8004, %v8228
      %v8268 = vadd.f32 %v8005, %v8228
      %v8269 = vadd.f32 %v8006, %v8228
      %v8270 = vadd.f32 %v8007, %v8228
      %v8271 = vadd.f32 %v8008, %v8228
      %v8272 = vadd.f32 %v8009, %v8228
      %v8273 = vadd.f32 %v8010, %v8228
      %v8274 = vadd.f32 %v8011, %v8228
      %v8275 = vadd.f32 %v8012, %v8228
      %v8276 = vadd.f32 %v8013, %v8228
      %v8277 = vadd.f32 %v8014, %v8228
      %v8278 = vadd.f32 %v8015, %v8228
      %v8279 = vadd.f32 %v8016, %v8228
      %v8280 = vadd.f32 %v8017, %v8228
      %v8281 = vadd.f32 %v8018, %v8228
      %v8282 = vadd.f32 %v8019, %v8228
      %v8283 = vadd.f32 %v8020, %v8228
      %v8284 = vadd.f32 %v8021, %v8228
      %v8285 = vadd.f32 %v8022, %v8228
      %v8286 = vadd.f32 %v8023, %v8228
      %v8287 = vadd.f32 %v8024, %v8228
      %v8288 = vadd.f32 %v8025, %v8228
      %v8289 = vadd.f32 %v8026, %v8228
      %v8290 = vadd.f32 %v8027, %v8228
      %v8291 = vadd.f32 %v8028, %v8228
      %v8292 = vadd.f32 %v8029, %v8228
      %v8293 = vadd.f32 %v8030, %v8228
      %v8294 = vadd.f32 %v8031, %v8228
      %v8295 = vadd.f32 %v8032, %v8228
      %v8296 = vadd.f32 %v8033, %v8228
      %v8297 = vadd.f32 %v8034, %v8228
      %v8298 = vadd.f32 %v8035, %v8228
      %v8299 = vadd.f32 %v8036, %v8228
      %v8300 = vadd.f32 %v8037, %v8228
      %v8301 = vadd.f32 %v8038, %v8228
      %v8302 = vadd.f32 %v8039, %v8228
      %v8303 = vadd.f32 %v8040, %v8228
      %v8304 = vadd.f32 %v8041, %v8228
      %v8305 = vadd.f32 %v8042, %v8228
      %v8306 = vadd.f32 %v8043, %v8228
      %v8307 = vadd.f32 %v8044, %v8228
      %v8308 = vadd.f32 %v8045, %v8228
      %v8309 = vadd.f32 %v8046, %v8228
      %v8310 = vadd.f32 %v8047, %v8228
      %v8311 = vadd.f32 %v8048, %v8228
      %v8312 = vadd.f32 %v8049, %v8228
      %v8313 = vadd.f32 %v8050, %v8228
      %v8314 = vadd.f32 %v8051, %v8228
      %v8315 = vadd.f32 %v8052, %v8228
      %v8316 = vadd.f32 %v8053, %v8228
      %v8317 = vadd.f32 %v8054, %v8228
      %v8318 = vadd.f32 %v8055, %v8228
      %v8319 = vadd.f32 %v8056, %v8228
      %v8320 = vadd.f32 %v8057, %v8228
      %v8321 = vadd.f32 %v8058, %v8228
      %v8322 = vadd.f32 %v8059, %v8228
      %v8323 = vadd.f32 %v8060, %v8228
      %v8324 = vadd.f32 %v8061, %v8228
      %v8325 = vadd.f32 %v8062, %v8228
      %v8326 = vadd.f32 %v8063, %v8228
      %v8327 = vadd.f32 %v8064, %v8228
      %v8328 = vadd.f32 %v8065, %v8228
      %v8329 = vadd.f32 %v8066, %v8228
      %v8330 = vadd.f32 %v8067, %v8228
      %v8331 = vadd.f32 %v8068, %v8228
      %v8332 = vadd.f32 %v8069, %v8228
      %v8333 = vadd.f32 %v8070, %v8228
      %v8334 = vadd.f32 %v8071, %v8228
      %v8335 = vadd.f32 %v8072, %v8228
      %v8336 = vadd.f32 %v8073, %v8228
      %v8337 = vadd.f32 %v8074, %v8228
      %v8338 = vadd.f32 %v8075, %v8228
      %v8339 = vadd.f32 %v8076, %v8228
      %v8340 = vadd.f32 %v8077, %v8228
      %v8341 = vadd.f32 %v8078, %v8228
      %v8342 = vadd.f32 %v8079, %v8228
      %v8343 = vadd.f32 %v8080, %v8228
      %v8344 = vadd.f32 %v8081, %v8228
      %v8345 = vadd.f32 %v8082, %v8228
      %v8346 = vadd.f32 %v8083, %v8228
      %v8347 = vadd.f32 %v8084, %v8228
      %v8348 = vadd.f32 %v8085, %v8228
      %v8349 = vadd.f32 %v8086, %v8228
      %v8350 = vadd.f32 %v8087, %v8228
      %v8351 = vadd.f32 %v8088, %v8228
      %v8352 = vadd.f32 %v8089, %v8228
      %v8353 = vadd.f32 %v8090, %v8228
      %v8354 = vadd.f32 %v8091, %v8228
      %v8355 = vadd.f32 %v8092, %v8228
      %v8356 = vadd.f32 %v8093, %v8228
      %v8357 = vadd.f32 %v8094, %v8228
      %v8358 = vadd.f32 %v8095, %v8228
      %v8359 = vadd.f32 %v8096, %v8228
      %v8360 = vadd.f32 %v8097, %v8228
      %v8361 = vadd.f32 %v8098, %v8228
      %v8362 = vadd.f32 %v8099, %v8228
      %v8363 = vadd.f32 %v8100, %v8228
      %v8364 = vadd.f32 %v8101, %v8228
      %v8365 = vadd.f32 %v8102, %v8228
      %v8366 = vadd.f32 %v8103, %v8228
      %v8367 = vadd.f32 %v8104, %v8228
      %v8368 = vadd.f32 %v8105, %v8228
      %v8369 = vadd.f32 %v8106, %v8228
      %v8370 = vadd.f32 %v8107, %v8228
      %v8371 = vadd.f32 %v8108, %v8228
      %v8372 = vadd.f32 %v8109, %v8228
      %v8373 = vadd.f32 %v8110, %v8228
      %v8374 = vadd.f32 %v8111, %v8228
      %v8375 = vadd.f32 %v8112, %v8228
      %v8376 = vadd.f32 %v8113, %v8228
      %v8377 = vadd.f32 %v8114, %v8228
      %v8378 = vadd.f32 %v8115, %v8228
      %v8379 = vadd.f32 %v8116, %v8228
      %v8380 = vadd.f32 %v8117, %v8228
      %v8381 = vadd.f32 %v8118, %v8228
      %v8382 = vadd.f32 %v8119, %v8228
      %v8383 = vadd.f32 %v8120, %v8228
      %v8384 = vadd.f32 %v8121, %v8228
      %v8385 = vadd.f32 %v8122, %v8228
      %v8386 = vadd.f32 %v8123, %v8228
      %v8387 = vadd.f32 %v8124, %v8228
      %v8388 = vadd.f32 %v8125, %v8228
      %v8389 = vadd.f32 %v8126, %v8228
      %v8390 = vadd.f32 %v8127, %v8228
      %v8391 = vadd.f32 %v8128, %v8228
      %v8392 = vadd.f32 %v8129, %v8228
      %v8393 = vadd.f32 %v8130, %v8228
      %v8394 = vadd.f32 %v8131, %v8228
      %v8395 = vadd.f32 %v8132, %v8228
      %v8396 = vadd.f32 %v8133, %v8228
      %v8397 = vadd.f32 %v8134, %v8228
      %v8398 = vadd.f32 %v8135, %v8228
      %v8399 = vadd.f32 %v8136, %v8228
      %v8400 = vadd.f32 %v8137, %v8228
      %v8401 = vadd.f32 %v8138, %v8228
      %v8402 = vadd.f32 %v8139, %v8228
      %v8403 = vadd.f32 %v8140, %v8228
      %v8404 = vadd.f32 %v8141, %v8228
      %v8405 = vadd.f32 %v8142, %v8228
      %v8406 = vadd.f32 %v8143, %v8228
      %v8407 = vadd.f32 %v8144, %v8228
      %v8408 = vadd.f32 %v8145, %v8228
      %v8409 = vadd.f32 %v8146, %v8228
      %v8410 = vadd.f32 %v8147, %v8228
      %v8411 = vadd.f32 %v8148, %v8228
      %v8412 = vadd.f32 %v8149, %v8228
      %v8413 = vadd.f32 %v8150, %v8228
      %v8414 = vadd.f32 %v8151, %v8228
      %v8415 = vadd.f32 %v8152, %v8228
      %v8416 = vadd.f32 %v8153, %v8228
      %v8417 = vadd.f32 %v8154, %v8228
      %v8418 = vadd.f32 %v8155, %v8228
      %v8419 = vadd.f32 %v8156, %v8228
      %v8420 = vadd.f32 %v8157, %v8228
      %v8421 = vadd.f32 %v8158, %v8228
      %v8422 = vadd.f32 %v8159, %v8228
      %v8423 = vadd.f32 %v8160, %v8228
      %v8424 = vadd.f32 %v8161, %v8228
      %v8425 = vadd.f32 %v8162, %v8228
      %v8426 = vadd.f32 %v8163, %v8228
      %v8427 = vadd.f32 %v8164, %v8228
      %v8428 = vadd.f32 %v8165, %v8228
      %v8429 = vadd.f32 %v8166, %v8228
      %v8430 = vadd.f32 %v8167, %v8228
      %v8431 = vadd.f32 %v8168, %v8228
      %v8432 = vadd.f32 %v8169, %v8228
      %v8433 = vadd.f32 %v8170, %v8228
      %v8434 = vadd.f32 %v8171, %v8228
      %v8435 = vadd.f32 %v8172, %v8228
      %v8436 = vadd.f32 %v8173, %v8228
      %v8437 = vadd.f32 %v8174, %v8228
      %v8438 = vadd.f32 %v8175, %v8228
      %v8439 = vadd.f32 %v8176, %v8228
      %v8440 = vadd.f32 %v8177, %v8228
      %v8441 = vadd.f32 %v8178, %v8228
      %v8442 = vadd.f32 %v8179, %v8228
      %v8443 = vadd.f32 %v8180, %v8228
      %v8444 = vadd.f32 %v8181, %v8228
      %v8445 = vadd.f32 %v8182, %v8228
      %v8446 = vadd.f32 %v8183, %v8228
      %v8447 = vadd.f32 %v8184, %v8228
      %v8448 = vadd.f32 %v8185, %v8228
      %v8449 = vadd.f32 %v8186, %v8228
      %v8450 = vadd.f32 %v8187, %v8228
      %v8451 = vadd.f32 %v8188, %v8228
      %v8452 = vadd.f32 %v8189, %v8228
      %v8453 = vadd.f32 %v8190, %v8228
      %v8454 = vadd.f32 %v8191, %v8228
      %v8455 = vadd.f32 %v8192, %v8228
      %v8456 = vadd.f32 %v8193, %v8228
      %v8457 = vadd.f32 %v8194, %v8228
      %v8458 = vadd.f32 %v8195, %v8228
      %v8459 = vadd.f32 %v8196, %v8228
      %v8460 = vadd.f32 %v8197, %v8228
      %v8461 = vadd.f32 %v8198, %v8228
      %v8462 = vadd.f32 %v8199, %v8228
      %v8463 = vadd.f32 %v8200, %v8228
      %v8464 = vadd.f32 %v8201, %v8228
      %v8465 = vadd.f32 %v8202, %v8228
      %v8466 = vadd.f32 %v8203, %v8228
      %v8467 = vadd.f32 %v8204, %v8228
      %v8468 = vadd.f32 %v8205, %v8228
      %v8469 = vadd.f32 %v8206, %v8228
      %v8470 = vadd.f32 %v8207, %v8228
      %v8471 = vadd.f32 %v8208, %v8228
      %v8472 = vadd.f32 %v8209, %v8228
      %v8473 = vadd.f32 %v8210, %v8228
      %v8474 = vadd.f32 %v8211, %v8228
      %v8475 = vadd.f32 %v8212, %v8228
      %v8476 = vadd.f32 %v8213, %v8228
      %v8477 = vadd.f32 %v8214, %v8228
      %v8478 = vadd.f32 %v8215, %v8228
      %v8479 = vadd.f32 %v8216, %v8228
      %v8480 = vadd.f32 %v8217, %v8228
      %v8481 = vadd.f32 %v8218, %v8228
      %v8482 = vadd.f32 %v8219, %v8228
      %v8483 = vadd.f32 %v8220, %v8228
      %v8484 = vadd.f32 %v8221, %v8228
      %v8485 = vadd.f32 %v8222, %v8228
      %v8486 = vmax.f32 %v8230, 0.0
      %v8487 = vmax.f32 %v8231, 0.0
      %v8488 = vmax.f32 %v8232, 0.0
      %v8489 = vmax.f32 %v8233, 0.0
      %v8490 = vmax.f32 %v8234, 0.0
      %v8491 = vmax.f32 %v8235, 0.0
      %v8492 = vmax.f32 %v8236, 0.0
      %v8493 = vmax.f32 %v8237, 0.0
      %v8494 = vmax.f32 %v8238, 0.0
      %v8495 = vmax.f32 %v8239, 0.0
      %v8496 = vmax.f32 %v8240, 0.0
      %v8497 = vmax.f32 %v8241, 0.0
      %v8498 = vmax.f32 %v8242, 0.0
      %v8499 = vmax.f32 %v8243, 0.0
      %v8500 = vmax.f32 %v8244, 0.0
      %v8501 = vmax.f32 %v8245, 0.0
      %v8502 = vmax.f32 %v8246, 0.0
      %v8503 = vmax.f32 %v8247, 0.0
      %v8504 = vmax.f32 %v8248, 0.0
      %v8505 = vmax.f32 %v8249, 0.0
      %v8506 = vmax.f32 %v8250, 0.0
      %v8507 = vmax.f32 %v8251, 0.0
      %v8508 = vmax.f32 %v8252, 0.0
      %v8509 = vmax.f32 %v8253, 0.0
      %v8510 = vmax.f32 %v8254, 0.0
      %v8511 = vmax.f32 %v8255, 0.0
      %v8512 = vmax.f32 %v8256, 0.0
      %v8513 = vmax.f32 %v8257, 0.0
      %v8514 = vmax.f32 %v8258, 0.0
      %v8515 = vmax.f32 %v8259, 0.0
      %v8516 = vmax.f32 %v8260, 0.0
      %v8517 = vmax.f32 %v8261, 0.0
      %v8518 = vmax.f32 %v8262, 0.0
      %v8519 = vmax.f32 %v8263, 0.0
      %v8520 = vmax.f32 %v8264, 0.0
      %v8521 = vmax.f32 %v8265, 0.0
      %v8522 = vmax.f32 %v8266, 0.0
      %v8523 = vmax.f32 %v8267, 0.0
      %v8524 = vmax.f32 %v8268, 0.0
      %v8525 = vmax.f32 %v8269, 0.0
      %v8526 = vmax.f32 %v8270, 0.0
      %v8527 = vmax.f32 %v8271, 0.0
      %v8528 = vmax.f32 %v8272, 0.0
      %v8529 = vmax.f32 %v8273, 0.0
      %v8530 = vmax.f32 %v8274, 0.0
      %v8531 = vmax.f32 %v8275, 0.0
      %v8532 = vmax.f32 %v8276, 0.0
      %v8533 = vmax.f32 %v8277, 0.0
      %v8534 = vmax.f32 %v8278, 0.0
      %v8535 = vmax.f32 %v8279, 0.0
      %v8536 = vmax.f32 %v8280, 0.0
      %v8537 = vmax.f32 %v8281, 0.0
      %v8538 = vmax.f32 %v8282, 0.0
      %v8539 = vmax.f32 %v8283, 0.0
      %v8540 = vmax.f32 %v8284, 0.0
      %v8541 = vmax.f32 %v8285, 0.0
      %v8542 = vmax.f32 %v8286, 0.0
      %v8543 = vmax.f32 %v8287, 0.0
      %v8544 = vmax.f32 %v8288, 0.0
      %v8545 = vmax.f32 %v8289, 0.0
      %v8546 = vmax.f32 %v8290, 0.0
      %v8547 = vmax.f32 %v8291, 0.0
      %v8548 = vmax.f32 %v8292, 0.0
      %v8549 = vmax.f32 %v8293, 0.0
      %v8550 = vmax.f32 %v8294, 0.0
      %v8551 = vmax.f32 %v8295, 0.0
      %v8552 = vmax.f32 %v8296, 0.0
      %v8553 = vmax.f32 %v8297, 0.0
      %v8554 = vmax.f32 %v8298, 0.0
      %v8555 = vmax.f32 %v8299, 0.0
      %v8556 = vmax.f32 %v8300, 0.0
      %v8557 = vmax.f32 %v8301, 0.0
      %v8558 = vmax.f32 %v8302, 0.0
      %v8559 = vmax.f32 %v8303, 0.0
      %v8560 = vmax.f32 %v8304, 0.0
      %v8561 = vmax.f32 %v8305, 0.0
      %v8562 = vmax.f32 %v8306, 0.0
      %v8563 = vmax.f32 %v8307, 0.0
      %v8564 = vmax.f32 %v8308, 0.0
      %v8565 = vmax.f32 %v8309, 0.0
      %v8566 = vmax.f32 %v8310, 0.0
      %v8567 = vmax.f32 %v8311, 0.0
      %v8568 = vmax.f32 %v8312, 0.0
      %v8569 = vmax.f32 %v8313, 0.0
      %v8570 = vmax.f32 %v8314, 0.0
      %v8571 = vmax.f32 %v8315, 0.0
      %v8572 = vmax.f32 %v8316, 0.0
      %v8573 = vmax.f32 %v8317, 0.0
      %v8574 = vmax.f32 %v8318, 0.0
      %v8575 = vmax.f32 %v8319, 0.0
      %v8576 = vmax.f32 %v8320, 0.0
      %v8577 = vmax.f32 %v8321, 0.0
      %v8578 = vmax.f32 %v8322, 0.0
      %v8579 = vmax.f32 %v8323, 0.0
      %v8580 = vmax.f32 %v8324, 0.0
      %v8581 = vmax.f32 %v8325, 0.0
      %v8582 = vmax.f32 %v8326, 0.0
      %v8583 = vmax.f32 %v8327, 0.0
      %v8584 = vmax.f32 %v8328, 0.0
      %v8585 = vmax.f32 %v8329, 0.0
      %v8586 = vmax.f32 %v8330, 0.0
      %v8587 = vmax.f32 %v8331, 0.0
      %v8588 = vmax.f32 %v8332, 0.0
      %v8589 = vmax.f32 %v8333, 0.0
      %v8590 = vmax.f32 %v8334, 0.0
      %v8591 = vmax.f32 %v8335, 0.0
      %v8592 = vmax.f32 %v8336, 0.0
      %v8593 = vmax.f32 %v8337, 0.0
      %v8594 = vmax.f32 %v8338, 0.0
      %v8595 = vmax.f32 %v8339, 0.0
      %v8596 = vmax.f32 %v8340, 0.0
      %v8597 = vmax.f32 %v8341, 0.0
      %v8598 = vmax.f32 %v8342, 0.0
      %v8599 = vmax.f32 %v8343, 0.0
      %v8600 = vmax.f32 %v8344, 0.0
      %v8601 = vmax.f32 %v8345, 0.0
      %v8602 = vmax.f32 %v8346, 0.0
      %v8603 = vmax.f32 %v8347, 0.0
      %v8604 = vmax.f32 %v8348, 0.0
      %v8605 = vmax.f32 %v8349, 0.0
      %v8606 = vmax.f32 %v8350, 0.0
      %v8607 = vmax.f32 %v8351, 0.0
      %v8608 = vmax.f32 %v8352, 0.0
      %v8609 = vmax.f32 %v8353, 0.0
      %v8610 = vmax.f32 %v8354, 0.0
      %v8611 = vmax.f32 %v8355, 0.0
      %v8612 = vmax.f32 %v8356, 0.0
      %v8613 = vmax.f32 %v8357, 0.0
      %v8614 = vmax.f32 %v8358, 0.0
      %v8615 = vmax.f32 %v8359, 0.0
      %v8616 = vmax.f32 %v8360, 0.0
      %v8617 = vmax.f32 %v8361, 0.0
      %v8618 = vmax.f32 %v8362, 0.0
      %v8619 = vmax.f32 %v8363, 0.0
      %v8620 = vmax.f32 %v8364, 0.0
      %v8621 = vmax.f32 %v8365, 0.0
      %v8622 = vmax.f32 %v8366, 0.0
      %v8623 = vmax.f32 %v8367, 0.0
      %v8624 = vmax.f32 %v8368, 0.0
      %v8625 = vmax.f32 %v8369, 0.0
      %v8626 = vmax.f32 %v8370, 0.0
      %v8627 = vmax.f32 %v8371, 0.0
      %v8628 = vmax.f32 %v8372, 0.0
      %v8629 = vmax.f32 %v8373, 0.0
      %v8630 = vmax.f32 %v8374, 0.0
      %v8631 = vmax.f32 %v8375, 0.0
      %v8632 = vmax.f32 %v8376, 0.0
      %v8633 = vmax.f32 %v8377, 0.0
      %v8634 = vmax.f32 %v8378, 0.0
      %v8635 = vmax.f32 %v8379, 0.0
      %v8636 = vmax.f32 %v8380, 0.0
      %v8637 = vmax.f32 %v8381, 0.0
      %v8638 = vmax.f32 %v8382, 0.0
      %v8639 = vmax.f32 %v8383, 0.0
      %v8640 = vmax.f32 %v8384, 0.0
      %v8641 = vmax.f32 %v8385, 0.0
      %v8642 = vmax.f32 %v8386, 0.0
      %v8643 = vmax.f32 %v8387, 0.0
      %v8644 = vmax.f32 %v8388, 0.0
      %v8645 = vmax.f32 %v8389, 0.0
      %v8646 = vmax.f32 %v8390, 0.0
      %v8647 = vmax.f32 %v8391, 0.0
      %v8648 = vmax.f32 %v8392, 0.0
      %v8649 = vmax.f32 %v8393, 0.0
      %v8650 = vmax.f32 %v8394, 0.0
      %v8651 = vmax.f32 %v8395, 0.0
      %v8652 = vmax.f32 %v8396, 0.0
      %v8653 = vmax.f32 %v8397, 0.0
      %v8654 = vmax.f32 %v8398, 0.0
      %v8655 = vmax.f32 %v8399, 0.0
      %v8656 = vmax.f32 %v8400, 0.0
      %v8657 = vmax.f32 %v8401, 0.0
      %v8658 = vmax.f32 %v8402, 0.0
      %v8659 = vmax.f32 %v8403, 0.0
      %v8660 = vmax.f32 %v8404, 0.0
      %v8661 = vmax.f32 %v8405, 0.0
      %v8662 = vmax.f32 %v8406, 0.0
      %v8663 = vmax.f32 %v8407, 0.0
      %v8664 = vmax.f32 %v8408, 0.0
      %v8665 = vmax.f32 %v8409, 0.0
      %v8666 = vmax.f32 %v8410, 0.0
      %v8667 = vmax.f32 %v8411, 0.0
      %v8668 = vmax.f32 %v8412, 0.0
      %v8669 = vmax.f32 %v8413, 0.0
      %v8670 = vmax.f32 %v8414, 0.0
      %v8671 = vmax.f32 %v8415, 0.0
      %v8672 = vmax.f32 %v8416, 0.0
      %v8673 = vmax.f32 %v8417, 0.0
      %v8674 = vmax.f32 %v8418, 0.0
      %v8675 = vmax.f32 %v8419, 0.0
      %v8676 = vmax.f32 %v8420, 0.0
      %v8677 = vmax.f32 %v8421, 0.0
      %v8678 = vmax.f32 %v8422, 0.0
      %v8679 = vmax.f32 %v8423, 0.0
      %v8680 = vmax.f32 %v8424, 0.0
      %v8681 = vmax.f32 %v8425, 0.0
      %v8682 = vmax.f32 %v8426, 0.0
      %v8683 = vmax.f32 %v8427, 0.0
      %v8684 = vmax.f32 %v8428, 0.0
      %v8685 = vmax.f32 %v8429, 0.0
      %v8686 = vmax.f32 %v8430, 0.0
      %v8687 = vmax.f32 %v8431, 0.0
      %v8688 = vmax.f32 %v8432, 0.0
      %v8689 = vmax.f32 %v8433, 0.0
      %v8690 = vmax.f32 %v8434, 0.0
      %v8691 = vmax.f32 %v8435, 0.0
      %v8692 = vmax.f32 %v8436, 0.0
      %v8693 = vmax.f32 %v8437, 0.0
      %v8694 = vmax.f32 %v8438, 0.0
      %v8695 = vmax.f32 %v8439, 0.0
      %v8696 = vmax.f32 %v8440, 0.0
      %v8697 = vmax.f32 %v8441, 0.0
      %v8698 = vmax.f32 %v8442, 0.0
      %v8699 = vmax.f32 %v8443, 0.0
      %v8700 = vmax.f32 %v8444, 0.0
      %v8701 = vmax.f32 %v8445, 0.0
      %v8702 = vmax.f32 %v8446, 0.0
      %v8703 = vmax.f32 %v8447, 0.0
      %v8704 = vmax.f32 %v8448, 0.0
      %v8705 = vmax.f32 %v8449, 0.0
      %v8706 = vmax.f32 %v8450, 0.0
      %v8707 = vmax.f32 %v8451, 0.0
      %v8708 = vmax.f32 %v8452, 0.0
      %v8709 = vmax.f32 %v8453, 0.0
      %v8710 = vmax.f32 %v8454, 0.0
      %v8711 = vmax.f32 %v8455, 0.0
      %v8712 = vmax.f32 %v8456, 0.0
      %v8713 = vmax.f32 %v8457, 0.0
      %v8714 = vmax.f32 %v8458, 0.0
      %v8715 = vmax.f32 %v8459, 0.0
      %v8716 = vmax.f32 %v8460, 0.0
      %v8717 = vmax.f32 %v8461, 0.0
      %v8718 = vmax.f32 %v8462, 0.0
      %v8719 = vmax.f32 %v8463, 0.0
      %v8720 = vmax.f32 %v8464, 0.0
      %v8721 = vmax.f32 %v8465, 0.0
      %v8722 = vmax.f32 %v8466, 0.0
      %v8723 = vmax.f32 %v8467, 0.0
      %v8724 = vmax.f32 %v8468, 0.0
      %v8725 = vmax.f32 %v8469, 0.0
      %v8726 = vmax.f32 %v8470, 0.0
      %v8727 = vmax.f32 %v8471, 0.0
      %v8728 = vmax.f32 %v8472, 0.0
      %v8729 = vmax.f32 %v8473, 0.0
      %v8730 = vmax.f32 %v8474, 0.0
      %v8731 = vmax.f32 %v8475, 0.0
      %v8732 = vmax.f32 %v8476, 0.0
      %v8733 = vmax.f32 %v8477, 0.0
      %v8734 = vmax.f32 %v8478, 0.0
      %v8735 = vmax.f32 %v8479, 0.0
      %v8736 = vmax.f32 %v8480, 0.0
      %v8737 = vmax.f32 %v8481, 0.0
      %v8738 = vmax.f32 %v8482, 0.0
      %v8739 = vmax.f32 %v8483, 0.0
      %v8740 = vmax.f32 %v8484, 0.0
      %v8741 = vmax.f32 %v8485, 0.0
      %vm8742 = vcmask 261120
      %v8743 = vsel %vm8742, %v8486, 0.0
      %v8744 = vsel %vm8742, %v8487, 0.0
      %v8745 = vadd.f32 %v8743, %v8744
      %v8746 = vsel %vm8742, %v8488, 0.0
      %v8747 = vadd.f32 %v8745, %v8746
      %v8748 = vsel %vm8742, %v8489, 0.0
      %v8749 = vadd.f32 %v8747, %v8748
      %v8750 = vsel %vm8742, %v8490, 0.0
      %v8751 = vadd.f32 %v8749, %v8750
      %v8752 = vsel %vm8742, %v8491, 0.0
      %v8753 = vadd.f32 %v8751, %v8752
      %v8754 = vsel %vm8742, %v8492, 0.0
      %v8755 = vadd.f32 %v8753, %v8754
      %v8756 = vsel %vm8742, %v8493, 0.0
      %v8757 = vadd.f32 %v8755, %v8756
      %v8758 = vsel %vm8742, %v8494, 0.0
      %v8759 = vadd.f32 %v8757, %v8758
      %v8760 = vsel %vm8742, %v8495, 0.0
      %v8761 = vadd.f32 %v8759, %v8760
      %v8762 = vsel %vm8742, %v8496, 0.0
      %v8763 = vadd.f32 %v8761, %v8762
      %v8764 = vsel %vm8742, %v8497, 0.0
      %v8765 = vadd.f32 %v8763, %v8764
      %v8766 = vsel %vm8742, %v8498, 0.0
      %v8767 = vadd.f32 %v8765, %v8766
      %v8768 = vsel %vm8742, %v8499, 0.0
      %v8769 = vadd.f32 %v8767, %v8768
      %v8770 = vsel %vm8742, %v8500, 0.0
      %v8771 = vadd.f32 %v8769, %v8770
      %v8772 = vsel %vm8742, %v8501, 0.0
      %v8773 = vadd.f32 %v8771, %v8772
      %v8774 = vsel %vm8742, %v8502, 0.0
      %v8775 = vadd.f32 %v8773, %v8774
      %v8776 = vsel %vm8742, %v8503, 0.0
      %v8777 = vadd.f32 %v8775, %v8776
      %v8778 = vsel %vm8742, %v8504, 0.0
      %v8779 = vadd.f32 %v8777, %v8778
      %v8780 = vsel %vm8742, %v8505, 0.0
      %v8781 = vadd.f32 %v8779, %v8780
      %v8782 = vsel %vm8742, %v8506, 0.0
      %v8783 = vadd.f32 %v8781, %v8782
      %v8784 = vsel %vm8742, %v8507, 0.0
      %v8785 = vadd.f32 %v8783, %v8784
      %v8786 = vsel %vm8742, %v8508, 0.0
      %v8787 = vadd.f32 %v8785, %v8786
      %v8788 = vsel %vm8742, %v8509, 0.0
      %v8789 = vadd.f32 %v8787, %v8788
      %v8790 = vsel %vm8742, %v8510, 0.0
      %v8791 = vadd.f32 %v8789, %v8790
      %v8792 = vsel %vm8742, %v8511, 0.0
      %v8793 = vadd.f32 %v8791, %v8792
      %v8794 = vsel %vm8742, %v8512, 0.0
      %v8795 = vadd.f32 %v8793, %v8794
      %v8796 = vsel %vm8742, %v8513, 0.0
      %v8797 = vadd.f32 %v8795, %v8796
      %v8798 = vsel %vm8742, %v8514, 0.0
      %v8799 = vadd.f32 %v8797, %v8798
      %v8800 = vsel %vm8742, %v8515, 0.0
      %v8801 = vadd.f32 %v8799, %v8800
      %v8802 = vsel %vm8742, %v8516, 0.0
      %v8803 = vadd.f32 %v8801, %v8802
      %v8804 = vsel %vm8742, %v8517, 0.0
      %v8805 = vadd.f32 %v8803, %v8804
      %v8806 = vrot.slane %v8805, 4
      %v8807 = vadd.f32 %v8805, %v8806
      %v8808 = vrot.slane %v8807, 2
      %v8809 = vadd.f32 %v8807, %v8808
      %v8810 = vrot.slane %v8809, 1
      %v8811 = vadd.f32 %v8809, %v8810
      %v8812 = vsel %vm8742, %v8518, 0.0
      %v8813 = vsel %vm8742, %v8519, 0.0
      %v8814 = vadd.f32 %v8812, %v8813
      %v8815 = vsel %vm8742, %v8520, 0.0
      %v8816 = vadd.f32 %v8814, %v8815
      %v8817 = vsel %vm8742, %v8521, 0.0
      %v8818 = vadd.f32 %v8816, %v8817
      %v8819 = vsel %vm8742, %v8522, 0.0
      %v8820 = vadd.f32 %v8818, %v8819
      %v8821 = vsel %vm8742, %v8523, 0.0
      %v8822 = vadd.f32 %v8820, %v8821
      %v8823 = vsel %vm8742, %v8524, 0.0
      %v8824 = vadd.f32 %v8822, %v8823
      %v8825 = vsel %vm8742, %v8525, 0.0
      %v8826 = vadd.f32 %v8824, %v8825
      %v8827 = vsel %vm8742, %v8526, 0.0
      %v8828 = vadd.f32 %v8826, %v8827
      %v8829 = vsel %vm8742, %v8527, 0.0
      %v8830 = vadd.f32 %v8828, %v8829
      %v8831 = vsel %vm8742, %v8528, 0.0
      %v8832 = vadd.f32 %v8830, %v8831
      %v8833 = vsel %vm8742, %v8529, 0.0
      %v8834 = vadd.f32 %v8832, %v8833
      %v8835 = vsel %vm8742, %v8530, 0.0
      %v8836 = vadd.f32 %v8834, %v8835
      %v8837 = vsel %vm8742, %v8531, 0.0
      %v8838 = vadd.f32 %v8836, %v8837
      %v8839 = vsel %vm8742, %v8532, 0.0
      %v8840 = vadd.f32 %v8838, %v8839
      %v8841 = vsel %vm8742, %v8533, 0.0
      %v8842 = vadd.f32 %v8840, %v8841
      %v8843 = vsel %vm8742, %v8534, 0.0
      %v8844 = vadd.f32 %v8842, %v8843
      %v8845 = vsel %vm8742, %v8535, 0.0
      %v8846 = vadd.f32 %v8844, %v8845
      %v8847 = vsel %vm8742, %v8536, 0.0
      %v8848 = vadd.f32 %v8846, %v8847
      %v8849 = vsel %vm8742, %v8537, 0.0
      %v8850 = vadd.f32 %v8848, %v8849
      %v8851 = vsel %vm8742, %v8538, 0.0
      %v8852 = vadd.f32 %v8850, %v8851
      %v8853 = vsel %vm8742, %v8539, 0.0
      %v8854 = vadd.f32 %v8852, %v8853
      %v8855 = vsel %vm8742, %v8540, 0.0
      %v8856 = vadd.f32 %v8854, %v8855
      %v8857 = vsel %vm8742, %v8541, 0.0
      %v8858 = vadd.f32 %v8856, %v8857
      %v8859 = vsel %vm8742, %v8542, 0.0
      %v8860 = vadd.f32 %v8858, %v8859
      %v8861 = vsel %vm8742, %v8543, 0.0
      %v8862 = vadd.f32 %v8860, %v8861
      %v8863 = vsel %vm8742, %v8544, 0.0
      %v8864 = vadd.f32 %v8862, %v8863
      %v8865 = vsel %vm8742, %v8545, 0.0
      %v8866 = vadd.f32 %v8864, %v8865
      %v8867 = vsel %vm8742, %v8546, 0.0
      %v8868 = vadd.f32 %v8866, %v8867
      %v8869 = vsel %vm8742, %v8547, 0.0
      %v8870 = vadd.f32 %v8868, %v8869
      %v8871 = vsel %vm8742, %v8548, 0.0
      %v8872 = vadd.f32 %v8870, %v8871
      %v8873 = vsel %vm8742, %v8549, 0.0
      %v8874 = vadd.f32 %v8872, %v8873
      %v8875 = vrot.slane %v8874, 4
      %v8876 = vadd.f32 %v8874, %v8875
      %v8877 = vrot.slane %v8876, 2
      %v8878 = vadd.f32 %v8876, %v8877
      %v8879 = vrot.slane %v8878, 1
      %v8880 = vadd.f32 %v8878, %v8879
      %v8881 = vsel %vm8742, %v8550, 0.0
      %v8882 = vsel %vm8742, %v8551, 0.0
      %v8883 = vadd.f32 %v8881, %v8882
      %v8884 = vsel %vm8742, %v8552, 0.0
      %v8885 = vadd.f32 %v8883, %v8884
      %v8886 = vsel %vm8742, %v8553, 0.0
      %v8887 = vadd.f32 %v8885, %v8886
      %v8888 = vsel %vm8742, %v8554, 0.0
      %v8889 = vadd.f32 %v8887, %v8888
      %v8890 = vsel %vm8742, %v8555, 0.0
      %v8891 = vadd.f32 %v8889, %v8890
      %v8892 = vsel %vm8742, %v8556, 0.0
      %v8893 = vadd.f32 %v8891, %v8892
      %v8894 = vsel %vm8742, %v8557, 0.0
      %v8895 = vadd.f32 %v8893, %v8894
      %v8896 = vsel %vm8742, %v8558, 0.0
      %v8897 = vadd.f32 %v8895, %v8896
      %v8898 = vsel %vm8742, %v8559, 0.0
      %v8899 = vadd.f32 %v8897, %v8898
      %v8900 = vsel %vm8742, %v8560, 0.0
      %v8901 = vadd.f32 %v8899, %v8900
      %v8902 = vsel %vm8742, %v8561, 0.0
      %v8903 = vadd.f32 %v8901, %v8902
      %v8904 = vsel %vm8742, %v8562, 0.0
      %v8905 = vadd.f32 %v8903, %v8904
      %v8906 = vsel %vm8742, %v8563, 0.0
      %v8907 = vadd.f32 %v8905, %v8906
      %v8908 = vsel %vm8742, %v8564, 0.0
      %v8909 = vadd.f32 %v8907, %v8908
      %v8910 = vsel %vm8742, %v8565, 0.0
      %v8911 = vadd.f32 %v8909, %v8910
      %v8912 = vsel %vm8742, %v8566, 0.0
      %v8913 = vadd.f32 %v8911, %v8912
      %v8914 = vsel %vm8742, %v8567, 0.0
      %v8915 = vadd.f32 %v8913, %v8914
      %v8916 = vsel %vm8742, %v8568, 0.0
      %v8917 = vadd.f32 %v8915, %v8916
      %v8918 = vsel %vm8742, %v8569, 0.0
      %v8919 = vadd.f32 %v8917, %v8918
      %v8920 = vsel %vm8742, %v8570, 0.0
      %v8921 = vadd.f32 %v8919, %v8920
      %v8922 = vsel %vm8742, %v8571, 0.0
      %v8923 = vadd.f32 %v8921, %v8922
      %v8924 = vsel %vm8742, %v8572, 0.0
      %v8925 = vadd.f32 %v8923, %v8924
      %v8926 = vsel %vm8742, %v8573, 0.0
      %v8927 = vadd.f32 %v8925, %v8926
      %v8928 = vsel %vm8742, %v8574, 0.0
      %v8929 = vadd.f32 %v8927, %v8928
      %v8930 = vsel %vm8742, %v8575, 0.0
      %v8931 = vadd.f32 %v8929, %v8930
      %v8932 = vsel %vm8742, %v8576, 0.0
      %v8933 = vadd.f32 %v8931, %v8932
      %v8934 = vsel %vm8742, %v8577, 0.0
      %v8935 = vadd.f32 %v8933, %v8934
      %v8936 = vsel %vm8742, %v8578, 0.0
      %v8937 = vadd.f32 %v8935, %v8936
      %v8938 = vsel %vm8742, %v8579, 0.0
      %v8939 = vadd.f32 %v8937, %v8938
      %v8940 = vsel %vm8742, %v8580, 0.0
      %v8941 = vadd.f32 %v8939, %v8940
      %v8942 = vsel %vm8742, %v8581, 0.0
      %v8943 = vadd.f32 %v8941, %v8942
      %v8944 = vrot.slane %v8943, 4
      %v8945 = vadd.f32 %v8943, %v8944
      %v8946 = vrot.slane %v8945, 2
      %v8947 = vadd.f32 %v8945, %v8946
      %v8948 = vrot.slane %v8947, 1
      %v8949 = vadd.f32 %v8947, %v8948
      %v8950 = vsel %vm8742, %v8582, 0.0
      %v8951 = vsel %vm8742, %v8583, 0.0
      %v8952 = vadd.f32 %v8950, %v8951
      %v8953 = vsel %vm8742, %v8584, 0.0
      %v8954 = vadd.f32 %v8952, %v8953
      %v8955 = vsel %vm8742, %v8585, 0.0
      %v8956 = vadd.f32 %v8954, %v8955
      %v8957 = vsel %vm8742, %v8586, 0.0
      %v8958 = vadd.f32 %v8956, %v8957
      %v8959 = vsel %vm8742, %v8587, 0.0
      %v8960 = vadd.f32 %v8958, %v8959
      %v8961 = vsel %vm8742, %v8588, 0.0
      %v8962 = vadd.f32 %v8960, %v8961
      %v8963 = vsel %vm8742, %v8589, 0.0
      %v8964 = vadd.f32 %v8962, %v8963
      %v8965 = vsel %vm8742, %v8590, 0.0
      %v8966 = vadd.f32 %v8964, %v8965
      %v8967 = vsel %vm8742, %v8591, 0.0
      %v8968 = vadd.f32 %v8966, %v8967
      %v8969 = vsel %vm8742, %v8592, 0.0
      %v8970 = vadd.f32 %v8968, %v8969
      %v8971 = vsel %vm8742, %v8593, 0.0
      %v8972 = vadd.f32 %v8970, %v8971
      %v8973 = vsel %vm8742, %v8594, 0.0
      %v8974 = vadd.f32 %v8972, %v8973
      %v8975 = vsel %vm8742, %v8595, 0.0
      %v8976 = vadd.f32 %v8974, %v8975
      %v8977 = vsel %vm8742, %v8596, 0.0
      %v8978 = vadd.f32 %v8976, %v8977
      %v8979 = vsel %vm8742, %v8597, 0.0
      %v8980 = vadd.f32 %v8978, %v8979
      %v8981 = vsel %vm8742, %v8598, 0.0
      %v8982 = vadd.f32 %v8980, %v8981
      %v8983 = vsel %vm8742, %v8599, 0.0
      %v8984 = vadd.f32 %v8982, %v8983
      %v8985 = vsel %vm8742, %v8600, 0.0
      %v8986 = vadd.f32 %v8984, %v8985
      %v8987 = vsel %vm8742, %v8601, 0.0
      %v8988 = vadd.f32 %v8986, %v8987
      %v8989 = vsel %vm8742, %v8602, 0.0
      %v8990 = vadd.f32 %v8988, %v8989
      %v8991 = vsel %vm8742, %v8603, 0.0
      %v8992 = vadd.f32 %v8990, %v8991
      %v8993 = vsel %vm8742, %v8604, 0.0
      %v8994 = vadd.f32 %v8992, %v8993
      %v8995 = vsel %vm8742, %v8605, 0.0
      %v8996 = vadd.f32 %v8994, %v8995
      %v8997 = vsel %vm8742, %v8606, 0.0
      %v8998 = vadd.f32 %v8996, %v8997
      %v8999 = vsel %vm8742, %v8607, 0.0
      %v9000 = vadd.f32 %v8998, %v8999
      %v9001 = vsel %vm8742, %v8608, 0.0
      %v9002 = vadd.f32 %v9000, %v9001
      %v9003 = vsel %vm8742, %v8609, 0.0
      %v9004 = vadd.f32 %v9002, %v9003
      %v9005 = vsel %vm8742, %v8610, 0.0
      %v9006 = vadd.f32 %v9004, %v9005
      %v9007 = vsel %vm8742, %v8611, 0.0
      %v9008 = vadd.f32 %v9006, %v9007
      %v9009 = vsel %vm8742, %v8612, 0.0
      %v9010 = vadd.f32 %v9008, %v9009
      %v9011 = vsel %vm8742, %v8613, 0.0
      %v9012 = vadd.f32 %v9010, %v9011
      %v9013 = vrot.slane %v9012, 4
      %v9014 = vadd.f32 %v9012, %v9013
      %v9015 = vrot.slane %v9014, 2
      %v9016 = vadd.f32 %v9014, %v9015
      %v9017 = vrot.slane %v9016, 1
      %v9018 = vadd.f32 %v9016, %v9017
      %v9019 = vsel %vm8742, %v8614, 0.0
      %v9020 = vsel %vm8742, %v8615, 0.0
      %v9021 = vadd.f32 %v9019, %v9020
      %v9022 = vsel %vm8742, %v8616, 0.0
      %v9023 = vadd.f32 %v9021, %v9022
      %v9024 = vsel %vm8742, %v8617, 0.0
      %v9025 = vadd.f32 %v9023, %v9024
      %v9026 = vsel %vm8742, %v8618, 0.0
      %v9027 = vadd.f32 %v9025, %v9026
      %v9028 = vsel %vm8742, %v8619, 0.0
      %v9029 = vadd.f32 %v9027, %v9028
      %v9030 = vsel %vm8742, %v8620, 0.0
      %v9031 = vadd.f32 %v9029, %v9030
      %v9032 = vsel %vm8742, %v8621, 0.0
      %v9033 = vadd.f32 %v9031, %v9032
      %v9034 = vsel %vm8742, %v8622, 0.0
      %v9035 = vadd.f32 %v9033, %v9034
      %v9036 = vsel %vm8742, %v8623, 0.0
      %v9037 = vadd.f32 %v9035, %v9036
      %v9038 = vsel %vm8742, %v8624, 0.0
      %v9039 = vadd.f32 %v9037, %v9038
      %v9040 = vsel %vm8742, %v8625, 0.0
      %v9041 = vadd.f32 %v9039, %v9040
      %v9042 = vsel %vm8742, %v8626, 0.0
      %v9043 = vadd.f32 %v9041, %v9042
      %v9044 = vsel %vm8742, %v8627, 0.0
      %v9045 = vadd.f32 %v9043, %v9044
      %v9046 = vsel %vm8742, %v8628, 0.0
      %v9047 = vadd.f32 %v9045, %v9046
      %v9048 = vsel %vm8742, %v8629, 0.0
      %v9049 = vadd.f32 %v9047, %v9048
      %v9050 = vsel %vm8742, %v8630, 0.0
      %v9051 = vadd.f32 %v9049, %v9050
      %v9052 = vsel %vm8742, %v8631, 0.0
      %v9053 = vadd.f32 %v9051, %v9052
      %v9054 = vsel %vm8742, %v8632, 0.0
      %v9055 = vadd.f32 %v9053, %v9054
      %v9056 = vsel %vm8742, %v8633, 0.0
      %v9057 = vadd.f32 %v9055, %v9056
      %v9058 = vsel %vm8742, %v8634, 0.0
      %v9059 = vadd.f32 %v9057, %v9058
      %v9060 = vsel %vm8742, %v8635, 0.0
      %v9061 = vadd.f32 %v9059, %v9060
      %v9062 = vsel %vm8742, %v8636, 0.0
      %v9063 = vadd.f32 %v9061, %v9062
      %v9064 = vsel %vm8742, %v8637, 0.0
      %v9065 = vadd.f32 %v9063, %v9064
      %v9066 = vsel %vm8742, %v8638, 0.0
      %v9067 = vadd.f32 %v9065, %v9066
      %v9068 = vsel %vm8742, %v8639, 0.0
      %v9069 = vadd.f32 %v9067, %v9068
      %v9070 = vsel %vm8742, %v8640, 0.0
      %v9071 = vadd.f32 %v9069, %v9070
      %v9072 = vsel %vm8742, %v8641, 0.0
      %v9073 = vadd.f32 %v9071, %v9072
      %v9074 = vsel %vm8742, %v8642, 0.0
      %v9075 = vadd.f32 %v9073, %v9074
      %v9076 = vsel %vm8742, %v8643, 0.0
      %v9077 = vadd.f32 %v9075, %v9076
      %v9078 = vsel %vm8742, %v8644, 0.0
      %v9079 = vadd.f32 %v9077, %v9078
      %v9080 = vsel %vm8742, %v8645, 0.0
      %v9081 = vadd.f32 %v9079, %v9080
      %v9082 = vrot.slane %v9081, 4
      %v9083 = vadd.f32 %v9081, %v9082
      %v9084 = vrot.slane %v9083, 2
      %v9085 = vadd.f32 %v9083, %v9084
      %v9086 = vrot.slane %v9085, 1
      %v9087 = vadd.f32 %v9085, %v9086
      %v9088 = vsel %vm8742, %v8646, 0.0
      %v9089 = vsel %vm8742, %v8647, 0.0
      %v9090 = vadd.f32 %v9088, %v9089
      %v9091 = vsel %vm8742, %v8648, 0.0
      %v9092 = vadd.f32 %v9090, %v9091
      %v9093 = vsel %vm8742, %v8649, 0.0
      %v9094 = vadd.f32 %v9092, %v9093
      %v9095 = vsel %vm8742, %v8650, 0.0
      %v9096 = vadd.f32 %v9094, %v9095
      %v9097 = vsel %vm8742, %v8651, 0.0
      %v9098 = vadd.f32 %v9096, %v9097
      %v9099 = vsel %vm8742, %v8652, 0.0
      %v9100 = vadd.f32 %v9098, %v9099
      %v9101 = vsel %vm8742, %v8653, 0.0
      %v9102 = vadd.f32 %v9100, %v9101
      %v9103 = vsel %vm8742, %v8654, 0.0
      %v9104 = vadd.f32 %v9102, %v9103
      %v9105 = vsel %vm8742, %v8655, 0.0
      %v9106 = vadd.f32 %v9104, %v9105
      %v9107 = vsel %vm8742, %v8656, 0.0
      %v9108 = vadd.f32 %v9106, %v9107
      %v9109 = vsel %vm8742, %v8657, 0.0
      %v9110 = vadd.f32 %v9108, %v9109
      %v9111 = vsel %vm8742, %v8658, 0.0
      %v9112 = vadd.f32 %v9110, %v9111
      %v9113 = vsel %vm8742, %v8659, 0.0
      %v9114 = vadd.f32 %v9112, %v9113
      %v9115 = vsel %vm8742, %v8660, 0.0
      %v9116 = vadd.f32 %v9114, %v9115
      %v9117 = vsel %vm8742, %v8661, 0.0
      %v9118 = vadd.f32 %v9116, %v9117
      %v9119 = vsel %vm8742, %v8662, 0.0
      %v9120 = vadd.f32 %v9118, %v9119
      %v9121 = vsel %vm8742, %v8663, 0.0
      %v9122 = vadd.f32 %v9120, %v9121
      %v9123 = vsel %vm8742, %v8664, 0.0
      %v9124 = vadd.f32 %v9122, %v9123
      %v9125 = vsel %vm8742, %v8665, 0.0
      %v9126 = vadd.f32 %v9124, %v9125
      %v9127 = vsel %vm8742, %v8666, 0.0
      %v9128 = vadd.f32 %v9126, %v9127
      %v9129 = vsel %vm8742, %v8667, 0.0
      %v9130 = vadd.f32 %v9128, %v9129
      %v9131 = vsel %vm8742, %v8668, 0.0
      %v9132 = vadd.f32 %v9130, %v9131
      %v9133 = vsel %vm8742, %v8669, 0.0
      %v9134 = vadd.f32 %v9132, %v9133
      %v9135 = vsel %vm8742, %v8670, 0.0
      %v9136 = vadd.f32 %v9134, %v9135
      %v9137 = vsel %vm8742, %v8671, 0.0
      %v9138 = vadd.f32 %v9136, %v9137
      %v9139 = vsel %vm8742, %v8672, 0.0
      %v9140 = vadd.f32 %v9138, %v9139
      %v9141 = vsel %vm8742, %v8673, 0.0
      %v9142 = vadd.f32 %v9140, %v9141
      %v9143 = vsel %vm8742, %v8674, 0.0
      %v9144 = vadd.f32 %v9142, %v9143
      %v9145 = vsel %vm8742, %v8675, 0.0
      %v9146 = vadd.f32 %v9144, %v9145
      %v9147 = vsel %vm8742, %v8676, 0.0
      %v9148 = vadd.f32 %v9146, %v9147
      %v9149 = vsel %vm8742, %v8677, 0.0
      %v9150 = vadd.f32 %v9148, %v9149
      %v9151 = vrot.slane %v9150, 4
      %v9152 = vadd.f32 %v9150, %v9151
      %v9153 = vrot.slane %v9152, 2
      %v9154 = vadd.f32 %v9152, %v9153
      %v9155 = vrot.slane %v9154, 1
      %v9156 = vadd.f32 %v9154, %v9155
      %v9157 = vsel %vm8742, %v8678, 0.0
      %v9158 = vsel %vm8742, %v8679, 0.0
      %v9159 = vadd.f32 %v9157, %v9158
      %v9160 = vsel %vm8742, %v8680, 0.0
      %v9161 = vadd.f32 %v9159, %v9160
      %v9162 = vsel %vm8742, %v8681, 0.0
      %v9163 = vadd.f32 %v9161, %v9162
      %v9164 = vsel %vm8742, %v8682, 0.0
      %v9165 = vadd.f32 %v9163, %v9164
      %v9166 = vsel %vm8742, %v8683, 0.0
      %v9167 = vadd.f32 %v9165, %v9166
      %v9168 = vsel %vm8742, %v8684, 0.0
      %v9169 = vadd.f32 %v9167, %v9168
      %v9170 = vsel %vm8742, %v8685, 0.0
      %v9171 = vadd.f32 %v9169, %v9170
      %v9172 = vsel %vm8742, %v8686, 0.0
      %v9173 = vadd.f32 %v9171, %v9172
      %v9174 = vsel %vm8742, %v8687, 0.0
      %v9175 = vadd.f32 %v9173, %v9174
      %v9176 = vsel %vm8742, %v8688, 0.0
      %v9177 = vadd.f32 %v9175, %v9176
      %v9178 = vsel %vm8742, %v8689, 0.0
      %v9179 = vadd.f32 %v9177, %v9178
      %v9180 = vsel %vm8742, %v8690, 0.0
      %v9181 = vadd.f32 %v9179, %v9180
      %v9182 = vsel %vm8742, %v8691, 0.0
      %v9183 = vadd.f32 %v9181, %v9182
      %v9184 = vsel %vm8742, %v8692, 0.0
      %v9185 = vadd.f32 %v9183, %v9184
      %v9186 = vsel %vm8742, %v8693, 0.0
      %v9187 = vadd.f32 %v9185, %v9186
      %v9188 = vsel %vm8742, %v8694, 0.0
      %v9189 = vadd.f32 %v9187, %v9188
      %v9190 = vsel %vm8742, %v8695, 0.0
      %v9191 = vadd.f32 %v9189, %v9190
      %v9192 = vsel %vm8742, %v8696, 0.0
      %v9193 = vadd.f32 %v9191, %v9192
      %v9194 = vsel %vm8742, %v8697, 0.0
      %v9195 = vadd.f32 %v9193, %v9194
      %v9196 = vsel %vm8742, %v8698, 0.0
      %v9197 = vadd.f32 %v9195, %v9196
      %v9198 = vsel %vm8742, %v8699, 0.0
      %v9199 = vadd.f32 %v9197, %v9198
      %v9200 = vsel %vm8742, %v8700, 0.0
      %v9201 = vadd.f32 %v9199, %v9200
      %v9202 = vsel %vm8742, %v8701, 0.0
      %v9203 = vadd.f32 %v9201, %v9202
      %v9204 = vsel %vm8742, %v8702, 0.0
      %v9205 = vadd.f32 %v9203, %v9204
      %v9206 = vsel %vm8742, %v8703, 0.0
      %v9207 = vadd.f32 %v9205, %v9206
      %v9208 = vsel %vm8742, %v8704, 0.0
      %v9209 = vadd.f32 %v9207, %v9208
      %v9210 = vsel %vm8742, %v8705, 0.0
      %v9211 = vadd.f32 %v9209, %v9210
      %v9212 = vsel %vm8742, %v8706, 0.0
      %v9213 = vadd.f32 %v9211, %v9212
      %v9214 = vsel %vm8742, %v8707, 0.0
      %v9215 = vadd.f32 %v9213, %v9214
      %v9216 = vsel %vm8742, %v8708, 0.0
      %v9217 = vadd.f32 %v9215, %v9216
      %v9218 = vsel %vm8742, %v8709, 0.0
      %v9219 = vadd.f32 %v9217, %v9218
      %v9220 = vrot.slane %v9219, 4
      %v9221 = vadd.f32 %v9219, %v9220
      %v9222 = vrot.slane %v9221, 2
      %v9223 = vadd.f32 %v9221, %v9222
      %v9224 = vrot.slane %v9223, 1
      %v9225 = vadd.f32 %v9223, %v9224
      %v9226 = vsel %vm8742, %v8710, 0.0
      %v9227 = vsel %vm8742, %v8711, 0.0
      %v9228 = vadd.f32 %v9226, %v9227
      %v9229 = vsel %vm8742, %v8712, 0.0
      %v9230 = vadd.f32 %v9228, %v9229
      %v9231 = vsel %vm8742, %v8713, 0.0
      %v9232 = vadd.f32 %v9230, %v9231
      %v9233 = vsel %vm8742, %v8714, 0.0
      %v9234 = vadd.f32 %v9232, %v9233
      %v9235 = vsel %vm8742, %v8715, 0.0
      %v9236 = vadd.f32 %v9234, %v9235
      %v9237 = vsel %vm8742, %v8716, 0.0
      %v9238 = vadd.f32 %v9236, %v9237
      %v9239 = vsel %vm8742, %v8717, 0.0
      %v9240 = vadd.f32 %v9238, %v9239
      %v9241 = vsel %vm8742, %v8718, 0.0
      %v9242 = vadd.f32 %v9240, %v9241
      %v9243 = vsel %vm8742, %v8719, 0.0
      %v9244 = vadd.f32 %v9242, %v9243
      %v9245 = vsel %vm8742, %v8720, 0.0
      %v9246 = vadd.f32 %v9244, %v9245
      %v9247 = vsel %vm8742, %v8721, 0.0
      %v9248 = vadd.f32 %v9246, %v9247
      %v9249 = vsel %vm8742, %v8722, 0.0
      %v9250 = vadd.f32 %v9248, %v9249
      %v9251 = vsel %vm8742, %v8723, 0.0
      %v9252 = vadd.f32 %v9250, %v9251
      %v9253 = vsel %vm8742, %v8724, 0.0
      %v9254 = vadd.f32 %v9252, %v9253
      %v9255 = vsel %vm8742, %v8725, 0.0
      %v9256 = vadd.f32 %v9254, %v9255
      %v9257 = vsel %vm8742, %v8726, 0.0
      %v9258 = vadd.f32 %v9256, %v9257
      %v9259 = vsel %vm8742, %v8727, 0.0
      %v9260 = vadd.f32 %v9258, %v9259
      %v9261 = vsel %vm8742, %v8728, 0.0
      %v9262 = vadd.f32 %v9260, %v9261
      %v9263 = vsel %vm8742, %v8729, 0.0
      %v9264 = vadd.f32 %v9262, %v9263
      %v9265 = vsel %vm8742, %v8730, 0.0
      %v9266 = vadd.f32 %v9264, %v9265
      %v9267 = vsel %vm8742, %v8731, 0.0
      %v9268 = vadd.f32 %v9266, %v9267
      %v9269 = vsel %vm8742, %v8732, 0.0
      %v9270 = vadd.f32 %v9268, %v9269
      %v9271 = vsel %vm8742, %v8733, 0.0
      %v9272 = vadd.f32 %v9270, %v9271
      %v9273 = vsel %vm8742, %v8734, 0.0
      %v9274 = vadd.f32 %v9272, %v9273
      %v9275 = vsel %vm8742, %v8735, 0.0
      %v9276 = vadd.f32 %v9274, %v9275
      %v9277 = vsel %vm8742, %v8736, 0.0
      %v9278 = vadd.f32 %v9276, %v9277
      %v9279 = vsel %vm8742, %v8737, 0.0
      %v9280 = vadd.f32 %v9278, %v9279
      %v9281 = vsel %vm8742, %v8738, 0.0
      %v9282 = vadd.f32 %v9280, %v9281
      %v9283 = vsel %vm8742, %v8739, 0.0
      %v9284 = vadd.f32 %v9282, %v9283
      %v9285 = vsel %vm8742, %v8740, 0.0
      %v9286 = vadd.f32 %v9284, %v9285
      %v9287 = vsel %vm8742, %v8741, 0.0
      %v9288 = vadd.f32 %v9286, %v9287
      %v9289 = vrot.slane %v9288, 4
      %v9290 = vadd.f32 %v9288, %v9289
      %v9291 = vrot.slane %v9290, 2
      %v9292 = vadd.f32 %v9290, %v9291
      %v9293 = vrot.slane %v9292, 1
      %v9294 = vadd.f32 %v9292, %v9293
      %v9295 = vmul.f32 %v8811, 0.00390625
      %v9296 = vmul.f32 %v8880, 0.00390625
      %v9297 = vmul.f32 %v8949, 0.00390625
      %v9298 = vmul.f32 %v9018, 0.00390625
      %v9299 = vmul.f32 %v9087, 0.00390625
      %v9300 = vmul.f32 %v9156, 0.00390625
      %v9301 = vmul.f32 %v9225, 0.00390625
      %v9302 = vmul.f32 %v9294, 0.00390625
      %v9303 = vld [vmem:[%s3] sm:$0xff]
      %v9304 = vld [vmem:[%s3 + $0x8] sm:$0xff]
      %v9305 = vld [vmem:[%s3 + $0x10] sm:$0xff]
      %v9306 = vld [vmem:[%s3 + $0x18] sm:$0xff]
      %v9307 = vld [vmem:[%s4] sm:$0x1]
      %v9309 = vlaneseq
      %v9310 = vshrl.u32 %v9309, 7
      %v9311 = vsub.s32 0, %v9310
      %v9312 = vrot.slane %v9307, %v9311
      %vm9322 = vcmask 1041409
      %v9323 = vsel %vm9322, %v9296, %v9295
      %vm9324 = vcmask 1042434
      %v9325 = vsel %vm9324, %v9297, %v9323
      %vm9326 = vcmask 1043459
      %v9327 = vsel %vm9326, %v9298, %v9325
      %vm9328 = vcmask 1044484
      %v9329 = vsel %vm9328, %v9299, %v9327
      %vm9330 = vcmask 1045509
      %v9331 = vsel %vm9330, %v9300, %v9329
      %vm9332 = vcmask 1046534
      %v9333 = vsel %vm9332, %v9301, %v9331
      %vm9334 = vcmask 1047559
      %v9335 = vsel %vm9334, %v9302, %v9333
      %v9336 = vsel %vm8742, %v9335, 0
      %9338 = vmatprep.subr.mxu0 0.0
      %9339 = vmatpush1.msra.mxu0 0.0
      %9340 = vmatprep.subr.mxu0 0.0
      %9341 = vmatpush1.msra.mxu0 0.0
      %9342 = vmatprep.subr.mxu0 0.0
      %9343 = vmatpush1.msra.mxu0 0.0
      %9344 = vmatprep.subr.mxu0 0.0
      %9345 = vmatpush1.msra.mxu0 0.0
      %9346 = vmatprep.subr.mxu0 0.0
      %9347 = vmatpush1.msra.mxu0 0.0
      %9348 = vmatprep.subr.mxu0 0.0
      %9349 = vmatpush1.msra.mxu0 0.0
      %9350 = vmatprep.subr.mxu0 0.0
      %9351 = vmatpush1.msra.mxu0 0.0
      %9352 = vmatprep.subr.mxu0 0.0
      %9353 = vmatpush1.msra.mxu0 0.0
      %9354 = vmatprep.subr.mxu0 0.0
      %9355 = vmatpush1.msra.mxu0 0.0
      %9356 = vmatprep.subr.mxu0 0.0
      %9357 = vmatpush1.msra.mxu0 0.0
      %9358 = vmatprep.subr.mxu0 0.0
      %9359 = vmatpush1.msra.mxu0 0.0
      %9360 = vmatprep.subr.mxu0 0.0
      %9361 = vmatpush1.msra.mxu0 0.0
      %9362 = vmatprep.subr.mxu0 0.0
      %9363 = vmatpush1.msra.mxu0 %v9306
      %9364 = vmatprep.subr.mxu0 0.0
      %9365 = vmatpush1.msra.mxu0 %v9305
      %9366 = vmatprep.subr.mxu0 0.0
      %9367 = vmatpush1.msra.mxu0 %v9304
      %9368 = vmatprep.subr.mxu0 0.0
      %9369 = vmatpush1.msra.mxu0 %v9303
      %9370 = vmatprep.subr.mxu0 0.0
      %9371 = vmatpush2.msra.mxu0 0.0
      %9372 = vmatprep.subr.mxu0 0.0
      %9373 = vmatpush2.msra.mxu0 0.0
      %9374 = vmatprep.subr.mxu0 0.0
      %9375 = vmatpush2.msra.mxu0 0.0
      %9376 = vmatprep.subr.mxu0 0.0
      %9377 = vmatpush2.msra.mxu0 0.0
      %9378 = vmatprep.subr.mxu0 0.0
      %9379 = vmatpush2.msra.mxu0 0.0
      %9380 = vmatprep.subr.mxu0 0.0
      %9381 = vmatpush2.msra.mxu0 0.0
      %9382 = vmatprep.subr.mxu0 0.0
      %9383 = vmatpush2.msra.mxu0 0.0
      %9384 = vmatprep.subr.mxu0 0.0
      %9385 = vmatpush2.msra.mxu0 0.0
      %9386 = vmatprep.subr.mxu0 0.0
      %9387 = vmatpush2.msra.mxu0 0.0
      %9388 = vmatprep.subr.mxu0 0.0
      %9389 = vmatpush2.msra.mxu0 0.0
      %9390 = vmatprep.subr.mxu0 0.0
      %9391 = vmatpush2.msra.mxu0 0.0
      %9392 = vmatprep.subr.mxu0 0.0
      %9393 = vmatpush2.msra.mxu0 0.0
      %9394 = vmatprep.subr.mxu0 0.0
      %9395 = vmatpush2.msra.mxu0 0.0
      %9396 = vmatprep.subr.mxu0 0.0
      %9397 = vmatpush2.msra.mxu0 0.0
      %9398 = vmatprep.subr.mxu0 0.0
      %9399 = vmatpush2.msra.mxu0 0.0
      %9400 = vmatprep.subr.mxu0 0.0
      %9401 = vmatpush2.msra.mxu0 0.0
      %9402 = vmatprep.mubr.f32.mxu0 0.0
      %9403 = vmatmul.mubr.f32.gmra.mxu0 %v9336
      %v9404 = vpop.f32.mrf.mxu0
      %v9405 = vadd.f32 %v9312, %v9404
      %v9406 = vpop.f32.mrf.mxu0
      %9407 = vdwg.mxu0
      %vm9408 = vcmask 31744
      %9409 = vst.msk [vmem:[%s227] sm:$0xff] %vm9408, %v9405
      %p9410 = scmp.lt.s32.totalorder %s16, 1
      %s9411 = scalar_select %p9410, %s16, 1
      %s9412 = smul.addr %s9411, 8
      %s9413 = scalar_lea.vmem %s5, %s9412
      // Predicated region
      $region41: #{tpu_custom_call.1} parent=39 // pred_check
        %p9414 = pneg %p144
      $region42: #{tpu_custom_call.1} parent=39 // pred_check_branch
        %9416 = sbr.rel (%p9414) target = $region44
      $region43: #{tpu_custom_call.1} parent=39 // pred_region
        _
      $region44: #{tpu_custom_call.1} parent=39 // pred_fallthru
        _
    $region40: #{tpu_custom_call.1} parent=5 // pred_fallthru
      _
    %p9417 = scmp.le.s32.totalorder 2, %s11
    // Predicated region
    $region45: #{tpu_custom_call.1} parent=5 // pred_check
      %p9418 = pneg %p9417
    $region46: #{tpu_custom_call.1} parent=5 // pred_check_branch
      %9420 = sbr.rel (%p9418) target = $region48
    $region47: #{tpu_custom_call.1} parent=5 // pred_region
      %s9421 = ssub.s32 %s11, 2
      // Predicated region
      $region49: #{tpu_custom_call.1} parent=47 // pred_check
        %p9422 = pneg %p150
      $region50: #{tpu_custom_call.1} parent=47 // pred_check_branch
        %9424 = sbr.rel (%p9422) target = $region52
      $region51: #{tpu_custom_call.1} parent=47 // pred_region
        %p9425 = scmp.lt.s32.totalorder %s17, 1
        %s9426 = scalar_select %p9425, %s17, 1
        %s9427 = smul.addr %s9426, 8
        %s9428 = scalar_lea.vmem %s5, %s9427
      $region52: #{tpu_custom_call.1} parent=47 // pred_fallthru
        _
    $region48: #{tpu_custom_call.1} parent=5 // pred_fallthru
      _
  $region6: #{tpu_custom_call.1} parent=0 // loop_footer
    %s15 = sadd.s32 1, %s11
  $region7: #{tpu_custom_call.1} parent=0 // loop_footer_branch
    %10 = sbr.rel target = $region3
  $region8: #{tpu_custom_call.1} parent=0 // loop_exit
    _

</llo_original>
